<compile_context>
chip_gen: v7x
topology: tpu7x:2x2x1
jax: 0.10.0
libtpu: 0.0.40
codegen_flags: <defaults>
</compile_context>

<pallas_src>
import functools

import jax
import jax.numpy as jnp
from jax import lax
from jax.experimental import pallas as pl
from jax.experimental.pallas import tpu as pltpu


def transformer_block_kernel(
    x_ref,                       # (Bt, S, D) input batch tile
    n1s_ref, n1b_ref,            # (1, D) LayerNorm1 scale / shift (f32)
    wqkv_ref,                    # (D, 3D) fused [Wq/sqrt(dh) | Wk | Wv], matmul_dtype
    wo_ref, bo_ref,              # (D, D) matmul_dtype, (1, D) f32
    n2s_ref, n2b_ref,            # (1, D) LayerNorm2 scale / shift (f32)
    w1_ref, b1_ref,              # (D, 4D) matmul_dtype, (1, 4D) f32
    w2_ref, b2_ref,              # (4D, D) matmul_dtype, (1, D) f32
    out_ref,                     # (Bt, S, D)
    h_scr,                       # VMEM (Bt*S, D) matmul_dtype: LN1 output, batch-folded rows
    x1_scr,                      # VMEM (Bt*S, D) f32: first-residual activations
    *, num_heads, with_mask, matmul_dtype,
):
    Bt, S, D = x_ref.shape
    dh = D // num_heads
    eps = 1e-5

    def layernorm(v, scale, shift):
        mean = jnp.mean(v, axis=-1, keepdims=True)
        var = jnp.mean((v - mean) ** 2, axis=-1, keepdims=True)   # unbiased=False
        return (v - mean) * lax.rsqrt(var + eps) * scale + shift

    def mm(a, w):
        # matmul inputs in matmul_dtype; accumulate in f32 on the MXU
        return jnp.dot(a.astype(matmul_dtype), w, preferred_element_type=jnp.float32)

    n1s = n1s_ref[...]
    n1b = n1b_ref[...]

    # ---- LayerNorm1; batch rows folded into the GEMM M dimension (M = Bt*S) ----
    for b in range(Bt):
        xb = x_ref[b, :, :].astype(jnp.float32)                    # (S, D)
        h_scr[b * S:(b + 1) * S, :] = layernorm(xb, n1s, n1b).astype(matmul_dtype)

    # One fused (Bt*S, D) @ (D, 3D) GEMM for Q|K|V (1/sqrt(dh) already in Wq).
    qkv = jnp.dot(h_scr[...], wqkv_ref[...], preferred_element_type=jnp.float32)

    if with_mask:
        row = lax.broadcasted_iota(jnp.int32, (S, S), 0)
        col = lax.broadcasted_iota(jnp.int32, (S, S), 1)
        causal = col > row                       # upper triangle (excl. diag)
        neg_big = jnp.float32(-1e30)             # finite: exp underflows to 0, no inf-inf

    wo = wo_ref[...]
    bo = bo_ref[...]

    # ---- causal multi-head attention + per-head out-projection accumulation ----
    for b in range(Bt):
        r0 = b * S
        attn_b = jnp.zeros((S, D), jnp.float32)
        for hd in range(num_heads):
            lo = hd * dh
            q = qkv[r0:r0 + S, lo:lo + dh]                  # (S, dh), scale pre-folded
            k = qkv[r0:r0 + S, D + lo:D + lo + dh]
            v = qkv[r0:r0 + S, 2 * D + lo:2 * D + lo + dh]

            # contract last dims directly -> no K transpose / relayout
            s = lax.dot_general(q.astype(matmul_dtype), k.astype(matmul_dtype),
                                (((1,), (1,)), ((), ())),
                                preferred_element_type=jnp.float32)   # (S, S)
            if with_mask:
                s = jnp.where(causal, neg_big, s)
            s = s - jnp.max(s, axis=-1, keepdims=True)
            p = jnp.exp(s)
            denom = jnp.sum(p, axis=-1, keepdims=True)      # (S, 1)
            # EUP approximate reciprocal + one Newton step on the tiny (S,1) vector;
            # the (S,S) normalization is a multiply, never a divide.
            inv = pl.reciprocal(denom, approx=True)
            inv = inv * (2.0 - denom * inv)
            p = p * inv
            # dropout on attention weights is identity in eval mode
            ctx = jnp.dot(p.astype(matmul_dtype), v.astype(matmul_dtype),
                          preferred_element_type=jnp.float32)          # (S, dh)
            # concat(ctx_h) @ Wo == sum_h ctx_h @ Wo[h*dh:(h+1)*dh, :]
            # -> no lane-misaligned (width-dh) stores into a context slab.
            attn_b = attn_b + jnp.dot(ctx.astype(matmul_dtype), wo[lo:lo + dh, :],
                                      preferred_element_type=jnp.float32)
        # residual (+ identity dropout); full-lane-width row-slice store
        x1_scr[r0:r0 + S, :] = x_ref[b, :, :].astype(jnp.float32) + attn_b + bo

    # ---- sublayer 2: LayerNorm -> FeedForward (GELU tanh) -> residual ----
    x1 = x1_scr[...]                                         # (Bt*S, D) f32
    h2 = layernorm(x1, n2s_ref[...], n2b_ref[...])
    z = mm(h2, w1_ref[...]) + b1_ref[...]
    z2 = z * z
    g = 0.5 * z * (1.0 + jnp.tanh(jnp.float32((2.0 / jnp.pi) ** 0.5)
                                  * (z + 0.044715 * (z2 * z))))
    f = mm(g, w2_ref[...]) + b2_ref[...]
    y = x1 + f                                               # residual (+ identity dropout)
    for b in range(Bt):
        out_ref[b, :, :] = y[b * S:(b + 1) * S, :].astype(out_ref.dtype)


def _pick_batch_tile(B, S, D):
    """Fold batch rows into GEMM M so rows approach MXU depth (256 on v6e/v7x,
    128 already saturates v5e), bounded by an activation-VMEM budget."""
    target_rows = 256
    max_bt = max(1, target_rows // max(S, 1))
    act_cap = max(1, (8 * 1024 * 1024) // max(1, S * 4 * D * 4))  # ~8 MiB f32 FFN slab
    max_bt = max(1, min(max_bt, act_cap))
    bt = 1
    for cand in range(1, min(B, max_bt) + 1):
        if B % cand == 0:
            bt = cand
    return bt


def _vmem_limit_bytes(D, S, Bt, matmul_dtype):
    H4 = 4 * D
    wsz = jnp.dtype(matmul_dtype).itemsize
    weight_bytes = (3 * D * D + D * D + D * H4 + H4 * D) * wsz + (6 * D + H4) * 4
    M = Bt * S
    act_bytes = M * (3 * D + 2 * H4 + 6 * D) * 4
    limit = 2 * (weight_bytes + act_bytes) + (8 << 20)
    # 32 MiB floor (default scoped limit); 100 MiB cap is fine for v5e/v6e (128 MiB
    # physical); at these shapes v7x (64 MiB physical) stays far below the cap.
    return int(min(max(limit, 32 << 20), 100 << 20))


def transformer_decoder_only(x, params, *, num_heads, with_mask=True,
                             matmul_dtype=jnp.bfloat16):
    """x: (B, S, D); params: 13-tuple matching the torch module (see init_params)."""
    (n1s, n1b, wq, wk, wv, wo, bo, n2s, n2b, w1, b1, w2, b2) = params
    B, S, D = x.shape
    H4 = 4 * D
    dh = D // num_heads
    Bt = _pick_batch_tile(B, S, D)

    # Host-side prep: fold 1/sqrt(dh) into Wq, fuse Wq/Wk/Wv into one (D, 3D)
    # weight, and cast only the big matmul weights to matmul_dtype.
    wq_scaled = wq * jnp.float32(1.0 / (dh ** 0.5))
    wqkv = jnp.concatenate([wq_scaled, wk, wv], axis=1).astype(matmul_dtype)
    wo_c = wo.astype(matmul_dtype)
    w1_c = w1.astype(matmul_dtype)
    w2_c = w2.astype(matmul_dtype)

    kernel = functools.partial(
        transformer_block_kernel,
        num_heads=num_heads, with_mask=with_mask, matmul_dtype=matmul_dtype,
    )

    wsz = jnp.dtype(matmul_dtype).itemsize
    cost = pl.CostEstimate(
        flops=int(2 * B * S * 12 * D * D + 4 * B * S * S * D),
        transcendentals=int(B * num_heads * S * S + B * S * H4),
        bytes_accessed=int(2 * B * S * D * 4
                           + (3 * D * D + D * D + D * H4 + H4 * D) * wsz),
    )

    def call(single_buffer_weights):
        def rep(shape):
            # whole array resident in VMEM, same block every grid step
            idx = lambda b, _shape=shape: (0,) * len(_shape)
            if single_buffer_weights:
                # invariant index_map -> double buffering buys nothing; save VMEM
                return pl.BlockSpec(shape, idx, pipeline_mode=pl.Buffered(buffer_count=1))
            return pl.BlockSpec(shape, idx)

        in_specs = [
            pl.BlockSpec((Bt, S, D), lambda b: (b, 0, 0)),     # x batch tile
            rep((1, D)), rep((1, D)),                          # norm1 scale / shift
            rep((D, 3 * D)),                                   # fused Wqkv
            rep((D, D)), rep((1, D)),                          # out_proj W, b
            rep((1, D)), rep((1, D)),                          # norm2 scale / shift
            rep((D, H4)), rep((1, H4)),                        # ffn W1, b1
            rep((H4, D)), rep((1, D)),                         # ffn W2, b2
        ]

        return pl.pallas_call(
            kernel,
            out_shape=jax.ShapeDtypeStruct((B, S, D), x.dtype),
            grid=(B // Bt,),
            in_specs=in_specs,
            out_specs=pl.BlockSpec((Bt, S, D), lambda b: (b, 0, 0)),
            scratch_shapes=[pltpu.VMEM((Bt * S, D), matmul_dtype),
                            pltpu.VMEM((Bt * S, D), jnp.float32)],
            compiler_params=pltpu.CompilerParams(
                dimension_semantics=("parallel",),
                vmem_limit_bytes=_vmem_limit_bytes(D, S, Bt, matmul_dtype),
            ),
            cost_estimate=cost,
        )(x, n1s, n1b, wqkv, wo_c, bo, n2s, n2b, w1_c, b1, w2_c, b2)

    try:
        return call(True)
    except Exception:
        # pipeline_mode / Buffered not supported by this JAX build: fall back to
        # default (double-buffered) weight windows.
        return call(False)


def init_params(key, d_emb):
    """Deterministic synthetic parameters (shapes match the torch module)."""
    H4 = 4 * d_emb
    ks = jax.random.split(key, 8)
    s = 0.05
    params = (
        jnp.ones((1, d_emb), jnp.float32),                           # norm1 scale
        jnp.zeros((1, d_emb), jnp.float32),                          # norm1 shift
        s * jax.random.normal(ks[0], (d_emb, d_emb), jnp.float32),   # Wq (no bias)
        s * jax.random.normal(ks[1], (d_emb, d_emb), jnp.float32),   # Wk
        s * jax.random.normal(ks[2], (d_emb, d_emb), jnp.float32),   # Wv
        s * jax.random.normal(ks[3], (d_emb, d_emb), jnp.float32),   # out_proj W
        s * jax.random.normal(ks[4], (1, d_emb), jnp.float32),       # out_proj b
        jnp.ones((1, d_emb), jnp.float32),                           # norm2 scale
        jnp.zeros((1, d_emb), jnp.float32),                          # norm2 shift
        s * jax.random.normal(ks[5], (d_emb, H4), jnp.float32),      # ffn W1
        s * jax.random.normal(ks[6], (1, H4), jnp.float32),          # ffn b1
        s * jax.random.normal(ks[7], (H4, d_emb), jnp.float32),      # ffn W2
        jnp.zeros((1, d_emb), jnp.float32),                          # ffn b2
    )
    return params


def reference_forward(x, params, *, num_heads, with_mask=True):
    """Pure-JAX reference mirroring the PyTorch forward (eval mode)."""
    (n1s, n1b, wq, wk, wv, wo, bo, n2s, n2b, w1, b1, w2, b2) = params
    B, S, D = x.shape
    dh = D // num_heads
    eps = 1e-5

    def ln(v, sc, sh):
        m = v.mean(-1, keepdims=True)
        var = ((v - m) ** 2).mean(-1, keepdims=True)
        return (v - m) / jnp.sqrt(var + eps) * sc + sh

    h = ln(x, n1s, n1b)
    q = (h @ wq).reshape(B, S, num_heads, dh).transpose(0, 2, 1, 3)
    k = (h @ wk).reshape(B, S, num_heads, dh).transpose(0, 2, 1, 3)
    v = (h @ wv).reshape(B, S, num_heads, dh).transpose(0, 2, 1, 3)
    scores = jnp.einsum("bhqd,bhkd->bhqk", q, k)
    if with_mask:
        mask = jnp.triu(jnp.ones((S, S), bool), 1)
        scores = jnp.where(mask[None, None], -jnp.inf, scores)
    w = jax.nn.softmax(scores / dh ** 0.5, axis=-1)
    ctx = jnp.einsum("bhqk,bhkd->bhqd", w, v).transpose(0, 2, 1, 3).reshape(B, S, D)
    x1 = x + ctx @ wo + bo
    h2 = ln(x1, n2s, n2b)
    z = h2 @ w1 + b1
    g = 0.5 * z * (1.0 + jnp.tanh((2.0 / jnp.pi) ** 0.5 * (z + 0.044715 * z ** 3)))
    return x1 + g @ w2 + b2


if __name__ == "__main__":
    B, S, D, H = 2, 8, 32, 4          # batch, seq, emb_dim, num_heads
    key = jax.random.PRNGKey(0)
    kx, kp = jax.random.split(key)
    x = jax.random.normal(kx, (B, S, D), jnp.float32)
    params = init_params(kp, D)

    ref = reference_forward(x, params, num_heads=H, with_mask=True)

    # Exact-math path (f32 matmuls): tight correctness check.
    out_f32 = transformer_decoder_only(x, params, num_heads=H, with_mask=True,
                                       matmul_dtype=jnp.float32)
    out_f32 = jax.block_until_ready(out_f32)
    assert out_f32.shape == (B, S, D)
    assert jnp.allclose(out_f32, ref, atol=2e-4, rtol=2e-4), \
        float(jnp.max(jnp.abs(out_f32 - ref)))

    # Default path: bf16 MXU matmuls with f32 accumulation (looser tolerance).
    out_bf16 = transformer_decoder_only(x, params, num_heads=H, with_mask=True)
    out_bf16 = jax.block_until_ready(out_bf16)
    assert out_bf16.shape == (B, S, D)
    assert jnp.allclose(out_bf16, ref, atol=5e-2, rtol=5e-2), \
        float(jnp.max(jnp.abs(out_bf16 - ref)))

    print("KERNEL_OK")
</pallas_src>

<mosaic_0001>
module attributes {stable_mosaic.version = 11 : i64} {
  func.func @transformer_block_kernel(%arg0: i32, %arg1: memref<2x8x32xf32, #tpu.memory_space<vmem>>, %arg2: memref<1x32xf32, #tpu.memory_space<vmem>>, %arg3: memref<1x32xf32, #tpu.memory_space<vmem>>, %arg4: memref<32x96xf32, #tpu.memory_space<vmem>>, %arg5: memref<32x32xf32, #tpu.memory_space<vmem>>, %arg6: memref<1x32xf32, #tpu.memory_space<vmem>>, %arg7: memref<1x32xf32, #tpu.memory_space<vmem>>, %arg8: memref<1x32xf32, #tpu.memory_space<vmem>>, %arg9: memref<32x128xf32, #tpu.memory_space<vmem>>, %arg10: memref<1x128xf32, #tpu.memory_space<vmem>>, %arg11: memref<128x32xf32, #tpu.memory_space<vmem>>, %arg12: memref<1x32xf32, #tpu.memory_space<vmem>>, %arg13: memref<2x8x32xf32, #tpu.memory_space<vmem>>, %arg14: memref<16x32xf32, #tpu.memory_space<vmem>>, %arg15: memref<16x32xf32, #tpu.memory_space<vmem>>) attributes {dimension_semantics = [#tpu.dimension_semantics<parallel>], iteration_bounds = array<i64: 1>, scalar_prefetch = 0 : i64, scratch_operands = 2 : i64, tpu.core_type = #tpu.core_type<tc>, window_params = [{transform_indices = @transform_0, window_bounds = array<i64: 2, 8, 32>}, {pipeline_mode = #tpu.pipeline_mode<synchronous>, transform_indices = @transform_1, window_bounds = array<i64: 1, 32>}, {pipeline_mode = #tpu.pipeline_mode<synchronous>, transform_indices = @transform_2, window_bounds = array<i64: 1, 32>}, {pipeline_mode = #tpu.pipeline_mode<synchronous>, transform_indices = @transform_3, window_bounds = array<i64: 32, 96>}, {pipeline_mode = #tpu.pipeline_mode<synchronous>, transform_indices = @transform_4, window_bounds = array<i64: 32, 32>}, {pipeline_mode = #tpu.pipeline_mode<synchronous>, transform_indices = @transform_5, window_bounds = array<i64: 1, 32>}, {pipeline_mode = #tpu.pipeline_mode<synchronous>, transform_indices = @transform_6, window_bounds = array<i64: 1, 32>}, {pipeline_mode = #tpu.pipeline_mode<synchronous>, transform_indices = @transform_7, window_bounds = array<i64: 1, 32>}, {pipeline_mode = #tpu.pipeline_mode<synchronous>, transform_indices = @transform_8, window_bounds = array<i64: 32, 128>}, {pipeline_mode = #tpu.pipeline_mode<synchronous>, transform_indices = @transform_9, window_bounds = array<i64: 1, 128>}, {pipeline_mode = #tpu.pipeline_mode<synchronous>, transform_indices = @transform_10, window_bounds = array<i64: 128, 32>}, {pipeline_mode = #tpu.pipeline_mode<synchronous>, transform_indices = @transform_11, window_bounds = array<i64: 1, 32>}, {transform_indices = @transform_12, window_bounds = array<i64: 2, 8, 32>}]} {
    %c0 = arith.constant 0 : index
    %c0_0 = arith.constant 0 : index
    %0 = vector.load %arg2[%c0, %c0_0] : memref<1x32xf32, #tpu.memory_space<vmem>>, vector<1x32xf32>
    %c0_1 = arith.constant 0 : index
    %c0_2 = arith.constant 0 : index
    %1 = vector.load %arg3[%c0_1, %c0_2] : memref<1x32xf32, #tpu.memory_space<vmem>>, vector<1x32xf32>
    %c0_3 = arith.constant 0 : index
    %c0_4 = arith.constant 0 : index
    %c0_5 = arith.constant 0 : index
    %2 = vector.load %arg1[%c0_3, %c0_4, %c0_5] : memref<2x8x32xf32, #tpu.memory_space<vmem>>, vector<1x8x32xf32>
    %3 = vector.shape_cast %2 : vector<1x8x32xf32> to vector<8x32xf32>
    %cst = arith.constant dense<0.000000e+00> : vector<8xf32>
    %4 = vector.multi_reduction <add>, %3, %cst [1] : vector<8x32xf32> to vector<8xf32>
    %5 = vector.shape_cast %4 : vector<8xf32> to vector<8x1xf32>
    %cst_6 = arith.constant 3.200000e+01 : f32
    %6 = vector.broadcast %cst_6 : f32 to vector<8x1xf32>
    %7 = arith.divf %5, %6 : vector<8x1xf32>
    %8 = vector.broadcast %7 : vector<8x1xf32> to vector<8x32xf32>
    %9 = arith.subf %3, %8 : vector<8x32xf32>
    %10 = arith.mulf %9, %9 : vector<8x32xf32>
    %cst_7 = arith.constant dense<0.000000e+00> : vector<8xf32>
    %11 = vector.multi_reduction <add>, %10, %cst_7 [1] : vector<8x32xf32> to vector<8xf32>
    %12 = vector.shape_cast %11 : vector<8xf32> to vector<8x1xf32>
    %cst_8 = arith.constant 3.200000e+01 : f32
    %13 = vector.broadcast %cst_8 : f32 to vector<8x1xf32>
    %14 = arith.divf %12, %13 : vector<8x1xf32>
    %15 = vector.broadcast %7 : vector<8x1xf32> to vector<8x32xf32>
    %16 = arith.subf %3, %15 : vector<8x32xf32>
    %cst_9 = arith.constant 9.99999974E-6 : f32
    %17 = vector.broadcast %cst_9 : f32 to vector<8x1xf32>
    %18 = arith.addf %14, %17 : vector<8x1xf32>
    %19 = math.rsqrt %18 : vector<8x1xf32>
    %20 = vector.broadcast %19 : vector<8x1xf32> to vector<8x32xf32>
    %21 = arith.mulf %16, %20 : vector<8x32xf32>
    %22 = vector.broadcast %0 : vector<1x32xf32> to vector<8x32xf32>
    %23 = arith.mulf %21, %22 : vector<8x32xf32>
    %24 = vector.broadcast %1 : vector<1x32xf32> to vector<8x32xf32>
    %25 = arith.addf %23, %24 : vector<8x32xf32>
    %c0_10 = arith.constant 0 : index
    %c0_11 = arith.constant 0 : index
    %26 = vector.load %arg14[%c0_10, %c0_11] : memref<16x32xf32, #tpu.memory_space<vmem>>, vector<8x32xf32>
    tpu.vector_store %arg14[%c0_10, %c0_11], %25 {strides = array<i32>} : memref<16x32xf32, #tpu.memory_space<vmem>>, vector<8x32xf32>,
    %c1 = arith.constant 1 : index
    %c0_12 = arith.constant 0 : index
    %c0_13 = arith.constant 0 : index
    %27 = vector.load %arg1[%c1, %c0_12, %c0_13] : memref<2x8x32xf32, #tpu.memory_space<vmem>>, vector<1x8x32xf32>
    %28 = vector.shape_cast %27 : vector<1x8x32xf32> to vector<8x32xf32>
    %cst_14 = arith.constant dense<0.000000e+00> : vector<8xf32>
    %29 = vector.multi_reduction <add>, %28, %cst_14 [1] : vector<8x32xf32> to vector<8xf32>
    %30 = vector.shape_cast %29 : vector<8xf32> to vector<8x1xf32>
    %cst_15 = arith.constant 3.200000e+01 : f32
    %31 = vector.broadcast %cst_15 : f32 to vector<8x1xf32>
    %32 = arith.divf %30, %31 : vector<8x1xf32>
    %33 = vector.broadcast %32 : vector<8x1xf32> to vector<8x32xf32>
    %34 = arith.subf %28, %33 : vector<8x32xf32>
    %35 = arith.mulf %34, %34 : vector<8x32xf32>
    %cst_16 = arith.constant dense<0.000000e+00> : vector<8xf32>
    %36 = vector.multi_reduction <add>, %35, %cst_16 [1] : vector<8x32xf32> to vector<8xf32>
    %37 = vector.shape_cast %36 : vector<8xf32> to vector<8x1xf32>
    %cst_17 = arith.constant 3.200000e+01 : f32
    %38 = vector.broadcast %cst_17 : f32 to vector<8x1xf32>
    %39 = arith.divf %37, %38 : vector<8x1xf32>
    %40 = vector.broadcast %32 : vector<8x1xf32> to vector<8x32xf32>
    %41 = arith.subf %28, %40 : vector<8x32xf32>
    %cst_18 = arith.constant 9.99999974E-6 : f32
    %42 = vector.broadcast %cst_18 : f32 to vector<8x1xf32>
    %43 = arith.addf %39, %42 : vector<8x1xf32>
    %44 = math.rsqrt %43 : vector<8x1xf32>
    %45 = vector.broadcast %44 : vector<8x1xf32> to vector<8x32xf32>
    %46 = arith.mulf %41, %45 : vector<8x32xf32>
    %47 = vector.broadcast %0 : vector<1x32xf32> to vector<8x32xf32>
    %48 = arith.mulf %46, %47 : vector<8x32xf32>
    %49 = vector.broadcast %1 : vector<1x32xf32> to vector<8x32xf32>
    %50 = arith.addf %48, %49 : vector<8x32xf32>
    %c8 = arith.constant 8 : index
    %c0_19 = arith.constant 0 : index
    %51 = vector.load %arg14[%c8, %c0_19] : memref<16x32xf32, #tpu.memory_space<vmem>>, vector<8x32xf32>
    tpu.vector_store %arg14[%c8, %c0_19], %50 {strides = array<i32>} : memref<16x32xf32, #tpu.memory_space<vmem>>, vector<8x32xf32>,
    %c0_20 = arith.constant 0 : index
    %c0_21 = arith.constant 0 : index
    %52 = vector.load %arg14[%c0_20, %c0_21] : memref<16x32xf32, #tpu.memory_space<vmem>>, vector<16x32xf32>
    %c0_22 = arith.constant 0 : index
    %c0_23 = arith.constant 0 : index
    %53 = vector.load %arg4[%c0_22, %c0_23] : memref<32x96xf32, #tpu.memory_space<vmem>>, vector<32x96xf32>
    %cst_24 = arith.constant dense<0.000000e+00> : vector<16x96xf32>
    %54 = tpu.matmul %52, %53, %cst_24 {dimension_numbers = #tpu.dot_dimension_numbers<[1], [0], [0], [1], [0, 0, 1, 1], [], []>} : vector<16x32xf32>, vector<32x96xf32>, vector<16x96xf32> -> vector<16x96xf32>
    %55 = tpu.iota {dimensions = array<i32: 0>} : vector<8x8xi32>
    %56 = tpu.iota {dimensions = array<i32: 1>} : vector<8x8xi32>
    %57 = arith.cmpi sgt, %56, %55 : vector<8x8xi32>
    %c0_25 = arith.constant 0 : index
    %c0_26 = arith.constant 0 : index
    %58 = vector.load %arg5[%c0_25, %c0_26] : memref<32x32xf32, #tpu.memory_space<vmem>>, vector<32x32xf32>
    %c0_27 = arith.constant 0 : index
    %c0_28 = arith.constant 0 : index
    %59 = vector.load %arg6[%c0_27, %c0_28] : memref<1x32xf32, #tpu.memory_space<vmem>>, vector<1x32xf32>
    %cst_29 = arith.constant 0.000000e+00 : f32
    %60 = vector.broadcast %cst_29 : f32 to vector<8x32xf32>
    %61 = vector.extract_strided_slice %54 {offsets = [0, 0], sizes = [8, 8], strides = [1, 1]} : vector<16x96xf32> to vector<8x8xf32>
    %62 = vector.extract_strided_slice %54 {offsets = [0, 32], sizes = [8, 8], strides = [1, 1]} : vector<16x96xf32> to vector<8x8xf32>
    %63 = vector.extract_strided_slice %54 {offsets = [0, 64], sizes = [8, 8], strides = [1, 1]} : vector<16x96xf32> to vector<8x8xf32>
    %cst_30 = arith.constant dense<0.000000e+00> : vector<8x8xf32>
    %64 = tpu.matmul %61, %62, %cst_30 {dimension_numbers = #tpu.dot_dimension_numbers<[1], [1], [0], [0], [0, 0, 1, 0], [], []>} : vector<8x8xf32>, vector<8x8xf32>, vector<8x8xf32> -> vector<8x8xf32>
    %cst_31 = arith.constant -1.000000e+30 : f32
    %65 = vector.broadcast %cst_31 : f32 to vector<8x8xf32>
    %66 = arith.select %57, %65, %64 : vector<8x8xi1>, vector<8x8xf32>
    %cst_32 = arith.constant dense<0xFF800000> : vector<8xf32>
    %67 = vector.multi_reduction <maximumf>, %66, %cst_32 [1] : vector<8x8xf32> to vector<8xf32>
    %68 = vector.shape_cast %67 : vector<8xf32> to vector<8x1xf32>
    %69 = vector.broadcast %68 : vector<8x1xf32> to vector<8x8xf32>
    %70 = arith.subf %66, %69 : vector<8x8xf32>
    %71 = math.exp %70 : vector<8x8xf32>
    %cst_33 = arith.constant dense<0.000000e+00> : vector<8xf32>
    %72 = vector.multi_reduction <add>, %71, %cst_33 [1] : vector<8x8xf32> to vector<8xf32>
    %73 = vector.shape_cast %72 : vector<8xf32> to vector<8x1xf32>
    %74 = tpu.reciprocal %73 {approx = true} : vector<8x1xf32> -> vector<8x1xf32>
    %75 = arith.mulf %73, %74 : vector<8x1xf32>
    %cst_34 = arith.constant 2.000000e+00 : f32
    %76 = vector.broadcast %cst_34 : f32 to vector<8x1xf32>
    %77 = arith.subf %76, %75 : vector<8x1xf32>
    %78 = arith.mulf %74, %77 : vector<8x1xf32>
    %79 = vector.broadcast %78 : vector<8x1xf32> to vector<8x8xf32>
    %80 = arith.mulf %71, %79 : vector<8x8xf32>
    %cst_35 = arith.constant dense<0.000000e+00> : vector<8x8xf32>
    %81 = tpu.matmul %80, %63, %cst_35 {dimension_numbers = #tpu.dot_dimension_numbers<[1], [0], [0], [1], [0, 0, 1, 1], [], []>} : vector<8x8xf32>, vector<8x8xf32>, vector<8x8xf32> -> vector<8x8xf32>
    %82 = vector.extract_strided_slice %58 {offsets = [0, 0], sizes = [8, 32], strides = [1, 1]} : vector<32x32xf32> to vector<8x32xf32>
    %cst_36 = arith.constant dense<0.000000e+00> : vector<8x32xf32>
    %83 = tpu.matmul %81, %82, %cst_36 {dimension_numbers = #tpu.dot_dimension_numbers<[1], [0], [0], [1], [0, 0, 1, 1], [], []>} : vector<8x8xf32>, vector<8x32xf32>, vector<8x32xf32> -> vector<8x32xf32>
    %84 = arith.addf %60, %83 : vector<8x32xf32>
    %85 = vector.extract_strided_slice %54 {offsets = [0, 8], sizes = [8, 8], strides = [1, 1]} : vector<16x96xf32> to vector<8x8xf32>
    %86 = vector.extract_strided_slice %54 {offsets = [0, 40], sizes = [8, 8], strides = [1, 1]} : vector<16x96xf32> to vector<8x8xf32>
    %87 = vector.extract_strided_slice %54 {offsets = [0, 72], sizes = [8, 8], strides = [1, 1]} : vector<16x96xf32> to vector<8x8xf32>
    %cst_37 = arith.constant dense<0.000000e+00> : vector<8x8xf32>
    %88 = tpu.matmul %85, %86, %cst_37 {dimension_numbers = #tpu.dot_dimension_numbers<[1], [1], [0], [0], [0, 0, 1, 0], [], []>} : vector<8x8xf32>, vector<8x8xf32>, vector<8x8xf32> -> vector<8x8xf32>
    %cst_38 = arith.constant -1.000000e+30 : f32
    %89 = vector.broadcast %cst_38 : f32 to vector<8x8xf32>
    %90 = arith.select %57, %89, %88 : vector<8x8xi1>, vector<8x8xf32>
    %cst_39 = arith.constant dense<0xFF800000> : vector<8xf32>
    %91 = vector.multi_reduction <maximumf>, %90, %cst_39 [1] : vector<8x8xf32> to vector<8xf32>
    %92 = vector.shape_cast %91 : vector<8xf32> to vector<8x1xf32>
    %93 = vector.broadcast %92 : vector<8x1xf32> to vector<8x8xf32>
    %94 = arith.subf %90, %93 : vector<8x8xf32>
    %95 = math.exp %94 : vector<8x8xf32>
    %cst_40 = arith.constant dense<0.000000e+00> : vector<8xf32>
    %96 = vector.multi_reduction <add>, %95, %cst_40 [1] : vector<8x8xf32> to vector<8xf32>
    %97 = vector.shape_cast %96 : vector<8xf32> to vector<8x1xf32>
    %98 = tpu.reciprocal %97 {approx = true} : vector<8x1xf32> -> vector<8x1xf32>
    %99 = arith.mulf %97, %98 : vector<8x1xf32>
    %cst_41 = arith.constant 2.000000e+00 : f32
    %100 = vector.broadcast %cst_41 : f32 to vector<8x1xf32>
    %101 = arith.subf %100, %99 : vector<8x1xf32>
    %102 = arith.mulf %98, %101 : vector<8x1xf32>
    %103 = vector.broadcast %102 : vector<8x1xf32> to vector<8x8xf32>
    %104 = arith.mulf %95, %103 : vector<8x8xf32>
    %cst_42 = arith.constant dense<0.000000e+00> : vector<8x8xf32>
    %105 = tpu.matmul %104, %87, %cst_42 {dimension_numbers = #tpu.dot_dimension_numbers<[1], [0], [0], [1], [0, 0, 1, 1], [], []>} : vector<8x8xf32>, vector<8x8xf32>, vector<8x8xf32> -> vector<8x8xf32>
    %106 = vector.extract_strided_slice %58 {offsets = [8, 0], sizes = [8, 32], strides = [1, 1]} : vector<32x32xf32> to vector<8x32xf32>
    %cst_43 = arith.constant dense<0.000000e+00> : vector<8x32xf32>
    %107 = tpu.matmul %105, %106, %cst_43 {dimension_numbers = #tpu.dot_dimension_numbers<[1], [0], [0], [1], [0, 0, 1, 1], [], []>} : vector<8x8xf32>, vector<8x32xf32>, vector<8x32xf32> -> vector<8x32xf32>
    %108 = arith.addf %84, %107 : vector<8x32xf32>
    %109 = vector.extract_strided_slice %54 {offsets = [0, 16], sizes = [8, 8], strides = [1, 1]} : vector<16x96xf32> to vector<8x8xf32>
    %110 = vector.extract_strided_slice %54 {offsets = [0, 48], sizes = [8, 8], strides = [1, 1]} : vector<16x96xf32> to vector<8x8xf32>
    %111 = vector.extract_strided_slice %54 {offsets = [0, 80], sizes = [8, 8], strides = [1, 1]} : vector<16x96xf32> to vector<8x8xf32>
    %cst_44 = arith.constant dense<0.000000e+00> : vector<8x8xf32>
    %112 = tpu.matmul %109, %110, %cst_44 {dimension_numbers = #tpu.dot_dimension_numbers<[1], [1], [0], [0], [0, 0, 1, 0], [], []>} : vector<8x8xf32>, vector<8x8xf32>, vector<8x8xf32> -> vector<8x8xf32>
    %cst_45 = arith.constant -1.000000e+30 : f32
    %113 = vector.broadcast %cst_45 : f32 to vector<8x8xf32>
    %114 = arith.select %57, %113, %112 : vector<8x8xi1>, vector<8x8xf32>
    %cst_46 = arith.constant dense<0xFF800000> : vector<8xf32>
    %115 = vector.multi_reduction <maximumf>, %114, %cst_46 [1] : vector<8x8xf32> to vector<8xf32>
    %116 = vector.shape_cast %115 : vector<8xf32> to vector<8x1xf32>
    %117 = vector.broadcast %116 : vector<8x1xf32> to vector<8x8xf32>
    %118 = arith.subf %114, %117 : vector<8x8xf32>
    %119 = math.exp %118 : vector<8x8xf32>
    %cst_47 = arith.constant dense<0.000000e+00> : vector<8xf32>
    %120 = vector.multi_reduction <add>, %119, %cst_47 [1] : vector<8x8xf32> to vector<8xf32>
    %121 = vector.shape_cast %120 : vector<8xf32> to vector<8x1xf32>
    %122 = tpu.reciprocal %121 {approx = true} : vector<8x1xf32> -> vector<8x1xf32>
    %123 = arith.mulf %121, %122 : vector<8x1xf32>
    %cst_48 = arith.constant 2.000000e+00 : f32
    %124 = vector.broadcast %cst_48 : f32 to vector<8x1xf32>
    %125 = arith.subf %124, %123 : vector<8x1xf32>
    %126 = arith.mulf %122, %125 : vector<8x1xf32>
    %127 = vector.broadcast %126 : vector<8x1xf32> to vector<8x8xf32>
    %128 = arith.mulf %119, %127 : vector<8x8xf32>
    %cst_49 = arith.constant dense<0.000000e+00> : vector<8x8xf32>
    %129 = tpu.matmul %128, %111, %cst_49 {dimension_numbers = #tpu.dot_dimension_numbers<[1], [0], [0], [1], [0, 0, 1, 1], [], []>} : vector<8x8xf32>, vector<8x8xf32>, vector<8x8xf32> -> vector<8x8xf32>
    %130 = vector.extract_strided_slice %58 {offsets = [16, 0], sizes = [8, 32], strides = [1, 1]} : vector<32x32xf32> to vector<8x32xf32>
    %cst_50 = arith.constant dense<0.000000e+00> : vector<8x32xf32>
    %131 = tpu.matmul %129, %130, %cst_50 {dimension_numbers = #tpu.dot_dimension_numbers<[1], [0], [0], [1], [0, 0, 1, 1], [], []>} : vector<8x8xf32>, vector<8x32xf32>, vector<8x32xf32> -> vector<8x32xf32>
    %132 = arith.addf %108, %131 : vector<8x32xf32>
    %133 = vector.extract_strided_slice %54 {offsets = [0, 24], sizes = [8, 8], strides = [1, 1]} : vector<16x96xf32> to vector<8x8xf32>
    %134 = vector.extract_strided_slice %54 {offsets = [0, 56], sizes = [8, 8], strides = [1, 1]} : vector<16x96xf32> to vector<8x8xf32>
    %135 = vector.extract_strided_slice %54 {offsets = [0, 88], sizes = [8, 8], strides = [1, 1]} : vector<16x96xf32> to vector<8x8xf32>
    %cst_51 = arith.constant dense<0.000000e+00> : vector<8x8xf32>
    %136 = tpu.matmul %133, %134, %cst_51 {dimension_numbers = #tpu.dot_dimension_numbers<[1], [1], [0], [0], [0, 0, 1, 0], [], []>} : vector<8x8xf32>, vector<8x8xf32>, vector<8x8xf32> -> vector<8x8xf32>
    %cst_52 = arith.constant -1.000000e+30 : f32
    %137 = vector.broadcast %cst_52 : f32 to vector<8x8xf32>
    %138 = arith.select %57, %137, %136 : vector<8x8xi1>, vector<8x8xf32>
    %cst_53 = arith.constant dense<0xFF800000> : vector<8xf32>
    %139 = vector.multi_reduction <maximumf>, %138, %cst_53 [1] : vector<8x8xf32> to vector<8xf32>
    %140 = vector.shape_cast %139 : vector<8xf32> to vector<8x1xf32>
    %141 = vector.broadcast %140 : vector<8x1xf32> to vector<8x8xf32>
    %142 = arith.subf %138, %141 : vector<8x8xf32>
    %143 = math.exp %142 : vector<8x8xf32>
    %cst_54 = arith.constant dense<0.000000e+00> : vector<8xf32>
    %144 = vector.multi_reduction <add>, %143, %cst_54 [1] : vector<8x8xf32> to vector<8xf32>
    %145 = vector.shape_cast %144 : vector<8xf32> to vector<8x1xf32>
    %146 = tpu.reciprocal %145 {approx = true} : vector<8x1xf32> -> vector<8x1xf32>
    %147 = arith.mulf %145, %146 : vector<8x1xf32>
    %cst_55 = arith.constant 2.000000e+00 : f32
    %148 = vector.broadcast %cst_55 : f32 to vector<8x1xf32>
    %149 = arith.subf %148, %147 : vector<8x1xf32>
    %150 = arith.mulf %146, %149 : vector<8x1xf32>
    %151 = vector.broadcast %150 : vector<8x1xf32> to vector<8x8xf32>
    %152 = arith.mulf %143, %151 : vector<8x8xf32>
    %cst_56 = arith.constant dense<0.000000e+00> : vector<8x8xf32>
    %153 = tpu.matmul %152, %135, %cst_56 {dimension_numbers = #tpu.dot_dimension_numbers<[1], [0], [0], [1], [0, 0, 1, 1], [], []>} : vector<8x8xf32>, vector<8x8xf32>, vector<8x8xf32> -> vector<8x8xf32>
    %154 = vector.extract_strided_slice %58 {offsets = [24, 0], sizes = [8, 32], strides = [1, 1]} : vector<32x32xf32> to vector<8x32xf32>
    %cst_57 = arith.constant dense<0.000000e+00> : vector<8x32xf32>
    %155 = tpu.matmul %153, %154, %cst_57 {dimension_numbers = #tpu.dot_dimension_numbers<[1], [0], [0], [1], [0, 0, 1, 1], [], []>} : vector<8x8xf32>, vector<8x32xf32>, vector<8x32xf32> -> vector<8x32xf32>
    %156 = arith.addf %132, %155 : vector<8x32xf32>
    %c0_58 = arith.constant 0 : index
    %c0_59 = arith.constant 0 : index
    %c0_60 = arith.constant 0 : index
    %157 = vector.load %arg1[%c0_58, %c0_59, %c0_60] : memref<2x8x32xf32, #tpu.memory_space<vmem>>, vector<1x8x32xf32>
    %158 = vector.shape_cast %157 : vector<1x8x32xf32> to vector<8x32xf32>
    %159 = arith.addf %158, %156 : vector<8x32xf32>
    %160 = vector.broadcast %59 : vector<1x32xf32> to vector<8x32xf32>
    %161 = arith.addf %159, %160 : vector<8x32xf32>
    %c0_61 = arith.constant 0 : index
    %c0_62 = arith.constant 0 : index
    %162 = vector.load %arg15[%c0_61, %c0_62] : memref<16x32xf32, #tpu.memory_space<vmem>>, vector<8x32xf32>
    tpu.vector_store %arg15[%c0_61, %c0_62], %161 {strides = array<i32>} : memref<16x32xf32, #tpu.memory_space<vmem>>, vector<8x32xf32>,
    %cst_63 = arith.constant 0.000000e+00 : f32
    %163 = vector.broadcast %cst_63 : f32 to vector<8x32xf32>
    %164 = vector.extract_strided_slice %54 {offsets = [8, 0], sizes = [8, 8], strides = [1, 1]} : vector<16x96xf32> to vector<8x8xf32>
    %165 = vector.extract_strided_slice %54 {offsets = [8, 32], sizes = [8, 8], strides = [1, 1]} : vector<16x96xf32> to vector<8x8xf32>
    %166 = vector.extract_strided_slice %54 {offsets = [8, 64], sizes = [8, 8], strides = [1, 1]} : vector<16x96xf32> to vector<8x8xf32>
    %cst_64 = arith.constant dense<0.000000e+00> : vector<8x8xf32>
    %167 = tpu.matmul %164, %165, %cst_64 {dimension_numbers = #tpu.dot_dimension_numbers<[1], [1], [0], [0], [0, 0, 1, 0], [], []>} : vector<8x8xf32>, vector<8x8xf32>, vector<8x8xf32> -> vector<8x8xf32>
    %cst_65 = arith.constant -1.000000e+30 : f32
    %168 = vector.broadcast %cst_65 : f32 to vector<8x8xf32>
    %169 = arith.select %57, %168, %167 : vector<8x8xi1>, vector<8x8xf32>
    %cst_66 = arith.constant dense<0xFF800000> : vector<8xf32>
    %170 = vector.multi_reduction <maximumf>, %169, %cst_66 [1] : vector<8x8xf32> to vector<8xf32>
    %171 = vector.shape_cast %170 : vector<8xf32> to vector<8x1xf32>
    %172 = vector.broadcast %171 : vector<8x1xf32> to vector<8x8xf32>
    %173 = arith.subf %169, %172 : vector<8x8xf32>
    %174 = math.exp %173 : vector<8x8xf32>
    %cst_67 = arith.constant dense<0.000000e+00> : vector<8xf32>
    %175 = vector.multi_reduction <add>, %174, %cst_67 [1] : vector<8x8xf32> to vector<8xf32>
    %176 = vector.shape_cast %175 : vector<8xf32> to vector<8x1xf32>
    %177 = tpu.reciprocal %176 {approx = true} : vector<8x1xf32> -> vector<8x1xf32>
    %178 = arith.mulf %176, %177 : vector<8x1xf32>
    %cst_68 = arith.constant 2.000000e+00 : f32
    %179 = vector.broadcast %cst_68 : f32 to vector<8x1xf32>
    %180 = arith.subf %179, %178 : vector<8x1xf32>
    %181 = arith.mulf %177, %180 : vector<8x1xf32>
    %182 = vector.broadcast %181 : vector<8x1xf32> to vector<8x8xf32>
    %183 = arith.mulf %174, %182 : vector<8x8xf32>
    %cst_69 = arith.constant dense<0.000000e+00> : vector<8x8xf32>
    %184 = tpu.matmul %183, %166, %cst_69 {dimension_numbers = #tpu.dot_dimension_numbers<[1], [0], [0], [1], [0, 0, 1, 1], [], []>} : vector<8x8xf32>, vector<8x8xf32>, vector<8x8xf32> -> vector<8x8xf32>
    %185 = vector.extract_strided_slice %58 {offsets = [0, 0], sizes = [8, 32], strides = [1, 1]} : vector<32x32xf32> to vector<8x32xf32>
    %cst_70 = arith.constant dense<0.000000e+00> : vector<8x32xf32>
    %186 = tpu.matmul %184, %185, %cst_70 {dimension_numbers = #tpu.dot_dimension_numbers<[1], [0], [0], [1], [0, 0, 1, 1], [], []>} : vector<8x8xf32>, vector<8x32xf32>, vector<8x32xf32> -> vector<8x32xf32>
    %187 = arith.addf %163, %186 : vector<8x32xf32>
    %188 = vector.extract_strided_slice %54 {offsets = [8, 8], sizes = [8, 8], strides = [1, 1]} : vector<16x96xf32> to vector<8x8xf32>
    %189 = vector.extract_strided_slice %54 {offsets = [8, 40], sizes = [8, 8], strides = [1, 1]} : vector<16x96xf32> to vector<8x8xf32>
    %190 = vector.extract_strided_slice %54 {offsets = [8, 72], sizes = [8, 8], strides = [1, 1]} : vector<16x96xf32> to vector<8x8xf32>
    %cst_71 = arith.constant dense<0.000000e+00> : vector<8x8xf32>
    %191 = tpu.matmul %188, %189, %cst_71 {dimension_numbers = #tpu.dot_dimension_numbers<[1], [1], [0], [0], [0, 0, 1, 0], [], []>} : vector<8x8xf32>, vector<8x8xf32>, vector<8x8xf32> -> vector<8x8xf32>
    %cst_72 = arith.constant -1.000000e+30 : f32
    %192 = vector.broadcast %cst_72 : f32 to vector<8x8xf32>
    %193 = arith.select %57, %192, %191 : vector<8x8xi1>, vector<8x8xf32>
    %cst_73 = arith.constant dense<0xFF800000> : vector<8xf32>
    %194 = vector.multi_reduction <maximumf>, %193, %cst_73 [1] : vector<8x8xf32> to vector<8xf32>
    %195 = vector.shape_cast %194 : vector<8xf32> to vector<8x1xf32>
    %196 = vector.broadcast %195 : vector<8x1xf32> to vector<8x8xf32>
    %197 = arith.subf %193, %196 : vector<8x8xf32>
    %198 = math.exp %197 : vector<8x8xf32>
    %cst_74 = arith.constant dense<0.000000e+00> : vector<8xf32>
    %199 = vector.multi_reduction <add>, %198, %cst_74 [1] : vector<8x8xf32> to vector<8xf32>
    %200 = vector.shape_cast %199 : vector<8xf32> to vector<8x1xf32>
    %201 = tpu.reciprocal %200 {approx = true} : vector<8x1xf32> -> vector<8x1xf32>
    %202 = arith.mulf %200, %201 : vector<8x1xf32>
    %cst_75 = arith.constant 2.000000e+00 : f32
    %203 = vector.broadcast %cst_75 : f32 to vector<8x1xf32>
    %204 = arith.subf %203, %202 : vector<8x1xf32>
    %205 = arith.mulf %201, %204 : vector<8x1xf32>
    %206 = vector.broadcast %205 : vector<8x1xf32> to vector<8x8xf32>
    %207 = arith.mulf %198, %206 : vector<8x8xf32>
    %cst_76 = arith.constant dense<0.000000e+00> : vector<8x8xf32>
    %208 = tpu.matmul %207, %190, %cst_76 {dimension_numbers = #tpu.dot_dimension_numbers<[1], [0], [0], [1], [0, 0, 1, 1], [], []>} : vector<8x8xf32>, vector<8x8xf32>, vector<8x8xf32> -> vector<8x8xf32>
    %209 = vector.extract_strided_slice %58 {offsets = [8, 0], sizes = [8, 32], strides = [1, 1]} : vector<32x32xf32> to vector<8x32xf32>
    %cst_77 = arith.constant dense<0.000000e+00> : vector<8x32xf32>
    %210 = tpu.matmul %208, %209, %cst_77 {dimension_numbers = #tpu.dot_dimension_numbers<[1], [0], [0], [1], [0, 0, 1, 1], [], []>} : vector<8x8xf32>, vector<8x32xf32>, vector<8x32xf32> -> vector<8x32xf32>
    %211 = arith.addf %187, %210 : vector<8x32xf32>
    %212 = vector.extract_strided_slice %54 {offsets = [8, 16], sizes = [8, 8], strides = [1, 1]} : vector<16x96xf32> to vector<8x8xf32>
    %213 = vector.extract_strided_slice %54 {offsets = [8, 48], sizes = [8, 8], strides = [1, 1]} : vector<16x96xf32> to vector<8x8xf32>
    %214 = vector.extract_strided_slice %54 {offsets = [8, 80], sizes = [8, 8], strides = [1, 1]} : vector<16x96xf32> to vector<8x8xf32>
    %cst_78 = arith.constant dense<0.000000e+00> : vector<8x8xf32>
    %215 = tpu.matmul %212, %213, %cst_78 {dimension_numbers = #tpu.dot_dimension_numbers<[1], [1], [0], [0], [0, 0, 1, 0], [], []>} : vector<8x8xf32>, vector<8x8xf32>, vector<8x8xf32> -> vector<8x8xf32>
    %cst_79 = arith.constant -1.000000e+30 : f32
    %216 = vector.broadcast %cst_79 : f32 to vector<8x8xf32>
    %217 = arith.select %57, %216, %215 : vector<8x8xi1>, vector<8x8xf32>
    %cst_80 = arith.constant dense<0xFF800000> : vector<8xf32>
    %218 = vector.multi_reduction <maximumf>, %217, %cst_80 [1] : vector<8x8xf32> to vector<8xf32>
    %219 = vector.shape_cast %218 : vector<8xf32> to vector<8x1xf32>
    %220 = vector.broadcast %219 : vector<8x1xf32> to vector<8x8xf32>
    %221 = arith.subf %217, %220 : vector<8x8xf32>
    %222 = math.exp %221 : vector<8x8xf32>
    %cst_81 = arith.constant dense<0.000000e+00> : vector<8xf32>
    %223 = vector.multi_reduction <add>, %222, %cst_81 [1] : vector<8x8xf32> to vector<8xf32>
    %224 = vector.shape_cast %223 : vector<8xf32> to vector<8x1xf32>
    %225 = tpu.reciprocal %224 {approx = true} : vector<8x1xf32> -> vector<8x1xf32>
    %226 = arith.mulf %224, %225 : vector<8x1xf32>
    %cst_82 = arith.constant 2.000000e+00 : f32
    %227 = vector.broadcast %cst_82 : f32 to vector<8x1xf32>
    %228 = arith.subf %227, %226 : vector<8x1xf32>
    %229 = arith.mulf %225, %228 : vector<8x1xf32>
    %230 = vector.broadcast %229 : vector<8x1xf32> to vector<8x8xf32>
    %231 = arith.mulf %222, %230 : vector<8x8xf32>
    %cst_83 = arith.constant dense<0.000000e+00> : vector<8x8xf32>
    %232 = tpu.matmul %231, %214, %cst_83 {dimension_numbers = #tpu.dot_dimension_numbers<[1], [0], [0], [1], [0, 0, 1, 1], [], []>} : vector<8x8xf32>, vector<8x8xf32>, vector<8x8xf32> -> vector<8x8xf32>
    %233 = vector.extract_strided_slice %58 {offsets = [16, 0], sizes = [8, 32], strides = [1, 1]} : vector<32x32xf32> to vector<8x32xf32>
    %cst_84 = arith.constant dense<0.000000e+00> : vector<8x32xf32>
    %234 = tpu.matmul %232, %233, %cst_84 {dimension_numbers = #tpu.dot_dimension_numbers<[1], [0], [0], [1], [0, 0, 1, 1], [], []>} : vector<8x8xf32>, vector<8x32xf32>, vector<8x32xf32> -> vector<8x32xf32>
    %235 = arith.addf %211, %234 : vector<8x32xf32>
    %236 = vector.extract_strided_slice %54 {offsets = [8, 24], sizes = [8, 8], strides = [1, 1]} : vector<16x96xf32> to vector<8x8xf32>
    %237 = vector.extract_strided_slice %54 {offsets = [8, 56], sizes = [8, 8], strides = [1, 1]} : vector<16x96xf32> to vector<8x8xf32>
    %238 = vector.extract_strided_slice %54 {offsets = [8, 88], sizes = [8, 8], strides = [1, 1]} : vector<16x96xf32> to vector<8x8xf32>
    %cst_85 = arith.constant dense<0.000000e+00> : vector<8x8xf32>
    %239 = tpu.matmul %236, %237, %cst_85 {dimension_numbers = #tpu.dot_dimension_numbers<[1], [1], [0], [0], [0, 0, 1, 0], [], []>} : vector<8x8xf32>, vector<8x8xf32>, vector<8x8xf32> -> vector<8x8xf32>
    %cst_86 = arith.constant -1.000000e+30 : f32
    %240 = vector.broadcast %cst_86 : f32 to vector<8x8xf32>
    %241 = arith.select %57, %240, %239 : vector<8x8xi1>, vector<8x8xf32>
    %cst_87 = arith.constant dense<0xFF800000> : vector<8xf32>
    %242 = vector.multi_reduction <maximumf>, %241, %cst_87 [1] : vector<8x8xf32> to vector<8xf32>
    %243 = vector.shape_cast %242 : vector<8xf32> to vector<8x1xf32>
    %244 = vector.broadcast %243 : vector<8x1xf32> to vector<8x8xf32>
    %245 = arith.subf %241, %244 : vector<8x8xf32>
    %246 = math.exp %245 : vector<8x8xf32>
    %cst_88 = arith.constant dense<0.000000e+00> : vector<8xf32>
    %247 = vector.multi_reduction <add>, %246, %cst_88 [1] : vector<8x8xf32> to vector<8xf32>
    %248 = vector.shape_cast %247 : vector<8xf32> to vector<8x1xf32>
    %249 = tpu.reciprocal %248 {approx = true} : vector<8x1xf32> -> vector<8x1xf32>
    %250 = arith.mulf %248, %249 : vector<8x1xf32>
    %cst_89 = arith.constant 2.000000e+00 : f32
    %251 = vector.broadcast %cst_89 : f32 to vector<8x1xf32>
    %252 = arith.subf %251, %250 : vector<8x1xf32>
    %253 = arith.mulf %249, %252 : vector<8x1xf32>
    %254 = vector.broadcast %253 : vector<8x1xf32> to vector<8x8xf32>
    %255 = arith.mulf %246, %254 : vector<8x8xf32>
    %cst_90 = arith.constant dense<0.000000e+00> : vector<8x8xf32>
    %256 = tpu.matmul %255, %238, %cst_90 {dimension_numbers = #tpu.dot_dimension_numbers<[1], [0], [0], [1], [0, 0, 1, 1], [], []>} : vector<8x8xf32>, vector<8x8xf32>, vector<8x8xf32> -> vector<8x8xf32>
    %257 = vector.extract_strided_slice %58 {offsets = [24, 0], sizes = [8, 32], strides = [1, 1]} : vector<32x32xf32> to vector<8x32xf32>
    %cst_91 = arith.constant dense<0.000000e+00> : vector<8x32xf32>
    %258 = tpu.matmul %256, %257, %cst_91 {dimension_numbers = #tpu.dot_dimension_numbers<[1], [0], [0], [1], [0, 0, 1, 1], [], []>} : vector<8x8xf32>, vector<8x32xf32>, vector<8x32xf32> -> vector<8x32xf32>
    %259 = arith.addf %235, %258 : vector<8x32xf32>
    %c1_92 = arith.constant 1 : index
    %c0_93 = arith.constant 0 : index
    %c0_94 = arith.constant 0 : index
    %260 = vector.load %arg1[%c1_92, %c0_93, %c0_94] : memref<2x8x32xf32, #tpu.memory_space<vmem>>, vector<1x8x32xf32>
    %261 = vector.shape_cast %260 : vector<1x8x32xf32> to vector<8x32xf32>
    %262 = arith.addf %261, %259 : vector<8x32xf32>
    %263 = vector.broadcast %59 : vector<1x32xf32> to vector<8x32xf32>
    %264 = arith.addf %262, %263 : vector<8x32xf32>
    %c8_95 = arith.constant 8 : index
    %c0_96 = arith.constant 0 : index
    %265 = vector.load %arg15[%c8_95, %c0_96] : memref<16x32xf32, #tpu.memory_space<vmem>>, vector<8x32xf32>
    tpu.vector_store %arg15[%c8_95, %c0_96], %264 {strides = array<i32>} : memref<16x32xf32, #tpu.memory_space<vmem>>, vector<8x32xf32>,
    %c0_97 = arith.constant 0 : index
    %c0_98 = arith.constant 0 : index
    %266 = vector.load %arg15[%c0_97, %c0_98] : memref<16x32xf32, #tpu.memory_space<vmem>>, vector<16x32xf32>
    %c0_99 = arith.constant 0 : index
    %c0_100 = arith.constant 0 : index
    %267 = vector.load %arg7[%c0_99, %c0_100] : memref<1x32xf32, #tpu.memory_space<vmem>>, vector<1x32xf32>
    %c0_101 = arith.constant 0 : index
    %c0_102 = arith.constant 0 : index
    %268 = vector.load %arg8[%c0_101, %c0_102] : memref<1x32xf32, #tpu.memory_space<vmem>>, vector<1x32xf32>
    %cst_103 = arith.constant dense<0.000000e+00> : vector<16xf32>
    %269 = vector.multi_reduction <add>, %266, %cst_103 [1] : vector<16x32xf32> to vector<16xf32>
    %270 = vector.shape_cast %269 : vector<16xf32> to vector<16x1xf32>
    %cst_104 = arith.constant 3.200000e+01 : f32
    %271 = vector.broadcast %cst_104 : f32 to vector<16x1xf32>
    %272 = arith.divf %270, %271 : vector<16x1xf32>
    %273 = vector.broadcast %272 : vector<16x1xf32> to vector<16x32xf32>
    %274 = arith.subf %266, %273 : vector<16x32xf32>
    %275 = arith.mulf %274, %274 : vector<16x32xf32>
    %cst_105 = arith.constant dense<0.000000e+00> : vector<16xf32>
    %276 = vector.multi_reduction <add>, %275, %cst_105 [1] : vector<16x32xf32> to vector<16xf32>
    %277 = vector.shape_cast %276 : vector<16xf32> to vector<16x1xf32>
    %cst_106 = arith.constant 3.200000e+01 : f32
    %278 = vector.broadcast %cst_106 : f32 to vector<16x1xf32>
    %279 = arith.divf %277, %278 : vector<16x1xf32>
    %280 = vector.broadcast %272 : vector<16x1xf32> to vector<16x32xf32>
    %281 = arith.subf %266, %280 : vector<16x32xf32>
    %cst_107 = arith.constant 9.99999974E-6 : f32
    %282 = vector.broadcast %cst_107 : f32 to vector<16x1xf32>
    %283 = arith.addf %279, %282 : vector<16x1xf32>
    %284 = math.rsqrt %283 : vector<16x1xf32>
    %285 = vector.broadcast %284 : vector<16x1xf32> to vector<16x32xf32>
    %286 = arith.mulf %281, %285 : vector<16x32xf32>
    %287 = vector.broadcast %267 : vector<1x32xf32> to vector<16x32xf32>
    %288 = arith.mulf %286, %287 : vector<16x32xf32>
    %289 = vector.broadcast %268 : vector<1x32xf32> to vector<16x32xf32>
    %290 = arith.addf %288, %289 : vector<16x32xf32>
    %c0_108 = arith.constant 0 : index
    %c0_109 = arith.constant 0 : index
    %291 = vector.load %arg9[%c0_108, %c0_109] : memref<32x128xf32, #tpu.memory_space<vmem>>, vector<32x128xf32>
    %cst_110 = arith.constant dense<0.000000e+00> : vector<16x128xf32>
    %292 = tpu.matmul %290, %291, %cst_110 {dimension_numbers = #tpu.dot_dimension_numbers<[1], [0], [0], [1], [0, 0, 1, 1], [], []>} : vector<16x32xf32>, vector<32x128xf32>, vector<16x128xf32> -> vector<16x128xf32>
    %c0_111 = arith.constant 0 : index
    %c0_112 = arith.constant 0 : index
    %293 = vector.load %arg10[%c0_111, %c0_112] : memref<1x128xf32, #tpu.memory_space<vmem>>, vector<1x128xf32>
    %294 = vector.broadcast %293 : vector<1x128xf32> to vector<16x128xf32>
    %295 = arith.addf %292, %294 : vector<16x128xf32>
    %296 = arith.mulf %295, %295 : vector<16x128xf32>
    %cst_113 = arith.constant 5.000000e-01 : f32
    %297 = vector.broadcast %cst_113 : f32 to vector<16x128xf32>
    %298 = arith.mulf %297, %295 : vector<16x128xf32>
    %299 = arith.mulf %296, %295 : vector<16x128xf32>
    %cst_114 = arith.constant 4.471500e-02 : f32
    %300 = vector.broadcast %cst_114 : f32 to vector<16x128xf32>
    %301 = arith.mulf %300, %299 : vector<16x128xf32>
    %302 = arith.addf %295, %301 : vector<16x128xf32>
    %cst_115 = arith.constant 0.797884583 : f32
    %303 = vector.broadcast %cst_115 : f32 to vector<16x128xf32>
    %304 = arith.mulf %303, %302 : vector<16x128xf32>
    %305 = math.tanh %304 : vector<16x128xf32>
    %cst_116 = arith.constant 1.000000e+00 : f32
    %306 = vector.broadcast %cst_116 : f32 to vector<16x128xf32>
    %307 = arith.addf %306, %305 : vector<16x128xf32>
    %308 = arith.mulf %298, %307 : vector<16x128xf32>
    %c0_117 = arith.constant 0 : index
    %c0_118 = arith.constant 0 : index
    %309 = vector.load %arg11[%c0_117, %c0_118] : memref<128x32xf32, #tpu.memory_space<vmem>>, vector<128x32xf32>
    %cst_119 = arith.constant dense<0.000000e+00> : vector<16x32xf32>
    %310 = tpu.matmul %308, %309, %cst_119 {dimension_numbers = #tpu.dot_dimension_numbers<[1], [0], [0], [1], [0, 0, 1, 1], [], []>} : vector<16x128xf32>, vector<128x32xf32>, vector<16x32xf32> -> vector<16x32xf32>
    %c0_120 = arith.constant 0 : index
    %c0_121 = arith.constant 0 : index
    %311 = vector.load %arg12[%c0_120, %c0_121] : memref<1x32xf32, #tpu.memory_space<vmem>>, vector<1x32xf32>
    %312 = vector.broadcast %311 : vector<1x32xf32> to vector<16x32xf32>
    %313 = arith.addf %310, %312 : vector<16x32xf32>
    %314 = arith.addf %266, %313 : vector<16x32xf32>
    %315 = vector.extract_strided_slice %314 {offsets = [0, 0], sizes = [8, 32], strides = [1, 1]} : vector<16x32xf32> to vector<8x32xf32>
    %c0_122 = arith.constant 0 : index
    %c0_123 = arith.constant 0 : index
    %c0_124 = arith.constant 0 : index
    %316 = vector.load %arg13[%c0_122, %c0_123, %c0_124] : memref<2x8x32xf32, #tpu.memory_space<vmem>>, vector<1x8x32xf32>
    %317 = vector.shape_cast %316 : vector<1x8x32xf32> to vector<8x32xf32>
    %318 = vector.shape_cast %315 : vector<8x32xf32> to vector<1x8x32xf32>
    tpu.vector_store %arg13[%c0_122, %c0_123, %c0_124], %318 {strides = array<i32>} : memref<2x8x32xf32, #tpu.memory_space<vmem>>, vector<1x8x32xf32>,
    %319 = vector.extract_strided_slice %314 {offsets = [8, 0], sizes = [8, 32], strides = [1, 1]} : vector<16x32xf32> to vector<8x32xf32>
    %c1_125 = arith.constant 1 : index
    %c0_126 = arith.constant 0 : index
    %c0_127 = arith.constant 0 : index
    %320 = vector.load %arg13[%c1_125, %c0_126, %c0_127] : memref<2x8x32xf32, #tpu.memory_space<vmem>>, vector<1x8x32xf32>
    %321 = vector.shape_cast %320 : vector<1x8x32xf32> to vector<8x32xf32>
    %322 = vector.shape_cast %319 : vector<8x32xf32> to vector<1x8x32xf32>
    tpu.vector_store %arg13[%c1_125, %c0_126, %c0_127], %322 {strides = array<i32>} : memref<2x8x32xf32, #tpu.memory_space<vmem>>, vector<1x8x32xf32>,
    return
  }
  func.func @transform_0(%arg0: i32) -> (i32, i32, i32) {
    %c0_i32 = arith.constant 0 : i32
    %c0_i32_0 = arith.constant 0 : i32
    %c0_i32_1 = arith.constant 0 : i32
    return %arg0, %c0_i32, %c0_i32_0 : i32, i32, i32
  }
  func.func @transform_1(%arg0: i32) -> (i32, i32) {
    %c0_i32 = arith.constant 0 : i32
    %c0_i32_0 = arith.constant 0 : i32
    %c0_i32_1 = arith.constant 0 : i32
    return %c0_i32, %c0_i32_0 : i32, i32
  }
  func.func @transform_2(%arg0: i32) -> (i32, i32) {
    %c0_i32 = arith.constant 0 : i32
    %c0_i32_0 = arith.constant 0 : i32
    %c0_i32_1 = arith.constant 0 : i32
    return %c0_i32, %c0_i32_0 : i32, i32
  }
  func.func @transform_3(%arg0: i32) -> (i32, i32) {
    %c0_i32 = arith.constant 0 : i32
    %c0_i32_0 = arith.constant 0 : i32
    %c0_i32_1 = arith.constant 0 : i32
    return %c0_i32, %c0_i32_0 : i32, i32
  }
  func.func @transform_4(%arg0: i32) -> (i32, i32) {
    %c0_i32 = arith.constant 0 : i32
    %c0_i32_0 = arith.constant 0 : i32
    %c0_i32_1 = arith.constant 0 : i32
    return %c0_i32, %c0_i32_0 : i32, i32
  }
  func.func @transform_5(%arg0: i32) -> (i32, i32) {
    %c0_i32 = arith.constant 0 : i32
    %c0_i32_0 = arith.constant 0 : i32
    %c0_i32_1 = arith.constant 0 : i32
    return %c0_i32, %c0_i32_0 : i32, i32
  }
  func.func @transform_6(%arg0: i32) -> (i32, i32) {
    %c0_i32 = arith.constant 0 : i32
    %c0_i32_0 = arith.constant 0 : i32
    %c0_i32_1 = arith.constant 0 : i32
    return %c0_i32, %c0_i32_0 : i32, i32
  }
  func.func @transform_7(%arg0: i32) -> (i32, i32) {
    %c0_i32 = arith.constant 0 : i32
    %c0_i32_0 = arith.constant 0 : i32
    %c0_i32_1 = arith.constant 0 : i32
    return %c0_i32, %c0_i32_0 : i32, i32
  }
  func.func @transform_8(%arg0: i32) -> (i32, i32) {
    %c0_i32 = arith.constant 0 : i32
    %c0_i32_0 = arith.constant 0 : i32
    %c0_i32_1 = arith.constant 0 : i32
    return %c0_i32, %c0_i32_0 : i32, i32
  }
  func.func @transform_9(%arg0: i32) -> (i32, i32) {
    %c0_i32 = arith.constant 0 : i32
    %c0_i32_0 = arith.constant 0 : i32
    %c0_i32_1 = arith.constant 0 : i32
    return %c0_i32, %c0_i32_0 : i32, i32
  }
  func.func @transform_10(%arg0: i32) -> (i32, i32) {
    %c0_i32 = arith.constant 0 : i32
    %c0_i32_0 = arith.constant 0 : i32
    %c0_i32_1 = arith.constant 0 : i32
    return %c0_i32, %c0_i32_0 : i32, i32
  }
  func.func @transform_11(%arg0: i32) -> (i32, i32) {
    %c0_i32 = arith.constant 0 : i32
    %c0_i32_0 = arith.constant 0 : i32
    %c0_i32_1 = arith.constant 0 : i32
    return %c0_i32, %c0_i32_0 : i32, i32
  }
  func.func @transform_12(%arg0: i32) -> (i32, i32, i32) {
    %c0_i32 = arith.constant 0 : i32
    %c0_i32_0 = arith.constant 0 : i32
    %c0_i32_1 = arith.constant 0 : i32
    return %arg0, %c0_i32, %c0_i32_0 : i32, i32, i32
  }
}

module attributes {stable_mosaic.version = 11 : i64} {
  func.func @transformer_block_kernel(%arg0: i32, %arg1: memref<2x8x32xf32, #tpu.memory_space<vmem>>, %arg2: memref<1x32xf32, #tpu.memory_space<vmem>>, %arg3: memref<1x32xf32, #tpu.memory_space<vmem>>, %arg4: memref<32x96xf32, #tpu.memory_space<vmem>>, %arg5: memref<32x32xf32, #tpu.memory_space<vmem>>, %arg6: memref<1x32xf32, #tpu.memory_space<vmem>>, %arg7: memref<1x32xf32, #tpu.memory_space<vmem>>, %arg8: memref<1x32xf32, #tpu.memory_space<vmem>>, %arg9: memref<32x128xf32, #tpu.memory_space<vmem>>, %arg10: memref<1x128xf32, #tpu.memory_space<vmem>>, %arg11: memref<128x32xf32, #tpu.memory_space<vmem>>, %arg12: memref<1x32xf32, #tpu.memory_space<vmem>>, %arg13: memref<2x8x32xf32, #tpu.memory_space<vmem>>, %arg14: memref<16x32xf32, #tpu.memory_space<vmem>>, %arg15: memref<16x32xf32, #tpu.memory_space<vmem>>) attributes {dimension_semantics = [#tpu.dimension_semantics<parallel>], iteration_bounds = array<i64: 1>, scalar_prefetch = 0 : i64, scratch_operands = 2 : i64, tpu.core_type = #tpu.core_type<tc>, window_params = [{transform_indices = @transform_0, window_bounds = array<i64: 2, 8, 32>}, {pipeline_mode = #tpu.pipeline_mode<synchronous>, transform_indices = @transform_1, window_bounds = array<i64: 1, 32>}, {pipeline_mode = #tpu.pipeline_mode<synchronous>, transform_indices = @transform_2, window_bounds = array<i64: 1, 32>}, {pipeline_mode = #tpu.pipeline_mode<synchronous>, transform_indices = @transform_3, window_bounds = array<i64: 32, 96>}, {pipeline_mode = #tpu.pipeline_mode<synchronous>, transform_indices = @transform_4, window_bounds = array<i64: 32, 32>}, {pipeline_mode = #tpu.pipeline_mode<synchronous>, transform_indices = @transform_5, window_bounds = array<i64: 1, 32>}, {pipeline_mode = #tpu.pipeline_mode<synchronous>, transform_indices = @transform_6, window_bounds = array<i64: 1, 32>}, {pipeline_mode = #tpu.pipeline_mode<synchronous>, transform_indices = @transform_7, window_bounds = array<i64: 1, 32>}, {pipeline_mode = #tpu.pipeline_mode<synchronous>, transform_indices = @transform_8, window_bounds = array<i64: 32, 128>}, {pipeline_mode = #tpu.pipeline_mode<synchronous>, transform_indices = @transform_9, window_bounds = array<i64: 1, 128>}, {pipeline_mode = #tpu.pipeline_mode<synchronous>, transform_indices = @transform_10, window_bounds = array<i64: 128, 32>}, {pipeline_mode = #tpu.pipeline_mode<synchronous>, transform_indices = @transform_11, window_bounds = array<i64: 1, 32>}, {transform_indices = @transform_12, window_bounds = array<i64: 2, 8, 32>}]} {
    %c0 = arith.constant 0 : index
    %c0_0 = arith.constant 0 : index
    %0 = vector.load %arg2[%c0, %c0_0] : memref<1x32xf32, #tpu.memory_space<vmem>>, vector<1x32xf32>
    %c0_1 = arith.constant 0 : index
    %c0_2 = arith.constant 0 : index
    %1 = vector.load %arg3[%c0_1, %c0_2] : memref<1x32xf32, #tpu.memory_space<vmem>>, vector<1x32xf32>
    %c0_3 = arith.constant 0 : index
    %c0_4 = arith.constant 0 : index
    %c0_5 = arith.constant 0 : index
    %2 = vector.load %arg1[%c0_3, %c0_4, %c0_5] : memref<2x8x32xf32, #tpu.memory_space<vmem>>, vector<1x8x32xf32>
    %3 = vector.shape_cast %2 : vector<1x8x32xf32> to vector<8x32xf32>
    %cst = arith.constant dense<0.000000e+00> : vector<8xf32>
    %4 = vector.multi_reduction <add>, %3, %cst [1] : vector<8x32xf32> to vector<8xf32>
    %5 = vector.shape_cast %4 : vector<8xf32> to vector<8x1xf32>
    %cst_6 = arith.constant 3.200000e+01 : f32
    %6 = vector.broadcast %cst_6 : f32 to vector<8x1xf32>
    %7 = arith.divf %5, %6 : vector<8x1xf32>
    %8 = vector.broadcast %7 : vector<8x1xf32> to vector<8x32xf32>
    %9 = arith.subf %3, %8 : vector<8x32xf32>
    %10 = arith.mulf %9, %9 : vector<8x32xf32>
    %cst_7 = arith.constant dense<0.000000e+00> : vector<8xf32>
    %11 = vector.multi_reduction <add>, %10, %cst_7 [1] : vector<8x32xf32> to vector<8xf32>
    %12 = vector.shape_cast %11 : vector<8xf32> to vector<8x1xf32>
    %cst_8 = arith.constant 3.200000e+01 : f32
    %13 = vector.broadcast %cst_8 : f32 to vector<8x1xf32>
    %14 = arith.divf %12, %13 : vector<8x1xf32>
    %15 = vector.broadcast %7 : vector<8x1xf32> to vector<8x32xf32>
    %16 = arith.subf %3, %15 : vector<8x32xf32>
    %cst_9 = arith.constant 9.99999974E-6 : f32
    %17 = vector.broadcast %cst_9 : f32 to vector<8x1xf32>
    %18 = arith.addf %14, %17 : vector<8x1xf32>
    %19 = math.rsqrt %18 : vector<8x1xf32>
    %20 = vector.broadcast %19 : vector<8x1xf32> to vector<8x32xf32>
    %21 = arith.mulf %16, %20 : vector<8x32xf32>
    %22 = vector.broadcast %0 : vector<1x32xf32> to vector<8x32xf32>
    %23 = arith.mulf %21, %22 : vector<8x32xf32>
    %24 = vector.broadcast %1 : vector<1x32xf32> to vector<8x32xf32>
    %25 = arith.addf %23, %24 : vector<8x32xf32>
    %c0_10 = arith.constant 0 : index
    %c0_11 = arith.constant 0 : index
    %26 = vector.load %arg14[%c0_10, %c0_11] : memref<16x32xf32, #tpu.memory_space<vmem>>, vector<8x32xf32>
    tpu.vector_store %arg14[%c0_10, %c0_11], %25 {strides = array<i32>} : memref<16x32xf32, #tpu.memory_space<vmem>>, vector<8x32xf32>,
    %c1 = arith.constant 1 : index
    %c0_12 = arith.constant 0 : index
    %c0_13 = arith.constant 0 : index
    %27 = vector.load %arg1[%c1, %c0_12, %c0_13] : memref<2x8x32xf32, #tpu.memory_space<vmem>>, vector<1x8x32xf32>
    %28 = vector.shape_cast %27 : vector<1x8x32xf32> to vector<8x32xf32>
    %cst_14 = arith.constant dense<0.000000e+00> : vector<8xf32>
    %29 = vector.multi_reduction <add>, %28, %cst_14 [1] : vector<8x32xf32> to vector<8xf32>
    %30 = vector.shape_cast %29 : vector<8xf32> to vector<8x1xf32>
    %cst_15 = arith.constant 3.200000e+01 : f32
    %31 = vector.broadcast %cst_15 : f32 to vector<8x1xf32>
    %32 = arith.divf %30, %31 : vector<8x1xf32>
    %33 = vector.broadcast %32 : vector<8x1xf32> to vector<8x32xf32>
    %34 = arith.subf %28, %33 : vector<8x32xf32>
    %35 = arith.mulf %34, %34 : vector<8x32xf32>
    %cst_16 = arith.constant dense<0.000000e+00> : vector<8xf32>
    %36 = vector.multi_reduction <add>, %35, %cst_16 [1] : vector<8x32xf32> to vector<8xf32>
    %37 = vector.shape_cast %36 : vector<8xf32> to vector<8x1xf32>
    %cst_17 = arith.constant 3.200000e+01 : f32
    %38 = vector.broadcast %cst_17 : f32 to vector<8x1xf32>
    %39 = arith.divf %37, %38 : vector<8x1xf32>
    %40 = vector.broadcast %32 : vector<8x1xf32> to vector<8x32xf32>
    %41 = arith.subf %28, %40 : vector<8x32xf32>
    %cst_18 = arith.constant 9.99999974E-6 : f32
    %42 = vector.broadcast %cst_18 : f32 to vector<8x1xf32>
    %43 = arith.addf %39, %42 : vector<8x1xf32>
    %44 = math.rsqrt %43 : vector<8x1xf32>
    %45 = vector.broadcast %44 : vector<8x1xf32> to vector<8x32xf32>
    %46 = arith.mulf %41, %45 : vector<8x32xf32>
    %47 = vector.broadcast %0 : vector<1x32xf32> to vector<8x32xf32>
    %48 = arith.mulf %46, %47 : vector<8x32xf32>
    %49 = vector.broadcast %1 : vector<1x32xf32> to vector<8x32xf32>
    %50 = arith.addf %48, %49 : vector<8x32xf32>
    %c8 = arith.constant 8 : index
    %c0_19 = arith.constant 0 : index
    %51 = vector.load %arg14[%c8, %c0_19] : memref<16x32xf32, #tpu.memory_space<vmem>>, vector<8x32xf32>
    tpu.vector_store %arg14[%c8, %c0_19], %50 {strides = array<i32>} : memref<16x32xf32, #tpu.memory_space<vmem>>, vector<8x32xf32>,
    %c0_20 = arith.constant 0 : index
    %c0_21 = arith.constant 0 : index
    %52 = vector.load %arg14[%c0_20, %c0_21] : memref<16x32xf32, #tpu.memory_space<vmem>>, vector<16x32xf32>
    %c0_22 = arith.constant 0 : index
    %c0_23 = arith.constant 0 : index
    %53 = vector.load %arg4[%c0_22, %c0_23] : memref<32x96xf32, #tpu.memory_space<vmem>>, vector<32x96xf32>
    %cst_24 = arith.constant dense<0.000000e+00> : vector<16x96xf32>
    %54 = tpu.matmul %52, %53, %cst_24 {dimension_numbers = #tpu.dot_dimension_numbers<[1], [0], [0], [1], [0, 0, 1, 1], [], []>} : vector<16x32xf32>, vector<32x96xf32>, vector<16x96xf32> -> vector<16x96xf32>
    %55 = tpu.iota {dimensions = array<i32: 0>} : vector<8x8xi32>
    %56 = tpu.iota {dimensions = array<i32: 1>} : vector<8x8xi32>
    %57 = arith.cmpi sgt, %56, %55 : vector<8x8xi32>
    %c0_25 = arith.constant 0 : index
    %c0_26 = arith.constant 0 : index
    %58 = vector.load %arg5[%c0_25, %c0_26] : memref<32x32xf32, #tpu.memory_space<vmem>>, vector<32x32xf32>
    %c0_27 = arith.constant 0 : index
    %c0_28 = arith.constant 0 : index
    %59 = vector.load %arg6[%c0_27, %c0_28] : memref<1x32xf32, #tpu.memory_space<vmem>>, vector<1x32xf32>
    %cst_29 = arith.constant 0.000000e+00 : f32
    %60 = vector.broadcast %cst_29 : f32 to vector<8x32xf32>
    %61 = vector.extract_strided_slice %54 {offsets = [0, 0], sizes = [8, 8], strides = [1, 1]} : vector<16x96xf32> to vector<8x8xf32>
    %62 = vector.extract_strided_slice %54 {offsets = [0, 32], sizes = [8, 8], strides = [1, 1]} : vector<16x96xf32> to vector<8x8xf32>
    %63 = vector.extract_strided_slice %54 {offsets = [0, 64], sizes = [8, 8], strides = [1, 1]} : vector<16x96xf32> to vector<8x8xf32>
    %cst_30 = arith.constant dense<0.000000e+00> : vector<8x8xf32>
    %64 = tpu.matmul %61, %62, %cst_30 {dimension_numbers = #tpu.dot_dimension_numbers<[1], [1], [0], [0], [0, 0, 1, 0], [], []>} : vector<8x8xf32>, vector<8x8xf32>, vector<8x8xf32> -> vector<8x8xf32>
    %cst_31 = arith.constant -1.000000e+30 : f32
    %65 = vector.broadcast %cst_31 : f32 to vector<8x8xf32>
    %66 = arith.select %57, %65, %64 : vector<8x8xi1>, vector<8x8xf32>
    %cst_32 = arith.constant dense<0xFF800000> : vector<8xf32>
    %67 = vector.multi_reduction <maximumf>, %66, %cst_32 [1] : vector<8x8xf32> to vector<8xf32>
    %68 = vector.shape_cast %67 : vector<8xf32> to vector<8x1xf32>
    %69 = vector.broadcast %68 : vector<8x1xf32> to vector<8x8xf32>
    %70 = arith.subf %66, %69 : vector<8x8xf32>
    %71 = math.exp %70 : vector<8x8xf32>
    %cst_33 = arith.constant dense<0.000000e+00> : vector<8xf32>
    %72 = vector.multi_reduction <add>, %71, %cst_33 [1] : vector<8x8xf32> to vector<8xf32>
    %73 = vector.shape_cast %72 : vector<8xf32> to vector<8x1xf32>
    %74 = tpu.reciprocal %73 {approx = true} : vector<8x1xf32> -> vector<8x1xf32>
    %75 = arith.mulf %73, %74 : vector<8x1xf32>
    %cst_34 = arith.constant 2.000000e+00 : f32
    %76 = vector.broadcast %cst_34 : f32 to vector<8x1xf32>
    %77 = arith.subf %76, %75 : vector<8x1xf32>
    %78 = arith.mulf %74, %77 : vector<8x1xf32>
    %79 = vector.broadcast %78 : vector<8x1xf32> to vector<8x8xf32>
    %80 = arith.mulf %71, %79 : vector<8x8xf32>
    %cst_35 = arith.constant dense<0.000000e+00> : vector<8x8xf32>
    %81 = tpu.matmul %80, %63, %cst_35 {dimension_numbers = #tpu.dot_dimension_numbers<[1], [0], [0], [1], [0, 0, 1, 1], [], []>} : vector<8x8xf32>, vector<8x8xf32>, vector<8x8xf32> -> vector<8x8xf32>
    %82 = vector.extract_strided_slice %58 {offsets = [0, 0], sizes = [8, 32], strides = [1, 1]} : vector<32x32xf32> to vector<8x32xf32>
    %cst_36 = arith.constant dense<0.000000e+00> : vector<8x32xf32>
    %83 = tpu.matmul %81, %82, %cst_36 {dimension_numbers = #tpu.dot_dimension_numbers<[1], [0], [0], [1], [0, 0, 1, 1], [], []>} : vector<8x8xf32>, vector<8x32xf32>, vector<8x32xf32> -> vector<8x32xf32>
    %84 = arith.addf %60, %83 : vector<8x32xf32>
    %85 = vector.extract_strided_slice %54 {offsets = [0, 8], sizes = [8, 8], strides = [1, 1]} : vector<16x96xf32> to vector<8x8xf32>
    %86 = vector.extract_strided_slice %54 {offsets = [0, 40], sizes = [8, 8], strides = [1, 1]} : vector<16x96xf32> to vector<8x8xf32>
    %87 = vector.extract_strided_slice %54 {offsets = [0, 72], sizes = [8, 8], strides = [1, 1]} : vector<16x96xf32> to vector<8x8xf32>
    %cst_37 = arith.constant dense<0.000000e+00> : vector<8x8xf32>
    %88 = tpu.matmul %85, %86, %cst_37 {dimension_numbers = #tpu.dot_dimension_numbers<[1], [1], [0], [0], [0, 0, 1, 0], [], []>} : vector<8x8xf32>, vector<8x8xf32>, vector<8x8xf32> -> vector<8x8xf32>
    %cst_38 = arith.constant -1.000000e+30 : f32
    %89 = vector.broadcast %cst_38 : f32 to vector<8x8xf32>
    %90 = arith.select %57, %89, %88 : vector<8x8xi1>, vector<8x8xf32>
    %cst_39 = arith.constant dense<0xFF800000> : vector<8xf32>
    %91 = vector.multi_reduction <maximumf>, %90, %cst_39 [1] : vector<8x8xf32> to vector<8xf32>
    %92 = vector.shape_cast %91 : vector<8xf32> to vector<8x1xf32>
    %93 = vector.broadcast %92 : vector<8x1xf32> to vector<8x8xf32>
    %94 = arith.subf %90, %93 : vector<8x8xf32>
    %95 = math.exp %94 : vector<8x8xf32>
    %cst_40 = arith.constant dense<0.000000e+00> : vector<8xf32>
    %96 = vector.multi_reduction <add>, %95, %cst_40 [1] : vector<8x8xf32> to vector<8xf32>
    %97 = vector.shape_cast %96 : vector<8xf32> to vector<8x1xf32>
    %98 = tpu.reciprocal %97 {approx = true} : vector<8x1xf32> -> vector<8x1xf32>
    %99 = arith.mulf %97, %98 : vector<8x1xf32>
    %cst_41 = arith.constant 2.000000e+00 : f32
    %100 = vector.broadcast %cst_41 : f32 to vector<8x1xf32>
    %101 = arith.subf %100, %99 : vector<8x1xf32>
    %102 = arith.mulf %98, %101 : vector<8x1xf32>
    %103 = vector.broadcast %102 : vector<8x1xf32> to vector<8x8xf32>
    %104 = arith.mulf %95, %103 : vector<8x8xf32>
    %cst_42 = arith.constant dense<0.000000e+00> : vector<8x8xf32>
    %105 = tpu.matmul %104, %87, %cst_42 {dimension_numbers = #tpu.dot_dimension_numbers<[1], [0], [0], [1], [0, 0, 1, 1], [], []>} : vector<8x8xf32>, vector<8x8xf32>, vector<8x8xf32> -> vector<8x8xf32>
    %106 = vector.extract_strided_slice %58 {offsets = [8, 0], sizes = [8, 32], strides = [1, 1]} : vector<32x32xf32> to vector<8x32xf32>
    %cst_43 = arith.constant dense<0.000000e+00> : vector<8x32xf32>
    %107 = tpu.matmul %105, %106, %cst_43 {dimension_numbers = #tpu.dot_dimension_numbers<[1], [0], [0], [1], [0, 0, 1, 1], [], []>} : vector<8x8xf32>, vector<8x32xf32>, vector<8x32xf32> -> vector<8x32xf32>
    %108 = arith.addf %84, %107 : vector<8x32xf32>
    %109 = vector.extract_strided_slice %54 {offsets = [0, 16], sizes = [8, 8], strides = [1, 1]} : vector<16x96xf32> to vector<8x8xf32>
    %110 = vector.extract_strided_slice %54 {offsets = [0, 48], sizes = [8, 8], strides = [1, 1]} : vector<16x96xf32> to vector<8x8xf32>
    %111 = vector.extract_strided_slice %54 {offsets = [0, 80], sizes = [8, 8], strides = [1, 1]} : vector<16x96xf32> to vector<8x8xf32>
    %cst_44 = arith.constant dense<0.000000e+00> : vector<8x8xf32>
    %112 = tpu.matmul %109, %110, %cst_44 {dimension_numbers = #tpu.dot_dimension_numbers<[1], [1], [0], [0], [0, 0, 1, 0], [], []>} : vector<8x8xf32>, vector<8x8xf32>, vector<8x8xf32> -> vector<8x8xf32>
    %cst_45 = arith.constant -1.000000e+30 : f32
    %113 = vector.broadcast %cst_45 : f32 to vector<8x8xf32>
    %114 = arith.select %57, %113, %112 : vector<8x8xi1>, vector<8x8xf32>
    %cst_46 = arith.constant dense<0xFF800000> : vector<8xf32>
    %115 = vector.multi_reduction <maximumf>, %114, %cst_46 [1] : vector<8x8xf32> to vector<8xf32>
    %116 = vector.shape_cast %115 : vector<8xf32> to vector<8x1xf32>
    %117 = vector.broadcast %116 : vector<8x1xf32> to vector<8x8xf32>
    %118 = arith.subf %114, %117 : vector<8x8xf32>
    %119 = math.exp %118 : vector<8x8xf32>
    %cst_47 = arith.constant dense<0.000000e+00> : vector<8xf32>
    %120 = vector.multi_reduction <add>, %119, %cst_47 [1] : vector<8x8xf32> to vector<8xf32>
    %121 = vector.shape_cast %120 : vector<8xf32> to vector<8x1xf32>
    %122 = tpu.reciprocal %121 {approx = true} : vector<8x1xf32> -> vector<8x1xf32>
    %123 = arith.mulf %121, %122 : vector<8x1xf32>
    %cst_48 = arith.constant 2.000000e+00 : f32
    %124 = vector.broadcast %cst_48 : f32 to vector<8x1xf32>
    %125 = arith.subf %124, %123 : vector<8x1xf32>
    %126 = arith.mulf %122, %125 : vector<8x1xf32>
    %127 = vector.broadcast %126 : vector<8x1xf32> to vector<8x8xf32>
    %128 = arith.mulf %119, %127 : vector<8x8xf32>
    %cst_49 = arith.constant dense<0.000000e+00> : vector<8x8xf32>
    %129 = tpu.matmul %128, %111, %cst_49 {dimension_numbers = #tpu.dot_dimension_numbers<[1], [0], [0], [1], [0, 0, 1, 1], [], []>} : vector<8x8xf32>, vector<8x8xf32>, vector<8x8xf32> -> vector<8x8xf32>
    %130 = vector.extract_strided_slice %58 {offsets = [16, 0], sizes = [8, 32], strides = [1, 1]} : vector<32x32xf32> to vector<8x32xf32>
    %cst_50 = arith.constant dense<0.000000e+00> : vector<8x32xf32>
    %131 = tpu.matmul %129, %130, %cst_50 {dimension_numbers = #tpu.dot_dimension_numbers<[1], [0], [0], [1], [0, 0, 1, 1], [], []>} : vector<8x8xf32>, vector<8x32xf32>, vector<8x32xf32> -> vector<8x32xf32>
    %132 = arith.addf %108, %131 : vector<8x32xf32>
    %133 = vector.extract_strided_slice %54 {offsets = [0, 24], sizes = [8, 8], strides = [1, 1]} : vector<16x96xf32> to vector<8x8xf32>
    %134 = vector.extract_strided_slice %54 {offsets = [0, 56], sizes = [8, 8], strides = [1, 1]} : vector<16x96xf32> to vector<8x8xf32>
    %135 = vector.extract_strided_slice %54 {offsets = [0, 88], sizes = [8, 8], strides = [1, 1]} : vector<16x96xf32> to vector<8x8xf32>
    %cst_51 = arith.constant dense<0.000000e+00> : vector<8x8xf32>
    %136 = tpu.matmul %133, %134, %cst_51 {dimension_numbers = #tpu.dot_dimension_numbers<[1], [1], [0], [0], [0, 0, 1, 0], [], []>} : vector<8x8xf32>, vector<8x8xf32>, vector<8x8xf32> -> vector<8x8xf32>
    %cst_52 = arith.constant -1.000000e+30 : f32
    %137 = vector.broadcast %cst_52 : f32 to vector<8x8xf32>
    %138 = arith.select %57, %137, %136 : vector<8x8xi1>, vector<8x8xf32>
    %cst_53 = arith.constant dense<0xFF800000> : vector<8xf32>
    %139 = vector.multi_reduction <maximumf>, %138, %cst_53 [1] : vector<8x8xf32> to vector<8xf32>
    %140 = vector.shape_cast %139 : vector<8xf32> to vector<8x1xf32>
    %141 = vector.broadcast %140 : vector<8x1xf32> to vector<8x8xf32>
    %142 = arith.subf %138, %141 : vector<8x8xf32>
    %143 = math.exp %142 : vector<8x8xf32>
    %cst_54 = arith.constant dense<0.000000e+00> : vector<8xf32>
    %144 = vector.multi_reduction <add>, %143, %cst_54 [1] : vector<8x8xf32> to vector<8xf32>
    %145 = vector.shape_cast %144 : vector<8xf32> to vector<8x1xf32>
    %146 = tpu.reciprocal %145 {approx = true} : vector<8x1xf32> -> vector<8x1xf32>
    %147 = arith.mulf %145, %146 : vector<8x1xf32>
    %cst_55 = arith.constant 2.000000e+00 : f32
    %148 = vector.broadcast %cst_55 : f32 to vector<8x1xf32>
    %149 = arith.subf %148, %147 : vector<8x1xf32>
    %150 = arith.mulf %146, %149 : vector<8x1xf32>
    %151 = vector.broadcast %150 : vector<8x1xf32> to vector<8x8xf32>
    %152 = arith.mulf %143, %151 : vector<8x8xf32>
    %cst_56 = arith.constant dense<0.000000e+00> : vector<8x8xf32>
    %153 = tpu.matmul %152, %135, %cst_56 {dimension_numbers = #tpu.dot_dimension_numbers<[1], [0], [0], [1], [0, 0, 1, 1], [], []>} : vector<8x8xf32>, vector<8x8xf32>, vector<8x8xf32> -> vector<8x8xf32>
    %154 = vector.extract_strided_slice %58 {offsets = [24, 0], sizes = [8, 32], strides = [1, 1]} : vector<32x32xf32> to vector<8x32xf32>
    %cst_57 = arith.constant dense<0.000000e+00> : vector<8x32xf32>
    %155 = tpu.matmul %153, %154, %cst_57 {dimension_numbers = #tpu.dot_dimension_numbers<[1], [0], [0], [1], [0, 0, 1, 1], [], []>} : vector<8x8xf32>, vector<8x32xf32>, vector<8x32xf32> -> vector<8x32xf32>
    %156 = arith.addf %132, %155 : vector<8x32xf32>
    %c0_58 = arith.constant 0 : index
    %c0_59 = arith.constant 0 : index
    %c0_60 = arith.constant 0 : index
    %157 = vector.load %arg1[%c0_58, %c0_59, %c0_60] : memref<2x8x32xf32, #tpu.memory_space<vmem>>, vector<1x8x32xf32>
    %158 = vector.shape_cast %157 : vector<1x8x32xf32> to vector<8x32xf32>
    %159 = arith.addf %158, %156 : vector<8x32xf32>
    %160 = vector.broadcast %59 : vector<1x32xf32> to vector<8x32xf32>
    %161 = arith.addf %159, %160 : vector<8x32xf32>
    %c0_61 = arith.constant 0 : index
    %c0_62 = arith.constant 0 : index
    %162 = vector.load %arg15[%c0_61, %c0_62] : memref<16x32xf32, #tpu.memory_space<vmem>>, vector<8x32xf32>
    tpu.vector_store %arg15[%c0_61, %c0_62], %161 {strides = array<i32>} : memref<16x32xf32, #tpu.memory_space<vmem>>, vector<8x32xf32>,
    %cst_63 = arith.constant 0.000000e+00 : f32
    %163 = vector.broadcast %cst_63 : f32 to vector<8x32xf32>
    %164 = vector.extract_strided_slice %54 {offsets = [8, 0], sizes = [8, 8], strides = [1, 1]} : vector<16x96xf32> to vector<8x8xf32>
    %165 = vector.extract_strided_slice %54 {offsets = [8, 32], sizes = [8, 8], strides = [1, 1]} : vector<16x96xf32> to vector<8x8xf32>
    %166 = vector.extract_strided_slice %54 {offsets = [8, 64], sizes = [8, 8], strides = [1, 1]} : vector<16x96xf32> to vector<8x8xf32>
    %cst_64 = arith.constant dense<0.000000e+00> : vector<8x8xf32>
    %167 = tpu.matmul %164, %165, %cst_64 {dimension_numbers = #tpu.dot_dimension_numbers<[1], [1], [0], [0], [0, 0, 1, 0], [], []>} : vector<8x8xf32>, vector<8x8xf32>, vector<8x8xf32> -> vector<8x8xf32>
    %cst_65 = arith.constant -1.000000e+30 : f32
    %168 = vector.broadcast %cst_65 : f32 to vector<8x8xf32>
    %169 = arith.select %57, %168, %167 : vector<8x8xi1>, vector<8x8xf32>
    %cst_66 = arith.constant dense<0xFF800000> : vector<8xf32>
    %170 = vector.multi_reduction <maximumf>, %169, %cst_66 [1] : vector<8x8xf32> to vector<8xf32>
    %171 = vector.shape_cast %170 : vector<8xf32> to vector<8x1xf32>
    %172 = vector.broadcast %171 : vector<8x1xf32> to vector<8x8xf32>
    %173 = arith.subf %169, %172 : vector<8x8xf32>
    %174 = math.exp %173 : vector<8x8xf32>
    %cst_67 = arith.constant dense<0.000000e+00> : vector<8xf32>
    %175 = vector.multi_reduction <add>, %174, %cst_67 [1] : vector<8x8xf32> to vector<8xf32>
    %176 = vector.shape_cast %175 : vector<8xf32> to vector<8x1xf32>
    %177 = tpu.reciprocal %176 {approx = true} : vector<8x1xf32> -> vector<8x1xf32>
    %178 = arith.mulf %176, %177 : vector<8x1xf32>
    %cst_68 = arith.constant 2.000000e+00 : f32
    %179 = vector.broadcast %cst_68 : f32 to vector<8x1xf32>
    %180 = arith.subf %179, %178 : vector<8x1xf32>
    %181 = arith.mulf %177, %180 : vector<8x1xf32>
    %182 = vector.broadcast %181 : vector<8x1xf32> to vector<8x8xf32>
    %183 = arith.mulf %174, %182 : vector<8x8xf32>
    %cst_69 = arith.constant dense<0.000000e+00> : vector<8x8xf32>
    %184 = tpu.matmul %183, %166, %cst_69 {dimension_numbers = #tpu.dot_dimension_numbers<[1], [0], [0], [1], [0, 0, 1, 1], [], []>} : vector<8x8xf32>, vector<8x8xf32>, vector<8x8xf32> -> vector<8x8xf32>
    %185 = vector.extract_strided_slice %58 {offsets = [0, 0], sizes = [8, 32], strides = [1, 1]} : vector<32x32xf32> to vector<8x32xf32>
    %cst_70 = arith.constant dense<0.000000e+00> : vector<8x32xf32>
    %186 = tpu.matmul %184, %185, %cst_70 {dimension_numbers = #tpu.dot_dimension_numbers<[1], [0], [0], [1], [0, 0, 1, 1], [], []>} : vector<8x8xf32>, vector<8x32xf32>, vector<8x32xf32> -> vector<8x32xf32>
    %187 = arith.addf %163, %186 : vector<8x32xf32>
    %188 = vector.extract_strided_slice %54 {offsets = [8, 8], sizes = [8, 8], strides = [1, 1]} : vector<16x96xf32> to vector<8x8xf32>
    %189 = vector.extract_strided_slice %54 {offsets = [8, 40], sizes = [8, 8], strides = [1, 1]} : vector<16x96xf32> to vector<8x8xf32>
    %190 = vector.extract_strided_slice %54 {offsets = [8, 72], sizes = [8, 8], strides = [1, 1]} : vector<16x96xf32> to vector<8x8xf32>
    %cst_71 = arith.constant dense<0.000000e+00> : vector<8x8xf32>
    %191 = tpu.matmul %188, %189, %cst_71 {dimension_numbers = #tpu.dot_dimension_numbers<[1], [1], [0], [0], [0, 0, 1, 0], [], []>} : vector<8x8xf32>, vector<8x8xf32>, vector<8x8xf32> -> vector<8x8xf32>
    %cst_72 = arith.constant -1.000000e+30 : f32
    %192 = vector.broadcast %cst_72 : f32 to vector<8x8xf32>
    %193 = arith.select %57, %192, %191 : vector<8x8xi1>, vector<8x8xf32>
    %cst_73 = arith.constant dense<0xFF800000> : vector<8xf32>
    %194 = vector.multi_reduction <maximumf>, %193, %cst_73 [1] : vector<8x8xf32> to vector<8xf32>
    %195 = vector.shape_cast %194 : vector<8xf32> to vector<8x1xf32>
    %196 = vector.broadcast %195 : vector<8x1xf32> to vector<8x8xf32>
    %197 = arith.subf %193, %196 : vector<8x8xf32>
    %198 = math.exp %197 : vector<8x8xf32>
    %cst_74 = arith.constant dense<0.000000e+00> : vector<8xf32>
    %199 = vector.multi_reduction <add>, %198, %cst_74 [1] : vector<8x8xf32> to vector<8xf32>
    %200 = vector.shape_cast %199 : vector<8xf32> to vector<8x1xf32>
    %201 = tpu.reciprocal %200 {approx = true} : vector<8x1xf32> -> vector<8x1xf32>
    %202 = arith.mulf %200, %201 : vector<8x1xf32>
    %cst_75 = arith.constant 2.000000e+00 : f32
    %203 = vector.broadcast %cst_75 : f32 to vector<8x1xf32>
    %204 = arith.subf %203, %202 : vector<8x1xf32>
    %205 = arith.mulf %201, %204 : vector<8x1xf32>
    %206 = vector.broadcast %205 : vector<8x1xf32> to vector<8x8xf32>
    %207 = arith.mulf %198, %206 : vector<8x8xf32>
    %cst_76 = arith.constant dense<0.000000e+00> : vector<8x8xf32>
    %208 = tpu.matmul %207, %190, %cst_76 {dimension_numbers = #tpu.dot_dimension_numbers<[1], [0], [0], [1], [0, 0, 1, 1], [], []>} : vector<8x8xf32>, vector<8x8xf32>, vector<8x8xf32> -> vector<8x8xf32>
    %209 = vector.extract_strided_slice %58 {offsets = [8, 0], sizes = [8, 32], strides = [1, 1]} : vector<32x32xf32> to vector<8x32xf32>
    %cst_77 = arith.constant dense<0.000000e+00> : vector<8x32xf32>
    %210 = tpu.matmul %208, %209, %cst_77 {dimension_numbers = #tpu.dot_dimension_numbers<[1], [0], [0], [1], [0, 0, 1, 1], [], []>} : vector<8x8xf32>, vector<8x32xf32>, vector<8x32xf32> -> vector<8x32xf32>
    %211 = arith.addf %187, %210 : vector<8x32xf32>
    %212 = vector.extract_strided_slice %54 {offsets = [8, 16], sizes = [8, 8], strides = [1, 1]} : vector<16x96xf32> to vector<8x8xf32>
    %213 = vector.extract_strided_slice %54 {offsets = [8, 48], sizes = [8, 8], strides = [1, 1]} : vector<16x96xf32> to vector<8x8xf32>
    %214 = vector.extract_strided_slice %54 {offsets = [8, 80], sizes = [8, 8], strides = [1, 1]} : vector<16x96xf32> to vector<8x8xf32>
    %cst_78 = arith.constant dense<0.000000e+00> : vector<8x8xf32>
    %215 = tpu.matmul %212, %213, %cst_78 {dimension_numbers = #tpu.dot_dimension_numbers<[1], [1], [0], [0], [0, 0, 1, 0], [], []>} : vector<8x8xf32>, vector<8x8xf32>, vector<8x8xf32> -> vector<8x8xf32>
    %cst_79 = arith.constant -1.000000e+30 : f32
    %216 = vector.broadcast %cst_79 : f32 to vector<8x8xf32>
    %217 = arith.select %57, %216, %215 : vector<8x8xi1>, vector<8x8xf32>
    %cst_80 = arith.constant dense<0xFF800000> : vector<8xf32>
    %218 = vector.multi_reduction <maximumf>, %217, %cst_80 [1] : vector<8x8xf32> to vector<8xf32>
    %219 = vector.shape_cast %218 : vector<8xf32> to vector<8x1xf32>
    %220 = vector.broadcast %219 : vector<8x1xf32> to vector<8x8xf32>
    %221 = arith.subf %217, %220 : vector<8x8xf32>
    %222 = math.exp %221 : vector<8x8xf32>
    %cst_81 = arith.constant dense<0.000000e+00> : vector<8xf32>
    %223 = vector.multi_reduction <add>, %222, %cst_81 [1] : vector<8x8xf32> to vector<8xf32>
    %224 = vector.shape_cast %223 : vector<8xf32> to vector<8x1xf32>
    %225 = tpu.reciprocal %224 {approx = true} : vector<8x1xf32> -> vector<8x1xf32>
    %226 = arith.mulf %224, %225 : vector<8x1xf32>
    %cst_82 = arith.constant 2.000000e+00 : f32
    %227 = vector.broadcast %cst_82 : f32 to vector<8x1xf32>
    %228 = arith.subf %227, %226 : vector<8x1xf32>
    %229 = arith.mulf %225, %228 : vector<8x1xf32>
    %230 = vector.broadcast %229 : vector<8x1xf32> to vector<8x8xf32>
    %231 = arith.mulf %222, %230 : vector<8x8xf32>
    %cst_83 = arith.constant dense<0.000000e+00> : vector<8x8xf32>
    %232 = tpu.matmul %231, %214, %cst_83 {dimension_numbers = #tpu.dot_dimension_numbers<[1], [0], [0], [1], [0, 0, 1, 1], [], []>} : vector<8x8xf32>, vector<8x8xf32>, vector<8x8xf32> -> vector<8x8xf32>
    %233 = vector.extract_strided_slice %58 {offsets = [16, 0], sizes = [8, 32], strides = [1, 1]} : vector<32x32xf32> to vector<8x32xf32>
    %cst_84 = arith.constant dense<0.000000e+00> : vector<8x32xf32>
    %234 = tpu.matmul %232, %233, %cst_84 {dimension_numbers = #tpu.dot_dimension_numbers<[1], [0], [0], [1], [0, 0, 1, 1], [], []>} : vector<8x8xf32>, vector<8x32xf32>, vector<8x32xf32> -> vector<8x32xf32>
    %235 = arith.addf %211, %234 : vector<8x32xf32>
    %236 = vector.extract_strided_slice %54 {offsets = [8, 24], sizes = [8, 8], strides = [1, 1]} : vector<16x96xf32> to vector<8x8xf32>
    %237 = vector.extract_strided_slice %54 {offsets = [8, 56], sizes = [8, 8], strides = [1, 1]} : vector<16x96xf32> to vector<8x8xf32>
    %238 = vector.extract_strided_slice %54 {offsets = [8, 88], sizes = [8, 8], strides = [1, 1]} : vector<16x96xf32> to vector<8x8xf32>
    %cst_85 = arith.constant dense<0.000000e+00> : vector<8x8xf32>
    %239 = tpu.matmul %236, %237, %cst_85 {dimension_numbers = #tpu.dot_dimension_numbers<[1], [1], [0], [0], [0, 0, 1, 0], [], []>} : vector<8x8xf32>, vector<8x8xf32>, vector<8x8xf32> -> vector<8x8xf32>
    %cst_86 = arith.constant -1.000000e+30 : f32
    %240 = vector.broadcast %cst_86 : f32 to vector<8x8xf32>
    %241 = arith.select %57, %240, %239 : vector<8x8xi1>, vector<8x8xf32>
    %cst_87 = arith.constant dense<0xFF800000> : vector<8xf32>
    %242 = vector.multi_reduction <maximumf>, %241, %cst_87 [1] : vector<8x8xf32> to vector<8xf32>
    %243 = vector.shape_cast %242 : vector<8xf32> to vector<8x1xf32>
    %244 = vector.broadcast %243 : vector<8x1xf32> to vector<8x8xf32>
    %245 = arith.subf %241, %244 : vector<8x8xf32>
    %246 = math.exp %245 : vector<8x8xf32>
    %cst_88 = arith.constant dense<0.000000e+00> : vector<8xf32>
    %247 = vector.multi_reduction <add>, %246, %cst_88 [1] : vector<8x8xf32> to vector<8xf32>
    %248 = vector.shape_cast %247 : vector<8xf32> to vector<8x1xf32>
    %249 = tpu.reciprocal %248 {approx = true} : vector<8x1xf32> -> vector<8x1xf32>
    %250 = arith.mulf %248, %249 : vector<8x1xf32>
    %cst_89 = arith.constant 2.000000e+00 : f32
    %251 = vector.broadcast %cst_89 : f32 to vector<8x1xf32>
    %252 = arith.subf %251, %250 : vector<8x1xf32>
    %253 = arith.mulf %249, %252 : vector<8x1xf32>
    %254 = vector.broadcast %253 : vector<8x1xf32> to vector<8x8xf32>
    %255 = arith.mulf %246, %254 : vector<8x8xf32>
    %cst_90 = arith.constant dense<0.000000e+00> : vector<8x8xf32>
    %256 = tpu.matmul %255, %238, %cst_90 {dimension_numbers = #tpu.dot_dimension_numbers<[1], [0], [0], [1], [0, 0, 1, 1], [], []>} : vector<8x8xf32>, vector<8x8xf32>, vector<8x8xf32> -> vector<8x8xf32>
    %257 = vector.extract_strided_slice %58 {offsets = [24, 0], sizes = [8, 32], strides = [1, 1]} : vector<32x32xf32> to vector<8x32xf32>
    %cst_91 = arith.constant dense<0.000000e+00> : vector<8x32xf32>
    %258 = tpu.matmul %256, %257, %cst_91 {dimension_numbers = #tpu.dot_dimension_numbers<[1], [0], [0], [1], [0, 0, 1, 1], [], []>} : vector<8x8xf32>, vector<8x32xf32>, vector<8x32xf32> -> vector<8x32xf32>
    %259 = arith.addf %235, %258 : vector<8x32xf32>
    %c1_92 = arith.constant 1 : index
    %c0_93 = arith.constant 0 : index
    %c0_94 = arith.constant 0 : index
    %260 = vector.load %arg1[%c1_92, %c0_93, %c0_94] : memref<2x8x32xf32, #tpu.memory_space<vmem>>, vector<1x8x32xf32>
    %261 = vector.shape_cast %260 : vector<1x8x32xf32> to vector<8x32xf32>
    %262 = arith.addf %261, %259 : vector<8x32xf32>
    %263 = vector.broadcast %59 : vector<1x32xf32> to vector<8x32xf32>
    %264 = arith.addf %262, %263 : vector<8x32xf32>
    %c8_95 = arith.constant 8 : index
    %c0_96 = arith.constant 0 : index
    %265 = vector.load %arg15[%c8_95, %c0_96] : memref<16x32xf32, #tpu.memory_space<vmem>>, vector<8x32xf32>
    tpu.vector_store %arg15[%c8_95, %c0_96], %264 {strides = array<i32>} : memref<16x32xf32, #tpu.memory_space<vmem>>, vector<8x32xf32>,
    %c0_97 = arith.constant 0 : index
    %c0_98 = arith.constant 0 : index
    %266 = vector.load %arg15[%c0_97, %c0_98] : memref<16x32xf32, #tpu.memory_space<vmem>>, vector<16x32xf32>
    %c0_99 = arith.constant 0 : index
    %c0_100 = arith.constant 0 : index
    %267 = vector.load %arg7[%c0_99, %c0_100] : memref<1x32xf32, #tpu.memory_space<vmem>>, vector<1x32xf32>
    %c0_101 = arith.constant 0 : index
    %c0_102 = arith.constant 0 : index
    %268 = vector.load %arg8[%c0_101, %c0_102] : memref<1x32xf32, #tpu.memory_space<vmem>>, vector<1x32xf32>
    %cst_103 = arith.constant dense<0.000000e+00> : vector<16xf32>
    %269 = vector.multi_reduction <add>, %266, %cst_103 [1] : vector<16x32xf32> to vector<16xf32>
    %270 = vector.shape_cast %269 : vector<16xf32> to vector<16x1xf32>
    %cst_104 = arith.constant 3.200000e+01 : f32
    %271 = vector.broadcast %cst_104 : f32 to vector<16x1xf32>
    %272 = arith.divf %270, %271 : vector<16x1xf32>
    %273 = vector.broadcast %272 : vector<16x1xf32> to vector<16x32xf32>
    %274 = arith.subf %266, %273 : vector<16x32xf32>
    %275 = arith.mulf %274, %274 : vector<16x32xf32>
    %cst_105 = arith.constant dense<0.000000e+00> : vector<16xf32>
    %276 = vector.multi_reduction <add>, %275, %cst_105 [1] : vector<16x32xf32> to vector<16xf32>
    %277 = vector.shape_cast %276 : vector<16xf32> to vector<16x1xf32>
    %cst_106 = arith.constant 3.200000e+01 : f32
    %278 = vector.broadcast %cst_106 : f32 to vector<16x1xf32>
    %279 = arith.divf %277, %278 : vector<16x1xf32>
    %280 = vector.broadcast %272 : vector<16x1xf32> to vector<16x32xf32>
    %281 = arith.subf %266, %280 : vector<16x32xf32>
    %cst_107 = arith.constant 9.99999974E-6 : f32
    %282 = vector.broadcast %cst_107 : f32 to vector<16x1xf32>
    %283 = arith.addf %279, %282 : vector<16x1xf32>
    %284 = math.rsqrt %283 : vector<16x1xf32>
    %285 = vector.broadcast %284 : vector<16x1xf32> to vector<16x32xf32>
    %286 = arith.mulf %281, %285 : vector<16x32xf32>
    %287 = vector.broadcast %267 : vector<1x32xf32> to vector<16x32xf32>
    %288 = arith.mulf %286, %287 : vector<16x32xf32>
    %289 = vector.broadcast %268 : vector<1x32xf32> to vector<16x32xf32>
    %290 = arith.addf %288, %289 : vector<16x32xf32>
    %c0_108 = arith.constant 0 : index
    %c0_109 = arith.constant 0 : index
    %291 = vector.load %arg9[%c0_108, %c0_109] : memref<32x128xf32, #tpu.memory_space<vmem>>, vector<32x128xf32>
    %cst_110 = arith.constant dense<0.000000e+00> : vector<16x128xf32>
    %292 = tpu.matmul %290, %291, %cst_110 {dimension_numbers = #tpu.dot_dimension_numbers<[1], [0], [0], [1], [0, 0, 1, 1], [], []>} : vector<16x32xf32>, vector<32x128xf32>, vector<16x128xf32> -> vector<16x128xf32>
    %c0_111 = arith.constant 0 : index
    %c0_112 = arith.constant 0 : index
    %293 = vector.load %arg10[%c0_111, %c0_112] : memref<1x128xf32, #tpu.memory_space<vmem>>, vector<1x128xf32>
    %294 = vector.broadcast %293 : vector<1x128xf32> to vector<16x128xf32>
    %295 = arith.addf %292, %294 : vector<16x128xf32>
    %296 = arith.mulf %295, %295 : vector<16x128xf32>
    %cst_113 = arith.constant 5.000000e-01 : f32
    %297 = vector.broadcast %cst_113 : f32 to vector<16x128xf32>
    %298 = arith.mulf %297, %295 : vector<16x128xf32>
    %299 = arith.mulf %296, %295 : vector<16x128xf32>
    %cst_114 = arith.constant 4.471500e-02 : f32
    %300 = vector.broadcast %cst_114 : f32 to vector<16x128xf32>
    %301 = arith.mulf %300, %299 : vector<16x128xf32>
    %302 = arith.addf %295, %301 : vector<16x128xf32>
    %cst_115 = arith.constant 0.797884583 : f32
    %303 = vector.broadcast %cst_115 : f32 to vector<16x128xf32>
    %304 = arith.mulf %303, %302 : vector<16x128xf32>
    %305 = math.tanh %304 : vector<16x128xf32>
    %cst_116 = arith.constant 1.000000e+00 : f32
    %306 = vector.broadcast %cst_116 : f32 to vector<16x128xf32>
    %307 = arith.addf %306, %305 : vector<16x128xf32>
    %308 = arith.mulf %298, %307 : vector<16x128xf32>
    %c0_117 = arith.constant 0 : index
    %c0_118 = arith.constant 0 : index
    %309 = vector.load %arg11[%c0_117, %c0_118] : memref<128x32xf32, #tpu.memory_space<vmem>>, vector<128x32xf32>
    %cst_119 = arith.constant dense<0.000000e+00> : vector<16x32xf32>
    %310 = tpu.matmul %308, %309, %cst_119 {dimension_numbers = #tpu.dot_dimension_numbers<[1], [0], [0], [1], [0, 0, 1, 1], [], []>} : vector<16x128xf32>, vector<128x32xf32>, vector<16x32xf32> -> vector<16x32xf32>
    %c0_120 = arith.constant 0 : index
    %c0_121 = arith.constant 0 : index
    %311 = vector.load %arg12[%c0_120, %c0_121] : memref<1x32xf32, #tpu.memory_space<vmem>>, vector<1x32xf32>
    %312 = vector.broadcast %311 : vector<1x32xf32> to vector<16x32xf32>
    %313 = arith.addf %310, %312 : vector<16x32xf32>
    %314 = arith.addf %266, %313 : vector<16x32xf32>
    %315 = vector.extract_strided_slice %314 {offsets = [0, 0], sizes = [8, 32], strides = [1, 1]} : vector<16x32xf32> to vector<8x32xf32>
    %c0_122 = arith.constant 0 : index
    %c0_123 = arith.constant 0 : index
    %c0_124 = arith.constant 0 : index
    %316 = vector.load %arg13[%c0_122, %c0_123, %c0_124] : memref<2x8x32xf32, #tpu.memory_space<vmem>>, vector<1x8x32xf32>
    %317 = vector.shape_cast %316 : vector<1x8x32xf32> to vector<8x32xf32>
    %318 = vector.shape_cast %315 : vector<8x32xf32> to vector<1x8x32xf32>
    tpu.vector_store %arg13[%c0_122, %c0_123, %c0_124], %318 {strides = array<i32>} : memref<2x8x32xf32, #tpu.memory_space<vmem>>, vector<1x8x32xf32>,
    %319 = vector.extract_strided_slice %314 {offsets = [8, 0], sizes = [8, 32], strides = [1, 1]} : vector<16x32xf32> to vector<8x32xf32>
    %c1_125 = arith.constant 1 : index
    %c0_126 = arith.constant 0 : index
    %c0_127 = arith.constant 0 : index
    %320 = vector.load %arg13[%c1_125, %c0_126, %c0_127] : memref<2x8x32xf32, #tpu.memory_space<vmem>>, vector<1x8x32xf32>
    %321 = vector.shape_cast %320 : vector<1x8x32xf32> to vector<8x32xf32>
    %322 = vector.shape_cast %319 : vector<8x32xf32> to vector<1x8x32xf32>
    tpu.vector_store %arg13[%c1_125, %c0_126, %c0_127], %322 {strides = array<i32>} : memref<2x8x32xf32, #tpu.memory_space<vmem>>, vector<1x8x32xf32>,
    return
  }
  func.func @transform_0(%arg0: i32) -> (i32, i32, i32) {
    %c0_i32 = arith.constant 0 : i32
    %c0_i32_0 = arith.constant 0 : i32
    %c0_i32_1 = arith.constant 0 : i32
    return %arg0, %c0_i32, %c0_i32_0 : i32, i32, i32
  }
  func.func @transform_1(%arg0: i32) -> (i32, i32) {
    %c0_i32 = arith.constant 0 : i32
    %c0_i32_0 = arith.constant 0 : i32
    %c0_i32_1 = arith.constant 0 : i32
    return %c0_i32, %c0_i32_0 : i32, i32
  }
  func.func @transform_2(%arg0: i32) -> (i32, i32) {
    %c0_i32 = arith.constant 0 : i32
    %c0_i32_0 = arith.constant 0 : i32
    %c0_i32_1 = arith.constant 0 : i32
    return %c0_i32, %c0_i32_0 : i32, i32
  }
  func.func @transform_3(%arg0: i32) -> (i32, i32) {
    %c0_i32 = arith.constant 0 : i32
    %c0_i32_0 = arith.constant 0 : i32
    %c0_i32_1 = arith.constant 0 : i32
    return %c0_i32, %c0_i32_0 : i32, i32
  }
  func.func @transform_4(%arg0: i32) -> (i32, i32) {
    %c0_i32 = arith.constant 0 : i32
    %c0_i32_0 = arith.constant 0 : i32
    %c0_i32_1 = arith.constant 0 : i32
    return %c0_i32, %c0_i32_0 : i32, i32
  }
  func.func @transform_5(%arg0: i32) -> (i32, i32) {
    %c0_i32 = arith.constant 0 : i32
    %c0_i32_0 = arith.constant 0 : i32
    %c0_i32_1 = arith.constant 0 : i32
    return %c0_i32, %c0_i32_0 : i32, i32
  }
  func.func @transform_6(%arg0: i32) -> (i32, i32) {
    %c0_i32 = arith.constant 0 : i32
    %c0_i32_0 = arith.constant 0 : i32
    %c0_i32_1 = arith.constant 0 : i32
    return %c0_i32, %c0_i32_0 : i32, i32
  }
  func.func @transform_7(%arg0: i32) -> (i32, i32) {
    %c0_i32 = arith.constant 0 : i32
    %c0_i32_0 = arith.constant 0 : i32
    %c0_i32_1 = arith.constant 0 : i32
    return %c0_i32, %c0_i32_0 : i32, i32
  }
  func.func @transform_8(%arg0: i32) -> (i32, i32) {
    %c0_i32 = arith.constant 0 : i32
    %c0_i32_0 = arith.constant 0 : i32
    %c0_i32_1 = arith.constant 0 : i32
    return %c0_i32, %c0_i32_0 : i32, i32
  }
  func.func @transform_9(%arg0: i32) -> (i32, i32) {
    %c0_i32 = arith.constant 0 : i32
    %c0_i32_0 = arith.constant 0 : i32
    %c0_i32_1 = arith.constant 0 : i32
    return %c0_i32, %c0_i32_0 : i32, i32
  }
  func.func @transform_10(%arg0: i32) -> (i32, i32) {
    %c0_i32 = arith.constant 0 : i32
    %c0_i32_0 = arith.constant 0 : i32
    %c0_i32_1 = arith.constant 0 : i32
    return %c0_i32, %c0_i32_0 : i32, i32
  }
  func.func @transform_11(%arg0: i32) -> (i32, i32) {
    %c0_i32 = arith.constant 0 : i32
    %c0_i32_0 = arith.constant 0 : i32
    %c0_i32_1 = arith.constant 0 : i32
    return %c0_i32, %c0_i32_0 : i32, i32
  }
  func.func @transform_12(%arg0: i32) -> (i32, i32, i32) {
    %c0_i32 = arith.constant 0 : i32
    %c0_i32_0 = arith.constant 0 : i32
    %c0_i32_1 = arith.constant 0 : i32
    return %arg0, %c0_i32, %c0_i32_0 : i32, i32, i32
  }
}

</mosaic_0001>

<llo_original>
// kernel: tpu_custom_call.1
$region0: #{tpu_custom_call.1}
  #allocation0 [shape = 'u32[]', space=smem, size = 0x4, offset = 0x4, fixed_abs, tag = 'smem constant byte address 0x4 - core index']
  #allocation1 [shape = 'u32[144,128]{1,0:T(1,128)}', space=vmem, size = 0x12000, scoped, tag = 'internal scratch']
  #allocation2 [shape = 'f32[16,32]{1,0:T(8,128)}', space=vmem, size = 0x2000, scoped, tag = 'scratch operand']
  #allocation3 [shape = 'f32[16,32]{1,0:T(8,128)}', space=vmem, size = 0x2000, scoped, tag = 'scratch operand']
  %s0 = inlined_call_operand.vmem [shape: f32[2,8,32], index: 0, kind: input, shape index: {}]
  %s1 = inlined_call_operand.vmem [shape: f32[1,32], index: 1, kind: input, shape index: {}]
  %s2 = inlined_call_operand.vmem [shape: f32[1,32], index: 2, kind: input, shape index: {}]
  %s3 = inlined_call_operand.vmem [shape: f32[32,96], index: 3, kind: input, shape index: {}]
  %s4 = inlined_call_operand.vmem [shape: f32[32,32], index: 4, kind: input, shape index: {}]
  %s5 = inlined_call_operand.vmem [shape: f32[1,32], index: 5, kind: input, shape index: {}]
  %s6 = inlined_call_operand.vmem [shape: f32[1,32], index: 6, kind: input, shape index: {}]
  %s7 = inlined_call_operand.vmem [shape: f32[1,32], index: 7, kind: input, shape index: {}]
  %s8 = inlined_call_operand.vmem [shape: f32[32,128], index: 8, kind: input, shape index: {}]
  %s9 = inlined_call_operand.vmem [shape: f32[1,128], index: 9, kind: input, shape index: {}]
  %s10 = inlined_call_operand.vmem [shape: f32[128,32], index: 10, kind: input, shape index: {}]
  %s11 = inlined_call_operand.vmem [shape: f32[1,32], index: 11, kind: input, shape index: {}]
  %s12 = inlined_call_operand.hbm [shape: f32[2,8,32], index: 12, kind: output, shape index: {}]
  %s13 = sld [smem:[#allocation0]]
  $region58: #{tpu_custom_call.1} parent=0
    _
  %s15 = ssub.s32 1, %s13
  %s16 = scalar_select 0, %s15, %s13
  $region1: #{tpu_custom_call.1} parent=0
    #allocation4 [shape = 'u8[8192]{0}', space=vmem, size = 0x2000, scoped, tag = 'output window, operand 0, single buffered']
    #allocation5 [shape = 's32[1]{0}', space=sflag, size = 0x4, scoped, tag = 'scoped memory for tpu_custom_call.1']
    %17 = vsyncpa [#allocation5], 0
    // Predicated region
    $region2: #{tpu_custom_call.1} parent=1 // pred_check
      _
    $region3: #{tpu_custom_call.1} parent=1 // pred_check_branch
      %19 = sbr.rel (0) target = $region5
    $region4: #{tpu_custom_call.1} parent=1 // pred_region
      _
    $region5: #{tpu_custom_call.1} parent=1 // pred_fallthru
      _
    // Predicated region
    $region6: #{tpu_custom_call.1} parent=1 // pred_check
      _
    $region7: #{tpu_custom_call.1} parent=1 // pred_check_branch
      %21 = sbr.rel (0) target = $region9
    $region8: #{tpu_custom_call.1} parent=1 // pred_region
      _
    $region9: #{tpu_custom_call.1} parent=1 // pred_fallthru
      _
    // Predicated region
    $region10: #{tpu_custom_call.1} parent=1 // pred_check
      _
    $region11: #{tpu_custom_call.1} parent=1 // pred_check_branch
      %23 = sbr.rel (0) target = $region13
    $region12: #{tpu_custom_call.1} parent=1 // pred_region
      _
    $region13: #{tpu_custom_call.1} parent=1 // pred_fallthru
      _
    // Predicated region
    $region14: #{tpu_custom_call.1} parent=1 // pred_check
      _
    $region15: #{tpu_custom_call.1} parent=1 // pred_check_branch
      %25 = sbr.rel (0) target = $region17
    $region16: #{tpu_custom_call.1} parent=1 // pred_region
      _
    $region17: #{tpu_custom_call.1} parent=1 // pred_fallthru
      _
    // Predicated region
    $region18: #{tpu_custom_call.1} parent=1 // pred_check
      _
    $region19: #{tpu_custom_call.1} parent=1 // pred_check_branch
      %27 = sbr.rel (0) target = $region21
    $region20: #{tpu_custom_call.1} parent=1 // pred_region
      _
    $region21: #{tpu_custom_call.1} parent=1 // pred_fallthru
      _
    // Predicated region
    $region22: #{tpu_custom_call.1} parent=1 // pred_check
      _
    $region23: #{tpu_custom_call.1} parent=1 // pred_check_branch
      %29 = sbr.rel (0) target = $region25
    $region24: #{tpu_custom_call.1} parent=1 // pred_region
      _
    $region25: #{tpu_custom_call.1} parent=1 // pred_fallthru
      _
    // Predicated region
    $region26: #{tpu_custom_call.1} parent=1 // pred_check
      _
    $region27: #{tpu_custom_call.1} parent=1 // pred_check_branch
      %31 = sbr.rel (0) target = $region29
    $region28: #{tpu_custom_call.1} parent=1 // pred_region
      _
    $region29: #{tpu_custom_call.1} parent=1 // pred_fallthru
      _
    // Predicated region
    $region30: #{tpu_custom_call.1} parent=1 // pred_check
      _
    $region31: #{tpu_custom_call.1} parent=1 // pred_check_branch
      %33 = sbr.rel (0) target = $region33
    $region32: #{tpu_custom_call.1} parent=1 // pred_region
      _
    $region33: #{tpu_custom_call.1} parent=1 // pred_fallthru
      _
    // Predicated region
    $region34: #{tpu_custom_call.1} parent=1 // pred_check
      _
    $region35: #{tpu_custom_call.1} parent=1 // pred_check_branch
      %35 = sbr.rel (0) target = $region37
    $region36: #{tpu_custom_call.1} parent=1 // pred_region
      _
    $region37: #{tpu_custom_call.1} parent=1 // pred_fallthru
      _
    // Predicated region
    $region38: #{tpu_custom_call.1} parent=1 // pred_check
      _
    $region39: #{tpu_custom_call.1} parent=1 // pred_check_branch
      %37 = sbr.rel (0) target = $region41
    $region40: #{tpu_custom_call.1} parent=1 // pred_region
      _
    $region41: #{tpu_custom_call.1} parent=1 // pred_fallthru
      _
    // Predicated region
    $region42: #{tpu_custom_call.1} parent=1 // pred_check
      _
    $region43: #{tpu_custom_call.1} parent=1 // pred_check_branch
      %39 = sbr.rel (0) target = $region45
    $region44: #{tpu_custom_call.1} parent=1 // pred_region
      _
    $region45: #{tpu_custom_call.1} parent=1 // pred_fallthru
      _
    // Predicated region
    $region46: #{tpu_custom_call.1} parent=1 // pred_check
      _
    $region47: #{tpu_custom_call.1} parent=1 // pred_check_branch
      %41 = sbr.rel (0) target = $region49
    $region48: #{tpu_custom_call.1} parent=1 // pred_region
      _
    $region49: #{tpu_custom_call.1} parent=1 // pred_fallthru
      _
    %v42 = vld [vmem:[%s1] sm:$0x1]
    %v43 = vld [vmem:[%s2] sm:$0x1]
    %v44 = vld [vmem:[%s0] sm:$0xff]
    %vm45 = vcmask 261120
    %v46 = vsel %vm45, %v44, 0.0
    %47 = vadd.xlane.f32.xlu0 %v46
    %v48 = vpop.xlane.xlu0 %47
    %v49 = vrcp.pop 32.0
    %v50 = vmul.f32 %v48, %v49
    %v51 = vsub.f32 %v44, %v50
    %v52 = vmul.f32 %v51, %v51
    %v53 = vsel %vm45, %v52, 0.0
    %54 = vadd.xlane.f32.xlu0 %v53
    %v55 = vpop.xlane.xlu0 %54
    %v56 = vmul.f32 %v55, %v49
    %v57 = vadd.f32 %v56, 1e-05
    %v58 = vrsqrt.pop %v57
    %v59 = vmul.f32 %v51, %v58
    %v61 = vlaneseq
    %v62 = vshrl.u32 %v61, 7
    %v63 = vsub.s32 0, %v62
    %v64 = vrot.slane %v42, %v63
    %v66 = vmul.f32 %v59, %v64
    %v68 = vlaneseq
    %v69 = vshrl.u32 %v68, 7
    %v70 = vsub.s32 0, %v69
    %v71 = vrot.slane %v43, %v70
    %v73 = vadd.f32 %v66, %v71
    %74 = vst.msk [vmem:[#allocation2] sm:$0xff] %vm45, %v73
    %s75 = scalar_lea.vmem %s0, 8
    %v76 = vld [vmem:[%s75] sm:$0xff]
    %v77 = vsel %vm45, %v76, 0.0
    %78 = vadd.xlane.f32.xlu0 %v77
    %v79 = vpop.xlane.xlu0 %78
    %v80 = vmul.f32 %v79, %v49
    %v81 = vsub.f32 %v76, %v80
    %v82 = vmul.f32 %v81, %v81
    %v83 = vsel %vm45, %v82, 0.0
    %84 = vadd.xlane.f32.xlu0 %v83
    %v85 = vpop.xlane.xlu0 %84
    %v86 = vmul.f32 %v85, %v49
    %v87 = vadd.f32 %v86, 1e-05
    %v88 = vrsqrt.pop %v87
    %v89 = vmul.f32 %v81, %v88
    %v90 = vmul.f32 %v89, %v64
    %v91 = vadd.f32 %v90, %v71
    %92 = vst.msk [vmem:[#allocation2 + $0x8] sm:$0xff] %vm45, %v91
    %v93 = vld [vmem:[#allocation2] sm:$0xff]
    %v94 = vld [vmem:[#allocation2 + $0x8] sm:$0xff]
    %v95 = vld [vmem:[%s3] sm:$0xff]
    %v96 = vld [vmem:[%s3 + $0x8] sm:$0xff]
    %v97 = vld [vmem:[%s3 + $0x10] sm:$0xff]
    %v98 = vld [vmem:[%s3 + $0x18] sm:$0xff]
    %v100 = vsel %vm45, %v93, 0
    %v103 = vsel %vm45, %v94, 0
    %105 = vmatprep.subr.mxu0 0.0
    %106 = vmatpush1.msra.mxu0 %v95
    %107 = vmatprep.subr.mxu0 0.0
    %108 = vmatpush1.msra.mxu0 %v96
    %109 = vmatprep.subr.mxu0 0.0
    %110 = vmatpush1.msra.mxu0 %v97
    %111 = vmatprep.subr.mxu0 0.0
    %112 = vmatpush1.msra.mxu0 %v98
    %113 = vmatprep.subr.mxu0 0.0
    %114 = vmatpush1.msra.mxu0 0.0
    %115 = vmatprep.subr.mxu0 0.0
    %116 = vmatpush1.msra.mxu0 0.0
    %117 = vmatprep.subr.mxu0 0.0
    %118 = vmatpush1.msra.mxu0 0.0
    %119 = vmatprep.subr.mxu0 0.0
    %120 = vmatpush1.msra.mxu0 0.0
    %121 = vmatprep.subr.mxu0 0.0
    %122 = vmatpush1.msra.mxu0 0.0
    %123 = vmatprep.subr.mxu0 0.0
    %124 = vmatpush1.msra.mxu0 0.0
    %125 = vmatprep.subr.mxu0 0.0
    %126 = vmatpush1.msra.mxu0 0.0
    %127 = vmatprep.subr.mxu0 0.0
    %128 = vmatpush1.msra.mxu0 0.0
    %129 = vmatprep.subr.mxu0 0.0
    %130 = vmatpush1.msra.mxu0 0.0
    %131 = vmatprep.subr.mxu0 0.0
    %132 = vmatpush1.msra.mxu0 0.0
    %133 = vmatprep.subr.mxu0 0.0
    %134 = vmatpush1.msra.mxu0 0.0
    %135 = vmatprep.subr.mxu0 0.0
    %136 = vmatpush1.msra.mxu0 0.0
    %137 = vmatprep.subr.mxu0 0.0
    %138 = vmatpush1.msra.mxu0 0.0
    %139 = vmatprep.subr.mxu0 0.0
    %140 = vmatpush1.msra.mxu0 0.0
    %141 = vmatprep.subr.mxu0 0.0
    %142 = vmatpush1.msra.mxu0 0.0
    %143 = vmatprep.subr.mxu0 0.0
    %144 = vmatpush1.msra.mxu0 0.0
    %145 = vmatprep.subr.mxu0 0.0
    %146 = vmatpush1.msra.mxu0 0.0
    %147 = vmatprep.subr.mxu0 0.0
    %148 = vmatpush1.msra.mxu0 0.0
    %149 = vmatprep.subr.mxu0 0.0
    %150 = vmatpush1.msra.mxu0 0.0
    %151 = vmatprep.subr.mxu0 0.0
    %152 = vmatpush1.msra.mxu0 0.0
    %153 = vmatprep.subr.mxu0 0.0
    %154 = vmatpush1.msra.mxu0 0.0
    %155 = vmatprep.subr.mxu0 0.0
    %156 = vmatpush1.msra.mxu0 0.0
    %157 = vmatprep.subr.mxu0 0.0
    %158 = vmatpush1.msra.mxu0 0.0
    %159 = vmatprep.subr.mxu0 0.0
    %160 = vmatpush1.msra.mxu0 0.0
    %161 = vmatprep.subr.mxu0 0.0
    %162 = vmatpush1.msra.mxu0 0.0
    %163 = vmatprep.subr.mxu0 0.0
    %164 = vmatpush1.msra.mxu0 0.0
    %165 = vmatprep.subr.mxu0 0.0
    %166 = vmatpush1.msra.mxu0 0.0
    %167 = vmatprep.subr.mxu0 0.0
    %168 = vmatpush1.msra.mxu0 0.0
    %169 = vmatprep.mubr.f32.mxu0 0.0
    %170 = vmatmul.mubr.f32.gmra.mrb[0].mxu0 %v100
    %v171 = vpop.f32.mrb[0].mxu0
    %v172 = vadd.f32 0.0, %v171
    %v173 = vpop.f32.mrb[0].mxu0
    %174 = vmatprep.mubr.f32.mxu0 0.0
    %175 = vmatmul.mubr.f32.gmra.mrb[0].mxu0 %v103
    %v176 = vpop.f32.mrb[0].mxu0
    %v177 = vadd.f32 0.0, %v176
    %v178 = vpop.f32.mrb[0].mxu0
    %179 = vdwg.mxu0
    %v180 = vlaneseq
    %v181 = vshrl.u32 %v180, 7
    %v182 = vlaneseq
    %v183 = vand.u32 %v182, 127
    %vm184 = vcmp.gt.s32.totalorder %v183, %v181
    %v185 = vld [vmem:[%s4] sm:$0xff]
    %v186 = vld [vmem:[%s4 + $0x8] sm:$0xff]
    %v187 = vld [vmem:[%s4 + $0x10] sm:$0xff]
    %v188 = vld [vmem:[%s4 + $0x18] sm:$0xff]
    %v189 = vld [vmem:[%s5] sm:$0x1]
    %191 = vrot.lane.b32.xlu0 %v172, 96
    %v192 = vpop.permute.xlu0 %191
    %vm193 = vcmask 64512
    %v194 = vsel %vm193, %v172, 0
    %v196 = vsel %vm193, %v192, 0
    %198 = vmatprep.subr.mxu0 0.0
    %199 = vmatpush1.xpose.msra.mxu0 %v196
    %200 = vmatprep.subr.mxu0 0.0
    %201 = vmatpush1.xpose.msra.mxu0 0.0
    %202 = vmatprep.subr.mxu0 0.0
    %203 = vmatpush1.xpose.msra.mxu0 0.0
    %204 = vmatprep.subr.mxu0 0.0
    %205 = vmatpush1.xpose.msra.mxu0 0.0
    %206 = vmatprep.subr.mxu0 0.0
    %207 = vmatpush1.xpose.msra.mxu0 0.0
    %208 = vmatprep.subr.mxu0 0.0
    %209 = vmatpush1.xpose.msra.mxu0 0.0
    %210 = vmatprep.subr.mxu0 0.0
    %211 = vmatpush1.xpose.msra.mxu0 0.0
    %212 = vmatprep.subr.mxu0 0.0
    %213 = vmatpush1.xpose.msra.mxu0 0.0
    %214 = vmatprep.subr.mxu0 0.0
    %215 = vmatpush1.xpose.msra.mxu0 0.0
    %216 = vmatprep.subr.mxu0 0.0
    %217 = vmatpush1.xpose.msra.mxu0 0.0
    %218 = vmatprep.subr.mxu0 0.0
    %219 = vmatpush1.xpose.msra.mxu0 0.0
    %220 = vmatprep.subr.mxu0 0.0
    %221 = vmatpush1.xpose.msra.mxu0 0.0
    %222 = vmatprep.subr.mxu0 0.0
    %223 = vmatpush1.xpose.msra.mxu0 0.0
    %224 = vmatprep.subr.mxu0 0.0
    %225 = vmatpush1.xpose.msra.mxu0 0.0
    %226 = vmatprep.subr.mxu0 0.0
    %227 = vmatpush1.xpose.msra.mxu0 0.0
    %228 = vmatprep.subr.mxu0 0.0
    %229 = vmatpush1.xpose.msra.mxu0 0.0
    %230 = vmatprep.subr.mxu0 0.0
    %231 = vmatpush1.xpose.msra.mxu0 0.0
    %232 = vmatprep.subr.mxu0 0.0
    %233 = vmatpush1.xpose.msra.mxu0 0.0
    %234 = vmatprep.subr.mxu0 0.0
    %235 = vmatpush1.xpose.msra.mxu0 0.0
    %236 = vmatprep.subr.mxu0 0.0
    %237 = vmatpush1.xpose.msra.mxu0 0.0
    %238 = vmatprep.subr.mxu0 0.0
    %239 = vmatpush1.xpose.msra.mxu0 0.0
    %240 = vmatprep.subr.mxu0 0.0
    %241 = vmatpush1.xpose.msra.mxu0 0.0
    %242 = vmatprep.subr.mxu0 0.0
    %243 = vmatpush1.xpose.msra.mxu0 0.0
    %244 = vmatprep.subr.mxu0 0.0
    %245 = vmatpush1.xpose.msra.mxu0 0.0
    %246 = vmatprep.subr.mxu0 0.0
    %247 = vmatpush1.xpose.msra.mxu0 0.0
    %248 = vmatprep.subr.mxu0 0.0
    %249 = vmatpush1.xpose.msra.mxu0 0.0
    %250 = vmatprep.subr.mxu0 0.0
    %251 = vmatpush1.xpose.msra.mxu0 0.0
    %252 = vmatprep.subr.mxu0 0.0
    %253 = vmatpush1.xpose.msra.mxu0 0.0
    %254 = vmatprep.subr.mxu0 0.0
    %255 = vmatpush1.xpose.msra.mxu0 0.0
    %256 = vmatprep.subr.mxu0 0.0
    %257 = vmatpush1.xpose.msra.mxu0 0.0
    %258 = vmatprep.subr.mxu0 0.0
    %259 = vmatpush1.xpose.msra.mxu0 0.0
    %260 = vmatprep.subr.mxu0 0.0
    %261 = vmatpush1.xpose.msra.mxu0 0.0
    %262 = vmatprep.mubr.f32.mxu0 0.0
    %263 = vmatmul.mubr.f32.gmra.mrb[0].mxu0 %v194
    %v264 = vpop.f32.mrb[0].mxu0
    %v265 = vadd.f32 0.0, %v264
    %v266 = vpop.f32.mrb[0].mxu0
    %267 = vdwg.mxu0
    %v268 = vsel %vm184, -1e+30, %v265
    %v269 = vsel %vm193, %v268, -inf
    %270 = vmax.xlane.f32.xlu0 %v269
    %v271 = vpop.xlane.xlu0 %270
    %v272 = vsub.f32 %v268, %v271
    %v273 = vmul.f32 %v272, 1.442695
    %v274 = vpow.pop %v273
    %v275 = vsel %vm193, %v274, 0.0
    %276 = vadd.xlane.f32.xlu0 %v275
    %v277 = vpop.xlane.xlu0 %276
    %v278 = vrcp.pop %v277
    %v279 = vmul.f32 %v277, %v278
    %v280 = vsub.f32 2.0, %v279
    %v281 = vmul.f32 %v278, %v280
    %v282 = vmul.f32 %v274, %v281
    %283 = vrot.lane.b32.xlu0 %v172, 64
    %v284 = vpop.permute.xlu0 %283
    %v287 = vsel %vm193, %v282, 0
    %289 = vmatprep.subr.mxu0 0.0
    %290 = vmatpush1.msra.mxu0 %v284
    %291 = vmatprep.subr.mxu0 0.0
    %292 = vmatpush1.msra.mxu0 0.0
    %293 = vmatprep.subr.mxu0 0.0
    %294 = vmatpush1.msra.mxu0 0.0
    %295 = vmatprep.subr.mxu0 0.0
    %296 = vmatpush1.msra.mxu0 0.0
    %297 = vmatprep.subr.mxu0 0.0
    %298 = vmatpush1.msra.mxu0 0.0
    %299 = vmatprep.subr.mxu0 0.0
    %300 = vmatpush1.msra.mxu0 0.0
    %301 = vmatprep.subr.mxu0 0.0
    %302 = vmatpush1.msra.mxu0 0.0
    %303 = vmatprep.subr.mxu0 0.0
    %304 = vmatpush1.msra.mxu0 0.0
    %305 = vmatprep.subr.mxu0 0.0
    %306 = vmatpush1.msra.mxu0 0.0
    %307 = vmatprep.subr.mxu0 0.0
    %308 = vmatpush1.msra.mxu0 0.0
    %309 = vmatprep.subr.mxu0 0.0
    %310 = vmatpush1.msra.mxu0 0.0
    %311 = vmatprep.subr.mxu0 0.0
    %312 = vmatpush1.msra.mxu0 0.0
    %313 = vmatprep.subr.mxu0 0.0
    %314 = vmatpush1.msra.mxu0 0.0
    %315 = vmatprep.subr.mxu0 0.0
    %316 = vmatpush1.msra.mxu0 0.0
    %317 = vmatprep.subr.mxu0 0.0
    %318 = vmatpush1.msra.mxu0 0.0
    %319 = vmatprep.subr.mxu0 0.0
    %320 = vmatpush1.msra.mxu0 0.0
    %321 = vmatprep.subr.mxu0 0.0
    %322 = vmatpush1.msra.mxu0 0.0
    %323 = vmatprep.subr.mxu0 0.0
    %324 = vmatpush1.msra.mxu0 0.0
    %325 = vmatprep.subr.mxu0 0.0
    %326 = vmatpush1.msra.mxu0 0.0
    %327 = vmatprep.subr.mxu0 0.0
    %328 = vmatpush1.msra.mxu0 0.0
    %329 = vmatprep.subr.mxu0 0.0
    %330 = vmatpush1.msra.mxu0 0.0
    %331 = vmatprep.subr.mxu0 0.0
    %332 = vmatpush1.msra.mxu0 0.0
    %333 = vmatprep.subr.mxu0 0.0
    %334 = vmatpush1.msra.mxu0 0.0
    %335 = vmatprep.subr.mxu0 0.0
    %336 = vmatpush1.msra.mxu0 0.0
    %337 = vmatprep.subr.mxu0 0.0
    %338 = vmatpush1.msra.mxu0 0.0
    %339 = vmatprep.subr.mxu0 0.0
    %340 = vmatpush1.msra.mxu0 0.0
    %341 = vmatprep.subr.mxu0 0.0
    %342 = vmatpush1.msra.mxu0 0.0
    %343 = vmatprep.subr.mxu0 0.0
    %344 = vmatpush1.msra.mxu0 0.0
    %345 = vmatprep.subr.mxu0 0.0
    %346 = vmatpush1.msra.mxu0 0.0
    %347 = vmatprep.subr.mxu0 0.0
    %348 = vmatpush1.msra.mxu0 0.0
    %349 = vmatprep.subr.mxu0 0.0
    %350 = vmatpush1.msra.mxu0 0.0
    %351 = vmatprep.subr.mxu0 0.0
    %352 = vmatpush1.msra.mxu0 0.0
    %353 = vmatprep.mubr.f32.mxu0 0.0
    %354 = vmatmul.mubr.f32.gmra.mrb[0].mxu0 %v287
    %v355 = vpop.f32.mrb[0].mxu0
    %v356 = vadd.f32 0.0, %v355
    %v357 = vpop.f32.mrb[0].mxu0
    %358 = vdwg.mxu0
    %359 = vrot.lane.b32.xlu0 %v172, 120
    %v360 = vpop.permute.xlu0 %359
    %361 = vrot.lane.b32.xlu0 %v172, 88
    %v362 = vpop.permute.xlu0 %361
    %v363 = vsel %vm193, %v360, 0
    %v365 = vsel %vm193, %v362, 0
    %367 = vmatprep.subr.mxu0 0.0
    %368 = vmatpush1.xpose.msra.mxu0 %v365
    %369 = vmatprep.subr.mxu0 0.0
    %370 = vmatpush1.xpose.msra.mxu0 0.0
    %371 = vmatprep.subr.mxu0 0.0
    %372 = vmatpush1.xpose.msra.mxu0 0.0
    %373 = vmatprep.subr.mxu0 0.0
    %374 = vmatpush1.xpose.msra.mxu0 0.0
    %375 = vmatprep.subr.mxu0 0.0
    %376 = vmatpush1.xpose.msra.mxu0 0.0
    %377 = vmatprep.subr.mxu0 0.0
    %378 = vmatpush1.xpose.msra.mxu0 0.0
    %379 = vmatprep.subr.mxu0 0.0
    %380 = vmatpush1.xpose.msra.mxu0 0.0
    %381 = vmatprep.subr.mxu0 0.0
    %382 = vmatpush1.xpose.msra.mxu0 0.0
    %383 = vmatprep.subr.mxu0 0.0
    %384 = vmatpush1.xpose.msra.mxu0 0.0
    %385 = vmatprep.subr.mxu0 0.0
    %386 = vmatpush1.xpose.msra.mxu0 0.0
    %387 = vmatprep.subr.mxu0 0.0
    %388 = vmatpush1.xpose.msra.mxu0 0.0
    %389 = vmatprep.subr.mxu0 0.0
    %390 = vmatpush1.xpose.msra.mxu0 0.0
    %391 = vmatprep.subr.mxu0 0.0
    %392 = vmatpush1.xpose.msra.mxu0 0.0
    %393 = vmatprep.subr.mxu0 0.0
    %394 = vmatpush1.xpose.msra.mxu0 0.0
    %395 = vmatprep.subr.mxu0 0.0
    %396 = vmatpush1.xpose.msra.mxu0 0.0
    %397 = vmatprep.subr.mxu0 0.0
    %398 = vmatpush1.xpose.msra.mxu0 0.0
    %399 = vmatprep.subr.mxu0 0.0
    %400 = vmatpush1.xpose.msra.mxu0 0.0
    %401 = vmatprep.subr.mxu0 0.0
    %402 = vmatpush1.xpose.msra.mxu0 0.0
    %403 = vmatprep.subr.mxu0 0.0
    %404 = vmatpush1.xpose.msra.mxu0 0.0
    %405 = vmatprep.subr.mxu0 0.0
    %406 = vmatpush1.xpose.msra.mxu0 0.0
    %407 = vmatprep.subr.mxu0 0.0
    %408 = vmatpush1.xpose.msra.mxu0 0.0
    %409 = vmatprep.subr.mxu0 0.0
    %410 = vmatpush1.xpose.msra.mxu0 0.0
    %411 = vmatprep.subr.mxu0 0.0
    %412 = vmatpush1.xpose.msra.mxu0 0.0
    %413 = vmatprep.subr.mxu0 0.0
    %414 = vmatpush1.xpose.msra.mxu0 0.0
    %415 = vmatprep.subr.mxu0 0.0
    %416 = vmatpush1.xpose.msra.mxu0 0.0
    %417 = vmatprep.subr.mxu0 0.0
    %418 = vmatpush1.xpose.msra.mxu0 0.0
    %419 = vmatprep.subr.mxu0 0.0
    %420 = vmatpush1.xpose.msra.mxu0 0.0
    %421 = vmatprep.subr.mxu0 0.0
    %422 = vmatpush1.xpose.msra.mxu0 0.0
    %423 = vmatprep.subr.mxu0 0.0
    %424 = vmatpush1.xpose.msra.mxu0 0.0
    %425 = vmatprep.subr.mxu0 0.0
    %426 = vmatpush1.xpose.msra.mxu0 0.0
    %427 = vmatprep.subr.mxu0 0.0
    %428 = vmatpush1.xpose.msra.mxu0 0.0
    %429 = vmatprep.subr.mxu0 0.0
    %430 = vmatpush1.xpose.msra.mxu0 0.0
    %431 = vmatprep.mubr.f32.mxu0 0.0
    %432 = vmatmul.mubr.f32.gmra.mrb[0].mxu0 %v363
    %v433 = vpop.f32.mrb[0].mxu0
    %v434 = vadd.f32 0.0, %v433
    %v435 = vpop.f32.mrb[0].mxu0
    %436 = vdwg.mxu0
    %v437 = vsel %vm184, -1e+30, %v434
    %v438 = vsel %vm193, %v437, -inf
    %439 = vmax.xlane.f32.xlu0 %v438
    %v440 = vpop.xlane.xlu0 %439
    %v441 = vsub.f32 %v437, %v440
    %v442 = vmul.f32 %v441, 1.442695
    %v443 = vpow.pop %v442
    %v444 = vsel %vm193, %v443, 0.0
    %445 = vadd.xlane.f32.xlu0 %v444
    %v446 = vpop.xlane.xlu0 %445
    %v447 = vrcp.pop %v446
    %v448 = vmul.f32 %v446, %v447
    %v449 = vsub.f32 2.0, %v448
    %v450 = vmul.f32 %v447, %v449
    %v451 = vmul.f32 %v443, %v450
    %452 = vrot.lane.b32.xlu0 %v172, 56
    %v453 = vpop.permute.xlu0 %452
    %v456 = vsel %vm193, %v451, 0
    %458 = vmatprep.subr.mxu0 0.0
    %459 = vmatpush1.msra.mxu0 %v453
    %460 = vmatprep.subr.mxu0 0.0
    %461 = vmatpush1.msra.mxu0 0.0
    %462 = vmatprep.subr.mxu0 0.0
    %463 = vmatpush1.msra.mxu0 0.0
    %464 = vmatprep.subr.mxu0 0.0
    %465 = vmatpush1.msra.mxu0 0.0
    %466 = vmatprep.subr.mxu0 0.0
    %467 = vmatpush1.msra.mxu0 0.0
    %468 = vmatprep.subr.mxu0 0.0
    %469 = vmatpush1.msra.mxu0 0.0
    %470 = vmatprep.subr.mxu0 0.0
    %471 = vmatpush1.msra.mxu0 0.0
    %472 = vmatprep.subr.mxu0 0.0
    %473 = vmatpush1.msra.mxu0 0.0
    %474 = vmatprep.subr.mxu0 0.0
    %475 = vmatpush1.msra.mxu0 0.0
    %476 = vmatprep.subr.mxu0 0.0
    %477 = vmatpush1.msra.mxu0 0.0
    %478 = vmatprep.subr.mxu0 0.0
    %479 = vmatpush1.msra.mxu0 0.0
    %480 = vmatprep.subr.mxu0 0.0
    %481 = vmatpush1.msra.mxu0 0.0
    %482 = vmatprep.subr.mxu0 0.0
    %483 = vmatpush1.msra.mxu0 0.0
    %484 = vmatprep.subr.mxu0 0.0
    %485 = vmatpush1.msra.mxu0 0.0
    %486 = vmatprep.subr.mxu0 0.0
    %487 = vmatpush1.msra.mxu0 0.0
    %488 = vmatprep.subr.mxu0 0.0
    %489 = vmatpush1.msra.mxu0 0.0
    %490 = vmatprep.subr.mxu0 0.0
    %491 = vmatpush1.msra.mxu0 0.0
    %492 = vmatprep.subr.mxu0 0.0
    %493 = vmatpush1.msra.mxu0 0.0
    %494 = vmatprep.subr.mxu0 0.0
    %495 = vmatpush1.msra.mxu0 0.0
    %496 = vmatprep.subr.mxu0 0.0
    %497 = vmatpush1.msra.mxu0 0.0
    %498 = vmatprep.subr.mxu0 0.0
    %499 = vmatpush1.msra.mxu0 0.0
    %500 = vmatprep.subr.mxu0 0.0
    %501 = vmatpush1.msra.mxu0 0.0
    %502 = vmatprep.subr.mxu0 0.0
    %503 = vmatpush1.msra.mxu0 0.0
    %504 = vmatprep.subr.mxu0 0.0
    %505 = vmatpush1.msra.mxu0 0.0
    %506 = vmatprep.subr.mxu0 0.0
    %507 = vmatpush1.msra.mxu0 0.0
    %508 = vmatprep.subr.mxu0 0.0
    %509 = vmatpush1.msra.mxu0 0.0
    %510 = vmatprep.subr.mxu0 0.0
    %511 = vmatpush1.msra.mxu0 0.0
    %512 = vmatprep.subr.mxu0 0.0
    %513 = vmatpush1.msra.mxu0 0.0
    %514 = vmatprep.subr.mxu0 0.0
    %515 = vmatpush1.msra.mxu0 0.0
    %516 = vmatprep.subr.mxu0 0.0
    %517 = vmatpush1.msra.mxu0 0.0
    %518 = vmatprep.subr.mxu0 0.0
    %519 = vmatpush1.msra.mxu0 0.0
    %520 = vmatprep.subr.mxu0 0.0
    %521 = vmatpush1.msra.mxu0 0.0
    %522 = vmatprep.mubr.f32.mxu0 0.0
    %523 = vmatmul.mubr.f32.gmra.mrb[0].mxu0 %v456
    %v524 = vpop.f32.mrb[0].mxu0
    %v525 = vadd.f32 0.0, %v524
    %v526 = vpop.f32.mrb[0].mxu0
    %527 = vdwg.mxu0
    %v529 = vsel %vm193, %v525, 0
    %531 = vmatprep.subr.mxu0 0.0
    %532 = vmatpush1.msra.mxu0 %v186
    %533 = vmatprep.subr.mxu0 0.0
    %534 = vmatpush1.msra.mxu0 0.0
    %535 = vmatprep.subr.mxu0 0.0
    %536 = vmatpush1.msra.mxu0 0.0
    %537 = vmatprep.subr.mxu0 0.0
    %538 = vmatpush1.msra.mxu0 0.0
    %539 = vmatprep.subr.mxu0 0.0
    %540 = vmatpush1.msra.mxu0 0.0
    %541 = vmatprep.subr.mxu0 0.0
    %542 = vmatpush1.msra.mxu0 0.0
    %543 = vmatprep.subr.mxu0 0.0
    %544 = vmatpush1.msra.mxu0 0.0
    %545 = vmatprep.subr.mxu0 0.0
    %546 = vmatpush1.msra.mxu0 0.0
    %547 = vmatprep.subr.mxu0 0.0
    %548 = vmatpush1.msra.mxu0 0.0
    %549 = vmatprep.subr.mxu0 0.0
    %550 = vmatpush1.msra.mxu0 0.0
    %551 = vmatprep.subr.mxu0 0.0
    %552 = vmatpush1.msra.mxu0 0.0
    %553 = vmatprep.subr.mxu0 0.0
    %554 = vmatpush1.msra.mxu0 0.0
    %555 = vmatprep.subr.mxu0 0.0
    %556 = vmatpush1.msra.mxu0 0.0
    %557 = vmatprep.subr.mxu0 0.0
    %558 = vmatpush1.msra.mxu0 0.0
    %559 = vmatprep.subr.mxu0 0.0
    %560 = vmatpush1.msra.mxu0 0.0
    %561 = vmatprep.subr.mxu0 0.0
    %562 = vmatpush1.msra.mxu0 0.0
    %563 = vmatprep.subr.mxu0 0.0
    %564 = vmatpush1.msra.mxu0 0.0
    %565 = vmatprep.subr.mxu0 0.0
    %566 = vmatpush1.msra.mxu0 0.0
    %567 = vmatprep.subr.mxu0 0.0
    %568 = vmatpush1.msra.mxu0 0.0
    %569 = vmatprep.subr.mxu0 0.0
    %570 = vmatpush1.msra.mxu0 0.0
    %571 = vmatprep.subr.mxu0 0.0
    %572 = vmatpush1.msra.mxu0 0.0
    %573 = vmatprep.subr.mxu0 0.0
    %574 = vmatpush1.msra.mxu0 0.0
    %575 = vmatprep.subr.mxu0 0.0
    %576 = vmatpush1.msra.mxu0 0.0
    %577 = vmatprep.subr.mxu0 0.0
    %578 = vmatpush1.msra.mxu0 0.0
    %579 = vmatprep.subr.mxu0 0.0
    %580 = vmatpush1.msra.mxu0 0.0
    %581 = vmatprep.subr.mxu0 0.0
    %582 = vmatpush1.msra.mxu0 0.0
    %583 = vmatprep.subr.mxu0 0.0
    %584 = vmatpush1.msra.mxu0 0.0
    %585 = vmatprep.subr.mxu0 0.0
    %586 = vmatpush1.msra.mxu0 0.0
    %587 = vmatprep.subr.mxu0 0.0
    %588 = vmatpush1.msra.mxu0 0.0
    %589 = vmatprep.subr.mxu0 0.0
    %590 = vmatpush1.msra.mxu0 0.0
    %591 = vmatprep.subr.mxu0 0.0
    %592 = vmatpush1.msra.mxu0 0.0
    %593 = vmatprep.subr.mxu0 0.0
    %594 = vmatpush1.msra.mxu0 0.0
    %595 = vmatprep.mubr.f32.mxu0 0.0
    %596 = vmatmul.mubr.f32.gmra.mrb[0].mxu0 %v529
    %v597 = vpop.f32.mrb[0].mxu0
    %v598 = vadd.f32 0.0, %v597
    %v599 = vpop.f32.mrb[0].mxu0
    %600 = vdwg.mxu0
    %v602 = vsel %vm193, %v356, 0
    %604 = vmatprep.subr.mxu0 0.0
    %605 = vmatpush1.msra.mxu0 %v185
    %606 = vmatprep.subr.mxu0 0.0
    %607 = vmatpush1.msra.mxu0 0.0
    %608 = vmatprep.subr.mxu0 0.0
    %609 = vmatpush1.msra.mxu0 0.0
    %610 = vmatprep.subr.mxu0 0.0
    %611 = vmatpush1.msra.mxu0 0.0
    %612 = vmatprep.subr.mxu0 0.0
    %613 = vmatpush1.msra.mxu0 0.0
    %614 = vmatprep.subr.mxu0 0.0
    %615 = vmatpush1.msra.mxu0 0.0
    %616 = vmatprep.subr.mxu0 0.0
    %617 = vmatpush1.msra.mxu0 0.0
    %618 = vmatprep.subr.mxu0 0.0
    %619 = vmatpush1.msra.mxu0 0.0
    %620 = vmatprep.subr.mxu0 0.0
    %621 = vmatpush1.msra.mxu0 0.0
    %622 = vmatprep.subr.mxu0 0.0
    %623 = vmatpush1.msra.mxu0 0.0
    %624 = vmatprep.subr.mxu0 0.0
    %625 = vmatpush1.msra.mxu0 0.0
    %626 = vmatprep.subr.mxu0 0.0
    %627 = vmatpush1.msra.mxu0 0.0
    %628 = vmatprep.subr.mxu0 0.0
    %629 = vmatpush1.msra.mxu0 0.0
    %630 = vmatprep.subr.mxu0 0.0
    %631 = vmatpush1.msra.mxu0 0.0
    %632 = vmatprep.subr.mxu0 0.0
    %633 = vmatpush1.msra.mxu0 0.0
    %634 = vmatprep.subr.mxu0 0.0
    %635 = vmatpush1.msra.mxu0 0.0
    %636 = vmatprep.subr.mxu0 0.0
    %637 = vmatpush1.msra.mxu0 0.0
    %638 = vmatprep.subr.mxu0 0.0
    %639 = vmatpush1.msra.mxu0 0.0
    %640 = vmatprep.subr.mxu0 0.0
    %641 = vmatpush1.msra.mxu0 0.0
    %642 = vmatprep.subr.mxu0 0.0
    %643 = vmatpush1.msra.mxu0 0.0
    %644 = vmatprep.subr.mxu0 0.0
    %645 = vmatpush1.msra.mxu0 0.0
    %646 = vmatprep.subr.mxu0 0.0
    %647 = vmatpush1.msra.mxu0 0.0
    %648 = vmatprep.subr.mxu0 0.0
    %649 = vmatpush1.msra.mxu0 0.0
    %650 = vmatprep.subr.mxu0 0.0
    %651 = vmatpush1.msra.mxu0 0.0
    %652 = vmatprep.subr.mxu0 0.0
    %653 = vmatpush1.msra.mxu0 0.0
    %654 = vmatprep.subr.mxu0 0.0
    %655 = vmatpush1.msra.mxu0 0.0
    %656 = vmatprep.subr.mxu0 0.0
    %657 = vmatpush1.msra.mxu0 0.0
    %658 = vmatprep.subr.mxu0 0.0
    %659 = vmatpush1.msra.mxu0 0.0
    %660 = vmatprep.subr.mxu0 0.0
    %661 = vmatpush1.msra.mxu0 0.0
    %662 = vmatprep.subr.mxu0 0.0
    %663 = vmatpush1.msra.mxu0 0.0
    %664 = vmatprep.subr.mxu0 0.0
    %665 = vmatpush1.msra.mxu0 0.0
    %666 = vmatprep.subr.mxu0 0.0
    %667 = vmatpush1.msra.mxu0 0.0
    %668 = vmatprep.mubr.f32.mxu0 0.0
    %669 = vmatmul.mubr.f32.gmra.mrb[0].mxu0 %v602
    %v670 = vpop.f32.mrb[0].mxu0
    %v671 = vadd.f32 %v598, %v670
    %v672 = vpop.f32.mrb[0].mxu0
    %673 = vdwg.mxu0
    %674 = vrot.lane.b32.xlu0 %v172, 112
    %v675 = vpop.permute.xlu0 %674
    %676 = vrot.lane.b32.xlu0 %v172, 80
    %v677 = vpop.permute.xlu0 %676
    %v678 = vsel %vm193, %v675, 0
    %v680 = vsel %vm193, %v677, 0
    %682 = vmatprep.subr.mxu0 0.0
    %683 = vmatpush1.xpose.msra.mxu0 %v680
    %684 = vmatprep.subr.mxu0 0.0
    %685 = vmatpush1.xpose.msra.mxu0 0.0
    %686 = vmatprep.subr.mxu0 0.0
    %687 = vmatpush1.xpose.msra.mxu0 0.0
    %688 = vmatprep.subr.mxu0 0.0
    %689 = vmatpush1.xpose.msra.mxu0 0.0
    %690 = vmatprep.subr.mxu0 0.0
    %691 = vmatpush1.xpose.msra.mxu0 0.0
    %692 = vmatprep.subr.mxu0 0.0
    %693 = vmatpush1.xpose.msra.mxu0 0.0
    %694 = vmatprep.subr.mxu0 0.0
    %695 = vmatpush1.xpose.msra.mxu0 0.0
    %696 = vmatprep.subr.mxu0 0.0
    %697 = vmatpush1.xpose.msra.mxu0 0.0
    %698 = vmatprep.subr.mxu0 0.0
    %699 = vmatpush1.xpose.msra.mxu0 0.0
    %700 = vmatprep.subr.mxu0 0.0
    %701 = vmatpush1.xpose.msra.mxu0 0.0
    %702 = vmatprep.subr.mxu0 0.0
    %703 = vmatpush1.xpose.msra.mxu0 0.0
    %704 = vmatprep.subr.mxu0 0.0
    %705 = vmatpush1.xpose.msra.mxu0 0.0
    %706 = vmatprep.subr.mxu0 0.0
    %707 = vmatpush1.xpose.msra.mxu0 0.0
    %708 = vmatprep.subr.mxu0 0.0
    %709 = vmatpush1.xpose.msra.mxu0 0.0
    %710 = vmatprep.subr.mxu0 0.0
    %711 = vmatpush1.xpose.msra.mxu0 0.0
    %712 = vmatprep.subr.mxu0 0.0
    %713 = vmatpush1.xpose.msra.mxu0 0.0
    %714 = vmatprep.subr.mxu0 0.0
    %715 = vmatpush1.xpose.msra.mxu0 0.0
    %716 = vmatprep.subr.mxu0 0.0
    %717 = vmatpush1.xpose.msra.mxu0 0.0
    %718 = vmatprep.subr.mxu0 0.0
    %719 = vmatpush1.xpose.msra.mxu0 0.0
    %720 = vmatprep.subr.mxu0 0.0
    %721 = vmatpush1.xpose.msra.mxu0 0.0
    %722 = vmatprep.subr.mxu0 0.0
    %723 = vmatpush1.xpose.msra.mxu0 0.0
    %724 = vmatprep.subr.mxu0 0.0
    %725 = vmatpush1.xpose.msra.mxu0 0.0
    %726 = vmatprep.subr.mxu0 0.0
    %727 = vmatpush1.xpose.msra.mxu0 0.0
    %728 = vmatprep.subr.mxu0 0.0
    %729 = vmatpush1.xpose.msra.mxu0 0.0
    %730 = vmatprep.subr.mxu0 0.0
    %731 = vmatpush1.xpose.msra.mxu0 0.0
    %732 = vmatprep.subr.mxu0 0.0
    %733 = vmatpush1.xpose.msra.mxu0 0.0
    %734 = vmatprep.subr.mxu0 0.0
    %735 = vmatpush1.xpose.msra.mxu0 0.0
    %736 = vmatprep.subr.mxu0 0.0
    %737 = vmatpush1.xpose.msra.mxu0 0.0
    %738 = vmatprep.subr.mxu0 0.0
    %739 = vmatpush1.xpose.msra.mxu0 0.0
    %740 = vmatprep.subr.mxu0 0.0
    %741 = vmatpush1.xpose.msra.mxu0 0.0
    %742 = vmatprep.subr.mxu0 0.0
    %743 = vmatpush1.xpose.msra.mxu0 0.0
    %744 = vmatprep.subr.mxu0 0.0
    %745 = vmatpush1.xpose.msra.mxu0 0.0
    %746 = vmatprep.mubr.f32.mxu0 0.0
    %747 = vmatmul.mubr.f32.gmra.mrb[0].mxu0 %v678
    %v748 = vpop.f32.mrb[0].mxu0
    %v749 = vadd.f32 0.0, %v748
    %v750 = vpop.f32.mrb[0].mxu0
    %751 = vdwg.mxu0
    %v752 = vsel %vm184, -1e+30, %v749
    %v753 = vsel %vm193, %v752, -inf
    %754 = vmax.xlane.f32.xlu0 %v753
    %v755 = vpop.xlane.xlu0 %754
    %v756 = vsub.f32 %v752, %v755
    %v757 = vmul.f32 %v756, 1.442695
    %v758 = vpow.pop %v757
    %v759 = vsel %vm193, %v758, 0.0
    %760 = vadd.xlane.f32.xlu0 %v759
    %v761 = vpop.xlane.xlu0 %760
    %v762 = vrcp.pop %v761
    %v763 = vmul.f32 %v761, %v762
    %v764 = vsub.f32 2.0, %v763
    %v765 = vmul.f32 %v762, %v764
    %v766 = vmul.f32 %v758, %v765
    %767 = vrot.lane.b32.xlu0 %v172, 48
    %v768 = vpop.permute.xlu0 %767
    %v771 = vsel %vm193, %v766, 0
    %773 = vmatprep.subr.mxu0 0.0
    %774 = vmatpush1.msra.mxu0 %v768
    %775 = vmatprep.subr.mxu0 0.0
    %776 = vmatpush1.msra.mxu0 0.0
    %777 = vmatprep.subr.mxu0 0.0
    %778 = vmatpush1.msra.mxu0 0.0
    %779 = vmatprep.subr.mxu0 0.0
    %780 = vmatpush1.msra.mxu0 0.0
    %781 = vmatprep.subr.mxu0 0.0
    %782 = vmatpush1.msra.mxu0 0.0
    %783 = vmatprep.subr.mxu0 0.0
    %784 = vmatpush1.msra.mxu0 0.0
    %785 = vmatprep.subr.mxu0 0.0
    %786 = vmatpush1.msra.mxu0 0.0
    %787 = vmatprep.subr.mxu0 0.0
    %788 = vmatpush1.msra.mxu0 0.0
    %789 = vmatprep.subr.mxu0 0.0
    %790 = vmatpush1.msra.mxu0 0.0
    %791 = vmatprep.subr.mxu0 0.0
    %792 = vmatpush1.msra.mxu0 0.0
    %793 = vmatprep.subr.mxu0 0.0
    %794 = vmatpush1.msra.mxu0 0.0
    %795 = vmatprep.subr.mxu0 0.0
    %796 = vmatpush1.msra.mxu0 0.0
    %797 = vmatprep.subr.mxu0 0.0
    %798 = vmatpush1.msra.mxu0 0.0
    %799 = vmatprep.subr.mxu0 0.0
    %800 = vmatpush1.msra.mxu0 0.0
    %801 = vmatprep.subr.mxu0 0.0
    %802 = vmatpush1.msra.mxu0 0.0
    %803 = vmatprep.subr.mxu0 0.0
    %804 = vmatpush1.msra.mxu0 0.0
    %805 = vmatprep.subr.mxu0 0.0
    %806 = vmatpush1.msra.mxu0 0.0
    %807 = vmatprep.subr.mxu0 0.0
    %808 = vmatpush1.msra.mxu0 0.0
    %809 = vmatprep.subr.mxu0 0.0
    %810 = vmatpush1.msra.mxu0 0.0
    %811 = vmatprep.subr.mxu0 0.0
    %812 = vmatpush1.msra.mxu0 0.0
    %813 = vmatprep.subr.mxu0 0.0
    %814 = vmatpush1.msra.mxu0 0.0
    %815 = vmatprep.subr.mxu0 0.0
    %816 = vmatpush1.msra.mxu0 0.0
    %817 = vmatprep.subr.mxu0 0.0
    %818 = vmatpush1.msra.mxu0 0.0
    %819 = vmatprep.subr.mxu0 0.0
    %820 = vmatpush1.msra.mxu0 0.0
    %821 = vmatprep.subr.mxu0 0.0
    %822 = vmatpush1.msra.mxu0 0.0
    %823 = vmatprep.subr.mxu0 0.0
    %824 = vmatpush1.msra.mxu0 0.0
    %825 = vmatprep.subr.mxu0 0.0
    %826 = vmatpush1.msra.mxu0 0.0
    %827 = vmatprep.subr.mxu0 0.0
    %828 = vmatpush1.msra.mxu0 0.0
    %829 = vmatprep.subr.mxu0 0.0
    %830 = vmatpush1.msra.mxu0 0.0
    %831 = vmatprep.subr.mxu0 0.0
    %832 = vmatpush1.msra.mxu0 0.0
    %833 = vmatprep.subr.mxu0 0.0
    %834 = vmatpush1.msra.mxu0 0.0
    %835 = vmatprep.subr.mxu0 0.0
    %836 = vmatpush1.msra.mxu0 0.0
    %837 = vmatprep.mubr.f32.mxu0 0.0
    %838 = vmatmul.mubr.f32.gmra.mrb[0].mxu0 %v771
    %v839 = vpop.f32.mrb[0].mxu0
    %v840 = vadd.f32 0.0, %v839
    %v841 = vpop.f32.mrb[0].mxu0
    %842 = vdwg.mxu0
    %v844 = vsel %vm193, %v840, 0
    %846 = vmatprep.subr.mxu0 0.0
    %847 = vmatpush1.msra.mxu0 %v187
    %848 = vmatprep.subr.mxu0 0.0
    %849 = vmatpush1.msra.mxu0 0.0
    %850 = vmatprep.subr.mxu0 0.0
    %851 = vmatpush1.msra.mxu0 0.0
    %852 = vmatprep.subr.mxu0 0.0
    %853 = vmatpush1.msra.mxu0 0.0
    %854 = vmatprep.subr.mxu0 0.0
    %855 = vmatpush1.msra.mxu0 0.0
    %856 = vmatprep.subr.mxu0 0.0
    %857 = vmatpush1.msra.mxu0 0.0
    %858 = vmatprep.subr.mxu0 0.0
    %859 = vmatpush1.msra.mxu0 0.0
    %860 = vmatprep.subr.mxu0 0.0
    %861 = vmatpush1.msra.mxu0 0.0
    %862 = vmatprep.subr.mxu0 0.0
    %863 = vmatpush1.msra.mxu0 0.0
    %864 = vmatprep.subr.mxu0 0.0
    %865 = vmatpush1.msra.mxu0 0.0
    %866 = vmatprep.subr.mxu0 0.0
    %867 = vmatpush1.msra.mxu0 0.0
    %868 = vmatprep.subr.mxu0 0.0
    %869 = vmatpush1.msra.mxu0 0.0
    %870 = vmatprep.subr.mxu0 0.0
    %871 = vmatpush1.msra.mxu0 0.0
    %872 = vmatprep.subr.mxu0 0.0
    %873 = vmatpush1.msra.mxu0 0.0
    %874 = vmatprep.subr.mxu0 0.0
    %875 = vmatpush1.msra.mxu0 0.0
    %876 = vmatprep.subr.mxu0 0.0
    %877 = vmatpush1.msra.mxu0 0.0
    %878 = vmatprep.subr.mxu0 0.0
    %879 = vmatpush1.msra.mxu0 0.0
    %880 = vmatprep.subr.mxu0 0.0
    %881 = vmatpush1.msra.mxu0 0.0
    %882 = vmatprep.subr.mxu0 0.0
    %883 = vmatpush1.msra.mxu0 0.0
    %884 = vmatprep.subr.mxu0 0.0
    %885 = vmatpush1.msra.mxu0 0.0
    %886 = vmatprep.subr.mxu0 0.0
    %887 = vmatpush1.msra.mxu0 0.0
    %888 = vmatprep.subr.mxu0 0.0
    %889 = vmatpush1.msra.mxu0 0.0
    %890 = vmatprep.subr.mxu0 0.0
    %891 = vmatpush1.msra.mxu0 0.0
    %892 = vmatprep.subr.mxu0 0.0
    %893 = vmatpush1.msra.mxu0 0.0
    %894 = vmatprep.subr.mxu0 0.0
    %895 = vmatpush1.msra.mxu0 0.0
    %896 = vmatprep.subr.mxu0 0.0
    %897 = vmatpush1.msra.mxu0 0.0
    %898 = vmatprep.subr.mxu0 0.0
    %899 = vmatpush1.msra.mxu0 0.0
    %900 = vmatprep.subr.mxu0 0.0
    %901 = vmatpush1.msra.mxu0 0.0
    %902 = vmatprep.subr.mxu0 0.0
    %903 = vmatpush1.msra.mxu0 0.0
    %904 = vmatprep.subr.mxu0 0.0
    %905 = vmatpush1.msra.mxu0 0.0
    %906 = vmatprep.subr.mxu0 0.0
    %907 = vmatpush1.msra.mxu0 0.0
    %908 = vmatprep.subr.mxu0 0.0
    %909 = vmatpush1.msra.mxu0 0.0
    %910 = vmatprep.mubr.f32.mxu0 0.0
    %911 = vmatmul.mubr.f32.gmra.mrb[0].mxu0 %v844
    %v912 = vpop.f32.mrb[0].mxu0
    %v913 = vadd.f32 0.0, %v912
    %v914 = vpop.f32.mrb[0].mxu0
    %915 = vdwg.mxu0
    %v916 = vadd.f32 %v671, %v913
    %917 = vrot.lane.b32.xlu0 %v172, 104
    %v918 = vpop.permute.xlu0 %917
    %919 = vrot.lane.b32.xlu0 %v172, 72
    %v920 = vpop.permute.xlu0 %919
    %v921 = vsel %vm193, %v918, 0
    %v923 = vsel %vm193, %v920, 0
    %925 = vmatprep.subr.mxu0 0.0
    %926 = vmatpush1.xpose.msra.mxu0 %v923
    %927 = vmatprep.subr.mxu0 0.0
    %928 = vmatpush1.xpose.msra.mxu0 0.0
    %929 = vmatprep.subr.mxu0 0.0
    %930 = vmatpush1.xpose.msra.mxu0 0.0
    %931 = vmatprep.subr.mxu0 0.0
    %932 = vmatpush1.xpose.msra.mxu0 0.0
    %933 = vmatprep.subr.mxu0 0.0
    %934 = vmatpush1.xpose.msra.mxu0 0.0
    %935 = vmatprep.subr.mxu0 0.0
    %936 = vmatpush1.xpose.msra.mxu0 0.0
    %937 = vmatprep.subr.mxu0 0.0
    %938 = vmatpush1.xpose.msra.mxu0 0.0
    %939 = vmatprep.subr.mxu0 0.0
    %940 = vmatpush1.xpose.msra.mxu0 0.0
    %941 = vmatprep.subr.mxu0 0.0
    %942 = vmatpush1.xpose.msra.mxu0 0.0
    %943 = vmatprep.subr.mxu0 0.0
    %944 = vmatpush1.xpose.msra.mxu0 0.0
    %945 = vmatprep.subr.mxu0 0.0
    %946 = vmatpush1.xpose.msra.mxu0 0.0
    %947 = vmatprep.subr.mxu0 0.0
    %948 = vmatpush1.xpose.msra.mxu0 0.0
    %949 = vmatprep.subr.mxu0 0.0
    %950 = vmatpush1.xpose.msra.mxu0 0.0
    %951 = vmatprep.subr.mxu0 0.0
    %952 = vmatpush1.xpose.msra.mxu0 0.0
    %953 = vmatprep.subr.mxu0 0.0
    %954 = vmatpush1.xpose.msra.mxu0 0.0
    %955 = vmatprep.subr.mxu0 0.0
    %956 = vmatpush1.xpose.msra.mxu0 0.0
    %957 = vmatprep.subr.mxu0 0.0
    %958 = vmatpush1.xpose.msra.mxu0 0.0
    %959 = vmatprep.subr.mxu0 0.0
    %960 = vmatpush1.xpose.msra.mxu0 0.0
    %961 = vmatprep.subr.mxu0 0.0
    %962 = vmatpush1.xpose.msra.mxu0 0.0
    %963 = vmatprep.subr.mxu0 0.0
    %964 = vmatpush1.xpose.msra.mxu0 0.0
    %965 = vmatprep.subr.mxu0 0.0
    %966 = vmatpush1.xpose.msra.mxu0 0.0
    %967 = vmatprep.subr.mxu0 0.0
    %968 = vmatpush1.xpose.msra.mxu0 0.0
    %969 = vmatprep.subr.mxu0 0.0
    %970 = vmatpush1.xpose.msra.mxu0 0.0
    %971 = vmatprep.subr.mxu0 0.0
    %972 = vmatpush1.xpose.msra.mxu0 0.0
    %973 = vmatprep.subr.mxu0 0.0
    %974 = vmatpush1.xpose.msra.mxu0 0.0
    %975 = vmatprep.subr.mxu0 0.0
    %976 = vmatpush1.xpose.msra.mxu0 0.0
    %977 = vmatprep.subr.mxu0 0.0
    %978 = vmatpush1.xpose.msra.mxu0 0.0
    %979 = vmatprep.subr.mxu0 0.0
    %980 = vmatpush1.xpose.msra.mxu0 0.0
    %981 = vmatprep.subr.mxu0 0.0
    %982 = vmatpush1.xpose.msra.mxu0 0.0
    %983 = vmatprep.subr.mxu0 0.0
    %984 = vmatpush1.xpose.msra.mxu0 0.0
    %985 = vmatprep.subr.mxu0 0.0
    %986 = vmatpush1.xpose.msra.mxu0 0.0
    %987 = vmatprep.subr.mxu0 0.0
    %988 = vmatpush1.xpose.msra.mxu0 0.0
    %989 = vmatprep.mubr.f32.mxu0 0.0
    %990 = vmatmul.mubr.f32.gmra.mrb[0].mxu0 %v921
    %v991 = vpop.f32.mrb[0].mxu0
    %v992 = vadd.f32 0.0, %v991
    %v993 = vpop.f32.mrb[0].mxu0
    %994 = vdwg.mxu0
    %v995 = vsel %vm184, -1e+30, %v992
    %v996 = vsel %vm193, %v995, -inf
    %997 = vmax.xlane.f32.xlu0 %v996
    %v998 = vpop.xlane.xlu0 %997
    %v999 = vsub.f32 %v995, %v998
    %v1000 = vmul.f32 %v999, 1.442695
    %v1001 = vpow.pop %v1000
    %v1002 = vsel %vm193, %v1001, 0.0
    %1003 = vadd.xlane.f32.xlu0 %v1002
    %v1004 = vpop.xlane.xlu0 %1003
    %v1005 = vrcp.pop %v1004
    %v1006 = vmul.f32 %v1004, %v1005
    %v1007 = vsub.f32 2.0, %v1006
    %v1008 = vmul.f32 %v1005, %v1007
    %v1009 = vmul.f32 %v1001, %v1008
    %1010 = vrot.lane.b32.xlu0 %v172, 40
    %v1011 = vpop.permute.xlu0 %1010
    %v1014 = vsel %vm193, %v1009, 0
    %1016 = vmatprep.subr.mxu0 0.0
    %1017 = vmatpush1.msra.mxu0 %v1011
    %1018 = vmatprep.subr.mxu0 0.0
    %1019 = vmatpush1.msra.mxu0 0.0
    %1020 = vmatprep.subr.mxu0 0.0
    %1021 = vmatpush1.msra.mxu0 0.0
    %1022 = vmatprep.subr.mxu0 0.0
    %1023 = vmatpush1.msra.mxu0 0.0
    %1024 = vmatprep.subr.mxu0 0.0
    %1025 = vmatpush1.msra.mxu0 0.0
    %1026 = vmatprep.subr.mxu0 0.0
    %1027 = vmatpush1.msra.mxu0 0.0
    %1028 = vmatprep.subr.mxu0 0.0
    %1029 = vmatpush1.msra.mxu0 0.0
    %1030 = vmatprep.subr.mxu0 0.0
    %1031 = vmatpush1.msra.mxu0 0.0
    %1032 = vmatprep.subr.mxu0 0.0
    %1033 = vmatpush1.msra.mxu0 0.0
    %1034 = vmatprep.subr.mxu0 0.0
    %1035 = vmatpush1.msra.mxu0 0.0
    %1036 = vmatprep.subr.mxu0 0.0
    %1037 = vmatpush1.msra.mxu0 0.0
    %1038 = vmatprep.subr.mxu0 0.0
    %1039 = vmatpush1.msra.mxu0 0.0
    %1040 = vmatprep.subr.mxu0 0.0
    %1041 = vmatpush1.msra.mxu0 0.0
    %1042 = vmatprep.subr.mxu0 0.0
    %1043 = vmatpush1.msra.mxu0 0.0
    %1044 = vmatprep.subr.mxu0 0.0
    %1045 = vmatpush1.msra.mxu0 0.0
    %1046 = vmatprep.subr.mxu0 0.0
    %1047 = vmatpush1.msra.mxu0 0.0
    %1048 = vmatprep.subr.mxu0 0.0
    %1049 = vmatpush1.msra.mxu0 0.0
    %1050 = vmatprep.subr.mxu0 0.0
    %1051 = vmatpush1.msra.mxu0 0.0
    %1052 = vmatprep.subr.mxu0 0.0
    %1053 = vmatpush1.msra.mxu0 0.0
    %1054 = vmatprep.subr.mxu0 0.0
    %1055 = vmatpush1.msra.mxu0 0.0
    %1056 = vmatprep.subr.mxu0 0.0
    %1057 = vmatpush1.msra.mxu0 0.0
    %1058 = vmatprep.subr.mxu0 0.0
    %1059 = vmatpush1.msra.mxu0 0.0
    %1060 = vmatprep.subr.mxu0 0.0
    %1061 = vmatpush1.msra.mxu0 0.0
    %1062 = vmatprep.subr.mxu0 0.0
    %1063 = vmatpush1.msra.mxu0 0.0
    %1064 = vmatprep.subr.mxu0 0.0
    %1065 = vmatpush1.msra.mxu0 0.0
    %1066 = vmatprep.subr.mxu0 0.0
    %1067 = vmatpush1.msra.mxu0 0.0
    %1068 = vmatprep.subr.mxu0 0.0
    %1069 = vmatpush1.msra.mxu0 0.0
    %1070 = vmatprep.subr.mxu0 0.0
    %1071 = vmatpush1.msra.mxu0 0.0
    %1072 = vmatprep.subr.mxu0 0.0
    %1073 = vmatpush1.msra.mxu0 0.0
    %1074 = vmatprep.subr.mxu0 0.0
    %1075 = vmatpush1.msra.mxu0 0.0
    %1076 = vmatprep.subr.mxu0 0.0
    %1077 = vmatpush1.msra.mxu0 0.0
    %1078 = vmatprep.subr.mxu0 0.0
    %1079 = vmatpush1.msra.mxu0 0.0
    %1080 = vmatprep.mubr.f32.mxu0 0.0
    %1081 = vmatmul.mubr.f32.gmra.mrb[0].mxu0 %v1014
    %v1082 = vpop.f32.mrb[0].mxu0
    %v1083 = vadd.f32 0.0, %v1082
    %v1084 = vpop.f32.mrb[0].mxu0
    %1085 = vdwg.mxu0
    %v1087 = vsel %vm193, %v1083, 0
    %1089 = vmatprep.subr.mxu0 0.0
    %1090 = vmatpush1.msra.mxu0 %v188
    %1091 = vmatprep.subr.mxu0 0.0
    %1092 = vmatpush1.msra.mxu0 0.0
    %1093 = vmatprep.subr.mxu0 0.0
    %1094 = vmatpush1.msra.mxu0 0.0
    %1095 = vmatprep.subr.mxu0 0.0
    %1096 = vmatpush1.msra.mxu0 0.0
    %1097 = vmatprep.subr.mxu0 0.0
    %1098 = vmatpush1.msra.mxu0 0.0
    %1099 = vmatprep.subr.mxu0 0.0
    %1100 = vmatpush1.msra.mxu0 0.0
    %1101 = vmatprep.subr.mxu0 0.0
    %1102 = vmatpush1.msra.mxu0 0.0
    %1103 = vmatprep.subr.mxu0 0.0
    %1104 = vmatpush1.msra.mxu0 0.0
    %1105 = vmatprep.subr.mxu0 0.0
    %1106 = vmatpush1.msra.mxu0 0.0
    %1107 = vmatprep.subr.mxu0 0.0
    %1108 = vmatpush1.msra.mxu0 0.0
    %1109 = vmatprep.subr.mxu0 0.0
    %1110 = vmatpush1.msra.mxu0 0.0
    %1111 = vmatprep.subr.mxu0 0.0
    %1112 = vmatpush1.msra.mxu0 0.0
    %1113 = vmatprep.subr.mxu0 0.0
    %1114 = vmatpush1.msra.mxu0 0.0
    %1115 = vmatprep.subr.mxu0 0.0
    %1116 = vmatpush1.msra.mxu0 0.0
    %1117 = vmatprep.subr.mxu0 0.0
    %1118 = vmatpush1.msra.mxu0 0.0
    %1119 = vmatprep.subr.mxu0 0.0
    %1120 = vmatpush1.msra.mxu0 0.0
    %1121 = vmatprep.subr.mxu0 0.0
    %1122 = vmatpush1.msra.mxu0 0.0
    %1123 = vmatprep.subr.mxu0 0.0
    %1124 = vmatpush1.msra.mxu0 0.0
    %1125 = vmatprep.subr.mxu0 0.0
    %1126 = vmatpush1.msra.mxu0 0.0
    %1127 = vmatprep.subr.mxu0 0.0
    %1128 = vmatpush1.msra.mxu0 0.0
    %1129 = vmatprep.subr.mxu0 0.0
    %1130 = vmatpush1.msra.mxu0 0.0
    %1131 = vmatprep.subr.mxu0 0.0
    %1132 = vmatpush1.msra.mxu0 0.0
    %1133 = vmatprep.subr.mxu0 0.0
    %1134 = vmatpush1.msra.mxu0 0.0
    %1135 = vmatprep.subr.mxu0 0.0
    %1136 = vmatpush1.msra.mxu0 0.0
    %1137 = vmatprep.subr.mxu0 0.0
    %1138 = vmatpush1.msra.mxu0 0.0
    %1139 = vmatprep.subr.mxu0 0.0
    %1140 = vmatpush1.msra.mxu0 0.0
    %1141 = vmatprep.subr.mxu0 0.0
    %1142 = vmatpush1.msra.mxu0 0.0
    %1143 = vmatprep.subr.mxu0 0.0
    %1144 = vmatpush1.msra.mxu0 0.0
    %1145 = vmatprep.subr.mxu0 0.0
    %1146 = vmatpush1.msra.mxu0 0.0
    %1147 = vmatprep.subr.mxu0 0.0
    %1148 = vmatpush1.msra.mxu0 0.0
    %1149 = vmatprep.subr.mxu0 0.0
    %1150 = vmatpush1.msra.mxu0 0.0
    %1151 = vmatprep.subr.mxu0 0.0
    %1152 = vmatpush1.msra.mxu0 0.0
    %1153 = vmatprep.mubr.f32.mxu0 0.0
    %1154 = vmatmul.mubr.f32.gmra.mrb[0].mxu0 %v1087
    %v1155 = vpop.f32.mrb[0].mxu0
    %v1156 = vadd.f32 0.0, %v1155
    %v1157 = vpop.f32.mrb[0].mxu0
    %1158 = vdwg.mxu0
    %v1159 = vadd.f32 %v916, %v1156
    %v1160 = vld [vmem:[%s0] sm:$0xff]
    %v1161 = vadd.f32 %v1160, %v1159
    %v1163 = vlaneseq
    %v1164 = vshrl.u32 %v1163, 7
    %v1165 = vsub.s32 0, %v1164
    %v1166 = vrot.slane %v189, %v1165
    %v1168 = vadd.f32 %v1161, %v1166
    %1169 = vst.msk [vmem:[#allocation3] sm:$0xff] %vm45, %v1168
    %1171 = vrot.lane.b32.xlu0 %v177, 96
    %v1172 = vpop.permute.xlu0 %1171
    %v1173 = vsel %vm193, %v177, 0
    %v1175 = vsel %vm193, %v1172, 0
    %1177 = vmatprep.subr.mxu0 0.0
    %1178 = vmatpush1.xpose.msra.mxu0 %v1175
    %1179 = vmatprep.subr.mxu0 0.0
    %1180 = vmatpush1.xpose.msra.mxu0 0.0
    %1181 = vmatprep.subr.mxu0 0.0
    %1182 = vmatpush1.xpose.msra.mxu0 0.0
    %1183 = vmatprep.subr.mxu0 0.0
    %1184 = vmatpush1.xpose.msra.mxu0 0.0
    %1185 = vmatprep.subr.mxu0 0.0
    %1186 = vmatpush1.xpose.msra.mxu0 0.0
    %1187 = vmatprep.subr.mxu0 0.0
    %1188 = vmatpush1.xpose.msra.mxu0 0.0
    %1189 = vmatprep.subr.mxu0 0.0
    %1190 = vmatpush1.xpose.msra.mxu0 0.0
    %1191 = vmatprep.subr.mxu0 0.0
    %1192 = vmatpush1.xpose.msra.mxu0 0.0
    %1193 = vmatprep.subr.mxu0 0.0
    %1194 = vmatpush1.xpose.msra.mxu0 0.0
    %1195 = vmatprep.subr.mxu0 0.0
    %1196 = vmatpush1.xpose.msra.mxu0 0.0
    %1197 = vmatprep.subr.mxu0 0.0
    %1198 = vmatpush1.xpose.msra.mxu0 0.0
    %1199 = vmatprep.subr.mxu0 0.0
    %1200 = vmatpush1.xpose.msra.mxu0 0.0
    %1201 = vmatprep.subr.mxu0 0.0
    %1202 = vmatpush1.xpose.msra.mxu0 0.0
    %1203 = vmatprep.subr.mxu0 0.0
    %1204 = vmatpush1.xpose.msra.mxu0 0.0
    %1205 = vmatprep.subr.mxu0 0.0
    %1206 = vmatpush1.xpose.msra.mxu0 0.0
    %1207 = vmatprep.subr.mxu0 0.0
    %1208 = vmatpush1.xpose.msra.mxu0 0.0
    %1209 = vmatprep.subr.mxu0 0.0
    %1210 = vmatpush1.xpose.msra.mxu0 0.0
    %1211 = vmatprep.subr.mxu0 0.0
    %1212 = vmatpush1.xpose.msra.mxu0 0.0
    %1213 = vmatprep.subr.mxu0 0.0
    %1214 = vmatpush1.xpose.msra.mxu0 0.0
    %1215 = vmatprep.subr.mxu0 0.0
    %1216 = vmatpush1.xpose.msra.mxu0 0.0
    %1217 = vmatprep.subr.mxu0 0.0
    %1218 = vmatpush1.xpose.msra.mxu0 0.0
    %1219 = vmatprep.subr.mxu0 0.0
    %1220 = vmatpush1.xpose.msra.mxu0 0.0
    %1221 = vmatprep.subr.mxu0 0.0
    %1222 = vmatpush1.xpose.msra.mxu0 0.0
    %1223 = vmatprep.subr.mxu0 0.0
    %1224 = vmatpush1.xpose.msra.mxu0 0.0
    %1225 = vmatprep.subr.mxu0 0.0
    %1226 = vmatpush1.xpose.msra.mxu0 0.0
    %1227 = vmatprep.subr.mxu0 0.0
    %1228 = vmatpush1.xpose.msra.mxu0 0.0
    %1229 = vmatprep.subr.mxu0 0.0
    %1230 = vmatpush1.xpose.msra.mxu0 0.0
    %1231 = vmatprep.subr.mxu0 0.0
    %1232 = vmatpush1.xpose.msra.mxu0 0.0
    %1233 = vmatprep.subr.mxu0 0.0
    %1234 = vmatpush1.xpose.msra.mxu0 0.0
    %1235 = vmatprep.subr.mxu0 0.0
    %1236 = vmatpush1.xpose.msra.mxu0 0.0
    %1237 = vmatprep.subr.mxu0 0.0
    %1238 = vmatpush1.xpose.msra.mxu0 0.0
    %1239 = vmatprep.subr.mxu0 0.0
    %1240 = vmatpush1.xpose.msra.mxu0 0.0
    %1241 = vmatprep.mubr.f32.mxu0 0.0
    %1242 = vmatmul.mubr.f32.gmra.mrb[0].mxu0 %v1173
    %v1243 = vpop.f32.mrb[0].mxu0
    %v1244 = vadd.f32 0.0, %v1243
    %v1245 = vpop.f32.mrb[0].mxu0
    %1246 = vdwg.mxu0
    %v1247 = vsel %vm184, -1e+30, %v1244
    %v1248 = vsel %vm193, %v1247, -inf
    %1249 = vmax.xlane.f32.xlu0 %v1248
    %v1250 = vpop.xlane.xlu0 %1249
    %v1251 = vsub.f32 %v1247, %v1250
    %v1252 = vmul.f32 %v1251, 1.442695
    %v1253 = vpow.pop %v1252
    %v1254 = vsel %vm193, %v1253, 0.0
    %1255 = vadd.xlane.f32.xlu0 %v1254
    %v1256 = vpop.xlane.xlu0 %1255
    %v1257 = vrcp.pop %v1256
    %v1258 = vmul.f32 %v1256, %v1257
    %v1259 = vsub.f32 2.0, %v1258
    %v1260 = vmul.f32 %v1257, %v1259
    %v1261 = vmul.f32 %v1253, %v1260
    %1262 = vrot.lane.b32.xlu0 %v177, 64
    %v1263 = vpop.permute.xlu0 %1262
    %v1266 = vsel %vm193, %v1261, 0
    %1268 = vmatprep.subr.mxu0 0.0
    %1269 = vmatpush1.msra.mxu0 %v1263
    %1270 = vmatprep.subr.mxu0 0.0
    %1271 = vmatpush1.msra.mxu0 0.0
    %1272 = vmatprep.subr.mxu0 0.0
    %1273 = vmatpush1.msra.mxu0 0.0
    %1274 = vmatprep.subr.mxu0 0.0
    %1275 = vmatpush1.msra.mxu0 0.0
    %1276 = vmatprep.subr.mxu0 0.0
    %1277 = vmatpush1.msra.mxu0 0.0
    %1278 = vmatprep.subr.mxu0 0.0
    %1279 = vmatpush1.msra.mxu0 0.0
    %1280 = vmatprep.subr.mxu0 0.0
    %1281 = vmatpush1.msra.mxu0 0.0
    %1282 = vmatprep.subr.mxu0 0.0
    %1283 = vmatpush1.msra.mxu0 0.0
    %1284 = vmatprep.subr.mxu0 0.0
    %1285 = vmatpush1.msra.mxu0 0.0
    %1286 = vmatprep.subr.mxu0 0.0
    %1287 = vmatpush1.msra.mxu0 0.0
    %1288 = vmatprep.subr.mxu0 0.0
    %1289 = vmatpush1.msra.mxu0 0.0
    %1290 = vmatprep.subr.mxu0 0.0
    %1291 = vmatpush1.msra.mxu0 0.0
    %1292 = vmatprep.subr.mxu0 0.0
    %1293 = vmatpush1.msra.mxu0 0.0
    %1294 = vmatprep.subr.mxu0 0.0
    %1295 = vmatpush1.msra.mxu0 0.0
    %1296 = vmatprep.subr.mxu0 0.0
    %1297 = vmatpush1.msra.mxu0 0.0
    %1298 = vmatprep.subr.mxu0 0.0
    %1299 = vmatpush1.msra.mxu0 0.0
    %1300 = vmatprep.subr.mxu0 0.0
    %1301 = vmatpush1.msra.mxu0 0.0
    %1302 = vmatprep.subr.mxu0 0.0
    %1303 = vmatpush1.msra.mxu0 0.0
    %1304 = vmatprep.subr.mxu0 0.0
    %1305 = vmatpush1.msra.mxu0 0.0
    %1306 = vmatprep.subr.mxu0 0.0
    %1307 = vmatpush1.msra.mxu0 0.0
    %1308 = vmatprep.subr.mxu0 0.0
    %1309 = vmatpush1.msra.mxu0 0.0
    %1310 = vmatprep.subr.mxu0 0.0
    %1311 = vmatpush1.msra.mxu0 0.0
    %1312 = vmatprep.subr.mxu0 0.0
    %1313 = vmatpush1.msra.mxu0 0.0
    %1314 = vmatprep.subr.mxu0 0.0
    %1315 = vmatpush1.msra.mxu0 0.0
    %1316 = vmatprep.subr.mxu0 0.0
    %1317 = vmatpush1.msra.mxu0 0.0
    %1318 = vmatprep.subr.mxu0 0.0
    %1319 = vmatpush1.msra.mxu0 0.0
    %1320 = vmatprep.subr.mxu0 0.0
    %1321 = vmatpush1.msra.mxu0 0.0
    %1322 = vmatprep.subr.mxu0 0.0
    %1323 = vmatpush1.msra.mxu0 0.0
    %1324 = vmatprep.subr.mxu0 0.0
    %1325 = vmatpush1.msra.mxu0 0.0
    %1326 = vmatprep.subr.mxu0 0.0
    %1327 = vmatpush1.msra.mxu0 0.0
    %1328 = vmatprep.subr.mxu0 0.0
    %1329 = vmatpush1.msra.mxu0 0.0
    %1330 = vmatprep.subr.mxu0 0.0
    %1331 = vmatpush1.msra.mxu0 0.0
    %1332 = vmatprep.mubr.f32.mxu0 0.0
    %1333 = vmatmul.mubr.f32.gmra.mrb[0].mxu0 %v1266
    %v1334 = vpop.f32.mrb[0].mxu0
    %v1335 = vadd.f32 0.0, %v1334
    %v1336 = vpop.f32.mrb[0].mxu0
    %1337 = vdwg.mxu0
    %1338 = vrot.lane.b32.xlu0 %v177, 120
    %v1339 = vpop.permute.xlu0 %1338
    %1340 = vrot.lane.b32.xlu0 %v177, 88
    %v1341 = vpop.permute.xlu0 %1340
    %v1342 = vsel %vm193, %v1339, 0
    %v1344 = vsel %vm193, %v1341, 0
    %1346 = vmatprep.subr.mxu0 0.0
    %1347 = vmatpush1.xpose.msra.mxu0 %v1344
    %1348 = vmatprep.subr.mxu0 0.0
    %1349 = vmatpush1.xpose.msra.mxu0 0.0
    %1350 = vmatprep.subr.mxu0 0.0
    %1351 = vmatpush1.xpose.msra.mxu0 0.0
    %1352 = vmatprep.subr.mxu0 0.0
    %1353 = vmatpush1.xpose.msra.mxu0 0.0
    %1354 = vmatprep.subr.mxu0 0.0
    %1355 = vmatpush1.xpose.msra.mxu0 0.0
    %1356 = vmatprep.subr.mxu0 0.0
    %1357 = vmatpush1.xpose.msra.mxu0 0.0
    %1358 = vmatprep.subr.mxu0 0.0
    %1359 = vmatpush1.xpose.msra.mxu0 0.0
    %1360 = vmatprep.subr.mxu0 0.0
    %1361 = vmatpush1.xpose.msra.mxu0 0.0
    %1362 = vmatprep.subr.mxu0 0.0
    %1363 = vmatpush1.xpose.msra.mxu0 0.0
    %1364 = vmatprep.subr.mxu0 0.0
    %1365 = vmatpush1.xpose.msra.mxu0 0.0
    %1366 = vmatprep.subr.mxu0 0.0
    %1367 = vmatpush1.xpose.msra.mxu0 0.0
    %1368 = vmatprep.subr.mxu0 0.0
    %1369 = vmatpush1.xpose.msra.mxu0 0.0
    %1370 = vmatprep.subr.mxu0 0.0
    %1371 = vmatpush1.xpose.msra.mxu0 0.0
    %1372 = vmatprep.subr.mxu0 0.0
    %1373 = vmatpush1.xpose.msra.mxu0 0.0
    %1374 = vmatprep.subr.mxu0 0.0
    %1375 = vmatpush1.xpose.msra.mxu0 0.0
    %1376 = vmatprep.subr.mxu0 0.0
    %1377 = vmatpush1.xpose.msra.mxu0 0.0
    %1378 = vmatprep.subr.mxu0 0.0
    %1379 = vmatpush1.xpose.msra.mxu0 0.0
    %1380 = vmatprep.subr.mxu0 0.0
    %1381 = vmatpush1.xpose.msra.mxu0 0.0
    %1382 = vmatprep.subr.mxu0 0.0
    %1383 = vmatpush1.xpose.msra.mxu0 0.0
    %1384 = vmatprep.subr.mxu0 0.0
    %1385 = vmatpush1.xpose.msra.mxu0 0.0
    %1386 = vmatprep.subr.mxu0 0.0
    %1387 = vmatpush1.xpose.msra.mxu0 0.0
    %1388 = vmatprep.subr.mxu0 0.0
    %1389 = vmatpush1.xpose.msra.mxu0 0.0
    %1390 = vmatprep.subr.mxu0 0.0
    %1391 = vmatpush1.xpose.msra.mxu0 0.0
    %1392 = vmatprep.subr.mxu0 0.0
    %1393 = vmatpush1.xpose.msra.mxu0 0.0
    %1394 = vmatprep.subr.mxu0 0.0
    %1395 = vmatpush1.xpose.msra.mxu0 0.0
    %1396 = vmatprep.subr.mxu0 0.0
    %1397 = vmatpush1.xpose.msra.mxu0 0.0
    %1398 = vmatprep.subr.mxu0 0.0
    %1399 = vmatpush1.xpose.msra.mxu0 0.0
    %1400 = vmatprep.subr.mxu0 0.0
    %1401 = vmatpush1.xpose.msra.mxu0 0.0
    %1402 = vmatprep.subr.mxu0 0.0
    %1403 = vmatpush1.xpose.msra.mxu0 0.0
    %1404 = vmatprep.subr.mxu0 0.0
    %1405 = vmatpush1.xpose.msra.mxu0 0.0
    %1406 = vmatprep.subr.mxu0 0.0
    %1407 = vmatpush1.xpose.msra.mxu0 0.0
    %1408 = vmatprep.subr.mxu0 0.0
    %1409 = vmatpush1.xpose.msra.mxu0 0.0
    %1410 = vmatprep.mubr.f32.mxu0 0.0
    %1411 = vmatmul.mubr.f32.gmra.mrb[0].mxu0 %v1342
    %v1412 = vpop.f32.mrb[0].mxu0
    %v1413 = vadd.f32 0.0, %v1412
    %v1414 = vpop.f32.mrb[0].mxu0
    %1415 = vdwg.mxu0
    %v1416 = vsel %vm184, -1e+30, %v1413
    %v1417 = vsel %vm193, %v1416, -inf
    %1418 = vmax.xlane.f32.xlu0 %v1417
    %v1419 = vpop.xlane.xlu0 %1418
    %v1420 = vsub.f32 %v1416, %v1419
    %v1421 = vmul.f32 %v1420, 1.442695
    %v1422 = vpow.pop %v1421
    %v1423 = vsel %vm193, %v1422, 0.0
    %1424 = vadd.xlane.f32.xlu0 %v1423
    %v1425 = vpop.xlane.xlu0 %1424
    %v1426 = vrcp.pop %v1425
    %v1427 = vmul.f32 %v1425, %v1426
    %v1428 = vsub.f32 2.0, %v1427
    %v1429 = vmul.f32 %v1426, %v1428
    %v1430 = vmul.f32 %v1422, %v1429
    %1431 = vrot.lane.b32.xlu0 %v177, 56
    %v1432 = vpop.permute.xlu0 %1431
    %v1435 = vsel %vm193, %v1430, 0
    %1437 = vmatprep.subr.mxu0 0.0
    %1438 = vmatpush1.msra.mxu0 %v1432
    %1439 = vmatprep.subr.mxu0 0.0
    %1440 = vmatpush1.msra.mxu0 0.0
    %1441 = vmatprep.subr.mxu0 0.0
    %1442 = vmatpush1.msra.mxu0 0.0
    %1443 = vmatprep.subr.mxu0 0.0
    %1444 = vmatpush1.msra.mxu0 0.0
    %1445 = vmatprep.subr.mxu0 0.0
    %1446 = vmatpush1.msra.mxu0 0.0
    %1447 = vmatprep.subr.mxu0 0.0
    %1448 = vmatpush1.msra.mxu0 0.0
    %1449 = vmatprep.subr.mxu0 0.0
    %1450 = vmatpush1.msra.mxu0 0.0
    %1451 = vmatprep.subr.mxu0 0.0
    %1452 = vmatpush1.msra.mxu0 0.0
    %1453 = vmatprep.subr.mxu0 0.0
    %1454 = vmatpush1.msra.mxu0 0.0
    %1455 = vmatprep.subr.mxu0 0.0
    %1456 = vmatpush1.msra.mxu0 0.0
    %1457 = vmatprep.subr.mxu0 0.0
    %1458 = vmatpush1.msra.mxu0 0.0
    %1459 = vmatprep.subr.mxu0 0.0
    %1460 = vmatpush1.msra.mxu0 0.0
    %1461 = vmatprep.subr.mxu0 0.0
    %1462 = vmatpush1.msra.mxu0 0.0
    %1463 = vmatprep.subr.mxu0 0.0
    %1464 = vmatpush1.msra.mxu0 0.0
    %1465 = vmatprep.subr.mxu0 0.0
    %1466 = vmatpush1.msra.mxu0 0.0
    %1467 = vmatprep.subr.mxu0 0.0
    %1468 = vmatpush1.msra.mxu0 0.0
    %1469 = vmatprep.subr.mxu0 0.0
    %1470 = vmatpush1.msra.mxu0 0.0
    %1471 = vmatprep.subr.mxu0 0.0
    %1472 = vmatpush1.msra.mxu0 0.0
    %1473 = vmatprep.subr.mxu0 0.0
    %1474 = vmatpush1.msra.mxu0 0.0
    %1475 = vmatprep.subr.mxu0 0.0
    %1476 = vmatpush1.msra.mxu0 0.0
    %1477 = vmatprep.subr.mxu0 0.0
    %1478 = vmatpush1.msra.mxu0 0.0
    %1479 = vmatprep.subr.mxu0 0.0
    %1480 = vmatpush1.msra.mxu0 0.0
    %1481 = vmatprep.subr.mxu0 0.0
    %1482 = vmatpush1.msra.mxu0 0.0
    %1483 = vmatprep.subr.mxu0 0.0
    %1484 = vmatpush1.msra.mxu0 0.0
    %1485 = vmatprep.subr.mxu0 0.0
    %1486 = vmatpush1.msra.mxu0 0.0
    %1487 = vmatprep.subr.mxu0 0.0
    %1488 = vmatpush1.msra.mxu0 0.0
    %1489 = vmatprep.subr.mxu0 0.0
    %1490 = vmatpush1.msra.mxu0 0.0
    %1491 = vmatprep.subr.mxu0 0.0
    %1492 = vmatpush1.msra.mxu0 0.0
    %1493 = vmatprep.subr.mxu0 0.0
    %1494 = vmatpush1.msra.mxu0 0.0
    %1495 = vmatprep.subr.mxu0 0.0
    %1496 = vmatpush1.msra.mxu0 0.0
    %1497 = vmatprep.subr.mxu0 0.0
    %1498 = vmatpush1.msra.mxu0 0.0
    %1499 = vmatprep.subr.mxu0 0.0
    %1500 = vmatpush1.msra.mxu0 0.0
    %1501 = vmatprep.mubr.f32.mxu0 0.0
    %1502 = vmatmul.mubr.f32.gmra.mrb[0].mxu0 %v1435
    %v1503 = vpop.f32.mrb[0].mxu0
    %v1504 = vadd.f32 0.0, %v1503
    %v1505 = vpop.f32.mrb[0].mxu0
    %1506 = vdwg.mxu0
    %v1508 = vsel %vm193, %v1504, 0
    %1510 = vmatprep.subr.mxu0 0.0
    %1511 = vmatpush1.msra.mxu0 %v186
    %1512 = vmatprep.subr.mxu0 0.0
    %1513 = vmatpush1.msra.mxu0 0.0
    %1514 = vmatprep.subr.mxu0 0.0
    %1515 = vmatpush1.msra.mxu0 0.0
    %1516 = vmatprep.subr.mxu0 0.0
    %1517 = vmatpush1.msra.mxu0 0.0
    %1518 = vmatprep.subr.mxu0 0.0
    %1519 = vmatpush1.msra.mxu0 0.0
    %1520 = vmatprep.subr.mxu0 0.0
    %1521 = vmatpush1.msra.mxu0 0.0
    %1522 = vmatprep.subr.mxu0 0.0
    %1523 = vmatpush1.msra.mxu0 0.0
    %1524 = vmatprep.subr.mxu0 0.0
    %1525 = vmatpush1.msra.mxu0 0.0
    %1526 = vmatprep.subr.mxu0 0.0
    %1527 = vmatpush1.msra.mxu0 0.0
    %1528 = vmatprep.subr.mxu0 0.0
    %1529 = vmatpush1.msra.mxu0 0.0
    %1530 = vmatprep.subr.mxu0 0.0
    %1531 = vmatpush1.msra.mxu0 0.0
    %1532 = vmatprep.subr.mxu0 0.0
    %1533 = vmatpush1.msra.mxu0 0.0
    %1534 = vmatprep.subr.mxu0 0.0
    %1535 = vmatpush1.msra.mxu0 0.0
    %1536 = vmatprep.subr.mxu0 0.0
    %1537 = vmatpush1.msra.mxu0 0.0
    %1538 = vmatprep.subr.mxu0 0.0
    %1539 = vmatpush1.msra.mxu0 0.0
    %1540 = vmatprep.subr.mxu0 0.0
    %1541 = vmatpush1.msra.mxu0 0.0
    %1542 = vmatprep.subr.mxu0 0.0
    %1543 = vmatpush1.msra.mxu0 0.0
    %1544 = vmatprep.subr.mxu0 0.0
    %1545 = vmatpush1.msra.mxu0 0.0
    %1546 = vmatprep.subr.mxu0 0.0
    %1547 = vmatpush1.msra.mxu0 0.0
    %1548 = vmatprep.subr.mxu0 0.0
    %1549 = vmatpush1.msra.mxu0 0.0
    %1550 = vmatprep.subr.mxu0 0.0
    %1551 = vmatpush1.msra.mxu0 0.0
    %1552 = vmatprep.subr.mxu0 0.0
    %1553 = vmatpush1.msra.mxu0 0.0
    %1554 = vmatprep.subr.mxu0 0.0
    %1555 = vmatpush1.msra.mxu0 0.0
    %1556 = vmatprep.subr.mxu0 0.0
    %1557 = vmatpush1.msra.mxu0 0.0
    %1558 = vmatprep.subr.mxu0 0.0
    %1559 = vmatpush1.msra.mxu0 0.0
    %1560 = vmatprep.subr.mxu0 0.0
    %1561 = vmatpush1.msra.mxu0 0.0
    %1562 = vmatprep.subr.mxu0 0.0
    %1563 = vmatpush1.msra.mxu0 0.0
    %1564 = vmatprep.subr.mxu0 0.0
    %1565 = vmatpush1.msra.mxu0 0.0
    %1566 = vmatprep.subr.mxu0 0.0
    %1567 = vmatpush1.msra.mxu0 0.0
    %1568 = vmatprep.subr.mxu0 0.0
    %1569 = vmatpush1.msra.mxu0 0.0
    %1570 = vmatprep.subr.mxu0 0.0
    %1571 = vmatpush1.msra.mxu0 0.0
    %1572 = vmatprep.subr.mxu0 0.0
    %1573 = vmatpush1.msra.mxu0 0.0
    %1574 = vmatprep.mubr.f32.mxu0 0.0
    %1575 = vmatmul.mubr.f32.gmra.mrb[0].mxu0 %v1508
    %v1576 = vpop.f32.mrb[0].mxu0
    %v1577 = vadd.f32 0.0, %v1576
    %v1578 = vpop.f32.mrb[0].mxu0
    %1579 = vdwg.mxu0
    %v1581 = vsel %vm193, %v1335, 0
    %1583 = vmatprep.subr.mxu0 0.0
    %1584 = vmatpush1.msra.mxu0 %v185
    %1585 = vmatprep.subr.mxu0 0.0
    %1586 = vmatpush1.msra.mxu0 0.0
    %1587 = vmatprep.subr.mxu0 0.0
    %1588 = vmatpush1.msra.mxu0 0.0
    %1589 = vmatprep.subr.mxu0 0.0
    %1590 = vmatpush1.msra.mxu0 0.0
    %1591 = vmatprep.subr.mxu0 0.0
    %1592 = vmatpush1.msra.mxu0 0.0
    %1593 = vmatprep.subr.mxu0 0.0
    %1594 = vmatpush1.msra.mxu0 0.0
    %1595 = vmatprep.subr.mxu0 0.0
    %1596 = vmatpush1.msra.mxu0 0.0
    %1597 = vmatprep.subr.mxu0 0.0
    %1598 = vmatpush1.msra.mxu0 0.0
    %1599 = vmatprep.subr.mxu0 0.0
    %1600 = vmatpush1.msra.mxu0 0.0
    %1601 = vmatprep.subr.mxu0 0.0
    %1602 = vmatpush1.msra.mxu0 0.0
    %1603 = vmatprep.subr.mxu0 0.0
    %1604 = vmatpush1.msra.mxu0 0.0
    %1605 = vmatprep.subr.mxu0 0.0
    %1606 = vmatpush1.msra.mxu0 0.0
    %1607 = vmatprep.subr.mxu0 0.0
    %1608 = vmatpush1.msra.mxu0 0.0
    %1609 = vmatprep.subr.mxu0 0.0
    %1610 = vmatpush1.msra.mxu0 0.0
    %1611 = vmatprep.subr.mxu0 0.0
    %1612 = vmatpush1.msra.mxu0 0.0
    %1613 = vmatprep.subr.mxu0 0.0
    %1614 = vmatpush1.msra.mxu0 0.0
    %1615 = vmatprep.subr.mxu0 0.0
    %1616 = vmatpush1.msra.mxu0 0.0
    %1617 = vmatprep.subr.mxu0 0.0
    %1618 = vmatpush1.msra.mxu0 0.0
    %1619 = vmatprep.subr.mxu0 0.0
    %1620 = vmatpush1.msra.mxu0 0.0
    %1621 = vmatprep.subr.mxu0 0.0
    %1622 = vmatpush1.msra.mxu0 0.0
    %1623 = vmatprep.subr.mxu0 0.0
    %1624 = vmatpush1.msra.mxu0 0.0
    %1625 = vmatprep.subr.mxu0 0.0
    %1626 = vmatpush1.msra.mxu0 0.0
    %1627 = vmatprep.subr.mxu0 0.0
    %1628 = vmatpush1.msra.mxu0 0.0
    %1629 = vmatprep.subr.mxu0 0.0
    %1630 = vmatpush1.msra.mxu0 0.0
    %1631 = vmatprep.subr.mxu0 0.0
    %1632 = vmatpush1.msra.mxu0 0.0
    %1633 = vmatprep.subr.mxu0 0.0
    %1634 = vmatpush1.msra.mxu0 0.0
    %1635 = vmatprep.subr.mxu0 0.0
    %1636 = vmatpush1.msra.mxu0 0.0
    %1637 = vmatprep.subr.mxu0 0.0
    %1638 = vmatpush1.msra.mxu0 0.0
    %1639 = vmatprep.subr.mxu0 0.0
    %1640 = vmatpush1.msra.mxu0 0.0
    %1641 = vmatprep.subr.mxu0 0.0
    %1642 = vmatpush1.msra.mxu0 0.0
    %1643 = vmatprep.subr.mxu0 0.0
    %1644 = vmatpush1.msra.mxu0 0.0
    %1645 = vmatprep.subr.mxu0 0.0
    %1646 = vmatpush1.msra.mxu0 0.0
    %1647 = vmatprep.mubr.f32.mxu0 0.0
    %1648 = vmatmul.mubr.f32.gmra.mrb[0].mxu0 %v1581
    %v1649 = vpop.f32.mrb[0].mxu0
    %v1650 = vadd.f32 %v1577, %v1649
    %v1651 = vpop.f32.mrb[0].mxu0
    %1652 = vdwg.mxu0
    %1653 = vrot.lane.b32.xlu0 %v177, 112
    %v1654 = vpop.permute.xlu0 %1653
    %1655 = vrot.lane.b32.xlu0 %v177, 80
    %v1656 = vpop.permute.xlu0 %1655
    %v1657 = vsel %vm193, %v1654, 0
    %v1659 = vsel %vm193, %v1656, 0
    %1661 = vmatprep.subr.mxu0 0.0
    %1662 = vmatpush1.xpose.msra.mxu0 %v1659
    %1663 = vmatprep.subr.mxu0 0.0
    %1664 = vmatpush1.xpose.msra.mxu0 0.0
    %1665 = vmatprep.subr.mxu0 0.0
    %1666 = vmatpush1.xpose.msra.mxu0 0.0
    %1667 = vmatprep.subr.mxu0 0.0
    %1668 = vmatpush1.xpose.msra.mxu0 0.0
    %1669 = vmatprep.subr.mxu0 0.0
    %1670 = vmatpush1.xpose.msra.mxu0 0.0
    %1671 = vmatprep.subr.mxu0 0.0
    %1672 = vmatpush1.xpose.msra.mxu0 0.0
    %1673 = vmatprep.subr.mxu0 0.0
    %1674 = vmatpush1.xpose.msra.mxu0 0.0
    %1675 = vmatprep.subr.mxu0 0.0
    %1676 = vmatpush1.xpose.msra.mxu0 0.0
    %1677 = vmatprep.subr.mxu0 0.0
    %1678 = vmatpush1.xpose.msra.mxu0 0.0
    %1679 = vmatprep.subr.mxu0 0.0
    %1680 = vmatpush1.xpose.msra.mxu0 0.0
    %1681 = vmatprep.subr.mxu0 0.0
    %1682 = vmatpush1.xpose.msra.mxu0 0.0
    %1683 = vmatprep.subr.mxu0 0.0
    %1684 = vmatpush1.xpose.msra.mxu0 0.0
    %1685 = vmatprep.subr.mxu0 0.0
    %1686 = vmatpush1.xpose.msra.mxu0 0.0
    %1687 = vmatprep.subr.mxu0 0.0
    %1688 = vmatpush1.xpose.msra.mxu0 0.0
    %1689 = vmatprep.subr.mxu0 0.0
    %1690 = vmatpush1.xpose.msra.mxu0 0.0
    %1691 = vmatprep.subr.mxu0 0.0
    %1692 = vmatpush1.xpose.msra.mxu0 0.0
    %1693 = vmatprep.subr.mxu0 0.0
    %1694 = vmatpush1.xpose.msra.mxu0 0.0
    %1695 = vmatprep.subr.mxu0 0.0
    %1696 = vmatpush1.xpose.msra.mxu0 0.0
    %1697 = vmatprep.subr.mxu0 0.0
    %1698 = vmatpush1.xpose.msra.mxu0 0.0
    %1699 = vmatprep.subr.mxu0 0.0
    %1700 = vmatpush1.xpose.msra.mxu0 0.0
    %1701 = vmatprep.subr.mxu0 0.0
    %1702 = vmatpush1.xpose.msra.mxu0 0.0
    %1703 = vmatprep.subr.mxu0 0.0
    %1704 = vmatpush1.xpose.msra.mxu0 0.0
    %1705 = vmatprep.subr.mxu0 0.0
    %1706 = vmatpush1.xpose.msra.mxu0 0.0
    %1707 = vmatprep.subr.mxu0 0.0
    %1708 = vmatpush1.xpose.msra.mxu0 0.0
    %1709 = vmatprep.subr.mxu0 0.0
    %1710 = vmatpush1.xpose.msra.mxu0 0.0
    %1711 = vmatprep.subr.mxu0 0.0
    %1712 = vmatpush1.xpose.msra.mxu0 0.0
    %1713 = vmatprep.subr.mxu0 0.0
    %1714 = vmatpush1.xpose.msra.mxu0 0.0
    %1715 = vmatprep.subr.mxu0 0.0
    %1716 = vmatpush1.xpose.msra.mxu0 0.0
    %1717 = vmatprep.subr.mxu0 0.0
    %1718 = vmatpush1.xpose.msra.mxu0 0.0
    %1719 = vmatprep.subr.mxu0 0.0
    %1720 = vmatpush1.xpose.msra.mxu0 0.0
    %1721 = vmatprep.subr.mxu0 0.0
    %1722 = vmatpush1.xpose.msra.mxu0 0.0
    %1723 = vmatprep.subr.mxu0 0.0
    %1724 = vmatpush1.xpose.msra.mxu0 0.0
    %1725 = vmatprep.mubr.f32.mxu0 0.0
    %1726 = vmatmul.mubr.f32.gmra.mrb[0].mxu0 %v1657
    %v1727 = vpop.f32.mrb[0].mxu0
    %v1728 = vadd.f32 0.0, %v1727
    %v1729 = vpop.f32.mrb[0].mxu0
    %1730 = vdwg.mxu0
    %v1731 = vsel %vm184, -1e+30, %v1728
    %v1732 = vsel %vm193, %v1731, -inf
    %1733 = vmax.xlane.f32.xlu0 %v1732
    %v1734 = vpop.xlane.xlu0 %1733
    %v1735 = vsub.f32 %v1731, %v1734
    %v1736 = vmul.f32 %v1735, 1.442695
    %v1737 = vpow.pop %v1736
    %v1738 = vsel %vm193, %v1737, 0.0
    %1739 = vadd.xlane.f32.xlu0 %v1738
    %v1740 = vpop.xlane.xlu0 %1739
    %v1741 = vrcp.pop %v1740
    %v1742 = vmul.f32 %v1740, %v1741
    %v1743 = vsub.f32 2.0, %v1742
    %v1744 = vmul.f32 %v1741, %v1743
    %v1745 = vmul.f32 %v1737, %v1744
    %1746 = vrot.lane.b32.xlu0 %v177, 48
    %v1747 = vpop.permute.xlu0 %1746
    %v1750 = vsel %vm193, %v1745, 0
    %1752 = vmatprep.subr.mxu0 0.0
    %1753 = vmatpush1.msra.mxu0 %v1747
    %1754 = vmatprep.subr.mxu0 0.0
    %1755 = vmatpush1.msra.mxu0 0.0
    %1756 = vmatprep.subr.mxu0 0.0
    %1757 = vmatpush1.msra.mxu0 0.0
    %1758 = vmatprep.subr.mxu0 0.0
    %1759 = vmatpush1.msra.mxu0 0.0
    %1760 = vmatprep.subr.mxu0 0.0
    %1761 = vmatpush1.msra.mxu0 0.0
    %1762 = vmatprep.subr.mxu0 0.0
    %1763 = vmatpush1.msra.mxu0 0.0
    %1764 = vmatprep.subr.mxu0 0.0
    %1765 = vmatpush1.msra.mxu0 0.0
    %1766 = vmatprep.subr.mxu0 0.0
    %1767 = vmatpush1.msra.mxu0 0.0
    %1768 = vmatprep.subr.mxu0 0.0
    %1769 = vmatpush1.msra.mxu0 0.0
    %1770 = vmatprep.subr.mxu0 0.0
    %1771 = vmatpush1.msra.mxu0 0.0
    %1772 = vmatprep.subr.mxu0 0.0
    %1773 = vmatpush1.msra.mxu0 0.0
    %1774 = vmatprep.subr.mxu0 0.0
    %1775 = vmatpush1.msra.mxu0 0.0
    %1776 = vmatprep.subr.mxu0 0.0
    %1777 = vmatpush1.msra.mxu0 0.0
    %1778 = vmatprep.subr.mxu0 0.0
    %1779 = vmatpush1.msra.mxu0 0.0
    %1780 = vmatprep.subr.mxu0 0.0
    %1781 = vmatpush1.msra.mxu0 0.0
    %1782 = vmatprep.subr.mxu0 0.0
    %1783 = vmatpush1.msra.mxu0 0.0
    %1784 = vmatprep.subr.mxu0 0.0
    %1785 = vmatpush1.msra.mxu0 0.0
    %1786 = vmatprep.subr.mxu0 0.0
    %1787 = vmatpush1.msra.mxu0 0.0
    %1788 = vmatprep.subr.mxu0 0.0
    %1789 = vmatpush1.msra.mxu0 0.0
    %1790 = vmatprep.subr.mxu0 0.0
    %1791 = vmatpush1.msra.mxu0 0.0
    %1792 = vmatprep.subr.mxu0 0.0
    %1793 = vmatpush1.msra.mxu0 0.0
    %1794 = vmatprep.subr.mxu0 0.0
    %1795 = vmatpush1.msra.mxu0 0.0
    %1796 = vmatprep.subr.mxu0 0.0
    %1797 = vmatpush1.msra.mxu0 0.0
    %1798 = vmatprep.subr.mxu0 0.0
    %1799 = vmatpush1.msra.mxu0 0.0
    %1800 = vmatprep.subr.mxu0 0.0
    %1801 = vmatpush1.msra.mxu0 0.0
    %1802 = vmatprep.subr.mxu0 0.0
    %1803 = vmatpush1.msra.mxu0 0.0
    %1804 = vmatprep.subr.mxu0 0.0
    %1805 = vmatpush1.msra.mxu0 0.0
    %1806 = vmatprep.subr.mxu0 0.0
    %1807 = vmatpush1.msra.mxu0 0.0
    %1808 = vmatprep.subr.mxu0 0.0
    %1809 = vmatpush1.msra.mxu0 0.0
    %1810 = vmatprep.subr.mxu0 0.0
    %1811 = vmatpush1.msra.mxu0 0.0
    %1812 = vmatprep.subr.mxu0 0.0
    %1813 = vmatpush1.msra.mxu0 0.0
    %1814 = vmatprep.subr.mxu0 0.0
    %1815 = vmatpush1.msra.mxu0 0.0
    %1816 = vmatprep.mubr.f32.mxu0 0.0
    %1817 = vmatmul.mubr.f32.gmra.mrb[0].mxu0 %v1750
    %v1818 = vpop.f32.mrb[0].mxu0
    %v1819 = vadd.f32 0.0, %v1818
    %v1820 = vpop.f32.mrb[0].mxu0
    %1821 = vdwg.mxu0
    %v1823 = vsel %vm193, %v1819, 0
    %1825 = vmatprep.subr.mxu0 0.0
    %1826 = vmatpush1.msra.mxu0 %v187
    %1827 = vmatprep.subr.mxu0 0.0
    %1828 = vmatpush1.msra.mxu0 0.0
    %1829 = vmatprep.subr.mxu0 0.0
    %1830 = vmatpush1.msra.mxu0 0.0
    %1831 = vmatprep.subr.mxu0 0.0
    %1832 = vmatpush1.msra.mxu0 0.0
    %1833 = vmatprep.subr.mxu0 0.0
    %1834 = vmatpush1.msra.mxu0 0.0
    %1835 = vmatprep.subr.mxu0 0.0
    %1836 = vmatpush1.msra.mxu0 0.0
    %1837 = vmatprep.subr.mxu0 0.0
    %1838 = vmatpush1.msra.mxu0 0.0
    %1839 = vmatprep.subr.mxu0 0.0
    %1840 = vmatpush1.msra.mxu0 0.0
    %1841 = vmatprep.subr.mxu0 0.0
    %1842 = vmatpush1.msra.mxu0 0.0
    %1843 = vmatprep.subr.mxu0 0.0
    %1844 = vmatpush1.msra.mxu0 0.0
    %1845 = vmatprep.subr.mxu0 0.0
    %1846 = vmatpush1.msra.mxu0 0.0
    %1847 = vmatprep.subr.mxu0 0.0
    %1848 = vmatpush1.msra.mxu0 0.0
    %1849 = vmatprep.subr.mxu0 0.0
    %1850 = vmatpush1.msra.mxu0 0.0
    %1851 = vmatprep.subr.mxu0 0.0
    %1852 = vmatpush1.msra.mxu0 0.0
    %1853 = vmatprep.subr.mxu0 0.0
    %1854 = vmatpush1.msra.mxu0 0.0
    %1855 = vmatprep.subr.mxu0 0.0
    %1856 = vmatpush1.msra.mxu0 0.0
    %1857 = vmatprep.subr.mxu0 0.0
    %1858 = vmatpush1.msra.mxu0 0.0
    %1859 = vmatprep.subr.mxu0 0.0
    %1860 = vmatpush1.msra.mxu0 0.0
    %1861 = vmatprep.subr.mxu0 0.0
    %1862 = vmatpush1.msra.mxu0 0.0
    %1863 = vmatprep.subr.mxu0 0.0
    %1864 = vmatpush1.msra.mxu0 0.0
    %1865 = vmatprep.subr.mxu0 0.0
    %1866 = vmatpush1.msra.mxu0 0.0
    %1867 = vmatprep.subr.mxu0 0.0
    %1868 = vmatpush1.msra.mxu0 0.0
    %1869 = vmatprep.subr.mxu0 0.0
    %1870 = vmatpush1.msra.mxu0 0.0
    %1871 = vmatprep.subr.mxu0 0.0
    %1872 = vmatpush1.msra.mxu0 0.0
    %1873 = vmatprep.subr.mxu0 0.0
    %1874 = vmatpush1.msra.mxu0 0.0
    %1875 = vmatprep.subr.mxu0 0.0
    %1876 = vmatpush1.msra.mxu0 0.0
    %1877 = vmatprep.subr.mxu0 0.0
    %1878 = vmatpush1.msra.mxu0 0.0
    %1879 = vmatprep.subr.mxu0 0.0
    %1880 = vmatpush1.msra.mxu0 0.0
    %1881 = vmatprep.subr.mxu0 0.0
    %1882 = vmatpush1.msra.mxu0 0.0
    %1883 = vmatprep.subr.mxu0 0.0
    %1884 = vmatpush1.msra.mxu0 0.0
    %1885 = vmatprep.subr.mxu0 0.0
    %1886 = vmatpush1.msra.mxu0 0.0
    %1887 = vmatprep.subr.mxu0 0.0
    %1888 = vmatpush1.msra.mxu0 0.0
    %1889 = vmatprep.mubr.f32.mxu0 0.0
    %1890 = vmatmul.mubr.f32.gmra.mrb[0].mxu0 %v1823
    %v1891 = vpop.f32.mrb[0].mxu0
    %v1892 = vadd.f32 0.0, %v1891
    %v1893 = vpop.f32.mrb[0].mxu0
    %1894 = vdwg.mxu0
    %v1895 = vadd.f32 %v1650, %v1892
    %1896 = vrot.lane.b32.xlu0 %v177, 104
    %v1897 = vpop.permute.xlu0 %1896
    %1898 = vrot.lane.b32.xlu0 %v177, 72
    %v1899 = vpop.permute.xlu0 %1898
    %v1900 = vsel %vm193, %v1897, 0
    %v1902 = vsel %vm193, %v1899, 0
    %1904 = vmatprep.subr.mxu0 0.0
    %1905 = vmatpush1.xpose.msra.mxu0 %v1902
    %1906 = vmatprep.subr.mxu0 0.0
    %1907 = vmatpush1.xpose.msra.mxu0 0.0
    %1908 = vmatprep.subr.mxu0 0.0
    %1909 = vmatpush1.xpose.msra.mxu0 0.0
    %1910 = vmatprep.subr.mxu0 0.0
    %1911 = vmatpush1.xpose.msra.mxu0 0.0
    %1912 = vmatprep.subr.mxu0 0.0
    %1913 = vmatpush1.xpose.msra.mxu0 0.0
    %1914 = vmatprep.subr.mxu0 0.0
    %1915 = vmatpush1.xpose.msra.mxu0 0.0
    %1916 = vmatprep.subr.mxu0 0.0
    %1917 = vmatpush1.xpose.msra.mxu0 0.0
    %1918 = vmatprep.subr.mxu0 0.0
    %1919 = vmatpush1.xpose.msra.mxu0 0.0
    %1920 = vmatprep.subr.mxu0 0.0
    %1921 = vmatpush1.xpose.msra.mxu0 0.0
    %1922 = vmatprep.subr.mxu0 0.0
    %1923 = vmatpush1.xpose.msra.mxu0 0.0
    %1924 = vmatprep.subr.mxu0 0.0
    %1925 = vmatpush1.xpose.msra.mxu0 0.0
    %1926 = vmatprep.subr.mxu0 0.0
    %1927 = vmatpush1.xpose.msra.mxu0 0.0
    %1928 = vmatprep.subr.mxu0 0.0
    %1929 = vmatpush1.xpose.msra.mxu0 0.0
    %1930 = vmatprep.subr.mxu0 0.0
    %1931 = vmatpush1.xpose.msra.mxu0 0.0
    %1932 = vmatprep.subr.mxu0 0.0
    %1933 = vmatpush1.xpose.msra.mxu0 0.0
    %1934 = vmatprep.subr.mxu0 0.0
    %1935 = vmatpush1.xpose.msra.mxu0 0.0
    %1936 = vmatprep.subr.mxu0 0.0
    %1937 = vmatpush1.xpose.msra.mxu0 0.0
    %1938 = vmatprep.subr.mxu0 0.0
    %1939 = vmatpush1.xpose.msra.mxu0 0.0
    %1940 = vmatprep.subr.mxu0 0.0
    %1941 = vmatpush1.xpose.msra.mxu0 0.0
    %1942 = vmatprep.subr.mxu0 0.0
    %1943 = vmatpush1.xpose.msra.mxu0 0.0
    %1944 = vmatprep.subr.mxu0 0.0
    %1945 = vmatpush1.xpose.msra.mxu0 0.0
    %1946 = vmatprep.subr.mxu0 0.0
    %1947 = vmatpush1.xpose.msra.mxu0 0.0
    %1948 = vmatprep.subr.mxu0 0.0
    %1949 = vmatpush1.xpose.msra.mxu0 0.0
    %1950 = vmatprep.subr.mxu0 0.0
    %1951 = vmatpush1.xpose.msra.mxu0 0.0
    %1952 = vmatprep.subr.mxu0 0.0
    %1953 = vmatpush1.xpose.msra.mxu0 0.0
    %1954 = vmatprep.subr.mxu0 0.0
    %1955 = vmatpush1.xpose.msra.mxu0 0.0
    %1956 = vmatprep.subr.mxu0 0.0
    %1957 = vmatpush1.xpose.msra.mxu0 0.0
    %1958 = vmatprep.subr.mxu0 0.0
    %1959 = vmatpush1.xpose.msra.mxu0 0.0
    %1960 = vmatprep.subr.mxu0 0.0
    %1961 = vmatpush1.xpose.msra.mxu0 0.0
    %1962 = vmatprep.subr.mxu0 0.0
    %1963 = vmatpush1.xpose.msra.mxu0 0.0
    %1964 = vmatprep.subr.mxu0 0.0
    %1965 = vmatpush1.xpose.msra.mxu0 0.0
    %1966 = vmatprep.subr.mxu0 0.0
    %1967 = vmatpush1.xpose.msra.mxu0 0.0
    %1968 = vmatprep.mubr.f32.mxu0 0.0
    %1969 = vmatmul.mubr.f32.gmra.mrb[0].mxu0 %v1900
    %v1970 = vpop.f32.mrb[0].mxu0
    %v1971 = vadd.f32 0.0, %v1970
    %v1972 = vpop.f32.mrb[0].mxu0
    %1973 = vdwg.mxu0
    %v1974 = vsel %vm184, -1e+30, %v1971
    %v1975 = vsel %vm193, %v1974, -inf
    %1976 = vmax.xlane.f32.xlu0 %v1975
    %v1977 = vpop.xlane.xlu0 %1976
    %v1978 = vsub.f32 %v1974, %v1977
    %v1979 = vmul.f32 %v1978, 1.442695
    %v1980 = vpow.pop %v1979
    %v1981 = vsel %vm193, %v1980, 0.0
    %1982 = vadd.xlane.f32.xlu0 %v1981
    %v1983 = vpop.xlane.xlu0 %1982
    %v1984 = vrcp.pop %v1983
    %v1985 = vmul.f32 %v1983, %v1984
    %v1986 = vsub.f32 2.0, %v1985
    %v1987 = vmul.f32 %v1984, %v1986
    %v1988 = vmul.f32 %v1980, %v1987
    %1989 = vrot.lane.b32.xlu0 %v177, 40
    %v1990 = vpop.permute.xlu0 %1989
    %v1993 = vsel %vm193, %v1988, 0
    %1995 = vmatprep.subr.mxu0 0.0
    %1996 = vmatpush1.msra.mxu0 %v1990
    %1997 = vmatprep.subr.mxu0 0.0
    %1998 = vmatpush1.msra.mxu0 0.0
    %1999 = vmatprep.subr.mxu0 0.0
    %2000 = vmatpush1.msra.mxu0 0.0
    %2001 = vmatprep.subr.mxu0 0.0
    %2002 = vmatpush1.msra.mxu0 0.0
    %2003 = vmatprep.subr.mxu0 0.0
    %2004 = vmatpush1.msra.mxu0 0.0
    %2005 = vmatprep.subr.mxu0 0.0
    %2006 = vmatpush1.msra.mxu0 0.0
    %2007 = vmatprep.subr.mxu0 0.0
    %2008 = vmatpush1.msra.mxu0 0.0
    %2009 = vmatprep.subr.mxu0 0.0
    %2010 = vmatpush1.msra.mxu0 0.0
    %2011 = vmatprep.subr.mxu0 0.0
    %2012 = vmatpush1.msra.mxu0 0.0
    %2013 = vmatprep.subr.mxu0 0.0
    %2014 = vmatpush1.msra.mxu0 0.0
    %2015 = vmatprep.subr.mxu0 0.0
    %2016 = vmatpush1.msra.mxu0 0.0
    %2017 = vmatprep.subr.mxu0 0.0
    %2018 = vmatpush1.msra.mxu0 0.0
    %2019 = vmatprep.subr.mxu0 0.0
    %2020 = vmatpush1.msra.mxu0 0.0
    %2021 = vmatprep.subr.mxu0 0.0
    %2022 = vmatpush1.msra.mxu0 0.0
    %2023 = vmatprep.subr.mxu0 0.0
    %2024 = vmatpush1.msra.mxu0 0.0
    %2025 = vmatprep.subr.mxu0 0.0
    %2026 = vmatpush1.msra.mxu0 0.0
    %2027 = vmatprep.subr.mxu0 0.0
    %2028 = vmatpush1.msra.mxu0 0.0
    %2029 = vmatprep.subr.mxu0 0.0
    %2030 = vmatpush1.msra.mxu0 0.0
    %2031 = vmatprep.subr.mxu0 0.0
    %2032 = vmatpush1.msra.mxu0 0.0
    %2033 = vmatprep.subr.mxu0 0.0
    %2034 = vmatpush1.msra.mxu0 0.0
    %2035 = vmatprep.subr.mxu0 0.0
    %2036 = vmatpush1.msra.mxu0 0.0
    %2037 = vmatprep.subr.mxu0 0.0
    %2038 = vmatpush1.msra.mxu0 0.0
    %2039 = vmatprep.subr.mxu0 0.0
    %2040 = vmatpush1.msra.mxu0 0.0
    %2041 = vmatprep.subr.mxu0 0.0
    %2042 = vmatpush1.msra.mxu0 0.0
    %2043 = vmatprep.subr.mxu0 0.0
    %2044 = vmatpush1.msra.mxu0 0.0
    %2045 = vmatprep.subr.mxu0 0.0
    %2046 = vmatpush1.msra.mxu0 0.0
    %2047 = vmatprep.subr.mxu0 0.0
    %2048 = vmatpush1.msra.mxu0 0.0
    %2049 = vmatprep.subr.mxu0 0.0
    %2050 = vmatpush1.msra.mxu0 0.0
    %2051 = vmatprep.subr.mxu0 0.0
    %2052 = vmatpush1.msra.mxu0 0.0
    %2053 = vmatprep.subr.mxu0 0.0
    %2054 = vmatpush1.msra.mxu0 0.0
    %2055 = vmatprep.subr.mxu0 0.0
    %2056 = vmatpush1.msra.mxu0 0.0
    %2057 = vmatprep.subr.mxu0 0.0
    %2058 = vmatpush1.msra.mxu0 0.0
    %2059 = vmatprep.mubr.f32.mxu0 0.0
    %2060 = vmatmul.mubr.f32.gmra.mrb[0].mxu0 %v1993
    %v2061 = vpop.f32.mrb[0].mxu0
    %v2062 = vadd.f32 0.0, %v2061
    %v2063 = vpop.f32.mrb[0].mxu0
    %2064 = vdwg.mxu0
    %v2066 = vsel %vm193, %v2062, 0
    %2068 = vmatprep.subr.mxu0 0.0
    %2069 = vmatpush1.msra.mxu0 %v188
    %2070 = vmatprep.subr.mxu0 0.0
    %2071 = vmatpush1.msra.mxu0 0.0
    %2072 = vmatprep.subr.mxu0 0.0
    %2073 = vmatpush1.msra.mxu0 0.0
    %2074 = vmatprep.subr.mxu0 0.0
    %2075 = vmatpush1.msra.mxu0 0.0
    %2076 = vmatprep.subr.mxu0 0.0
    %2077 = vmatpush1.msra.mxu0 0.0
    %2078 = vmatprep.subr.mxu0 0.0
    %2079 = vmatpush1.msra.mxu0 0.0
    %2080 = vmatprep.subr.mxu0 0.0
    %2081 = vmatpush1.msra.mxu0 0.0
    %2082 = vmatprep.subr.mxu0 0.0
    %2083 = vmatpush1.msra.mxu0 0.0
    %2084 = vmatprep.subr.mxu0 0.0
    %2085 = vmatpush1.msra.mxu0 0.0
    %2086 = vmatprep.subr.mxu0 0.0
    %2087 = vmatpush1.msra.mxu0 0.0
    %2088 = vmatprep.subr.mxu0 0.0
    %2089 = vmatpush1.msra.mxu0 0.0
    %2090 = vmatprep.subr.mxu0 0.0
    %2091 = vmatpush1.msra.mxu0 0.0
    %2092 = vmatprep.subr.mxu0 0.0
    %2093 = vmatpush1.msra.mxu0 0.0
    %2094 = vmatprep.subr.mxu0 0.0
    %2095 = vmatpush1.msra.mxu0 0.0
    %2096 = vmatprep.subr.mxu0 0.0
    %2097 = vmatpush1.msra.mxu0 0.0
    %2098 = vmatprep.subr.mxu0 0.0
    %2099 = vmatpush1.msra.mxu0 0.0
    %2100 = vmatprep.subr.mxu0 0.0
    %2101 = vmatpush1.msra.mxu0 0.0
    %2102 = vmatprep.subr.mxu0 0.0
    %2103 = vmatpush1.msra.mxu0 0.0
    %2104 = vmatprep.subr.mxu0 0.0
    %2105 = vmatpush1.msra.mxu0 0.0
    %2106 = vmatprep.subr.mxu0 0.0
    %2107 = vmatpush1.msra.mxu0 0.0
    %2108 = vmatprep.subr.mxu0 0.0
    %2109 = vmatpush1.msra.mxu0 0.0
    %2110 = vmatprep.subr.mxu0 0.0
    %2111 = vmatpush1.msra.mxu0 0.0
    %2112 = vmatprep.subr.mxu0 0.0
    %2113 = vmatpush1.msra.mxu0 0.0
    %2114 = vmatprep.subr.mxu0 0.0
    %2115 = vmatpush1.msra.mxu0 0.0
    %2116 = vmatprep.subr.mxu0 0.0
    %2117 = vmatpush1.msra.mxu0 0.0
    %2118 = vmatprep.subr.mxu0 0.0
    %2119 = vmatpush1.msra.mxu0 0.0
    %2120 = vmatprep.subr.mxu0 0.0
    %2121 = vmatpush1.msra.mxu0 0.0
    %2122 = vmatprep.subr.mxu0 0.0
    %2123 = vmatpush1.msra.mxu0 0.0
    %2124 = vmatprep.subr.mxu0 0.0
    %2125 = vmatpush1.msra.mxu0 0.0
    %2126 = vmatprep.subr.mxu0 0.0
    %2127 = vmatpush1.msra.mxu0 0.0
    %2128 = vmatprep.subr.mxu0 0.0
    %2129 = vmatpush1.msra.mxu0 0.0
    %2130 = vmatprep.subr.mxu0 0.0
    %2131 = vmatpush1.msra.mxu0 0.0
    %2132 = vmatprep.mubr.f32.mxu0 0.0
    %2133 = vmatmul.mubr.f32.gmra.mrb[0].mxu0 %v2066
    %v2134 = vpop.f32.mrb[0].mxu0
    %v2135 = vadd.f32 0.0, %v2134
    %v2136 = vpop.f32.mrb[0].mxu0
    %2137 = vdwg.mxu0
    %v2138 = vadd.f32 %v1895, %v2135
    %v2139 = vld [vmem:[%s75] sm:$0xff]
    %v2140 = vadd.f32 %v2139, %v2138
    %v2141 = vadd.f32 %v2140, %v1166
    %2142 = vst.msk [vmem:[#allocation3 + $0x8] sm:$0xff] %vm45, %v2141
    %v2143 = vld [vmem:[#allocation3] sm:$0xff]
    %v2144 = vld [vmem:[#allocation3 + $0x8] sm:$0xff]
    %v2145 = vld [vmem:[%s6] sm:$0x1]
    %v2146 = vld [vmem:[%s7] sm:$0x1]
    %v2147 = vsel %vm45, %v2143, 0.0
    %2148 = vadd.xlane.f32.xlu0 %v2147
    %v2149 = vpop.xlane.xlu0 %2148
    %v2150 = vsel %vm45, %v2144, 0.0
    %2151 = vadd.xlane.f32.xlu0 %v2150
    %v2152 = vpop.xlane.xlu0 %2151
    %v2153 = vmul.f32 %v2149, %v49
    %v2154 = vmul.f32 %v2152, %v49
    %v2155 = vsub.f32 %v2143, %v2153
    %v2156 = vsub.f32 %v2144, %v2154
    %v2157 = vmul.f32 %v2155, %v2155
    %v2158 = vmul.f32 %v2156, %v2156
    %v2159 = vsel %vm45, %v2157, 0.0
    %2160 = vadd.xlane.f32.xlu0 %v2159
    %v2161 = vpop.xlane.xlu0 %2160
    %v2162 = vsel %vm45, %v2158, 0.0
    %2163 = vadd.xlane.f32.xlu0 %v2162
    %v2164 = vpop.xlane.xlu0 %2163
    %v2165 = vmul.f32 %v2161, %v49
    %v2166 = vmul.f32 %v2164, %v49
    %v2167 = vadd.f32 %v2165, 1e-05
    %v2168 = vadd.f32 %v2166, 1e-05
    %v2169 = vrsqrt.pop %v2167
    %v2170 = vrsqrt.pop %v2168
    %v2171 = vmul.f32 %v2155, %v2169
    %v2172 = vmul.f32 %v2156, %v2170
    %v2174 = vlaneseq
    %v2175 = vshrl.u32 %v2174, 7
    %v2176 = vsub.s32 0, %v2175
    %v2177 = vrot.slane %v2145, %v2176
    %v2179 = vmul.f32 %v2171, %v2177
    %v2180 = vmul.f32 %v2172, %v2177
    %v2182 = vlaneseq
    %v2183 = vshrl.u32 %v2182, 7
    %v2184 = vsub.s32 0, %v2183
    %v2185 = vrot.slane %v2146, %v2184
    %v2187 = vadd.f32 %v2179, %v2185
    %v2188 = vadd.f32 %v2180, %v2185
    %v2189 = vld [vmem:[%s8] sm:$0xff]
    %v2190 = vld [vmem:[%s8 + $0x8] sm:$0xff]
    %v2191 = vld [vmem:[%s8 + $0x10] sm:$0xff]
    %v2192 = vld [vmem:[%s8 + $0x18] sm:$0xff]
    %v2193 = vld [vmem:[%s9] sm:$0x1]
    %v2195 = vlaneseq
    %v2196 = vshrl.u32 %v2195, 7
    %v2197 = vsub.s32 0, %v2196
    %v2198 = vrot.slane %v2193, %v2197
    %v2201 = vsel %vm45, %v2187, 0
    %v2204 = vsel %vm45, %v2188, 0
    %2206 = vmatprep.subr.mxu0 0.0
    %2207 = vmatpush1.msra.mxu0 %v2189
    %2208 = vmatprep.subr.mxu0 0.0
    %2209 = vmatpush1.msra.mxu0 %v2190
    %2210 = vmatprep.subr.mxu0 0.0
    %2211 = vmatpush1.msra.mxu0 %v2191
    %2212 = vmatprep.subr.mxu0 0.0
    %2213 = vmatpush1.msra.mxu0 %v2192
    %2214 = vmatprep.subr.mxu0 0.0
    %2215 = vmatpush1.msra.mxu0 0.0
    %2216 = vmatprep.subr.mxu0 0.0
    %2217 = vmatpush1.msra.mxu0 0.0
    %2218 = vmatprep.subr.mxu0 0.0
    %2219 = vmatpush1.msra.mxu0 0.0
    %2220 = vmatprep.subr.mxu0 0.0
    %2221 = vmatpush1.msra.mxu0 0.0
    %2222 = vmatprep.subr.mxu0 0.0
    %2223 = vmatpush1.msra.mxu0 0.0
    %2224 = vmatprep.subr.mxu0 0.0
    %2225 = vmatpush1.msra.mxu0 0.0
    %2226 = vmatprep.subr.mxu0 0.0
    %2227 = vmatpush1.msra.mxu0 0.0
    %2228 = vmatprep.subr.mxu0 0.0
    %2229 = vmatpush1.msra.mxu0 0.0
    %2230 = vmatprep.subr.mxu0 0.0
    %2231 = vmatpush1.msra.mxu0 0.0
    %2232 = vmatprep.subr.mxu0 0.0
    %2233 = vmatpush1.msra.mxu0 0.0
    %2234 = vmatprep.subr.mxu0 0.0
    %2235 = vmatpush1.msra.mxu0 0.0
    %2236 = vmatprep.subr.mxu0 0.0
    %2237 = vmatpush1.msra.mxu0 0.0
    %2238 = vmatprep.subr.mxu0 0.0
    %2239 = vmatpush1.msra.mxu0 0.0
    %2240 = vmatprep.subr.mxu0 0.0
    %2241 = vmatpush1.msra.mxu0 0.0
    %2242 = vmatprep.subr.mxu0 0.0
    %2243 = vmatpush1.msra.mxu0 0.0
    %2244 = vmatprep.subr.mxu0 0.0
    %2245 = vmatpush1.msra.mxu0 0.0
    %2246 = vmatprep.subr.mxu0 0.0
    %2247 = vmatpush1.msra.mxu0 0.0
    %2248 = vmatprep.subr.mxu0 0.0
    %2249 = vmatpush1.msra.mxu0 0.0
    %2250 = vmatprep.subr.mxu0 0.0
    %2251 = vmatpush1.msra.mxu0 0.0
    %2252 = vmatprep.subr.mxu0 0.0
    %2253 = vmatpush1.msra.mxu0 0.0
    %2254 = vmatprep.subr.mxu0 0.0
    %2255 = vmatpush1.msra.mxu0 0.0
    %2256 = vmatprep.subr.mxu0 0.0
    %2257 = vmatpush1.msra.mxu0 0.0
    %2258 = vmatprep.subr.mxu0 0.0
    %2259 = vmatpush1.msra.mxu0 0.0
    %2260 = vmatprep.subr.mxu0 0.0
    %2261 = vmatpush1.msra.mxu0 0.0
    %2262 = vmatprep.subr.mxu0 0.0
    %2263 = vmatpush1.msra.mxu0 0.0
    %2264 = vmatprep.subr.mxu0 0.0
    %2265 = vmatpush1.msra.mxu0 0.0
    %2266 = vmatprep.subr.mxu0 0.0
    %2267 = vmatpush1.msra.mxu0 0.0
    %2268 = vmatprep.subr.mxu0 0.0
    %2269 = vmatpush1.msra.mxu0 0.0
    %2270 = vmatprep.mubr.f32.mxu0 0.0
    %2271 = vmatmul.mubr.f32.gmra.mrb[0].mxu0 %v2201
    %v2272 = vpop.f32.mrb[0].mxu0
    %v2273 = vadd.f32 %v2198, %v2272
    %v2274 = vpop.f32.mrb[0].mxu0
    %2275 = vmatprep.mubr.f32.mxu0 0.0
    %2276 = vmatmul.mubr.f32.gmra.mrb[0].mxu0 %v2204
    %v2277 = vpop.f32.mrb[0].mxu0
    %v2278 = vadd.f32 %v2198, %v2277
    %v2279 = vpop.f32.mrb[0].mxu0
    %2280 = vdwg.mxu0
    %v2281 = vmul.f32 %v2273, %v2273
    %v2282 = vmul.f32 %v2278, %v2278
    %v2283 = vmul.f32 %v2273, 0.5
    %v2284 = vmul.f32 %v2278, 0.5
    %v2285 = vmul.f32 %v2281, %v2273
    %v2286 = vmul.f32 %v2282, %v2278
    %v2287 = vmul.f32 %v2285, 0.044715
    %v2288 = vmul.f32 %v2286, 0.044715
    %v2289 = vadd.f32 %v2273, %v2287
    %v2290 = vadd.f32 %v2278, %v2288
    %v2291 = vmul.f32 %v2289, 0.7978846
    %v2292 = vmul.f32 %v2290, 0.7978846
    %v2293 = vtanh.pop %v2291
    %v2294 = vtanh.pop %v2292
    %v2295 = vadd.f32 %v2293, 1.0
    %v2296 = vadd.f32 %v2294, 1.0
    %v2297 = vmul.f32 %v2283, %v2295
    %v2298 = vmul.f32 %v2284, %v2296
    %v2299 = vld [vmem:[%s10] sm:$0xff]
    %v2300 = vld [vmem:[%s10 + $0x8] sm:$0xff]
    %v2301 = vld [vmem:[%s10 + $0x10] sm:$0xff]
    %v2302 = vld [vmem:[%s10 + $0x18] sm:$0xff]
    %v2303 = vld [vmem:[%s10 + $0x20] sm:$0xff]
    %v2304 = vld [vmem:[%s10 + $0x28] sm:$0xff]
    %v2305 = vld [vmem:[%s10 + $0x30] sm:$0xff]
    %v2306 = vld [vmem:[%s10 + $0x38] sm:$0xff]
    %v2307 = vld [vmem:[%s10 + $0x40] sm:$0xff]
    %v2308 = vld [vmem:[%s10 + $0x48] sm:$0xff]
    %v2309 = vld [vmem:[%s10 + $0x50] sm:$0xff]
    %v2310 = vld [vmem:[%s10 + $0x58] sm:$0xff]
    %v2311 = vld [vmem:[%s10 + $0x60] sm:$0xff]
    %v2312 = vld [vmem:[%s10 + $0x68] sm:$0xff]
    %v2313 = vld [vmem:[%s10 + $0x70] sm:$0xff]
    %v2314 = vld [vmem:[%s10 + $0x78] sm:$0xff]
    %v2315 = vld [vmem:[%s11] sm:$0x1]
    %v2317 = vlaneseq
    %v2318 = vshrl.u32 %v2317, 7
    %v2319 = vsub.s32 0, %v2318
    %v2320 = vrot.slane %v2315, %v2319
    %2322 = vmatprep.subr.mxu0 0.0
    %2323 = vmatpush1.msra.mxu0 %v2299
    %2324 = vmatprep.subr.mxu0 0.0
    %2325 = vmatpush1.msra.mxu0 %v2300
    %2326 = vmatprep.subr.mxu0 0.0
    %2327 = vmatpush1.msra.mxu0 %v2301
    %2328 = vmatprep.subr.mxu0 0.0
    %2329 = vmatpush1.msra.mxu0 %v2302
    %2330 = vmatprep.subr.mxu0 0.0
    %2331 = vmatpush1.msra.mxu0 %v2303
    %2332 = vmatprep.subr.mxu0 0.0
    %2333 = vmatpush1.msra.mxu0 %v2304
    %2334 = vmatprep.subr.mxu0 0.0
    %2335 = vmatpush1.msra.mxu0 %v2305
    %2336 = vmatprep.subr.mxu0 0.0
    %2337 = vmatpush1.msra.mxu0 %v2306
    %2338 = vmatprep.subr.mxu0 0.0
    %2339 = vmatpush1.msra.mxu0 %v2307
    %2340 = vmatprep.subr.mxu0 0.0
    %2341 = vmatpush1.msra.mxu0 %v2308
    %2342 = vmatprep.subr.mxu0 0.0
    %2343 = vmatpush1.msra.mxu0 %v2309
    %2344 = vmatprep.subr.mxu0 0.0
    %2345 = vmatpush1.msra.mxu0 %v2310
    %2346 = vmatprep.subr.mxu0 0.0
    %2347 = vmatpush1.msra.mxu0 %v2311
    %2348 = vmatprep.subr.mxu0 0.0
    %2349 = vmatpush1.msra.mxu0 %v2312
    %2350 = vmatprep.subr.mxu0 0.0
    %2351 = vmatpush1.msra.mxu0 %v2313
    %2352 = vmatprep.subr.mxu0 0.0
    %2353 = vmatpush1.msra.mxu0 %v2314
    %2354 = vmatprep.subr.mxu0 0.0
    %2355 = vmatpush1.msra.mxu0 0.0
    %2356 = vmatprep.subr.mxu0 0.0
    %2357 = vmatpush1.msra.mxu0 0.0
    %2358 = vmatprep.subr.mxu0 0.0
    %2359 = vmatpush1.msra.mxu0 0.0
    %2360 = vmatprep.subr.mxu0 0.0
    %2361 = vmatpush1.msra.mxu0 0.0
    %2362 = vmatprep.subr.mxu0 0.0
    %2363 = vmatpush1.msra.mxu0 0.0
    %2364 = vmatprep.subr.mxu0 0.0
    %2365 = vmatpush1.msra.mxu0 0.0
    %2366 = vmatprep.subr.mxu0 0.0
    %2367 = vmatpush1.msra.mxu0 0.0
    %2368 = vmatprep.subr.mxu0 0.0
    %2369 = vmatpush1.msra.mxu0 0.0
    %2370 = vmatprep.subr.mxu0 0.0
    %2371 = vmatpush1.msra.mxu0 0.0
    %2372 = vmatprep.subr.mxu0 0.0
    %2373 = vmatpush1.msra.mxu0 0.0
    %2374 = vmatprep.subr.mxu0 0.0
    %2375 = vmatpush1.msra.mxu0 0.0
    %2376 = vmatprep.subr.mxu0 0.0
    %2377 = vmatpush1.msra.mxu0 0.0
    %2378 = vmatprep.subr.mxu0 0.0
    %2379 = vmatpush1.msra.mxu0 0.0
    %2380 = vmatprep.subr.mxu0 0.0
    %2381 = vmatpush1.msra.mxu0 0.0
    %2382 = vmatprep.subr.mxu0 0.0
    %2383 = vmatpush1.msra.mxu0 0.0
    %2384 = vmatprep.subr.mxu0 0.0
    %2385 = vmatpush1.msra.mxu0 0.0
    %2386 = vmatprep.mubr.f32.mxu0 0.0
    %2387 = vmatmul.mubr.f32.gmra.mrb[0].mxu0 %v2297
    %v2388 = vpop.f32.mrb[0].mxu0
    %v2389 = vadd.f32 %v2320, %v2388
    %v2390 = vpop.f32.mrb[0].mxu0
    %2391 = vmatprep.mubr.f32.mxu0 0.0
    %2392 = vmatmul.mubr.f32.gmra.mrb[0].mxu0 %v2298
    %v2393 = vpop.f32.mrb[0].mxu0
    %v2394 = vadd.f32 %v2320, %v2393
    %v2395 = vpop.f32.mrb[0].mxu0
    %2396 = vdwg.mxu0
    %v2397 = vadd.f32 %v2143, %v2389
    %v2398 = vadd.f32 %v2144, %v2394
    %2399 = vst.msk [vmem:[#allocation4] sm:$0xff] %vm45, %v2397
    %s2400 = scalar_lea.vmem [#allocation4], 8
    %2401 = vst.msk [vmem:[%s2400] sm:$0xff] %vm45, %v2398
    // Predicated region
    $region50: #{tpu_custom_call.1} parent=1 // pred_check
      _
    $region51: #{tpu_custom_call.1} parent=1 // pred_check_branch
      %2403 = sbr.rel (0) target = $region53
    $region52: #{tpu_custom_call.1} parent=1 // pred_region
      %s2405 = ssub.s32 256, 256
      %2406 = vsyncadd [#allocation5], %s2405
      %s2407 = sshll.u32 [#allocation4], 4
      %s2408 = int_to_ptr.vmem [resolvable:$true] %s2407
      %2413 = dma.vmem_to_hbm [thread:$0]  %s2408, 256, %s12, [#allocation5], 128, 128, 8
    $region53: #{tpu_custom_call.1} parent=1 // pred_fallthru
      _
    // Predicated region
    $region54: #{tpu_custom_call.1} parent=1 // pred_check
      _
    $region55: #{tpu_custom_call.1} parent=1 // pred_check_branch
      %2415 = sbr.rel (0) target = $region57
    $region56: #{tpu_custom_call.1} parent=1 // pred_region
      %2416 = dma.done [#allocation5], 256
    $region57: #{tpu_custom_call.1} parent=1 // pred_fallthru
      _
    %2417 = vsyncpa [#allocation5], 1

// kernel: tpu_custom_call.1
$region0: #{tpu_custom_call.1}
  #allocation0 [shape = 'u32[]', space=smem, size = 0x4, offset = 0x4, fixed_abs, tag = 'smem constant byte address 0x4 - core index']
  #allocation1 [shape = 'u32[144,128]{1,0:T(1,128)}', space=vmem, size = 0x12000, scoped, tag = 'internal scratch']
  #allocation2 [shape = 'f32[16,32]{1,0:T(8,128)}', space=vmem, size = 0x2000, scoped, tag = 'scratch operand']
  #allocation3 [shape = 'f32[16,32]{1,0:T(8,128)}', space=vmem, size = 0x2000, scoped, tag = 'scratch operand']
  %s0 = inlined_call_operand.vmem [shape: f32[2,8,32], index: 0, kind: input, shape index: {}]
  %s1 = inlined_call_operand.vmem [shape: f32[1,32], index: 1, kind: input, shape index: {}]
  %s2 = inlined_call_operand.vmem [shape: f32[1,32], index: 2, kind: input, shape index: {}]
  %s3 = inlined_call_operand.vmem [shape: f32[32,96], index: 3, kind: input, shape index: {}]
  %s4 = inlined_call_operand.vmem [shape: f32[32,32], index: 4, kind: input, shape index: {}]
  %s5 = inlined_call_operand.vmem [shape: f32[1,32], index: 5, kind: input, shape index: {}]
  %s6 = inlined_call_operand.vmem [shape: f32[1,32], index: 6, kind: input, shape index: {}]
  %s7 = inlined_call_operand.vmem [shape: f32[1,32], index: 7, kind: input, shape index: {}]
  %s8 = inlined_call_operand.vmem [shape: f32[32,128], index: 8, kind: input, shape index: {}]
  %s9 = inlined_call_operand.vmem [shape: f32[1,128], index: 9, kind: input, shape index: {}]
  %s10 = inlined_call_operand.vmem [shape: f32[128,32], index: 10, kind: input, shape index: {}]
  %s11 = inlined_call_operand.vmem [shape: f32[1,32], index: 11, kind: input, shape index: {}]
  %s12 = inlined_call_operand.hbm [shape: f32[2,8,32], index: 12, kind: output, shape index: {}]
  %s13 = sld [smem:[#allocation0]]
  $region58: #{tpu_custom_call.1} parent=0
    _
  %s15 = ssub.s32 1, %s13
  %s16 = scalar_select 0, %s15, %s13
  $region1: #{tpu_custom_call.1} parent=0
    #allocation4 [shape = 'u8[8192]{0}', space=vmem, size = 0x2000, scoped, tag = 'output window, operand 0, single buffered']
    #allocation5 [shape = 's32[1]{0}', space=sflag, size = 0x4, scoped, tag = 'scoped memory for tpu_custom_call.1']
    %17 = vsyncpa [#allocation5], 0
    // Predicated region
    $region2: #{tpu_custom_call.1} parent=1 // pred_check
      _
    $region3: #{tpu_custom_call.1} parent=1 // pred_check_branch
      %19 = sbr.rel (0) target = $region5
    $region4: #{tpu_custom_call.1} parent=1 // pred_region
      _
    $region5: #{tpu_custom_call.1} parent=1 // pred_fallthru
      _
    // Predicated region
    $region6: #{tpu_custom_call.1} parent=1 // pred_check
      _
    $region7: #{tpu_custom_call.1} parent=1 // pred_check_branch
      %21 = sbr.rel (0) target = $region9
    $region8: #{tpu_custom_call.1} parent=1 // pred_region
      _
    $region9: #{tpu_custom_call.1} parent=1 // pred_fallthru
      _
    // Predicated region
    $region10: #{tpu_custom_call.1} parent=1 // pred_check
      _
    $region11: #{tpu_custom_call.1} parent=1 // pred_check_branch
      %23 = sbr.rel (0) target = $region13
    $region12: #{tpu_custom_call.1} parent=1 // pred_region
      _
    $region13: #{tpu_custom_call.1} parent=1 // pred_fallthru
      _
    // Predicated region
    $region14: #{tpu_custom_call.1} parent=1 // pred_check
      _
    $region15: #{tpu_custom_call.1} parent=1 // pred_check_branch
      %25 = sbr.rel (0) target = $region17
    $region16: #{tpu_custom_call.1} parent=1 // pred_region
      _
    $region17: #{tpu_custom_call.1} parent=1 // pred_fallthru
      _
    // Predicated region
    $region18: #{tpu_custom_call.1} parent=1 // pred_check
      _
    $region19: #{tpu_custom_call.1} parent=1 // pred_check_branch
      %27 = sbr.rel (0) target = $region21
    $region20: #{tpu_custom_call.1} parent=1 // pred_region
      _
    $region21: #{tpu_custom_call.1} parent=1 // pred_fallthru
      _
    // Predicated region
    $region22: #{tpu_custom_call.1} parent=1 // pred_check
      _
    $region23: #{tpu_custom_call.1} parent=1 // pred_check_branch
      %29 = sbr.rel (0) target = $region25
    $region24: #{tpu_custom_call.1} parent=1 // pred_region
      _
    $region25: #{tpu_custom_call.1} parent=1 // pred_fallthru
      _
    // Predicated region
    $region26: #{tpu_custom_call.1} parent=1 // pred_check
      _
    $region27: #{tpu_custom_call.1} parent=1 // pred_check_branch
      %31 = sbr.rel (0) target = $region29
    $region28: #{tpu_custom_call.1} parent=1 // pred_region
      _
    $region29: #{tpu_custom_call.1} parent=1 // pred_fallthru
      _
    // Predicated region
    $region30: #{tpu_custom_call.1} parent=1 // pred_check
      _
    $region31: #{tpu_custom_call.1} parent=1 // pred_check_branch
      %33 = sbr.rel (0) target = $region33
    $region32: #{tpu_custom_call.1} parent=1 // pred_region
      _
    $region33: #{tpu_custom_call.1} parent=1 // pred_fallthru
      _
    // Predicated region
    $region34: #{tpu_custom_call.1} parent=1 // pred_check
      _
    $region35: #{tpu_custom_call.1} parent=1 // pred_check_branch
      %35 = sbr.rel (0) target = $region37
    $region36: #{tpu_custom_call.1} parent=1 // pred_region
      _
    $region37: #{tpu_custom_call.1} parent=1 // pred_fallthru
      _
    // Predicated region
    $region38: #{tpu_custom_call.1} parent=1 // pred_check
      _
    $region39: #{tpu_custom_call.1} parent=1 // pred_check_branch
      %37 = sbr.rel (0) target = $region41
    $region40: #{tpu_custom_call.1} parent=1 // pred_region
      _
    $region41: #{tpu_custom_call.1} parent=1 // pred_fallthru
      _
    // Predicated region
    $region42: #{tpu_custom_call.1} parent=1 // pred_check
      _
    $region43: #{tpu_custom_call.1} parent=1 // pred_check_branch
      %39 = sbr.rel (0) target = $region45
    $region44: #{tpu_custom_call.1} parent=1 // pred_region
      _
    $region45: #{tpu_custom_call.1} parent=1 // pred_fallthru
      _
    // Predicated region
    $region46: #{tpu_custom_call.1} parent=1 // pred_check
      _
    $region47: #{tpu_custom_call.1} parent=1 // pred_check_branch
      %41 = sbr.rel (0) target = $region49
    $region48: #{tpu_custom_call.1} parent=1 // pred_region
      _
    $region49: #{tpu_custom_call.1} parent=1 // pred_fallthru
      _
    %v42 = vld [vmem:[%s1] sm:$0x1]
    %v43 = vld [vmem:[%s2] sm:$0x1]
    %v44 = vld [vmem:[%s0] sm:$0xff]
    %vm45 = vcmask 261120
    %v46 = vsel %vm45, %v44, 0.0
    %47 = vadd.xlane.f32.xlu0 %v46
    %v48 = vpop.xlane.xlu0 %47
    %v49 = vrcp.pop 32.0
    %v50 = vmul.f32 %v48, %v49
    %v51 = vsub.f32 %v44, %v50
    %v52 = vmul.f32 %v51, %v51
    %v53 = vsel %vm45, %v52, 0.0
    %54 = vadd.xlane.f32.xlu0 %v53
    %v55 = vpop.xlane.xlu0 %54
    %v56 = vmul.f32 %v55, %v49
    %v57 = vadd.f32 %v56, 1e-05
    %v58 = vrsqrt.pop %v57
    %v59 = vmul.f32 %v51, %v58
    %v61 = vlaneseq
    %v62 = vshrl.u32 %v61, 7
    %v63 = vsub.s32 0, %v62
    %v64 = vrot.slane %v42, %v63
    %v66 = vmul.f32 %v59, %v64
    %v68 = vlaneseq
    %v69 = vshrl.u32 %v68, 7
    %v70 = vsub.s32 0, %v69
    %v71 = vrot.slane %v43, %v70
    %v73 = vadd.f32 %v66, %v71
    %74 = vst.msk [vmem:[#allocation2] sm:$0xff] %vm45, %v73
    %s75 = scalar_lea.vmem %s0, 8
    %v76 = vld [vmem:[%s75] sm:$0xff]
    %v77 = vsel %vm45, %v76, 0.0
    %78 = vadd.xlane.f32.xlu0 %v77
    %v79 = vpop.xlane.xlu0 %78
    %v80 = vmul.f32 %v79, %v49
    %v81 = vsub.f32 %v76, %v80
    %v82 = vmul.f32 %v81, %v81
    %v83 = vsel %vm45, %v82, 0.0
    %84 = vadd.xlane.f32.xlu0 %v83
    %v85 = vpop.xlane.xlu0 %84
    %v86 = vmul.f32 %v85, %v49
    %v87 = vadd.f32 %v86, 1e-05
    %v88 = vrsqrt.pop %v87
    %v89 = vmul.f32 %v81, %v88
    %v90 = vmul.f32 %v89, %v64
    %v91 = vadd.f32 %v90, %v71
    %92 = vst.msk [vmem:[#allocation2 + $0x8] sm:$0xff] %vm45, %v91
    %v93 = vld [vmem:[#allocation2] sm:$0xff]
    %v94 = vld [vmem:[#allocation2 + $0x8] sm:$0xff]
    %v95 = vld [vmem:[%s3] sm:$0xff]
    %v96 = vld [vmem:[%s3 + $0x8] sm:$0xff]
    %v97 = vld [vmem:[%s3 + $0x10] sm:$0xff]
    %v98 = vld [vmem:[%s3 + $0x18] sm:$0xff]
    %v100 = vsel %vm45, %v93, 0
    %v103 = vsel %vm45, %v94, 0
    %105 = vmatprep.subr.mxu0 0.0
    %106 = vmatpush1.msra.mxu0 %v95
    %107 = vmatprep.subr.mxu0 0.0
    %108 = vmatpush1.msra.mxu0 %v96
    %109 = vmatprep.subr.mxu0 0.0
    %110 = vmatpush1.msra.mxu0 %v97
    %111 = vmatprep.subr.mxu0 0.0
    %112 = vmatpush1.msra.mxu0 %v98
    %113 = vmatprep.subr.mxu0 0.0
    %114 = vmatpush1.msra.mxu0 0.0
    %115 = vmatprep.subr.mxu0 0.0
    %116 = vmatpush1.msra.mxu0 0.0
    %117 = vmatprep.subr.mxu0 0.0
    %118 = vmatpush1.msra.mxu0 0.0
    %119 = vmatprep.subr.mxu0 0.0
    %120 = vmatpush1.msra.mxu0 0.0
    %121 = vmatprep.subr.mxu0 0.0
    %122 = vmatpush1.msra.mxu0 0.0
    %123 = vmatprep.subr.mxu0 0.0
    %124 = vmatpush1.msra.mxu0 0.0
    %125 = vmatprep.subr.mxu0 0.0
    %126 = vmatpush1.msra.mxu0 0.0
    %127 = vmatprep.subr.mxu0 0.0
    %128 = vmatpush1.msra.mxu0 0.0
    %129 = vmatprep.subr.mxu0 0.0
    %130 = vmatpush1.msra.mxu0 0.0
    %131 = vmatprep.subr.mxu0 0.0
    %132 = vmatpush1.msra.mxu0 0.0
    %133 = vmatprep.subr.mxu0 0.0
    %134 = vmatpush1.msra.mxu0 0.0
    %135 = vmatprep.subr.mxu0 0.0
    %136 = vmatpush1.msra.mxu0 0.0
    %137 = vmatprep.subr.mxu0 0.0
    %138 = vmatpush1.msra.mxu0 0.0
    %139 = vmatprep.subr.mxu0 0.0
    %140 = vmatpush1.msra.mxu0 0.0
    %141 = vmatprep.subr.mxu0 0.0
    %142 = vmatpush1.msra.mxu0 0.0
    %143 = vmatprep.subr.mxu0 0.0
    %144 = vmatpush1.msra.mxu0 0.0
    %145 = vmatprep.subr.mxu0 0.0
    %146 = vmatpush1.msra.mxu0 0.0
    %147 = vmatprep.subr.mxu0 0.0
    %148 = vmatpush1.msra.mxu0 0.0
    %149 = vmatprep.subr.mxu0 0.0
    %150 = vmatpush1.msra.mxu0 0.0
    %151 = vmatprep.subr.mxu0 0.0
    %152 = vmatpush1.msra.mxu0 0.0
    %153 = vmatprep.subr.mxu0 0.0
    %154 = vmatpush1.msra.mxu0 0.0
    %155 = vmatprep.subr.mxu0 0.0
    %156 = vmatpush1.msra.mxu0 0.0
    %157 = vmatprep.subr.mxu0 0.0
    %158 = vmatpush1.msra.mxu0 0.0
    %159 = vmatprep.subr.mxu0 0.0
    %160 = vmatpush1.msra.mxu0 0.0
    %161 = vmatprep.subr.mxu0 0.0
    %162 = vmatpush1.msra.mxu0 0.0
    %163 = vmatprep.subr.mxu0 0.0
    %164 = vmatpush1.msra.mxu0 0.0
    %165 = vmatprep.subr.mxu0 0.0
    %166 = vmatpush1.msra.mxu0 0.0
    %167 = vmatprep.subr.mxu0 0.0
    %168 = vmatpush1.msra.mxu0 0.0
    %169 = vmatprep.mubr.f32.mxu0 0.0
    %170 = vmatmul.mubr.f32.gmra.mrb[0].mxu0 %v100
    %v171 = vpop.f32.mrb[0].mxu0
    %v172 = vadd.f32 0.0, %v171
    %v173 = vpop.f32.mrb[0].mxu0
    %174 = vmatprep.mubr.f32.mxu0 0.0
    %175 = vmatmul.mubr.f32.gmra.mrb[0].mxu0 %v103
    %v176 = vpop.f32.mrb[0].mxu0
    %v177 = vadd.f32 0.0, %v176
    %v178 = vpop.f32.mrb[0].mxu0
    %179 = vdwg.mxu0
    %v180 = vlaneseq
    %v181 = vshrl.u32 %v180, 7
    %v182 = vlaneseq
    %v183 = vand.u32 %v182, 127
    %vm184 = vcmp.gt.s32.totalorder %v183, %v181
    %v185 = vld [vmem:[%s4] sm:$0xff]
    %v186 = vld [vmem:[%s4 + $0x8] sm:$0xff]
    %v187 = vld [vmem:[%s4 + $0x10] sm:$0xff]
    %v188 = vld [vmem:[%s4 + $0x18] sm:$0xff]
    %v189 = vld [vmem:[%s5] sm:$0x1]
    %191 = vrot.lane.b32.xlu0 %v172, 96
    %v192 = vpop.permute.xlu0 %191
    %vm193 = vcmask 64512
    %v194 = vsel %vm193, %v172, 0
    %v196 = vsel %vm193, %v192, 0
    %198 = vmatprep.subr.mxu0 0.0
    %199 = vmatpush1.xpose.msra.mxu0 %v196
    %200 = vmatprep.subr.mxu0 0.0
    %201 = vmatpush1.xpose.msra.mxu0 0.0
    %202 = vmatprep.subr.mxu0 0.0
    %203 = vmatpush1.xpose.msra.mxu0 0.0
    %204 = vmatprep.subr.mxu0 0.0
    %205 = vmatpush1.xpose.msra.mxu0 0.0
    %206 = vmatprep.subr.mxu0 0.0
    %207 = vmatpush1.xpose.msra.mxu0 0.0
    %208 = vmatprep.subr.mxu0 0.0
    %209 = vmatpush1.xpose.msra.mxu0 0.0
    %210 = vmatprep.subr.mxu0 0.0
    %211 = vmatpush1.xpose.msra.mxu0 0.0
    %212 = vmatprep.subr.mxu0 0.0
    %213 = vmatpush1.xpose.msra.mxu0 0.0
    %214 = vmatprep.subr.mxu0 0.0
    %215 = vmatpush1.xpose.msra.mxu0 0.0
    %216 = vmatprep.subr.mxu0 0.0
    %217 = vmatpush1.xpose.msra.mxu0 0.0
    %218 = vmatprep.subr.mxu0 0.0
    %219 = vmatpush1.xpose.msra.mxu0 0.0
    %220 = vmatprep.subr.mxu0 0.0
    %221 = vmatpush1.xpose.msra.mxu0 0.0
    %222 = vmatprep.subr.mxu0 0.0
    %223 = vmatpush1.xpose.msra.mxu0 0.0
    %224 = vmatprep.subr.mxu0 0.0
    %225 = vmatpush1.xpose.msra.mxu0 0.0
    %226 = vmatprep.subr.mxu0 0.0
    %227 = vmatpush1.xpose.msra.mxu0 0.0
    %228 = vmatprep.subr.mxu0 0.0
    %229 = vmatpush1.xpose.msra.mxu0 0.0
    %230 = vmatprep.subr.mxu0 0.0
    %231 = vmatpush1.xpose.msra.mxu0 0.0
    %232 = vmatprep.subr.mxu0 0.0
    %233 = vmatpush1.xpose.msra.mxu0 0.0
    %234 = vmatprep.subr.mxu0 0.0
    %235 = vmatpush1.xpose.msra.mxu0 0.0
    %236 = vmatprep.subr.mxu0 0.0
    %237 = vmatpush1.xpose.msra.mxu0 0.0
    %238 = vmatprep.subr.mxu0 0.0
    %239 = vmatpush1.xpose.msra.mxu0 0.0
    %240 = vmatprep.subr.mxu0 0.0
    %241 = vmatpush1.xpose.msra.mxu0 0.0
    %242 = vmatprep.subr.mxu0 0.0
    %243 = vmatpush1.xpose.msra.mxu0 0.0
    %244 = vmatprep.subr.mxu0 0.0
    %245 = vmatpush1.xpose.msra.mxu0 0.0
    %246 = vmatprep.subr.mxu0 0.0
    %247 = vmatpush1.xpose.msra.mxu0 0.0
    %248 = vmatprep.subr.mxu0 0.0
    %249 = vmatpush1.xpose.msra.mxu0 0.0
    %250 = vmatprep.subr.mxu0 0.0
    %251 = vmatpush1.xpose.msra.mxu0 0.0
    %252 = vmatprep.subr.mxu0 0.0
    %253 = vmatpush1.xpose.msra.mxu0 0.0
    %254 = vmatprep.subr.mxu0 0.0
    %255 = vmatpush1.xpose.msra.mxu0 0.0
    %256 = vmatprep.subr.mxu0 0.0
    %257 = vmatpush1.xpose.msra.mxu0 0.0
    %258 = vmatprep.subr.mxu0 0.0
    %259 = vmatpush1.xpose.msra.mxu0 0.0
    %260 = vmatprep.subr.mxu0 0.0
    %261 = vmatpush1.xpose.msra.mxu0 0.0
    %262 = vmatprep.mubr.f32.mxu0 0.0
    %263 = vmatmul.mubr.f32.gmra.mrb[0].mxu0 %v194
    %v264 = vpop.f32.mrb[0].mxu0
    %v265 = vadd.f32 0.0, %v264
    %v266 = vpop.f32.mrb[0].mxu0
    %267 = vdwg.mxu0
    %v268 = vsel %vm184, -1e+30, %v265
    %v269 = vsel %vm193, %v268, -inf
    %270 = vmax.xlane.f32.xlu0 %v269
    %v271 = vpop.xlane.xlu0 %270
    %v272 = vsub.f32 %v268, %v271
    %v273 = vmul.f32 %v272, 1.442695
    %v274 = vpow.pop %v273
    %v275 = vsel %vm193, %v274, 0.0
    %276 = vadd.xlane.f32.xlu0 %v275
    %v277 = vpop.xlane.xlu0 %276
    %v278 = vrcp.pop %v277
    %v279 = vmul.f32 %v277, %v278
    %v280 = vsub.f32 2.0, %v279
    %v281 = vmul.f32 %v278, %v280
    %v282 = vmul.f32 %v274, %v281
    %283 = vrot.lane.b32.xlu0 %v172, 64
    %v284 = vpop.permute.xlu0 %283
    %v287 = vsel %vm193, %v282, 0
    %289 = vmatprep.subr.mxu0 0.0
    %290 = vmatpush1.msra.mxu0 %v284
    %291 = vmatprep.subr.mxu0 0.0
    %292 = vmatpush1.msra.mxu0 0.0
    %293 = vmatprep.subr.mxu0 0.0
    %294 = vmatpush1.msra.mxu0 0.0
    %295 = vmatprep.subr.mxu0 0.0
    %296 = vmatpush1.msra.mxu0 0.0
    %297 = vmatprep.subr.mxu0 0.0
    %298 = vmatpush1.msra.mxu0 0.0
    %299 = vmatprep.subr.mxu0 0.0
    %300 = vmatpush1.msra.mxu0 0.0
    %301 = vmatprep.subr.mxu0 0.0
    %302 = vmatpush1.msra.mxu0 0.0
    %303 = vmatprep.subr.mxu0 0.0
    %304 = vmatpush1.msra.mxu0 0.0
    %305 = vmatprep.subr.mxu0 0.0
    %306 = vmatpush1.msra.mxu0 0.0
    %307 = vmatprep.subr.mxu0 0.0
    %308 = vmatpush1.msra.mxu0 0.0
    %309 = vmatprep.subr.mxu0 0.0
    %310 = vmatpush1.msra.mxu0 0.0
    %311 = vmatprep.subr.mxu0 0.0
    %312 = vmatpush1.msra.mxu0 0.0
    %313 = vmatprep.subr.mxu0 0.0
    %314 = vmatpush1.msra.mxu0 0.0
    %315 = vmatprep.subr.mxu0 0.0
    %316 = vmatpush1.msra.mxu0 0.0
    %317 = vmatprep.subr.mxu0 0.0
    %318 = vmatpush1.msra.mxu0 0.0
    %319 = vmatprep.subr.mxu0 0.0
    %320 = vmatpush1.msra.mxu0 0.0
    %321 = vmatprep.subr.mxu0 0.0
    %322 = vmatpush1.msra.mxu0 0.0
    %323 = vmatprep.subr.mxu0 0.0
    %324 = vmatpush1.msra.mxu0 0.0
    %325 = vmatprep.subr.mxu0 0.0
    %326 = vmatpush1.msra.mxu0 0.0
    %327 = vmatprep.subr.mxu0 0.0
    %328 = vmatpush1.msra.mxu0 0.0
    %329 = vmatprep.subr.mxu0 0.0
    %330 = vmatpush1.msra.mxu0 0.0
    %331 = vmatprep.subr.mxu0 0.0
    %332 = vmatpush1.msra.mxu0 0.0
    %333 = vmatprep.subr.mxu0 0.0
    %334 = vmatpush1.msra.mxu0 0.0
    %335 = vmatprep.subr.mxu0 0.0
    %336 = vmatpush1.msra.mxu0 0.0
    %337 = vmatprep.subr.mxu0 0.0
    %338 = vmatpush1.msra.mxu0 0.0
    %339 = vmatprep.subr.mxu0 0.0
    %340 = vmatpush1.msra.mxu0 0.0
    %341 = vmatprep.subr.mxu0 0.0
    %342 = vmatpush1.msra.mxu0 0.0
    %343 = vmatprep.subr.mxu0 0.0
    %344 = vmatpush1.msra.mxu0 0.0
    %345 = vmatprep.subr.mxu0 0.0
    %346 = vmatpush1.msra.mxu0 0.0
    %347 = vmatprep.subr.mxu0 0.0
    %348 = vmatpush1.msra.mxu0 0.0
    %349 = vmatprep.subr.mxu0 0.0
    %350 = vmatpush1.msra.mxu0 0.0
    %351 = vmatprep.subr.mxu0 0.0
    %352 = vmatpush1.msra.mxu0 0.0
    %353 = vmatprep.mubr.f32.mxu0 0.0
    %354 = vmatmul.mubr.f32.gmra.mrb[0].mxu0 %v287
    %v355 = vpop.f32.mrb[0].mxu0
    %v356 = vadd.f32 0.0, %v355
    %v357 = vpop.f32.mrb[0].mxu0
    %358 = vdwg.mxu0
    %359 = vrot.lane.b32.xlu0 %v172, 120
    %v360 = vpop.permute.xlu0 %359
    %361 = vrot.lane.b32.xlu0 %v172, 88
    %v362 = vpop.permute.xlu0 %361
    %v363 = vsel %vm193, %v360, 0
    %v365 = vsel %vm193, %v362, 0
    %367 = vmatprep.subr.mxu0 0.0
    %368 = vmatpush1.xpose.msra.mxu0 %v365
    %369 = vmatprep.subr.mxu0 0.0
    %370 = vmatpush1.xpose.msra.mxu0 0.0
    %371 = vmatprep.subr.mxu0 0.0
    %372 = vmatpush1.xpose.msra.mxu0 0.0
    %373 = vmatprep.subr.mxu0 0.0
    %374 = vmatpush1.xpose.msra.mxu0 0.0
    %375 = vmatprep.subr.mxu0 0.0
    %376 = vmatpush1.xpose.msra.mxu0 0.0
    %377 = vmatprep.subr.mxu0 0.0
    %378 = vmatpush1.xpose.msra.mxu0 0.0
    %379 = vmatprep.subr.mxu0 0.0
    %380 = vmatpush1.xpose.msra.mxu0 0.0
    %381 = vmatprep.subr.mxu0 0.0
    %382 = vmatpush1.xpose.msra.mxu0 0.0
    %383 = vmatprep.subr.mxu0 0.0
    %384 = vmatpush1.xpose.msra.mxu0 0.0
    %385 = vmatprep.subr.mxu0 0.0
    %386 = vmatpush1.xpose.msra.mxu0 0.0
    %387 = vmatprep.subr.mxu0 0.0
    %388 = vmatpush1.xpose.msra.mxu0 0.0
    %389 = vmatprep.subr.mxu0 0.0
    %390 = vmatpush1.xpose.msra.mxu0 0.0
    %391 = vmatprep.subr.mxu0 0.0
    %392 = vmatpush1.xpose.msra.mxu0 0.0
    %393 = vmatprep.subr.mxu0 0.0
    %394 = vmatpush1.xpose.msra.mxu0 0.0
    %395 = vmatprep.subr.mxu0 0.0
    %396 = vmatpush1.xpose.msra.mxu0 0.0
    %397 = vmatprep.subr.mxu0 0.0
    %398 = vmatpush1.xpose.msra.mxu0 0.0
    %399 = vmatprep.subr.mxu0 0.0
    %400 = vmatpush1.xpose.msra.mxu0 0.0
    %401 = vmatprep.subr.mxu0 0.0
    %402 = vmatpush1.xpose.msra.mxu0 0.0
    %403 = vmatprep.subr.mxu0 0.0
    %404 = vmatpush1.xpose.msra.mxu0 0.0
    %405 = vmatprep.subr.mxu0 0.0
    %406 = vmatpush1.xpose.msra.mxu0 0.0
    %407 = vmatprep.subr.mxu0 0.0
    %408 = vmatpush1.xpose.msra.mxu0 0.0
    %409 = vmatprep.subr.mxu0 0.0
    %410 = vmatpush1.xpose.msra.mxu0 0.0
    %411 = vmatprep.subr.mxu0 0.0
    %412 = vmatpush1.xpose.msra.mxu0 0.0
    %413 = vmatprep.subr.mxu0 0.0
    %414 = vmatpush1.xpose.msra.mxu0 0.0
    %415 = vmatprep.subr.mxu0 0.0
    %416 = vmatpush1.xpose.msra.mxu0 0.0
    %417 = vmatprep.subr.mxu0 0.0
    %418 = vmatpush1.xpose.msra.mxu0 0.0
    %419 = vmatprep.subr.mxu0 0.0
    %420 = vmatpush1.xpose.msra.mxu0 0.0
    %421 = vmatprep.subr.mxu0 0.0
    %422 = vmatpush1.xpose.msra.mxu0 0.0
    %423 = vmatprep.subr.mxu0 0.0
    %424 = vmatpush1.xpose.msra.mxu0 0.0
    %425 = vmatprep.subr.mxu0 0.0
    %426 = vmatpush1.xpose.msra.mxu0 0.0
    %427 = vmatprep.subr.mxu0 0.0
    %428 = vmatpush1.xpose.msra.mxu0 0.0
    %429 = vmatprep.subr.mxu0 0.0
    %430 = vmatpush1.xpose.msra.mxu0 0.0
    %431 = vmatprep.mubr.f32.mxu0 0.0
    %432 = vmatmul.mubr.f32.gmra.mrb[0].mxu0 %v363
    %v433 = vpop.f32.mrb[0].mxu0
    %v434 = vadd.f32 0.0, %v433
    %v435 = vpop.f32.mrb[0].mxu0
    %436 = vdwg.mxu0
    %v437 = vsel %vm184, -1e+30, %v434
    %v438 = vsel %vm193, %v437, -inf
    %439 = vmax.xlane.f32.xlu0 %v438
    %v440 = vpop.xlane.xlu0 %439
    %v441 = vsub.f32 %v437, %v440
    %v442 = vmul.f32 %v441, 1.442695
    %v443 = vpow.pop %v442
    %v444 = vsel %vm193, %v443, 0.0
    %445 = vadd.xlane.f32.xlu0 %v444
    %v446 = vpop.xlane.xlu0 %445
    %v447 = vrcp.pop %v446
    %v448 = vmul.f32 %v446, %v447
    %v449 = vsub.f32 2.0, %v448
    %v450 = vmul.f32 %v447, %v449
    %v451 = vmul.f32 %v443, %v450
    %452 = vrot.lane.b32.xlu0 %v172, 56
    %v453 = vpop.permute.xlu0 %452
    %v456 = vsel %vm193, %v451, 0
    %458 = vmatprep.subr.mxu0 0.0
    %459 = vmatpush1.msra.mxu0 %v453
    %460 = vmatprep.subr.mxu0 0.0
    %461 = vmatpush1.msra.mxu0 0.0
    %462 = vmatprep.subr.mxu0 0.0
    %463 = vmatpush1.msra.mxu0 0.0
    %464 = vmatprep.subr.mxu0 0.0
    %465 = vmatpush1.msra.mxu0 0.0
    %466 = vmatprep.subr.mxu0 0.0
    %467 = vmatpush1.msra.mxu0 0.0
    %468 = vmatprep.subr.mxu0 0.0
    %469 = vmatpush1.msra.mxu0 0.0
    %470 = vmatprep.subr.mxu0 0.0
    %471 = vmatpush1.msra.mxu0 0.0
    %472 = vmatprep.subr.mxu0 0.0
    %473 = vmatpush1.msra.mxu0 0.0
    %474 = vmatprep.subr.mxu0 0.0
    %475 = vmatpush1.msra.mxu0 0.0
    %476 = vmatprep.subr.mxu0 0.0
    %477 = vmatpush1.msra.mxu0 0.0
    %478 = vmatprep.subr.mxu0 0.0
    %479 = vmatpush1.msra.mxu0 0.0
    %480 = vmatprep.subr.mxu0 0.0
    %481 = vmatpush1.msra.mxu0 0.0
    %482 = vmatprep.subr.mxu0 0.0
    %483 = vmatpush1.msra.mxu0 0.0
    %484 = vmatprep.subr.mxu0 0.0
    %485 = vmatpush1.msra.mxu0 0.0
    %486 = vmatprep.subr.mxu0 0.0
    %487 = vmatpush1.msra.mxu0 0.0
    %488 = vmatprep.subr.mxu0 0.0
    %489 = vmatpush1.msra.mxu0 0.0
    %490 = vmatprep.subr.mxu0 0.0
    %491 = vmatpush1.msra.mxu0 0.0
    %492 = vmatprep.subr.mxu0 0.0
    %493 = vmatpush1.msra.mxu0 0.0
    %494 = vmatprep.subr.mxu0 0.0
    %495 = vmatpush1.msra.mxu0 0.0
    %496 = vmatprep.subr.mxu0 0.0
    %497 = vmatpush1.msra.mxu0 0.0
    %498 = vmatprep.subr.mxu0 0.0
    %499 = vmatpush1.msra.mxu0 0.0
    %500 = vmatprep.subr.mxu0 0.0
    %501 = vmatpush1.msra.mxu0 0.0
    %502 = vmatprep.subr.mxu0 0.0
    %503 = vmatpush1.msra.mxu0 0.0
    %504 = vmatprep.subr.mxu0 0.0
    %505 = vmatpush1.msra.mxu0 0.0
    %506 = vmatprep.subr.mxu0 0.0
    %507 = vmatpush1.msra.mxu0 0.0
    %508 = vmatprep.subr.mxu0 0.0
    %509 = vmatpush1.msra.mxu0 0.0
    %510 = vmatprep.subr.mxu0 0.0
    %511 = vmatpush1.msra.mxu0 0.0
    %512 = vmatprep.subr.mxu0 0.0
    %513 = vmatpush1.msra.mxu0 0.0
    %514 = vmatprep.subr.mxu0 0.0
    %515 = vmatpush1.msra.mxu0 0.0
    %516 = vmatprep.subr.mxu0 0.0
    %517 = vmatpush1.msra.mxu0 0.0
    %518 = vmatprep.subr.mxu0 0.0
    %519 = vmatpush1.msra.mxu0 0.0
    %520 = vmatprep.subr.mxu0 0.0
    %521 = vmatpush1.msra.mxu0 0.0
    %522 = vmatprep.mubr.f32.mxu0 0.0
    %523 = vmatmul.mubr.f32.gmra.mrb[0].mxu0 %v456
    %v524 = vpop.f32.mrb[0].mxu0
    %v525 = vadd.f32 0.0, %v524
    %v526 = vpop.f32.mrb[0].mxu0
    %527 = vdwg.mxu0
    %v529 = vsel %vm193, %v525, 0
    %531 = vmatprep.subr.mxu0 0.0
    %532 = vmatpush1.msra.mxu0 %v186
    %533 = vmatprep.subr.mxu0 0.0
    %534 = vmatpush1.msra.mxu0 0.0
    %535 = vmatprep.subr.mxu0 0.0
    %536 = vmatpush1.msra.mxu0 0.0
    %537 = vmatprep.subr.mxu0 0.0
    %538 = vmatpush1.msra.mxu0 0.0
    %539 = vmatprep.subr.mxu0 0.0
    %540 = vmatpush1.msra.mxu0 0.0
    %541 = vmatprep.subr.mxu0 0.0
    %542 = vmatpush1.msra.mxu0 0.0
    %543 = vmatprep.subr.mxu0 0.0
    %544 = vmatpush1.msra.mxu0 0.0
    %545 = vmatprep.subr.mxu0 0.0
    %546 = vmatpush1.msra.mxu0 0.0
    %547 = vmatprep.subr.mxu0 0.0
    %548 = vmatpush1.msra.mxu0 0.0
    %549 = vmatprep.subr.mxu0 0.0
    %550 = vmatpush1.msra.mxu0 0.0
    %551 = vmatprep.subr.mxu0 0.0
    %552 = vmatpush1.msra.mxu0 0.0
    %553 = vmatprep.subr.mxu0 0.0
    %554 = vmatpush1.msra.mxu0 0.0
    %555 = vmatprep.subr.mxu0 0.0
    %556 = vmatpush1.msra.mxu0 0.0
    %557 = vmatprep.subr.mxu0 0.0
    %558 = vmatpush1.msra.mxu0 0.0
    %559 = vmatprep.subr.mxu0 0.0
    %560 = vmatpush1.msra.mxu0 0.0
    %561 = vmatprep.subr.mxu0 0.0
    %562 = vmatpush1.msra.mxu0 0.0
    %563 = vmatprep.subr.mxu0 0.0
    %564 = vmatpush1.msra.mxu0 0.0
    %565 = vmatprep.subr.mxu0 0.0
    %566 = vmatpush1.msra.mxu0 0.0
    %567 = vmatprep.subr.mxu0 0.0
    %568 = vmatpush1.msra.mxu0 0.0
    %569 = vmatprep.subr.mxu0 0.0
    %570 = vmatpush1.msra.mxu0 0.0
    %571 = vmatprep.subr.mxu0 0.0
    %572 = vmatpush1.msra.mxu0 0.0
    %573 = vmatprep.subr.mxu0 0.0
    %574 = vmatpush1.msra.mxu0 0.0
    %575 = vmatprep.subr.mxu0 0.0
    %576 = vmatpush1.msra.mxu0 0.0
    %577 = vmatprep.subr.mxu0 0.0
    %578 = vmatpush1.msra.mxu0 0.0
    %579 = vmatprep.subr.mxu0 0.0
    %580 = vmatpush1.msra.mxu0 0.0
    %581 = vmatprep.subr.mxu0 0.0
    %582 = vmatpush1.msra.mxu0 0.0
    %583 = vmatprep.subr.mxu0 0.0
    %584 = vmatpush1.msra.mxu0 0.0
    %585 = vmatprep.subr.mxu0 0.0
    %586 = vmatpush1.msra.mxu0 0.0
    %587 = vmatprep.subr.mxu0 0.0
    %588 = vmatpush1.msra.mxu0 0.0
    %589 = vmatprep.subr.mxu0 0.0
    %590 = vmatpush1.msra.mxu0 0.0
    %591 = vmatprep.subr.mxu0 0.0
    %592 = vmatpush1.msra.mxu0 0.0
    %593 = vmatprep.subr.mxu0 0.0
    %594 = vmatpush1.msra.mxu0 0.0
    %595 = vmatprep.mubr.f32.mxu0 0.0
    %596 = vmatmul.mubr.f32.gmra.mrb[0].mxu0 %v529
    %v597 = vpop.f32.mrb[0].mxu0
    %v598 = vadd.f32 0.0, %v597
    %v599 = vpop.f32.mrb[0].mxu0
    %600 = vdwg.mxu0
    %v602 = vsel %vm193, %v356, 0
    %604 = vmatprep.subr.mxu0 0.0
    %605 = vmatpush1.msra.mxu0 %v185
    %606 = vmatprep.subr.mxu0 0.0
    %607 = vmatpush1.msra.mxu0 0.0
    %608 = vmatprep.subr.mxu0 0.0
    %609 = vmatpush1.msra.mxu0 0.0
    %610 = vmatprep.subr.mxu0 0.0
    %611 = vmatpush1.msra.mxu0 0.0
    %612 = vmatprep.subr.mxu0 0.0
    %613 = vmatpush1.msra.mxu0 0.0
    %614 = vmatprep.subr.mxu0 0.0
    %615 = vmatpush1.msra.mxu0 0.0
    %616 = vmatprep.subr.mxu0 0.0
    %617 = vmatpush1.msra.mxu0 0.0
    %618 = vmatprep.subr.mxu0 0.0
    %619 = vmatpush1.msra.mxu0 0.0
    %620 = vmatprep.subr.mxu0 0.0
    %621 = vmatpush1.msra.mxu0 0.0
    %622 = vmatprep.subr.mxu0 0.0
    %623 = vmatpush1.msra.mxu0 0.0
    %624 = vmatprep.subr.mxu0 0.0
    %625 = vmatpush1.msra.mxu0 0.0
    %626 = vmatprep.subr.mxu0 0.0
    %627 = vmatpush1.msra.mxu0 0.0
    %628 = vmatprep.subr.mxu0 0.0
    %629 = vmatpush1.msra.mxu0 0.0
    %630 = vmatprep.subr.mxu0 0.0
    %631 = vmatpush1.msra.mxu0 0.0
    %632 = vmatprep.subr.mxu0 0.0
    %633 = vmatpush1.msra.mxu0 0.0
    %634 = vmatprep.subr.mxu0 0.0
    %635 = vmatpush1.msra.mxu0 0.0
    %636 = vmatprep.subr.mxu0 0.0
    %637 = vmatpush1.msra.mxu0 0.0
    %638 = vmatprep.subr.mxu0 0.0
    %639 = vmatpush1.msra.mxu0 0.0
    %640 = vmatprep.subr.mxu0 0.0
    %641 = vmatpush1.msra.mxu0 0.0
    %642 = vmatprep.subr.mxu0 0.0
    %643 = vmatpush1.msra.mxu0 0.0
    %644 = vmatprep.subr.mxu0 0.0
    %645 = vmatpush1.msra.mxu0 0.0
    %646 = vmatprep.subr.mxu0 0.0
    %647 = vmatpush1.msra.mxu0 0.0
    %648 = vmatprep.subr.mxu0 0.0
    %649 = vmatpush1.msra.mxu0 0.0
    %650 = vmatprep.subr.mxu0 0.0
    %651 = vmatpush1.msra.mxu0 0.0
    %652 = vmatprep.subr.mxu0 0.0
    %653 = vmatpush1.msra.mxu0 0.0
    %654 = vmatprep.subr.mxu0 0.0
    %655 = vmatpush1.msra.mxu0 0.0
    %656 = vmatprep.subr.mxu0 0.0
    %657 = vmatpush1.msra.mxu0 0.0
    %658 = vmatprep.subr.mxu0 0.0
    %659 = vmatpush1.msra.mxu0 0.0
    %660 = vmatprep.subr.mxu0 0.0
    %661 = vmatpush1.msra.mxu0 0.0
    %662 = vmatprep.subr.mxu0 0.0
    %663 = vmatpush1.msra.mxu0 0.0
    %664 = vmatprep.subr.mxu0 0.0
    %665 = vmatpush1.msra.mxu0 0.0
    %666 = vmatprep.subr.mxu0 0.0
    %667 = vmatpush1.msra.mxu0 0.0
    %668 = vmatprep.mubr.f32.mxu0 0.0
    %669 = vmatmul.mubr.f32.gmra.mrb[0].mxu0 %v602
    %v670 = vpop.f32.mrb[0].mxu0
    %v671 = vadd.f32 %v598, %v670
    %v672 = vpop.f32.mrb[0].mxu0
    %673 = vdwg.mxu0
    %674 = vrot.lane.b32.xlu0 %v172, 112
    %v675 = vpop.permute.xlu0 %674
    %676 = vrot.lane.b32.xlu0 %v172, 80
    %v677 = vpop.permute.xlu0 %676
    %v678 = vsel %vm193, %v675, 0
    %v680 = vsel %vm193, %v677, 0
    %682 = vmatprep.subr.mxu0 0.0
    %683 = vmatpush1.xpose.msra.mxu0 %v680
    %684 = vmatprep.subr.mxu0 0.0
    %685 = vmatpush1.xpose.msra.mxu0 0.0
    %686 = vmatprep.subr.mxu0 0.0
    %687 = vmatpush1.xpose.msra.mxu0 0.0
    %688 = vmatprep.subr.mxu0 0.0
    %689 = vmatpush1.xpose.msra.mxu0 0.0
    %690 = vmatprep.subr.mxu0 0.0
    %691 = vmatpush1.xpose.msra.mxu0 0.0
    %692 = vmatprep.subr.mxu0 0.0
    %693 = vmatpush1.xpose.msra.mxu0 0.0
    %694 = vmatprep.subr.mxu0 0.0
    %695 = vmatpush1.xpose.msra.mxu0 0.0
    %696 = vmatprep.subr.mxu0 0.0
    %697 = vmatpush1.xpose.msra.mxu0 0.0
    %698 = vmatprep.subr.mxu0 0.0
    %699 = vmatpush1.xpose.msra.mxu0 0.0
    %700 = vmatprep.subr.mxu0 0.0
    %701 = vmatpush1.xpose.msra.mxu0 0.0
    %702 = vmatprep.subr.mxu0 0.0
    %703 = vmatpush1.xpose.msra.mxu0 0.0
    %704 = vmatprep.subr.mxu0 0.0
    %705 = vmatpush1.xpose.msra.mxu0 0.0
    %706 = vmatprep.subr.mxu0 0.0
    %707 = vmatpush1.xpose.msra.mxu0 0.0
    %708 = vmatprep.subr.mxu0 0.0
    %709 = vmatpush1.xpose.msra.mxu0 0.0
    %710 = vmatprep.subr.mxu0 0.0
    %711 = vmatpush1.xpose.msra.mxu0 0.0
    %712 = vmatprep.subr.mxu0 0.0
    %713 = vmatpush1.xpose.msra.mxu0 0.0
    %714 = vmatprep.subr.mxu0 0.0
    %715 = vmatpush1.xpose.msra.mxu0 0.0
    %716 = vmatprep.subr.mxu0 0.0
    %717 = vmatpush1.xpose.msra.mxu0 0.0
    %718 = vmatprep.subr.mxu0 0.0
    %719 = vmatpush1.xpose.msra.mxu0 0.0
    %720 = vmatprep.subr.mxu0 0.0
    %721 = vmatpush1.xpose.msra.mxu0 0.0
    %722 = vmatprep.subr.mxu0 0.0
    %723 = vmatpush1.xpose.msra.mxu0 0.0
    %724 = vmatprep.subr.mxu0 0.0
    %725 = vmatpush1.xpose.msra.mxu0 0.0
    %726 = vmatprep.subr.mxu0 0.0
    %727 = vmatpush1.xpose.msra.mxu0 0.0
    %728 = vmatprep.subr.mxu0 0.0
    %729 = vmatpush1.xpose.msra.mxu0 0.0
    %730 = vmatprep.subr.mxu0 0.0
    %731 = vmatpush1.xpose.msra.mxu0 0.0
    %732 = vmatprep.subr.mxu0 0.0
    %733 = vmatpush1.xpose.msra.mxu0 0.0
    %734 = vmatprep.subr.mxu0 0.0
    %735 = vmatpush1.xpose.msra.mxu0 0.0
    %736 = vmatprep.subr.mxu0 0.0
    %737 = vmatpush1.xpose.msra.mxu0 0.0
    %738 = vmatprep.subr.mxu0 0.0
    %739 = vmatpush1.xpose.msra.mxu0 0.0
    %740 = vmatprep.subr.mxu0 0.0
    %741 = vmatpush1.xpose.msra.mxu0 0.0
    %742 = vmatprep.subr.mxu0 0.0
    %743 = vmatpush1.xpose.msra.mxu0 0.0
    %744 = vmatprep.subr.mxu0 0.0
    %745 = vmatpush1.xpose.msra.mxu0 0.0
    %746 = vmatprep.mubr.f32.mxu0 0.0
    %747 = vmatmul.mubr.f32.gmra.mrb[0].mxu0 %v678
    %v748 = vpop.f32.mrb[0].mxu0
    %v749 = vadd.f32 0.0, %v748
    %v750 = vpop.f32.mrb[0].mxu0
    %751 = vdwg.mxu0
    %v752 = vsel %vm184, -1e+30, %v749
    %v753 = vsel %vm193, %v752, -inf
    %754 = vmax.xlane.f32.xlu0 %v753
    %v755 = vpop.xlane.xlu0 %754
    %v756 = vsub.f32 %v752, %v755
    %v757 = vmul.f32 %v756, 1.442695
    %v758 = vpow.pop %v757
    %v759 = vsel %vm193, %v758, 0.0
    %760 = vadd.xlane.f32.xlu0 %v759
    %v761 = vpop.xlane.xlu0 %760
    %v762 = vrcp.pop %v761
    %v763 = vmul.f32 %v761, %v762
    %v764 = vsub.f32 2.0, %v763
    %v765 = vmul.f32 %v762, %v764
    %v766 = vmul.f32 %v758, %v765
    %767 = vrot.lane.b32.xlu0 %v172, 48
    %v768 = vpop.permute.xlu0 %767
    %v771 = vsel %vm193, %v766, 0
    %773 = vmatprep.subr.mxu0 0.0
    %774 = vmatpush1.msra.mxu0 %v768
    %775 = vmatprep.subr.mxu0 0.0
    %776 = vmatpush1.msra.mxu0 0.0
    %777 = vmatprep.subr.mxu0 0.0
    %778 = vmatpush1.msra.mxu0 0.0
    %779 = vmatprep.subr.mxu0 0.0
    %780 = vmatpush1.msra.mxu0 0.0
    %781 = vmatprep.subr.mxu0 0.0
    %782 = vmatpush1.msra.mxu0 0.0
    %783 = vmatprep.subr.mxu0 0.0
    %784 = vmatpush1.msra.mxu0 0.0
    %785 = vmatprep.subr.mxu0 0.0
    %786 = vmatpush1.msra.mxu0 0.0
    %787 = vmatprep.subr.mxu0 0.0
    %788 = vmatpush1.msra.mxu0 0.0
    %789 = vmatprep.subr.mxu0 0.0
    %790 = vmatpush1.msra.mxu0 0.0
    %791 = vmatprep.subr.mxu0 0.0
    %792 = vmatpush1.msra.mxu0 0.0
    %793 = vmatprep.subr.mxu0 0.0
    %794 = vmatpush1.msra.mxu0 0.0
    %795 = vmatprep.subr.mxu0 0.0
    %796 = vmatpush1.msra.mxu0 0.0
    %797 = vmatprep.subr.mxu0 0.0
    %798 = vmatpush1.msra.mxu0 0.0
    %799 = vmatprep.subr.mxu0 0.0
    %800 = vmatpush1.msra.mxu0 0.0
    %801 = vmatprep.subr.mxu0 0.0
    %802 = vmatpush1.msra.mxu0 0.0
    %803 = vmatprep.subr.mxu0 0.0
    %804 = vmatpush1.msra.mxu0 0.0
    %805 = vmatprep.subr.mxu0 0.0
    %806 = vmatpush1.msra.mxu0 0.0
    %807 = vmatprep.subr.mxu0 0.0
    %808 = vmatpush1.msra.mxu0 0.0
    %809 = vmatprep.subr.mxu0 0.0
    %810 = vmatpush1.msra.mxu0 0.0
    %811 = vmatprep.subr.mxu0 0.0
    %812 = vmatpush1.msra.mxu0 0.0
    %813 = vmatprep.subr.mxu0 0.0
    %814 = vmatpush1.msra.mxu0 0.0
    %815 = vmatprep.subr.mxu0 0.0
    %816 = vmatpush1.msra.mxu0 0.0
    %817 = vmatprep.subr.mxu0 0.0
    %818 = vmatpush1.msra.mxu0 0.0
    %819 = vmatprep.subr.mxu0 0.0
    %820 = vmatpush1.msra.mxu0 0.0
    %821 = vmatprep.subr.mxu0 0.0
    %822 = vmatpush1.msra.mxu0 0.0
    %823 = vmatprep.subr.mxu0 0.0
    %824 = vmatpush1.msra.mxu0 0.0
    %825 = vmatprep.subr.mxu0 0.0
    %826 = vmatpush1.msra.mxu0 0.0
    %827 = vmatprep.subr.mxu0 0.0
    %828 = vmatpush1.msra.mxu0 0.0
    %829 = vmatprep.subr.mxu0 0.0
    %830 = vmatpush1.msra.mxu0 0.0
    %831 = vmatprep.subr.mxu0 0.0
    %832 = vmatpush1.msra.mxu0 0.0
    %833 = vmatprep.subr.mxu0 0.0
    %834 = vmatpush1.msra.mxu0 0.0
    %835 = vmatprep.subr.mxu0 0.0
    %836 = vmatpush1.msra.mxu0 0.0
    %837 = vmatprep.mubr.f32.mxu0 0.0
    %838 = vmatmul.mubr.f32.gmra.mrb[0].mxu0 %v771
    %v839 = vpop.f32.mrb[0].mxu0
    %v840 = vadd.f32 0.0, %v839
    %v841 = vpop.f32.mrb[0].mxu0
    %842 = vdwg.mxu0
    %v844 = vsel %vm193, %v840, 0
    %846 = vmatprep.subr.mxu0 0.0
    %847 = vmatpush1.msra.mxu0 %v187
    %848 = vmatprep.subr.mxu0 0.0
    %849 = vmatpush1.msra.mxu0 0.0
    %850 = vmatprep.subr.mxu0 0.0
    %851 = vmatpush1.msra.mxu0 0.0
    %852 = vmatprep.subr.mxu0 0.0
    %853 = vmatpush1.msra.mxu0 0.0
    %854 = vmatprep.subr.mxu0 0.0
    %855 = vmatpush1.msra.mxu0 0.0
    %856 = vmatprep.subr.mxu0 0.0
    %857 = vmatpush1.msra.mxu0 0.0
    %858 = vmatprep.subr.mxu0 0.0
    %859 = vmatpush1.msra.mxu0 0.0
    %860 = vmatprep.subr.mxu0 0.0
    %861 = vmatpush1.msra.mxu0 0.0
    %862 = vmatprep.subr.mxu0 0.0
    %863 = vmatpush1.msra.mxu0 0.0
    %864 = vmatprep.subr.mxu0 0.0
    %865 = vmatpush1.msra.mxu0 0.0
    %866 = vmatprep.subr.mxu0 0.0
    %867 = vmatpush1.msra.mxu0 0.0
    %868 = vmatprep.subr.mxu0 0.0
    %869 = vmatpush1.msra.mxu0 0.0
    %870 = vmatprep.subr.mxu0 0.0
    %871 = vmatpush1.msra.mxu0 0.0
    %872 = vmatprep.subr.mxu0 0.0
    %873 = vmatpush1.msra.mxu0 0.0
    %874 = vmatprep.subr.mxu0 0.0
    %875 = vmatpush1.msra.mxu0 0.0
    %876 = vmatprep.subr.mxu0 0.0
    %877 = vmatpush1.msra.mxu0 0.0
    %878 = vmatprep.subr.mxu0 0.0
    %879 = vmatpush1.msra.mxu0 0.0
    %880 = vmatprep.subr.mxu0 0.0
    %881 = vmatpush1.msra.mxu0 0.0
    %882 = vmatprep.subr.mxu0 0.0
    %883 = vmatpush1.msra.mxu0 0.0
    %884 = vmatprep.subr.mxu0 0.0
    %885 = vmatpush1.msra.mxu0 0.0
    %886 = vmatprep.subr.mxu0 0.0
    %887 = vmatpush1.msra.mxu0 0.0
    %888 = vmatprep.subr.mxu0 0.0
    %889 = vmatpush1.msra.mxu0 0.0
    %890 = vmatprep.subr.mxu0 0.0
    %891 = vmatpush1.msra.mxu0 0.0
    %892 = vmatprep.subr.mxu0 0.0
    %893 = vmatpush1.msra.mxu0 0.0
    %894 = vmatprep.subr.mxu0 0.0
    %895 = vmatpush1.msra.mxu0 0.0
    %896 = vmatprep.subr.mxu0 0.0
    %897 = vmatpush1.msra.mxu0 0.0
    %898 = vmatprep.subr.mxu0 0.0
    %899 = vmatpush1.msra.mxu0 0.0
    %900 = vmatprep.subr.mxu0 0.0
    %901 = vmatpush1.msra.mxu0 0.0
    %902 = vmatprep.subr.mxu0 0.0
    %903 = vmatpush1.msra.mxu0 0.0
    %904 = vmatprep.subr.mxu0 0.0
    %905 = vmatpush1.msra.mxu0 0.0
    %906 = vmatprep.subr.mxu0 0.0
    %907 = vmatpush1.msra.mxu0 0.0
    %908 = vmatprep.subr.mxu0 0.0
    %909 = vmatpush1.msra.mxu0 0.0
    %910 = vmatprep.mubr.f32.mxu0 0.0
    %911 = vmatmul.mubr.f32.gmra.mrb[0].mxu0 %v844
    %v912 = vpop.f32.mrb[0].mxu0
    %v913 = vadd.f32 0.0, %v912
    %v914 = vpop.f32.mrb[0].mxu0
    %915 = vdwg.mxu0
    %v916 = vadd.f32 %v671, %v913
    %917 = vrot.lane.b32.xlu0 %v172, 104
    %v918 = vpop.permute.xlu0 %917
    %919 = vrot.lane.b32.xlu0 %v172, 72
    %v920 = vpop.permute.xlu0 %919
    %v921 = vsel %vm193, %v918, 0
    %v923 = vsel %vm193, %v920, 0
    %925 = vmatprep.subr.mxu0 0.0
    %926 = vmatpush1.xpose.msra.mxu0 %v923
    %927 = vmatprep.subr.mxu0 0.0
    %928 = vmatpush1.xpose.msra.mxu0 0.0
    %929 = vmatprep.subr.mxu0 0.0
    %930 = vmatpush1.xpose.msra.mxu0 0.0
    %931 = vmatprep.subr.mxu0 0.0
    %932 = vmatpush1.xpose.msra.mxu0 0.0
    %933 = vmatprep.subr.mxu0 0.0
    %934 = vmatpush1.xpose.msra.mxu0 0.0
    %935 = vmatprep.subr.mxu0 0.0
    %936 = vmatpush1.xpose.msra.mxu0 0.0
    %937 = vmatprep.subr.mxu0 0.0
    %938 = vmatpush1.xpose.msra.mxu0 0.0
    %939 = vmatprep.subr.mxu0 0.0
    %940 = vmatpush1.xpose.msra.mxu0 0.0
    %941 = vmatprep.subr.mxu0 0.0
    %942 = vmatpush1.xpose.msra.mxu0 0.0
    %943 = vmatprep.subr.mxu0 0.0
    %944 = vmatpush1.xpose.msra.mxu0 0.0
    %945 = vmatprep.subr.mxu0 0.0
    %946 = vmatpush1.xpose.msra.mxu0 0.0
    %947 = vmatprep.subr.mxu0 0.0
    %948 = vmatpush1.xpose.msra.mxu0 0.0
    %949 = vmatprep.subr.mxu0 0.0
    %950 = vmatpush1.xpose.msra.mxu0 0.0
    %951 = vmatprep.subr.mxu0 0.0
    %952 = vmatpush1.xpose.msra.mxu0 0.0
    %953 = vmatprep.subr.mxu0 0.0
    %954 = vmatpush1.xpose.msra.mxu0 0.0
    %955 = vmatprep.subr.mxu0 0.0
    %956 = vmatpush1.xpose.msra.mxu0 0.0
    %957 = vmatprep.subr.mxu0 0.0
    %958 = vmatpush1.xpose.msra.mxu0 0.0
    %959 = vmatprep.subr.mxu0 0.0
    %960 = vmatpush1.xpose.msra.mxu0 0.0
    %961 = vmatprep.subr.mxu0 0.0
    %962 = vmatpush1.xpose.msra.mxu0 0.0
    %963 = vmatprep.subr.mxu0 0.0
    %964 = vmatpush1.xpose.msra.mxu0 0.0
    %965 = vmatprep.subr.mxu0 0.0
    %966 = vmatpush1.xpose.msra.mxu0 0.0
    %967 = vmatprep.subr.mxu0 0.0
    %968 = vmatpush1.xpose.msra.mxu0 0.0
    %969 = vmatprep.subr.mxu0 0.0
    %970 = vmatpush1.xpose.msra.mxu0 0.0
    %971 = vmatprep.subr.mxu0 0.0
    %972 = vmatpush1.xpose.msra.mxu0 0.0
    %973 = vmatprep.subr.mxu0 0.0
    %974 = vmatpush1.xpose.msra.mxu0 0.0
    %975 = vmatprep.subr.mxu0 0.0
    %976 = vmatpush1.xpose.msra.mxu0 0.0
    %977 = vmatprep.subr.mxu0 0.0
    %978 = vmatpush1.xpose.msra.mxu0 0.0
    %979 = vmatprep.subr.mxu0 0.0
    %980 = vmatpush1.xpose.msra.mxu0 0.0
    %981 = vmatprep.subr.mxu0 0.0
    %982 = vmatpush1.xpose.msra.mxu0 0.0
    %983 = vmatprep.subr.mxu0 0.0
    %984 = vmatpush1.xpose.msra.mxu0 0.0
    %985 = vmatprep.subr.mxu0 0.0
    %986 = vmatpush1.xpose.msra.mxu0 0.0
    %987 = vmatprep.subr.mxu0 0.0
    %988 = vmatpush1.xpose.msra.mxu0 0.0
    %989 = vmatprep.mubr.f32.mxu0 0.0
    %990 = vmatmul.mubr.f32.gmra.mrb[0].mxu0 %v921
    %v991 = vpop.f32.mrb[0].mxu0
    %v992 = vadd.f32 0.0, %v991
    %v993 = vpop.f32.mrb[0].mxu0
    %994 = vdwg.mxu0
    %v995 = vsel %vm184, -1e+30, %v992
    %v996 = vsel %vm193, %v995, -inf
    %997 = vmax.xlane.f32.xlu0 %v996
    %v998 = vpop.xlane.xlu0 %997
    %v999 = vsub.f32 %v995, %v998
    %v1000 = vmul.f32 %v999, 1.442695
    %v1001 = vpow.pop %v1000
    %v1002 = vsel %vm193, %v1001, 0.0
    %1003 = vadd.xlane.f32.xlu0 %v1002
    %v1004 = vpop.xlane.xlu0 %1003
    %v1005 = vrcp.pop %v1004
    %v1006 = vmul.f32 %v1004, %v1005
    %v1007 = vsub.f32 2.0, %v1006
    %v1008 = vmul.f32 %v1005, %v1007
    %v1009 = vmul.f32 %v1001, %v1008
    %1010 = vrot.lane.b32.xlu0 %v172, 40
    %v1011 = vpop.permute.xlu0 %1010
    %v1014 = vsel %vm193, %v1009, 0
    %1016 = vmatprep.subr.mxu0 0.0
    %1017 = vmatpush1.msra.mxu0 %v1011
    %1018 = vmatprep.subr.mxu0 0.0
    %1019 = vmatpush1.msra.mxu0 0.0
    %1020 = vmatprep.subr.mxu0 0.0
    %1021 = vmatpush1.msra.mxu0 0.0
    %1022 = vmatprep.subr.mxu0 0.0
    %1023 = vmatpush1.msra.mxu0 0.0
    %1024 = vmatprep.subr.mxu0 0.0
    %1025 = vmatpush1.msra.mxu0 0.0
    %1026 = vmatprep.subr.mxu0 0.0
    %1027 = vmatpush1.msra.mxu0 0.0
    %1028 = vmatprep.subr.mxu0 0.0
    %1029 = vmatpush1.msra.mxu0 0.0
    %1030 = vmatprep.subr.mxu0 0.0
    %1031 = vmatpush1.msra.mxu0 0.0
    %1032 = vmatprep.subr.mxu0 0.0
    %1033 = vmatpush1.msra.mxu0 0.0
    %1034 = vmatprep.subr.mxu0 0.0
    %1035 = vmatpush1.msra.mxu0 0.0
    %1036 = vmatprep.subr.mxu0 0.0
    %1037 = vmatpush1.msra.mxu0 0.0
    %1038 = vmatprep.subr.mxu0 0.0
    %1039 = vmatpush1.msra.mxu0 0.0
    %1040 = vmatprep.subr.mxu0 0.0
    %1041 = vmatpush1.msra.mxu0 0.0
    %1042 = vmatprep.subr.mxu0 0.0
    %1043 = vmatpush1.msra.mxu0 0.0
    %1044 = vmatprep.subr.mxu0 0.0
    %1045 = vmatpush1.msra.mxu0 0.0
    %1046 = vmatprep.subr.mxu0 0.0
    %1047 = vmatpush1.msra.mxu0 0.0
    %1048 = vmatprep.subr.mxu0 0.0
    %1049 = vmatpush1.msra.mxu0 0.0
    %1050 = vmatprep.subr.mxu0 0.0
    %1051 = vmatpush1.msra.mxu0 0.0
    %1052 = vmatprep.subr.mxu0 0.0
    %1053 = vmatpush1.msra.mxu0 0.0
    %1054 = vmatprep.subr.mxu0 0.0
    %1055 = vmatpush1.msra.mxu0 0.0
    %1056 = vmatprep.subr.mxu0 0.0
    %1057 = vmatpush1.msra.mxu0 0.0
    %1058 = vmatprep.subr.mxu0 0.0
    %1059 = vmatpush1.msra.mxu0 0.0
    %1060 = vmatprep.subr.mxu0 0.0
    %1061 = vmatpush1.msra.mxu0 0.0
    %1062 = vmatprep.subr.mxu0 0.0
    %1063 = vmatpush1.msra.mxu0 0.0
    %1064 = vmatprep.subr.mxu0 0.0
    %1065 = vmatpush1.msra.mxu0 0.0
    %1066 = vmatprep.subr.mxu0 0.0
    %1067 = vmatpush1.msra.mxu0 0.0
    %1068 = vmatprep.subr.mxu0 0.0
    %1069 = vmatpush1.msra.mxu0 0.0
    %1070 = vmatprep.subr.mxu0 0.0
    %1071 = vmatpush1.msra.mxu0 0.0
    %1072 = vmatprep.subr.mxu0 0.0
    %1073 = vmatpush1.msra.mxu0 0.0
    %1074 = vmatprep.subr.mxu0 0.0
    %1075 = vmatpush1.msra.mxu0 0.0
    %1076 = vmatprep.subr.mxu0 0.0
    %1077 = vmatpush1.msra.mxu0 0.0
    %1078 = vmatprep.subr.mxu0 0.0
    %1079 = vmatpush1.msra.mxu0 0.0
    %1080 = vmatprep.mubr.f32.mxu0 0.0
    %1081 = vmatmul.mubr.f32.gmra.mrb[0].mxu0 %v1014
    %v1082 = vpop.f32.mrb[0].mxu0
    %v1083 = vadd.f32 0.0, %v1082
    %v1084 = vpop.f32.mrb[0].mxu0
    %1085 = vdwg.mxu0
    %v1087 = vsel %vm193, %v1083, 0
    %1089 = vmatprep.subr.mxu0 0.0
    %1090 = vmatpush1.msra.mxu0 %v188
    %1091 = vmatprep.subr.mxu0 0.0
    %1092 = vmatpush1.msra.mxu0 0.0
    %1093 = vmatprep.subr.mxu0 0.0
    %1094 = vmatpush1.msra.mxu0 0.0
    %1095 = vmatprep.subr.mxu0 0.0
    %1096 = vmatpush1.msra.mxu0 0.0
    %1097 = vmatprep.subr.mxu0 0.0
    %1098 = vmatpush1.msra.mxu0 0.0
    %1099 = vmatprep.subr.mxu0 0.0
    %1100 = vmatpush1.msra.mxu0 0.0
    %1101 = vmatprep.subr.mxu0 0.0
    %1102 = vmatpush1.msra.mxu0 0.0
    %1103 = vmatprep.subr.mxu0 0.0
    %1104 = vmatpush1.msra.mxu0 0.0
    %1105 = vmatprep.subr.mxu0 0.0
    %1106 = vmatpush1.msra.mxu0 0.0
    %1107 = vmatprep.subr.mxu0 0.0
    %1108 = vmatpush1.msra.mxu0 0.0
    %1109 = vmatprep.subr.mxu0 0.0
    %1110 = vmatpush1.msra.mxu0 0.0
    %1111 = vmatprep.subr.mxu0 0.0
    %1112 = vmatpush1.msra.mxu0 0.0
    %1113 = vmatprep.subr.mxu0 0.0
    %1114 = vmatpush1.msra.mxu0 0.0
    %1115 = vmatprep.subr.mxu0 0.0
    %1116 = vmatpush1.msra.mxu0 0.0
    %1117 = vmatprep.subr.mxu0 0.0
    %1118 = vmatpush1.msra.mxu0 0.0
    %1119 = vmatprep.subr.mxu0 0.0
    %1120 = vmatpush1.msra.mxu0 0.0
    %1121 = vmatprep.subr.mxu0 0.0
    %1122 = vmatpush1.msra.mxu0 0.0
    %1123 = vmatprep.subr.mxu0 0.0
    %1124 = vmatpush1.msra.mxu0 0.0
    %1125 = vmatprep.subr.mxu0 0.0
    %1126 = vmatpush1.msra.mxu0 0.0
    %1127 = vmatprep.subr.mxu0 0.0
    %1128 = vmatpush1.msra.mxu0 0.0
    %1129 = vmatprep.subr.mxu0 0.0
    %1130 = vmatpush1.msra.mxu0 0.0
    %1131 = vmatprep.subr.mxu0 0.0
    %1132 = vmatpush1.msra.mxu0 0.0
    %1133 = vmatprep.subr.mxu0 0.0
    %1134 = vmatpush1.msra.mxu0 0.0
    %1135 = vmatprep.subr.mxu0 0.0
    %1136 = vmatpush1.msra.mxu0 0.0
    %1137 = vmatprep.subr.mxu0 0.0
    %1138 = vmatpush1.msra.mxu0 0.0
    %1139 = vmatprep.subr.mxu0 0.0
    %1140 = vmatpush1.msra.mxu0 0.0
    %1141 = vmatprep.subr.mxu0 0.0
    %1142 = vmatpush1.msra.mxu0 0.0
    %1143 = vmatprep.subr.mxu0 0.0
    %1144 = vmatpush1.msra.mxu0 0.0
    %1145 = vmatprep.subr.mxu0 0.0
    %1146 = vmatpush1.msra.mxu0 0.0
    %1147 = vmatprep.subr.mxu0 0.0
    %1148 = vmatpush1.msra.mxu0 0.0
    %1149 = vmatprep.subr.mxu0 0.0
    %1150 = vmatpush1.msra.mxu0 0.0
    %1151 = vmatprep.subr.mxu0 0.0
    %1152 = vmatpush1.msra.mxu0 0.0
    %1153 = vmatprep.mubr.f32.mxu0 0.0
    %1154 = vmatmul.mubr.f32.gmra.mrb[0].mxu0 %v1087
    %v1155 = vpop.f32.mrb[0].mxu0
    %v1156 = vadd.f32 0.0, %v1155
    %v1157 = vpop.f32.mrb[0].mxu0
    %1158 = vdwg.mxu0
    %v1159 = vadd.f32 %v916, %v1156
    %v1160 = vld [vmem:[%s0] sm:$0xff]
    %v1161 = vadd.f32 %v1160, %v1159
    %v1163 = vlaneseq
    %v1164 = vshrl.u32 %v1163, 7
    %v1165 = vsub.s32 0, %v1164
    %v1166 = vrot.slane %v189, %v1165
    %v1168 = vadd.f32 %v1161, %v1166
    %1169 = vst.msk [vmem:[#allocation3] sm:$0xff] %vm45, %v1168
    %1171 = vrot.lane.b32.xlu0 %v177, 96
    %v1172 = vpop.permute.xlu0 %1171
    %v1173 = vsel %vm193, %v177, 0
    %v1175 = vsel %vm193, %v1172, 0
    %1177 = vmatprep.subr.mxu0 0.0
    %1178 = vmatpush1.xpose.msra.mxu0 %v1175
    %1179 = vmatprep.subr.mxu0 0.0
    %1180 = vmatpush1.xpose.msra.mxu0 0.0
    %1181 = vmatprep.subr.mxu0 0.0
    %1182 = vmatpush1.xpose.msra.mxu0 0.0
    %1183 = vmatprep.subr.mxu0 0.0
    %1184 = vmatpush1.xpose.msra.mxu0 0.0
    %1185 = vmatprep.subr.mxu0 0.0
    %1186 = vmatpush1.xpose.msra.mxu0 0.0
    %1187 = vmatprep.subr.mxu0 0.0
    %1188 = vmatpush1.xpose.msra.mxu0 0.0
    %1189 = vmatprep.subr.mxu0 0.0
    %1190 = vmatpush1.xpose.msra.mxu0 0.0
    %1191 = vmatprep.subr.mxu0 0.0
    %1192 = vmatpush1.xpose.msra.mxu0 0.0
    %1193 = vmatprep.subr.mxu0 0.0
    %1194 = vmatpush1.xpose.msra.mxu0 0.0
    %1195 = vmatprep.subr.mxu0 0.0
    %1196 = vmatpush1.xpose.msra.mxu0 0.0
    %1197 = vmatprep.subr.mxu0 0.0
    %1198 = vmatpush1.xpose.msra.mxu0 0.0
    %1199 = vmatprep.subr.mxu0 0.0
    %1200 = vmatpush1.xpose.msra.mxu0 0.0
    %1201 = vmatprep.subr.mxu0 0.0
    %1202 = vmatpush1.xpose.msra.mxu0 0.0
    %1203 = vmatprep.subr.mxu0 0.0
    %1204 = vmatpush1.xpose.msra.mxu0 0.0
    %1205 = vmatprep.subr.mxu0 0.0
    %1206 = vmatpush1.xpose.msra.mxu0 0.0
    %1207 = vmatprep.subr.mxu0 0.0
    %1208 = vmatpush1.xpose.msra.mxu0 0.0
    %1209 = vmatprep.subr.mxu0 0.0
    %1210 = vmatpush1.xpose.msra.mxu0 0.0
    %1211 = vmatprep.subr.mxu0 0.0
    %1212 = vmatpush1.xpose.msra.mxu0 0.0
    %1213 = vmatprep.subr.mxu0 0.0
    %1214 = vmatpush1.xpose.msra.mxu0 0.0
    %1215 = vmatprep.subr.mxu0 0.0
    %1216 = vmatpush1.xpose.msra.mxu0 0.0
    %1217 = vmatprep.subr.mxu0 0.0
    %1218 = vmatpush1.xpose.msra.mxu0 0.0
    %1219 = vmatprep.subr.mxu0 0.0
    %1220 = vmatpush1.xpose.msra.mxu0 0.0
    %1221 = vmatprep.subr.mxu0 0.0
    %1222 = vmatpush1.xpose.msra.mxu0 0.0
    %1223 = vmatprep.subr.mxu0 0.0
    %1224 = vmatpush1.xpose.msra.mxu0 0.0
    %1225 = vmatprep.subr.mxu0 0.0
    %1226 = vmatpush1.xpose.msra.mxu0 0.0
    %1227 = vmatprep.subr.mxu0 0.0
    %1228 = vmatpush1.xpose.msra.mxu0 0.0
    %1229 = vmatprep.subr.mxu0 0.0
    %1230 = vmatpush1.xpose.msra.mxu0 0.0
    %1231 = vmatprep.subr.mxu0 0.0
    %1232 = vmatpush1.xpose.msra.mxu0 0.0
    %1233 = vmatprep.subr.mxu0 0.0
    %1234 = vmatpush1.xpose.msra.mxu0 0.0
    %1235 = vmatprep.subr.mxu0 0.0
    %1236 = vmatpush1.xpose.msra.mxu0 0.0
    %1237 = vmatprep.subr.mxu0 0.0
    %1238 = vmatpush1.xpose.msra.mxu0 0.0
    %1239 = vmatprep.subr.mxu0 0.0
    %1240 = vmatpush1.xpose.msra.mxu0 0.0
    %1241 = vmatprep.mubr.f32.mxu0 0.0
    %1242 = vmatmul.mubr.f32.gmra.mrb[0].mxu0 %v1173
    %v1243 = vpop.f32.mrb[0].mxu0
    %v1244 = vadd.f32 0.0, %v1243
    %v1245 = vpop.f32.mrb[0].mxu0
    %1246 = vdwg.mxu0
    %v1247 = vsel %vm184, -1e+30, %v1244
    %v1248 = vsel %vm193, %v1247, -inf
    %1249 = vmax.xlane.f32.xlu0 %v1248
    %v1250 = vpop.xlane.xlu0 %1249
    %v1251 = vsub.f32 %v1247, %v1250
    %v1252 = vmul.f32 %v1251, 1.442695
    %v1253 = vpow.pop %v1252
    %v1254 = vsel %vm193, %v1253, 0.0
    %1255 = vadd.xlane.f32.xlu0 %v1254
    %v1256 = vpop.xlane.xlu0 %1255
    %v1257 = vrcp.pop %v1256
    %v1258 = vmul.f32 %v1256, %v1257
    %v1259 = vsub.f32 2.0, %v1258
    %v1260 = vmul.f32 %v1257, %v1259
    %v1261 = vmul.f32 %v1253, %v1260
    %1262 = vrot.lane.b32.xlu0 %v177, 64
    %v1263 = vpop.permute.xlu0 %1262
    %v1266 = vsel %vm193, %v1261, 0
    %1268 = vmatprep.subr.mxu0 0.0
    %1269 = vmatpush1.msra.mxu0 %v1263
    %1270 = vmatprep.subr.mxu0 0.0
    %1271 = vmatpush1.msra.mxu0 0.0
    %1272 = vmatprep.subr.mxu0 0.0
    %1273 = vmatpush1.msra.mxu0 0.0
    %1274 = vmatprep.subr.mxu0 0.0
    %1275 = vmatpush1.msra.mxu0 0.0
    %1276 = vmatprep.subr.mxu0 0.0
    %1277 = vmatpush1.msra.mxu0 0.0
    %1278 = vmatprep.subr.mxu0 0.0
    %1279 = vmatpush1.msra.mxu0 0.0
    %1280 = vmatprep.subr.mxu0 0.0
    %1281 = vmatpush1.msra.mxu0 0.0
    %1282 = vmatprep.subr.mxu0 0.0
    %1283 = vmatpush1.msra.mxu0 0.0
    %1284 = vmatprep.subr.mxu0 0.0
    %1285 = vmatpush1.msra.mxu0 0.0
    %1286 = vmatprep.subr.mxu0 0.0
    %1287 = vmatpush1.msra.mxu0 0.0
    %1288 = vmatprep.subr.mxu0 0.0
    %1289 = vmatpush1.msra.mxu0 0.0
    %1290 = vmatprep.subr.mxu0 0.0
    %1291 = vmatpush1.msra.mxu0 0.0
    %1292 = vmatprep.subr.mxu0 0.0
    %1293 = vmatpush1.msra.mxu0 0.0
    %1294 = vmatprep.subr.mxu0 0.0
    %1295 = vmatpush1.msra.mxu0 0.0
    %1296 = vmatprep.subr.mxu0 0.0
    %1297 = vmatpush1.msra.mxu0 0.0
    %1298 = vmatprep.subr.mxu0 0.0
    %1299 = vmatpush1.msra.mxu0 0.0
    %1300 = vmatprep.subr.mxu0 0.0
    %1301 = vmatpush1.msra.mxu0 0.0
    %1302 = vmatprep.subr.mxu0 0.0
    %1303 = vmatpush1.msra.mxu0 0.0
    %1304 = vmatprep.subr.mxu0 0.0
    %1305 = vmatpush1.msra.mxu0 0.0
    %1306 = vmatprep.subr.mxu0 0.0
    %1307 = vmatpush1.msra.mxu0 0.0
    %1308 = vmatprep.subr.mxu0 0.0
    %1309 = vmatpush1.msra.mxu0 0.0
    %1310 = vmatprep.subr.mxu0 0.0
    %1311 = vmatpush1.msra.mxu0 0.0
    %1312 = vmatprep.subr.mxu0 0.0
    %1313 = vmatpush1.msra.mxu0 0.0
    %1314 = vmatprep.subr.mxu0 0.0
    %1315 = vmatpush1.msra.mxu0 0.0
    %1316 = vmatprep.subr.mxu0 0.0
    %1317 = vmatpush1.msra.mxu0 0.0
    %1318 = vmatprep.subr.mxu0 0.0
    %1319 = vmatpush1.msra.mxu0 0.0
    %1320 = vmatprep.subr.mxu0 0.0
    %1321 = vmatpush1.msra.mxu0 0.0
    %1322 = vmatprep.subr.mxu0 0.0
    %1323 = vmatpush1.msra.mxu0 0.0
    %1324 = vmatprep.subr.mxu0 0.0
    %1325 = vmatpush1.msra.mxu0 0.0
    %1326 = vmatprep.subr.mxu0 0.0
    %1327 = vmatpush1.msra.mxu0 0.0
    %1328 = vmatprep.subr.mxu0 0.0
    %1329 = vmatpush1.msra.mxu0 0.0
    %1330 = vmatprep.subr.mxu0 0.0
    %1331 = vmatpush1.msra.mxu0 0.0
    %1332 = vmatprep.mubr.f32.mxu0 0.0
    %1333 = vmatmul.mubr.f32.gmra.mrb[0].mxu0 %v1266
    %v1334 = vpop.f32.mrb[0].mxu0
    %v1335 = vadd.f32 0.0, %v1334
    %v1336 = vpop.f32.mrb[0].mxu0
    %1337 = vdwg.mxu0
    %1338 = vrot.lane.b32.xlu0 %v177, 120
    %v1339 = vpop.permute.xlu0 %1338
    %1340 = vrot.lane.b32.xlu0 %v177, 88
    %v1341 = vpop.permute.xlu0 %1340
    %v1342 = vsel %vm193, %v1339, 0
    %v1344 = vsel %vm193, %v1341, 0
    %1346 = vmatprep.subr.mxu0 0.0
    %1347 = vmatpush1.xpose.msra.mxu0 %v1344
    %1348 = vmatprep.subr.mxu0 0.0
    %1349 = vmatpush1.xpose.msra.mxu0 0.0
    %1350 = vmatprep.subr.mxu0 0.0
    %1351 = vmatpush1.xpose.msra.mxu0 0.0
    %1352 = vmatprep.subr.mxu0 0.0
    %1353 = vmatpush1.xpose.msra.mxu0 0.0
    %1354 = vmatprep.subr.mxu0 0.0
    %1355 = vmatpush1.xpose.msra.mxu0 0.0
    %1356 = vmatprep.subr.mxu0 0.0
    %1357 = vmatpush1.xpose.msra.mxu0 0.0
    %1358 = vmatprep.subr.mxu0 0.0
    %1359 = vmatpush1.xpose.msra.mxu0 0.0
    %1360 = vmatprep.subr.mxu0 0.0
    %1361 = vmatpush1.xpose.msra.mxu0 0.0
    %1362 = vmatprep.subr.mxu0 0.0
    %1363 = vmatpush1.xpose.msra.mxu0 0.0
    %1364 = vmatprep.subr.mxu0 0.0
    %1365 = vmatpush1.xpose.msra.mxu0 0.0
    %1366 = vmatprep.subr.mxu0 0.0
    %1367 = vmatpush1.xpose.msra.mxu0 0.0
    %1368 = vmatprep.subr.mxu0 0.0
    %1369 = vmatpush1.xpose.msra.mxu0 0.0
    %1370 = vmatprep.subr.mxu0 0.0
    %1371 = vmatpush1.xpose.msra.mxu0 0.0
    %1372 = vmatprep.subr.mxu0 0.0
    %1373 = vmatpush1.xpose.msra.mxu0 0.0
    %1374 = vmatprep.subr.mxu0 0.0
    %1375 = vmatpush1.xpose.msra.mxu0 0.0
    %1376 = vmatprep.subr.mxu0 0.0
    %1377 = vmatpush1.xpose.msra.mxu0 0.0
    %1378 = vmatprep.subr.mxu0 0.0
    %1379 = vmatpush1.xpose.msra.mxu0 0.0
    %1380 = vmatprep.subr.mxu0 0.0
    %1381 = vmatpush1.xpose.msra.mxu0 0.0
    %1382 = vmatprep.subr.mxu0 0.0
    %1383 = vmatpush1.xpose.msra.mxu0 0.0
    %1384 = vmatprep.subr.mxu0 0.0
    %1385 = vmatpush1.xpose.msra.mxu0 0.0
    %1386 = vmatprep.subr.mxu0 0.0
    %1387 = vmatpush1.xpose.msra.mxu0 0.0
    %1388 = vmatprep.subr.mxu0 0.0
    %1389 = vmatpush1.xpose.msra.mxu0 0.0
    %1390 = vmatprep.subr.mxu0 0.0
    %1391 = vmatpush1.xpose.msra.mxu0 0.0
    %1392 = vmatprep.subr.mxu0 0.0
    %1393 = vmatpush1.xpose.msra.mxu0 0.0
    %1394 = vmatprep.subr.mxu0 0.0
    %1395 = vmatpush1.xpose.msra.mxu0 0.0
    %1396 = vmatprep.subr.mxu0 0.0
    %1397 = vmatpush1.xpose.msra.mxu0 0.0
    %1398 = vmatprep.subr.mxu0 0.0
    %1399 = vmatpush1.xpose.msra.mxu0 0.0
    %1400 = vmatprep.subr.mxu0 0.0
    %1401 = vmatpush1.xpose.msra.mxu0 0.0
    %1402 = vmatprep.subr.mxu0 0.0
    %1403 = vmatpush1.xpose.msra.mxu0 0.0
    %1404 = vmatprep.subr.mxu0 0.0
    %1405 = vmatpush1.xpose.msra.mxu0 0.0
    %1406 = vmatprep.subr.mxu0 0.0
    %1407 = vmatpush1.xpose.msra.mxu0 0.0
    %1408 = vmatprep.subr.mxu0 0.0
    %1409 = vmatpush1.xpose.msra.mxu0 0.0
    %1410 = vmatprep.mubr.f32.mxu0 0.0
    %1411 = vmatmul.mubr.f32.gmra.mrb[0].mxu0 %v1342
    %v1412 = vpop.f32.mrb[0].mxu0
    %v1413 = vadd.f32 0.0, %v1412
    %v1414 = vpop.f32.mrb[0].mxu0
    %1415 = vdwg.mxu0
    %v1416 = vsel %vm184, -1e+30, %v1413
    %v1417 = vsel %vm193, %v1416, -inf
    %1418 = vmax.xlane.f32.xlu0 %v1417
    %v1419 = vpop.xlane.xlu0 %1418
    %v1420 = vsub.f32 %v1416, %v1419
    %v1421 = vmul.f32 %v1420, 1.442695
    %v1422 = vpow.pop %v1421
    %v1423 = vsel %vm193, %v1422, 0.0
    %1424 = vadd.xlane.f32.xlu0 %v1423
    %v1425 = vpop.xlane.xlu0 %1424
    %v1426 = vrcp.pop %v1425
    %v1427 = vmul.f32 %v1425, %v1426
    %v1428 = vsub.f32 2.0, %v1427
    %v1429 = vmul.f32 %v1426, %v1428
    %v1430 = vmul.f32 %v1422, %v1429
    %1431 = vrot.lane.b32.xlu0 %v177, 56
    %v1432 = vpop.permute.xlu0 %1431
    %v1435 = vsel %vm193, %v1430, 0
    %1437 = vmatprep.subr.mxu0 0.0
    %1438 = vmatpush1.msra.mxu0 %v1432
    %1439 = vmatprep.subr.mxu0 0.0
    %1440 = vmatpush1.msra.mxu0 0.0
    %1441 = vmatprep.subr.mxu0 0.0
    %1442 = vmatpush1.msra.mxu0 0.0
    %1443 = vmatprep.subr.mxu0 0.0
    %1444 = vmatpush1.msra.mxu0 0.0
    %1445 = vmatprep.subr.mxu0 0.0
    %1446 = vmatpush1.msra.mxu0 0.0
    %1447 = vmatprep.subr.mxu0 0.0
    %1448 = vmatpush1.msra.mxu0 0.0
    %1449 = vmatprep.subr.mxu0 0.0
    %1450 = vmatpush1.msra.mxu0 0.0
    %1451 = vmatprep.subr.mxu0 0.0
    %1452 = vmatpush1.msra.mxu0 0.0
    %1453 = vmatprep.subr.mxu0 0.0
    %1454 = vmatpush1.msra.mxu0 0.0
    %1455 = vmatprep.subr.mxu0 0.0
    %1456 = vmatpush1.msra.mxu0 0.0
    %1457 = vmatprep.subr.mxu0 0.0
    %1458 = vmatpush1.msra.mxu0 0.0
    %1459 = vmatprep.subr.mxu0 0.0
    %1460 = vmatpush1.msra.mxu0 0.0
    %1461 = vmatprep.subr.mxu0 0.0
    %1462 = vmatpush1.msra.mxu0 0.0
    %1463 = vmatprep.subr.mxu0 0.0
    %1464 = vmatpush1.msra.mxu0 0.0
    %1465 = vmatprep.subr.mxu0 0.0
    %1466 = vmatpush1.msra.mxu0 0.0
    %1467 = vmatprep.subr.mxu0 0.0
    %1468 = vmatpush1.msra.mxu0 0.0
    %1469 = vmatprep.subr.mxu0 0.0
    %1470 = vmatpush1.msra.mxu0 0.0
    %1471 = vmatprep.subr.mxu0 0.0
    %1472 = vmatpush1.msra.mxu0 0.0
    %1473 = vmatprep.subr.mxu0 0.0
    %1474 = vmatpush1.msra.mxu0 0.0
    %1475 = vmatprep.subr.mxu0 0.0
    %1476 = vmatpush1.msra.mxu0 0.0
    %1477 = vmatprep.subr.mxu0 0.0
    %1478 = vmatpush1.msra.mxu0 0.0
    %1479 = vmatprep.subr.mxu0 0.0
    %1480 = vmatpush1.msra.mxu0 0.0
    %1481 = vmatprep.subr.mxu0 0.0
    %1482 = vmatpush1.msra.mxu0 0.0
    %1483 = vmatprep.subr.mxu0 0.0
    %1484 = vmatpush1.msra.mxu0 0.0
    %1485 = vmatprep.subr.mxu0 0.0
    %1486 = vmatpush1.msra.mxu0 0.0
    %1487 = vmatprep.subr.mxu0 0.0
    %1488 = vmatpush1.msra.mxu0 0.0
    %1489 = vmatprep.subr.mxu0 0.0
    %1490 = vmatpush1.msra.mxu0 0.0
    %1491 = vmatprep.subr.mxu0 0.0
    %1492 = vmatpush1.msra.mxu0 0.0
    %1493 = vmatprep.subr.mxu0 0.0
    %1494 = vmatpush1.msra.mxu0 0.0
    %1495 = vmatprep.subr.mxu0 0.0
    %1496 = vmatpush1.msra.mxu0 0.0
    %1497 = vmatprep.subr.mxu0 0.0
    %1498 = vmatpush1.msra.mxu0 0.0
    %1499 = vmatprep.subr.mxu0 0.0
    %1500 = vmatpush1.msra.mxu0 0.0
    %1501 = vmatprep.mubr.f32.mxu0 0.0
    %1502 = vmatmul.mubr.f32.gmra.mrb[0].mxu0 %v1435
    %v1503 = vpop.f32.mrb[0].mxu0
    %v1504 = vadd.f32 0.0, %v1503
    %v1505 = vpop.f32.mrb[0].mxu0
    %1506 = vdwg.mxu0
    %v1508 = vsel %vm193, %v1504, 0
    %1510 = vmatprep.subr.mxu0 0.0
    %1511 = vmatpush1.msra.mxu0 %v186
    %1512 = vmatprep.subr.mxu0 0.0
    %1513 = vmatpush1.msra.mxu0 0.0
    %1514 = vmatprep.subr.mxu0 0.0
    %1515 = vmatpush1.msra.mxu0 0.0
    %1516 = vmatprep.subr.mxu0 0.0
    %1517 = vmatpush1.msra.mxu0 0.0
    %1518 = vmatprep.subr.mxu0 0.0
    %1519 = vmatpush1.msra.mxu0 0.0
    %1520 = vmatprep.subr.mxu0 0.0
    %1521 = vmatpush1.msra.mxu0 0.0
    %1522 = vmatprep.subr.mxu0 0.0
    %1523 = vmatpush1.msra.mxu0 0.0
    %1524 = vmatprep.subr.mxu0 0.0
    %1525 = vmatpush1.msra.mxu0 0.0
    %1526 = vmatprep.subr.mxu0 0.0
    %1527 = vmatpush1.msra.mxu0 0.0
    %1528 = vmatprep.subr.mxu0 0.0
    %1529 = vmatpush1.msra.mxu0 0.0
    %1530 = vmatprep.subr.mxu0 0.0
    %1531 = vmatpush1.msra.mxu0 0.0
    %1532 = vmatprep.subr.mxu0 0.0
    %1533 = vmatpush1.msra.mxu0 0.0
    %1534 = vmatprep.subr.mxu0 0.0
    %1535 = vmatpush1.msra.mxu0 0.0
    %1536 = vmatprep.subr.mxu0 0.0
    %1537 = vmatpush1.msra.mxu0 0.0
    %1538 = vmatprep.subr.mxu0 0.0
    %1539 = vmatpush1.msra.mxu0 0.0
    %1540 = vmatprep.subr.mxu0 0.0
    %1541 = vmatpush1.msra.mxu0 0.0
    %1542 = vmatprep.subr.mxu0 0.0
    %1543 = vmatpush1.msra.mxu0 0.0
    %1544 = vmatprep.subr.mxu0 0.0
    %1545 = vmatpush1.msra.mxu0 0.0
    %1546 = vmatprep.subr.mxu0 0.0
    %1547 = vmatpush1.msra.mxu0 0.0
    %1548 = vmatprep.subr.mxu0 0.0
    %1549 = vmatpush1.msra.mxu0 0.0
    %1550 = vmatprep.subr.mxu0 0.0
    %1551 = vmatpush1.msra.mxu0 0.0
    %1552 = vmatprep.subr.mxu0 0.0
    %1553 = vmatpush1.msra.mxu0 0.0
    %1554 = vmatprep.subr.mxu0 0.0
    %1555 = vmatpush1.msra.mxu0 0.0
    %1556 = vmatprep.subr.mxu0 0.0
    %1557 = vmatpush1.msra.mxu0 0.0
    %1558 = vmatprep.subr.mxu0 0.0
    %1559 = vmatpush1.msra.mxu0 0.0
    %1560 = vmatprep.subr.mxu0 0.0
    %1561 = vmatpush1.msra.mxu0 0.0
    %1562 = vmatprep.subr.mxu0 0.0
    %1563 = vmatpush1.msra.mxu0 0.0
    %1564 = vmatprep.subr.mxu0 0.0
    %1565 = vmatpush1.msra.mxu0 0.0
    %1566 = vmatprep.subr.mxu0 0.0
    %1567 = vmatpush1.msra.mxu0 0.0
    %1568 = vmatprep.subr.mxu0 0.0
    %1569 = vmatpush1.msra.mxu0 0.0
    %1570 = vmatprep.subr.mxu0 0.0
    %1571 = vmatpush1.msra.mxu0 0.0
    %1572 = vmatprep.subr.mxu0 0.0
    %1573 = vmatpush1.msra.mxu0 0.0
    %1574 = vmatprep.mubr.f32.mxu0 0.0
    %1575 = vmatmul.mubr.f32.gmra.mrb[0].mxu0 %v1508
    %v1576 = vpop.f32.mrb[0].mxu0
    %v1577 = vadd.f32 0.0, %v1576
    %v1578 = vpop.f32.mrb[0].mxu0
    %1579 = vdwg.mxu0
    %v1581 = vsel %vm193, %v1335, 0
    %1583 = vmatprep.subr.mxu0 0.0
    %1584 = vmatpush1.msra.mxu0 %v185
    %1585 = vmatprep.subr.mxu0 0.0
    %1586 = vmatpush1.msra.mxu0 0.0
    %1587 = vmatprep.subr.mxu0 0.0
    %1588 = vmatpush1.msra.mxu0 0.0
    %1589 = vmatprep.subr.mxu0 0.0
    %1590 = vmatpush1.msra.mxu0 0.0
    %1591 = vmatprep.subr.mxu0 0.0
    %1592 = vmatpush1.msra.mxu0 0.0
    %1593 = vmatprep.subr.mxu0 0.0
    %1594 = vmatpush1.msra.mxu0 0.0
    %1595 = vmatprep.subr.mxu0 0.0
    %1596 = vmatpush1.msra.mxu0 0.0
    %1597 = vmatprep.subr.mxu0 0.0
    %1598 = vmatpush1.msra.mxu0 0.0
    %1599 = vmatprep.subr.mxu0 0.0
    %1600 = vmatpush1.msra.mxu0 0.0
    %1601 = vmatprep.subr.mxu0 0.0
    %1602 = vmatpush1.msra.mxu0 0.0
    %1603 = vmatprep.subr.mxu0 0.0
    %1604 = vmatpush1.msra.mxu0 0.0
    %1605 = vmatprep.subr.mxu0 0.0
    %1606 = vmatpush1.msra.mxu0 0.0
    %1607 = vmatprep.subr.mxu0 0.0
    %1608 = vmatpush1.msra.mxu0 0.0
    %1609 = vmatprep.subr.mxu0 0.0
    %1610 = vmatpush1.msra.mxu0 0.0
    %1611 = vmatprep.subr.mxu0 0.0
    %1612 = vmatpush1.msra.mxu0 0.0
    %1613 = vmatprep.subr.mxu0 0.0
    %1614 = vmatpush1.msra.mxu0 0.0
    %1615 = vmatprep.subr.mxu0 0.0
    %1616 = vmatpush1.msra.mxu0 0.0
    %1617 = vmatprep.subr.mxu0 0.0
    %1618 = vmatpush1.msra.mxu0 0.0
    %1619 = vmatprep.subr.mxu0 0.0
    %1620 = vmatpush1.msra.mxu0 0.0
    %1621 = vmatprep.subr.mxu0 0.0
    %1622 = vmatpush1.msra.mxu0 0.0
    %1623 = vmatprep.subr.mxu0 0.0
    %1624 = vmatpush1.msra.mxu0 0.0
    %1625 = vmatprep.subr.mxu0 0.0
    %1626 = vmatpush1.msra.mxu0 0.0
    %1627 = vmatprep.subr.mxu0 0.0
    %1628 = vmatpush1.msra.mxu0 0.0
    %1629 = vmatprep.subr.mxu0 0.0
    %1630 = vmatpush1.msra.mxu0 0.0
    %1631 = vmatprep.subr.mxu0 0.0
    %1632 = vmatpush1.msra.mxu0 0.0
    %1633 = vmatprep.subr.mxu0 0.0
    %1634 = vmatpush1.msra.mxu0 0.0
    %1635 = vmatprep.subr.mxu0 0.0
    %1636 = vmatpush1.msra.mxu0 0.0
    %1637 = vmatprep.subr.mxu0 0.0
    %1638 = vmatpush1.msra.mxu0 0.0
    %1639 = vmatprep.subr.mxu0 0.0
    %1640 = vmatpush1.msra.mxu0 0.0
    %1641 = vmatprep.subr.mxu0 0.0
    %1642 = vmatpush1.msra.mxu0 0.0
    %1643 = vmatprep.subr.mxu0 0.0
    %1644 = vmatpush1.msra.mxu0 0.0
    %1645 = vmatprep.subr.mxu0 0.0
    %1646 = vmatpush1.msra.mxu0 0.0
    %1647 = vmatprep.mubr.f32.mxu0 0.0
    %1648 = vmatmul.mubr.f32.gmra.mrb[0].mxu0 %v1581
    %v1649 = vpop.f32.mrb[0].mxu0
    %v1650 = vadd.f32 %v1577, %v1649
    %v1651 = vpop.f32.mrb[0].mxu0
    %1652 = vdwg.mxu0
    %1653 = vrot.lane.b32.xlu0 %v177, 112
    %v1654 = vpop.permute.xlu0 %1653
    %1655 = vrot.lane.b32.xlu0 %v177, 80
    %v1656 = vpop.permute.xlu0 %1655
    %v1657 = vsel %vm193, %v1654, 0
    %v1659 = vsel %vm193, %v1656, 0
    %1661 = vmatprep.subr.mxu0 0.0
    %1662 = vmatpush1.xpose.msra.mxu0 %v1659
    %1663 = vmatprep.subr.mxu0 0.0
    %1664 = vmatpush1.xpose.msra.mxu0 0.0
    %1665 = vmatprep.subr.mxu0 0.0
    %1666 = vmatpush1.xpose.msra.mxu0 0.0
    %1667 = vmatprep.subr.mxu0 0.0
    %1668 = vmatpush1.xpose.msra.mxu0 0.0
    %1669 = vmatprep.subr.mxu0 0.0
    %1670 = vmatpush1.xpose.msra.mxu0 0.0
    %1671 = vmatprep.subr.mxu0 0.0
    %1672 = vmatpush1.xpose.msra.mxu0 0.0
    %1673 = vmatprep.subr.mxu0 0.0
    %1674 = vmatpush1.xpose.msra.mxu0 0.0
    %1675 = vmatprep.subr.mxu0 0.0
    %1676 = vmatpush1.xpose.msra.mxu0 0.0
    %1677 = vmatprep.subr.mxu0 0.0
    %1678 = vmatpush1.xpose.msra.mxu0 0.0
    %1679 = vmatprep.subr.mxu0 0.0
    %1680 = vmatpush1.xpose.msra.mxu0 0.0
    %1681 = vmatprep.subr.mxu0 0.0
    %1682 = vmatpush1.xpose.msra.mxu0 0.0
    %1683 = vmatprep.subr.mxu0 0.0
    %1684 = vmatpush1.xpose.msra.mxu0 0.0
    %1685 = vmatprep.subr.mxu0 0.0
    %1686 = vmatpush1.xpose.msra.mxu0 0.0
    %1687 = vmatprep.subr.mxu0 0.0
    %1688 = vmatpush1.xpose.msra.mxu0 0.0
    %1689 = vmatprep.subr.mxu0 0.0
    %1690 = vmatpush1.xpose.msra.mxu0 0.0
    %1691 = vmatprep.subr.mxu0 0.0
    %1692 = vmatpush1.xpose.msra.mxu0 0.0
    %1693 = vmatprep.subr.mxu0 0.0
    %1694 = vmatpush1.xpose.msra.mxu0 0.0
    %1695 = vmatprep.subr.mxu0 0.0
    %1696 = vmatpush1.xpose.msra.mxu0 0.0
    %1697 = vmatprep.subr.mxu0 0.0
    %1698 = vmatpush1.xpose.msra.mxu0 0.0
    %1699 = vmatprep.subr.mxu0 0.0
    %1700 = vmatpush1.xpose.msra.mxu0 0.0
    %1701 = vmatprep.subr.mxu0 0.0
    %1702 = vmatpush1.xpose.msra.mxu0 0.0
    %1703 = vmatprep.subr.mxu0 0.0
    %1704 = vmatpush1.xpose.msra.mxu0 0.0
    %1705 = vmatprep.subr.mxu0 0.0
    %1706 = vmatpush1.xpose.msra.mxu0 0.0
    %1707 = vmatprep.subr.mxu0 0.0
    %1708 = vmatpush1.xpose.msra.mxu0 0.0
    %1709 = vmatprep.subr.mxu0 0.0
    %1710 = vmatpush1.xpose.msra.mxu0 0.0
    %1711 = vmatprep.subr.mxu0 0.0
    %1712 = vmatpush1.xpose.msra.mxu0 0.0
    %1713 = vmatprep.subr.mxu0 0.0
    %1714 = vmatpush1.xpose.msra.mxu0 0.0
    %1715 = vmatprep.subr.mxu0 0.0
    %1716 = vmatpush1.xpose.msra.mxu0 0.0
    %1717 = vmatprep.subr.mxu0 0.0
    %1718 = vmatpush1.xpose.msra.mxu0 0.0
    %1719 = vmatprep.subr.mxu0 0.0
    %1720 = vmatpush1.xpose.msra.mxu0 0.0
    %1721 = vmatprep.subr.mxu0 0.0
    %1722 = vmatpush1.xpose.msra.mxu0 0.0
    %1723 = vmatprep.subr.mxu0 0.0
    %1724 = vmatpush1.xpose.msra.mxu0 0.0
    %1725 = vmatprep.mubr.f32.mxu0 0.0
    %1726 = vmatmul.mubr.f32.gmra.mrb[0].mxu0 %v1657
    %v1727 = vpop.f32.mrb[0].mxu0
    %v1728 = vadd.f32 0.0, %v1727
    %v1729 = vpop.f32.mrb[0].mxu0
    %1730 = vdwg.mxu0
    %v1731 = vsel %vm184, -1e+30, %v1728
    %v1732 = vsel %vm193, %v1731, -inf
    %1733 = vmax.xlane.f32.xlu0 %v1732
    %v1734 = vpop.xlane.xlu0 %1733
    %v1735 = vsub.f32 %v1731, %v1734
    %v1736 = vmul.f32 %v1735, 1.442695
    %v1737 = vpow.pop %v1736
    %v1738 = vsel %vm193, %v1737, 0.0
    %1739 = vadd.xlane.f32.xlu0 %v1738
    %v1740 = vpop.xlane.xlu0 %1739
    %v1741 = vrcp.pop %v1740
    %v1742 = vmul.f32 %v1740, %v1741
    %v1743 = vsub.f32 2.0, %v1742
    %v1744 = vmul.f32 %v1741, %v1743
    %v1745 = vmul.f32 %v1737, %v1744
    %1746 = vrot.lane.b32.xlu0 %v177, 48
    %v1747 = vpop.permute.xlu0 %1746
    %v1750 = vsel %vm193, %v1745, 0
    %1752 = vmatprep.subr.mxu0 0.0
    %1753 = vmatpush1.msra.mxu0 %v1747
    %1754 = vmatprep.subr.mxu0 0.0
    %1755 = vmatpush1.msra.mxu0 0.0
    %1756 = vmatprep.subr.mxu0 0.0
    %1757 = vmatpush1.msra.mxu0 0.0
    %1758 = vmatprep.subr.mxu0 0.0
    %1759 = vmatpush1.msra.mxu0 0.0
    %1760 = vmatprep.subr.mxu0 0.0
    %1761 = vmatpush1.msra.mxu0 0.0
    %1762 = vmatprep.subr.mxu0 0.0
    %1763 = vmatpush1.msra.mxu0 0.0
    %1764 = vmatprep.subr.mxu0 0.0
    %1765 = vmatpush1.msra.mxu0 0.0
    %1766 = vmatprep.subr.mxu0 0.0
    %1767 = vmatpush1.msra.mxu0 0.0
    %1768 = vmatprep.subr.mxu0 0.0
    %1769 = vmatpush1.msra.mxu0 0.0
    %1770 = vmatprep.subr.mxu0 0.0
    %1771 = vmatpush1.msra.mxu0 0.0
    %1772 = vmatprep.subr.mxu0 0.0
    %1773 = vmatpush1.msra.mxu0 0.0
    %1774 = vmatprep.subr.mxu0 0.0
    %1775 = vmatpush1.msra.mxu0 0.0
    %1776 = vmatprep.subr.mxu0 0.0
    %1777 = vmatpush1.msra.mxu0 0.0
    %1778 = vmatprep.subr.mxu0 0.0
    %1779 = vmatpush1.msra.mxu0 0.0
    %1780 = vmatprep.subr.mxu0 0.0
    %1781 = vmatpush1.msra.mxu0 0.0
    %1782 = vmatprep.subr.mxu0 0.0
    %1783 = vmatpush1.msra.mxu0 0.0
    %1784 = vmatprep.subr.mxu0 0.0
    %1785 = vmatpush1.msra.mxu0 0.0
    %1786 = vmatprep.subr.mxu0 0.0
    %1787 = vmatpush1.msra.mxu0 0.0
    %1788 = vmatprep.subr.mxu0 0.0
    %1789 = vmatpush1.msra.mxu0 0.0
    %1790 = vmatprep.subr.mxu0 0.0
    %1791 = vmatpush1.msra.mxu0 0.0
    %1792 = vmatprep.subr.mxu0 0.0
    %1793 = vmatpush1.msra.mxu0 0.0
    %1794 = vmatprep.subr.mxu0 0.0
    %1795 = vmatpush1.msra.mxu0 0.0
    %1796 = vmatprep.subr.mxu0 0.0
    %1797 = vmatpush1.msra.mxu0 0.0
    %1798 = vmatprep.subr.mxu0 0.0
    %1799 = vmatpush1.msra.mxu0 0.0
    %1800 = vmatprep.subr.mxu0 0.0
    %1801 = vmatpush1.msra.mxu0 0.0
    %1802 = vmatprep.subr.mxu0 0.0
    %1803 = vmatpush1.msra.mxu0 0.0
    %1804 = vmatprep.subr.mxu0 0.0
    %1805 = vmatpush1.msra.mxu0 0.0
    %1806 = vmatprep.subr.mxu0 0.0
    %1807 = vmatpush1.msra.mxu0 0.0
    %1808 = vmatprep.subr.mxu0 0.0
    %1809 = vmatpush1.msra.mxu0 0.0
    %1810 = vmatprep.subr.mxu0 0.0
    %1811 = vmatpush1.msra.mxu0 0.0
    %1812 = vmatprep.subr.mxu0 0.0
    %1813 = vmatpush1.msra.mxu0 0.0
    %1814 = vmatprep.subr.mxu0 0.0
    %1815 = vmatpush1.msra.mxu0 0.0
    %1816 = vmatprep.mubr.f32.mxu0 0.0
    %1817 = vmatmul.mubr.f32.gmra.mrb[0].mxu0 %v1750
    %v1818 = vpop.f32.mrb[0].mxu0
    %v1819 = vadd.f32 0.0, %v1818
    %v1820 = vpop.f32.mrb[0].mxu0
    %1821 = vdwg.mxu0
    %v1823 = vsel %vm193, %v1819, 0
    %1825 = vmatprep.subr.mxu0 0.0
    %1826 = vmatpush1.msra.mxu0 %v187
    %1827 = vmatprep.subr.mxu0 0.0
    %1828 = vmatpush1.msra.mxu0 0.0
    %1829 = vmatprep.subr.mxu0 0.0
    %1830 = vmatpush1.msra.mxu0 0.0
    %1831 = vmatprep.subr.mxu0 0.0
    %1832 = vmatpush1.msra.mxu0 0.0
    %1833 = vmatprep.subr.mxu0 0.0
    %1834 = vmatpush1.msra.mxu0 0.0
    %1835 = vmatprep.subr.mxu0 0.0
    %1836 = vmatpush1.msra.mxu0 0.0
    %1837 = vmatprep.subr.mxu0 0.0
    %1838 = vmatpush1.msra.mxu0 0.0
    %1839 = vmatprep.subr.mxu0 0.0
    %1840 = vmatpush1.msra.mxu0 0.0
    %1841 = vmatprep.subr.mxu0 0.0
    %1842 = vmatpush1.msra.mxu0 0.0
    %1843 = vmatprep.subr.mxu0 0.0
    %1844 = vmatpush1.msra.mxu0 0.0
    %1845 = vmatprep.subr.mxu0 0.0
    %1846 = vmatpush1.msra.mxu0 0.0
    %1847 = vmatprep.subr.mxu0 0.0
    %1848 = vmatpush1.msra.mxu0 0.0
    %1849 = vmatprep.subr.mxu0 0.0
    %1850 = vmatpush1.msra.mxu0 0.0
    %1851 = vmatprep.subr.mxu0 0.0
    %1852 = vmatpush1.msra.mxu0 0.0
    %1853 = vmatprep.subr.mxu0 0.0
    %1854 = vmatpush1.msra.mxu0 0.0
    %1855 = vmatprep.subr.mxu0 0.0
    %1856 = vmatpush1.msra.mxu0 0.0
    %1857 = vmatprep.subr.mxu0 0.0
    %1858 = vmatpush1.msra.mxu0 0.0
    %1859 = vmatprep.subr.mxu0 0.0
    %1860 = vmatpush1.msra.mxu0 0.0
    %1861 = vmatprep.subr.mxu0 0.0
    %1862 = vmatpush1.msra.mxu0 0.0
    %1863 = vmatprep.subr.mxu0 0.0
    %1864 = vmatpush1.msra.mxu0 0.0
    %1865 = vmatprep.subr.mxu0 0.0
    %1866 = vmatpush1.msra.mxu0 0.0
    %1867 = vmatprep.subr.mxu0 0.0
    %1868 = vmatpush1.msra.mxu0 0.0
    %1869 = vmatprep.subr.mxu0 0.0
    %1870 = vmatpush1.msra.mxu0 0.0
    %1871 = vmatprep.subr.mxu0 0.0
    %1872 = vmatpush1.msra.mxu0 0.0
    %1873 = vmatprep.subr.mxu0 0.0
    %1874 = vmatpush1.msra.mxu0 0.0
    %1875 = vmatprep.subr.mxu0 0.0
    %1876 = vmatpush1.msra.mxu0 0.0
    %1877 = vmatprep.subr.mxu0 0.0
    %1878 = vmatpush1.msra.mxu0 0.0
    %1879 = vmatprep.subr.mxu0 0.0
    %1880 = vmatpush1.msra.mxu0 0.0
    %1881 = vmatprep.subr.mxu0 0.0
    %1882 = vmatpush1.msra.mxu0 0.0
    %1883 = vmatprep.subr.mxu0 0.0
    %1884 = vmatpush1.msra.mxu0 0.0
    %1885 = vmatprep.subr.mxu0 0.0
    %1886 = vmatpush1.msra.mxu0 0.0
    %1887 = vmatprep.subr.mxu0 0.0
    %1888 = vmatpush1.msra.mxu0 0.0
    %1889 = vmatprep.mubr.f32.mxu0 0.0
    %1890 = vmatmul.mubr.f32.gmra.mrb[0].mxu0 %v1823
    %v1891 = vpop.f32.mrb[0].mxu0
    %v1892 = vadd.f32 0.0, %v1891
    %v1893 = vpop.f32.mrb[0].mxu0
    %1894 = vdwg.mxu0
    %v1895 = vadd.f32 %v1650, %v1892
    %1896 = vrot.lane.b32.xlu0 %v177, 104
    %v1897 = vpop.permute.xlu0 %1896
    %1898 = vrot.lane.b32.xlu0 %v177, 72
    %v1899 = vpop.permute.xlu0 %1898
    %v1900 = vsel %vm193, %v1897, 0
    %v1902 = vsel %vm193, %v1899, 0
    %1904 = vmatprep.subr.mxu0 0.0
    %1905 = vmatpush1.xpose.msra.mxu0 %v1902
    %1906 = vmatprep.subr.mxu0 0.0
    %1907 = vmatpush1.xpose.msra.mxu0 0.0
    %1908 = vmatprep.subr.mxu0 0.0
    %1909 = vmatpush1.xpose.msra.mxu0 0.0
    %1910 = vmatprep.subr.mxu0 0.0
    %1911 = vmatpush1.xpose.msra.mxu0 0.0
    %1912 = vmatprep.subr.mxu0 0.0
    %1913 = vmatpush1.xpose.msra.mxu0 0.0
    %1914 = vmatprep.subr.mxu0 0.0
    %1915 = vmatpush1.xpose.msra.mxu0 0.0
    %1916 = vmatprep.subr.mxu0 0.0
    %1917 = vmatpush1.xpose.msra.mxu0 0.0
    %1918 = vmatprep.subr.mxu0 0.0
    %1919 = vmatpush1.xpose.msra.mxu0 0.0
    %1920 = vmatprep.subr.mxu0 0.0
    %1921 = vmatpush1.xpose.msra.mxu0 0.0
    %1922 = vmatprep.subr.mxu0 0.0
    %1923 = vmatpush1.xpose.msra.mxu0 0.0
    %1924 = vmatprep.subr.mxu0 0.0
    %1925 = vmatpush1.xpose.msra.mxu0 0.0
    %1926 = vmatprep.subr.mxu0 0.0
    %1927 = vmatpush1.xpose.msra.mxu0 0.0
    %1928 = vmatprep.subr.mxu0 0.0
    %1929 = vmatpush1.xpose.msra.mxu0 0.0
    %1930 = vmatprep.subr.mxu0 0.0
    %1931 = vmatpush1.xpose.msra.mxu0 0.0
    %1932 = vmatprep.subr.mxu0 0.0
    %1933 = vmatpush1.xpose.msra.mxu0 0.0
    %1934 = vmatprep.subr.mxu0 0.0
    %1935 = vmatpush1.xpose.msra.mxu0 0.0
    %1936 = vmatprep.subr.mxu0 0.0
    %1937 = vmatpush1.xpose.msra.mxu0 0.0
    %1938 = vmatprep.subr.mxu0 0.0
    %1939 = vmatpush1.xpose.msra.mxu0 0.0
    %1940 = vmatprep.subr.mxu0 0.0
    %1941 = vmatpush1.xpose.msra.mxu0 0.0
    %1942 = vmatprep.subr.mxu0 0.0
    %1943 = vmatpush1.xpose.msra.mxu0 0.0
    %1944 = vmatprep.subr.mxu0 0.0
    %1945 = vmatpush1.xpose.msra.mxu0 0.0
    %1946 = vmatprep.subr.mxu0 0.0
    %1947 = vmatpush1.xpose.msra.mxu0 0.0
    %1948 = vmatprep.subr.mxu0 0.0
    %1949 = vmatpush1.xpose.msra.mxu0 0.0
    %1950 = vmatprep.subr.mxu0 0.0
    %1951 = vmatpush1.xpose.msra.mxu0 0.0
    %1952 = vmatprep.subr.mxu0 0.0
    %1953 = vmatpush1.xpose.msra.mxu0 0.0
    %1954 = vmatprep.subr.mxu0 0.0
    %1955 = vmatpush1.xpose.msra.mxu0 0.0
    %1956 = vmatprep.subr.mxu0 0.0
    %1957 = vmatpush1.xpose.msra.mxu0 0.0
    %1958 = vmatprep.subr.mxu0 0.0
    %1959 = vmatpush1.xpose.msra.mxu0 0.0
    %1960 = vmatprep.subr.mxu0 0.0
    %1961 = vmatpush1.xpose.msra.mxu0 0.0
    %1962 = vmatprep.subr.mxu0 0.0
    %1963 = vmatpush1.xpose.msra.mxu0 0.0
    %1964 = vmatprep.subr.mxu0 0.0
    %1965 = vmatpush1.xpose.msra.mxu0 0.0
    %1966 = vmatprep.subr.mxu0 0.0
    %1967 = vmatpush1.xpose.msra.mxu0 0.0
    %1968 = vmatprep.mubr.f32.mxu0 0.0
    %1969 = vmatmul.mubr.f32.gmra.mrb[0].mxu0 %v1900
    %v1970 = vpop.f32.mrb[0].mxu0
    %v1971 = vadd.f32 0.0, %v1970
    %v1972 = vpop.f32.mrb[0].mxu0
    %1973 = vdwg.mxu0
    %v1974 = vsel %vm184, -1e+30, %v1971
    %v1975 = vsel %vm193, %v1974, -inf
    %1976 = vmax.xlane.f32.xlu0 %v1975
    %v1977 = vpop.xlane.xlu0 %1976
    %v1978 = vsub.f32 %v1974, %v1977
    %v1979 = vmul.f32 %v1978, 1.442695
    %v1980 = vpow.pop %v1979
    %v1981 = vsel %vm193, %v1980, 0.0
    %1982 = vadd.xlane.f32.xlu0 %v1981
    %v1983 = vpop.xlane.xlu0 %1982
    %v1984 = vrcp.pop %v1983
    %v1985 = vmul.f32 %v1983, %v1984
    %v1986 = vsub.f32 2.0, %v1985
    %v1987 = vmul.f32 %v1984, %v1986
    %v1988 = vmul.f32 %v1980, %v1987
    %1989 = vrot.lane.b32.xlu0 %v177, 40
    %v1990 = vpop.permute.xlu0 %1989
    %v1993 = vsel %vm193, %v1988, 0
    %1995 = vmatprep.subr.mxu0 0.0
    %1996 = vmatpush1.msra.mxu0 %v1990
    %1997 = vmatprep.subr.mxu0 0.0
    %1998 = vmatpush1.msra.mxu0 0.0
    %1999 = vmatprep.subr.mxu0 0.0
    %2000 = vmatpush1.msra.mxu0 0.0
    %2001 = vmatprep.subr.mxu0 0.0
    %2002 = vmatpush1.msra.mxu0 0.0
    %2003 = vmatprep.subr.mxu0 0.0
    %2004 = vmatpush1.msra.mxu0 0.0
    %2005 = vmatprep.subr.mxu0 0.0
    %2006 = vmatpush1.msra.mxu0 0.0
    %2007 = vmatprep.subr.mxu0 0.0
    %2008 = vmatpush1.msra.mxu0 0.0
    %2009 = vmatprep.subr.mxu0 0.0
    %2010 = vmatpush1.msra.mxu0 0.0
    %2011 = vmatprep.subr.mxu0 0.0
    %2012 = vmatpush1.msra.mxu0 0.0
    %2013 = vmatprep.subr.mxu0 0.0
    %2014 = vmatpush1.msra.mxu0 0.0
    %2015 = vmatprep.subr.mxu0 0.0
    %2016 = vmatpush1.msra.mxu0 0.0
    %2017 = vmatprep.subr.mxu0 0.0
    %2018 = vmatpush1.msra.mxu0 0.0
    %2019 = vmatprep.subr.mxu0 0.0
    %2020 = vmatpush1.msra.mxu0 0.0
    %2021 = vmatprep.subr.mxu0 0.0
    %2022 = vmatpush1.msra.mxu0 0.0
    %2023 = vmatprep.subr.mxu0 0.0
    %2024 = vmatpush1.msra.mxu0 0.0
    %2025 = vmatprep.subr.mxu0 0.0
    %2026 = vmatpush1.msra.mxu0 0.0
    %2027 = vmatprep.subr.mxu0 0.0
    %2028 = vmatpush1.msra.mxu0 0.0
    %2029 = vmatprep.subr.mxu0 0.0
    %2030 = vmatpush1.msra.mxu0 0.0
    %2031 = vmatprep.subr.mxu0 0.0
    %2032 = vmatpush1.msra.mxu0 0.0
    %2033 = vmatprep.subr.mxu0 0.0
    %2034 = vmatpush1.msra.mxu0 0.0
    %2035 = vmatprep.subr.mxu0 0.0
    %2036 = vmatpush1.msra.mxu0 0.0
    %2037 = vmatprep.subr.mxu0 0.0
    %2038 = vmatpush1.msra.mxu0 0.0
    %2039 = vmatprep.subr.mxu0 0.0
    %2040 = vmatpush1.msra.mxu0 0.0
    %2041 = vmatprep.subr.mxu0 0.0
    %2042 = vmatpush1.msra.mxu0 0.0
    %2043 = vmatprep.subr.mxu0 0.0
    %2044 = vmatpush1.msra.mxu0 0.0
    %2045 = vmatprep.subr.mxu0 0.0
    %2046 = vmatpush1.msra.mxu0 0.0
    %2047 = vmatprep.subr.mxu0 0.0
    %2048 = vmatpush1.msra.mxu0 0.0
    %2049 = vmatprep.subr.mxu0 0.0
    %2050 = vmatpush1.msra.mxu0 0.0
    %2051 = vmatprep.subr.mxu0 0.0
    %2052 = vmatpush1.msra.mxu0 0.0
    %2053 = vmatprep.subr.mxu0 0.0
    %2054 = vmatpush1.msra.mxu0 0.0
    %2055 = vmatprep.subr.mxu0 0.0
    %2056 = vmatpush1.msra.mxu0 0.0
    %2057 = vmatprep.subr.mxu0 0.0
    %2058 = vmatpush1.msra.mxu0 0.0
    %2059 = vmatprep.mubr.f32.mxu0 0.0
    %2060 = vmatmul.mubr.f32.gmra.mrb[0].mxu0 %v1993
    %v2061 = vpop.f32.mrb[0].mxu0
    %v2062 = vadd.f32 0.0, %v2061
    %v2063 = vpop.f32.mrb[0].mxu0
    %2064 = vdwg.mxu0
    %v2066 = vsel %vm193, %v2062, 0
    %2068 = vmatprep.subr.mxu0 0.0
    %2069 = vmatpush1.msra.mxu0 %v188
    %2070 = vmatprep.subr.mxu0 0.0
    %2071 = vmatpush1.msra.mxu0 0.0
    %2072 = vmatprep.subr.mxu0 0.0
    %2073 = vmatpush1.msra.mxu0 0.0
    %2074 = vmatprep.subr.mxu0 0.0
    %2075 = vmatpush1.msra.mxu0 0.0
    %2076 = vmatprep.subr.mxu0 0.0
    %2077 = vmatpush1.msra.mxu0 0.0
    %2078 = vmatprep.subr.mxu0 0.0
    %2079 = vmatpush1.msra.mxu0 0.0
    %2080 = vmatprep.subr.mxu0 0.0
    %2081 = vmatpush1.msra.mxu0 0.0
    %2082 = vmatprep.subr.mxu0 0.0
    %2083 = vmatpush1.msra.mxu0 0.0
    %2084 = vmatprep.subr.mxu0 0.0
    %2085 = vmatpush1.msra.mxu0 0.0
    %2086 = vmatprep.subr.mxu0 0.0
    %2087 = vmatpush1.msra.mxu0 0.0
    %2088 = vmatprep.subr.mxu0 0.0
    %2089 = vmatpush1.msra.mxu0 0.0
    %2090 = vmatprep.subr.mxu0 0.0
    %2091 = vmatpush1.msra.mxu0 0.0
    %2092 = vmatprep.subr.mxu0 0.0
    %2093 = vmatpush1.msra.mxu0 0.0
    %2094 = vmatprep.subr.mxu0 0.0
    %2095 = vmatpush1.msra.mxu0 0.0
    %2096 = vmatprep.subr.mxu0 0.0
    %2097 = vmatpush1.msra.mxu0 0.0
    %2098 = vmatprep.subr.mxu0 0.0
    %2099 = vmatpush1.msra.mxu0 0.0
    %2100 = vmatprep.subr.mxu0 0.0
    %2101 = vmatpush1.msra.mxu0 0.0
    %2102 = vmatprep.subr.mxu0 0.0
    %2103 = vmatpush1.msra.mxu0 0.0
    %2104 = vmatprep.subr.mxu0 0.0
    %2105 = vmatpush1.msra.mxu0 0.0
    %2106 = vmatprep.subr.mxu0 0.0
    %2107 = vmatpush1.msra.mxu0 0.0
    %2108 = vmatprep.subr.mxu0 0.0
    %2109 = vmatpush1.msra.mxu0 0.0
    %2110 = vmatprep.subr.mxu0 0.0
    %2111 = vmatpush1.msra.mxu0 0.0
    %2112 = vmatprep.subr.mxu0 0.0
    %2113 = vmatpush1.msra.mxu0 0.0
    %2114 = vmatprep.subr.mxu0 0.0
    %2115 = vmatpush1.msra.mxu0 0.0
    %2116 = vmatprep.subr.mxu0 0.0
    %2117 = vmatpush1.msra.mxu0 0.0
    %2118 = vmatprep.subr.mxu0 0.0
    %2119 = vmatpush1.msra.mxu0 0.0
    %2120 = vmatprep.subr.mxu0 0.0
    %2121 = vmatpush1.msra.mxu0 0.0
    %2122 = vmatprep.subr.mxu0 0.0
    %2123 = vmatpush1.msra.mxu0 0.0
    %2124 = vmatprep.subr.mxu0 0.0
    %2125 = vmatpush1.msra.mxu0 0.0
    %2126 = vmatprep.subr.mxu0 0.0
    %2127 = vmatpush1.msra.mxu0 0.0
    %2128 = vmatprep.subr.mxu0 0.0
    %2129 = vmatpush1.msra.mxu0 0.0
    %2130 = vmatprep.subr.mxu0 0.0
    %2131 = vmatpush1.msra.mxu0 0.0
    %2132 = vmatprep.mubr.f32.mxu0 0.0
    %2133 = vmatmul.mubr.f32.gmra.mrb[0].mxu0 %v2066
    %v2134 = vpop.f32.mrb[0].mxu0
    %v2135 = vadd.f32 0.0, %v2134
    %v2136 = vpop.f32.mrb[0].mxu0
    %2137 = vdwg.mxu0
    %v2138 = vadd.f32 %v1895, %v2135
    %v2139 = vld [vmem:[%s75] sm:$0xff]
    %v2140 = vadd.f32 %v2139, %v2138
    %v2141 = vadd.f32 %v2140, %v1166
    %2142 = vst.msk [vmem:[#allocation3 + $0x8] sm:$0xff] %vm45, %v2141
    %v2143 = vld [vmem:[#allocation3] sm:$0xff]
    %v2144 = vld [vmem:[#allocation3 + $0x8] sm:$0xff]
    %v2145 = vld [vmem:[%s6] sm:$0x1]
    %v2146 = vld [vmem:[%s7] sm:$0x1]
    %v2147 = vsel %vm45, %v2143, 0.0
    %2148 = vadd.xlane.f32.xlu0 %v2147
    %v2149 = vpop.xlane.xlu0 %2148
    %v2150 = vsel %vm45, %v2144, 0.0
    %2151 = vadd.xlane.f32.xlu0 %v2150
    %v2152 = vpop.xlane.xlu0 %2151
    %v2153 = vmul.f32 %v2149, %v49
    %v2154 = vmul.f32 %v2152, %v49
    %v2155 = vsub.f32 %v2143, %v2153
    %v2156 = vsub.f32 %v2144, %v2154
    %v2157 = vmul.f32 %v2155, %v2155
    %v2158 = vmul.f32 %v2156, %v2156
    %v2159 = vsel %vm45, %v2157, 0.0
    %2160 = vadd.xlane.f32.xlu0 %v2159
    %v2161 = vpop.xlane.xlu0 %2160
    %v2162 = vsel %vm45, %v2158, 0.0
    %2163 = vadd.xlane.f32.xlu0 %v2162
    %v2164 = vpop.xlane.xlu0 %2163
    %v2165 = vmul.f32 %v2161, %v49
    %v2166 = vmul.f32 %v2164, %v49
    %v2167 = vadd.f32 %v2165, 1e-05
    %v2168 = vadd.f32 %v2166, 1e-05
    %v2169 = vrsqrt.pop %v2167
    %v2170 = vrsqrt.pop %v2168
    %v2171 = vmul.f32 %v2155, %v2169
    %v2172 = vmul.f32 %v2156, %v2170
    %v2174 = vlaneseq
    %v2175 = vshrl.u32 %v2174, 7
    %v2176 = vsub.s32 0, %v2175
    %v2177 = vrot.slane %v2145, %v2176
    %v2179 = vmul.f32 %v2171, %v2177
    %v2180 = vmul.f32 %v2172, %v2177
    %v2182 = vlaneseq
    %v2183 = vshrl.u32 %v2182, 7
    %v2184 = vsub.s32 0, %v2183
    %v2185 = vrot.slane %v2146, %v2184
    %v2187 = vadd.f32 %v2179, %v2185
    %v2188 = vadd.f32 %v2180, %v2185
    %v2189 = vld [vmem:[%s8] sm:$0xff]
    %v2190 = vld [vmem:[%s8 + $0x8] sm:$0xff]
    %v2191 = vld [vmem:[%s8 + $0x10] sm:$0xff]
    %v2192 = vld [vmem:[%s8 + $0x18] sm:$0xff]
    %v2193 = vld [vmem:[%s9] sm:$0x1]
    %v2195 = vlaneseq
    %v2196 = vshrl.u32 %v2195, 7
    %v2197 = vsub.s32 0, %v2196
    %v2198 = vrot.slane %v2193, %v2197
    %v2201 = vsel %vm45, %v2187, 0
    %v2204 = vsel %vm45, %v2188, 0
    %2206 = vmatprep.subr.mxu0 0.0
    %2207 = vmatpush1.msra.mxu0 %v2189
    %2208 = vmatprep.subr.mxu0 0.0
    %2209 = vmatpush1.msra.mxu0 %v2190
    %2210 = vmatprep.subr.mxu0 0.0
    %2211 = vmatpush1.msra.mxu0 %v2191
    %2212 = vmatprep.subr.mxu0 0.0
    %2213 = vmatpush1.msra.mxu0 %v2192
    %2214 = vmatprep.subr.mxu0 0.0
    %2215 = vmatpush1.msra.mxu0 0.0
    %2216 = vmatprep.subr.mxu0 0.0
    %2217 = vmatpush1.msra.mxu0 0.0
    %2218 = vmatprep.subr.mxu0 0.0
    %2219 = vmatpush1.msra.mxu0 0.0
    %2220 = vmatprep.subr.mxu0 0.0
    %2221 = vmatpush1.msra.mxu0 0.0
    %2222 = vmatprep.subr.mxu0 0.0
    %2223 = vmatpush1.msra.mxu0 0.0
    %2224 = vmatprep.subr.mxu0 0.0
    %2225 = vmatpush1.msra.mxu0 0.0
    %2226 = vmatprep.subr.mxu0 0.0
    %2227 = vmatpush1.msra.mxu0 0.0
    %2228 = vmatprep.subr.mxu0 0.0
    %2229 = vmatpush1.msra.mxu0 0.0
    %2230 = vmatprep.subr.mxu0 0.0
    %2231 = vmatpush1.msra.mxu0 0.0
    %2232 = vmatprep.subr.mxu0 0.0
    %2233 = vmatpush1.msra.mxu0 0.0
    %2234 = vmatprep.subr.mxu0 0.0
    %2235 = vmatpush1.msra.mxu0 0.0
    %2236 = vmatprep.subr.mxu0 0.0
    %2237 = vmatpush1.msra.mxu0 0.0
    %2238 = vmatprep.subr.mxu0 0.0
    %2239 = vmatpush1.msra.mxu0 0.0
    %2240 = vmatprep.subr.mxu0 0.0
    %2241 = vmatpush1.msra.mxu0 0.0
    %2242 = vmatprep.subr.mxu0 0.0
    %2243 = vmatpush1.msra.mxu0 0.0
    %2244 = vmatprep.subr.mxu0 0.0
    %2245 = vmatpush1.msra.mxu0 0.0
    %2246 = vmatprep.subr.mxu0 0.0
    %2247 = vmatpush1.msra.mxu0 0.0
    %2248 = vmatprep.subr.mxu0 0.0
    %2249 = vmatpush1.msra.mxu0 0.0
    %2250 = vmatprep.subr.mxu0 0.0
    %2251 = vmatpush1.msra.mxu0 0.0
    %2252 = vmatprep.subr.mxu0 0.0
    %2253 = vmatpush1.msra.mxu0 0.0
    %2254 = vmatprep.subr.mxu0 0.0
    %2255 = vmatpush1.msra.mxu0 0.0
    %2256 = vmatprep.subr.mxu0 0.0
    %2257 = vmatpush1.msra.mxu0 0.0
    %2258 = vmatprep.subr.mxu0 0.0
    %2259 = vmatpush1.msra.mxu0 0.0
    %2260 = vmatprep.subr.mxu0 0.0
    %2261 = vmatpush1.msra.mxu0 0.0
    %2262 = vmatprep.subr.mxu0 0.0
    %2263 = vmatpush1.msra.mxu0 0.0
    %2264 = vmatprep.subr.mxu0 0.0
    %2265 = vmatpush1.msra.mxu0 0.0
    %2266 = vmatprep.subr.mxu0 0.0
    %2267 = vmatpush1.msra.mxu0 0.0
    %2268 = vmatprep.subr.mxu0 0.0
    %2269 = vmatpush1.msra.mxu0 0.0
    %2270 = vmatprep.mubr.f32.mxu0 0.0
    %2271 = vmatmul.mubr.f32.gmra.mrb[0].mxu0 %v2201
    %v2272 = vpop.f32.mrb[0].mxu0
    %v2273 = vadd.f32 %v2198, %v2272
    %v2274 = vpop.f32.mrb[0].mxu0
    %2275 = vmatprep.mubr.f32.mxu0 0.0
    %2276 = vmatmul.mubr.f32.gmra.mrb[0].mxu0 %v2204
    %v2277 = vpop.f32.mrb[0].mxu0
    %v2278 = vadd.f32 %v2198, %v2277
    %v2279 = vpop.f32.mrb[0].mxu0
    %2280 = vdwg.mxu0
    %v2281 = vmul.f32 %v2273, %v2273
    %v2282 = vmul.f32 %v2278, %v2278
    %v2283 = vmul.f32 %v2273, 0.5
    %v2284 = vmul.f32 %v2278, 0.5
    %v2285 = vmul.f32 %v2281, %v2273
    %v2286 = vmul.f32 %v2282, %v2278
    %v2287 = vmul.f32 %v2285, 0.044715
    %v2288 = vmul.f32 %v2286, 0.044715
    %v2289 = vadd.f32 %v2273, %v2287
    %v2290 = vadd.f32 %v2278, %v2288
    %v2291 = vmul.f32 %v2289, 0.7978846
    %v2292 = vmul.f32 %v2290, 0.7978846
    %v2293 = vtanh.pop %v2291
    %v2294 = vtanh.pop %v2292
    %v2295 = vadd.f32 %v2293, 1.0
    %v2296 = vadd.f32 %v2294, 1.0
    %v2297 = vmul.f32 %v2283, %v2295
    %v2298 = vmul.f32 %v2284, %v2296
    %v2299 = vld [vmem:[%s10] sm:$0xff]
    %v2300 = vld [vmem:[%s10 + $0x8] sm:$0xff]
    %v2301 = vld [vmem:[%s10 + $0x10] sm:$0xff]
    %v2302 = vld [vmem:[%s10 + $0x18] sm:$0xff]
    %v2303 = vld [vmem:[%s10 + $0x20] sm:$0xff]
    %v2304 = vld [vmem:[%s10 + $0x28] sm:$0xff]
    %v2305 = vld [vmem:[%s10 + $0x30] sm:$0xff]
    %v2306 = vld [vmem:[%s10 + $0x38] sm:$0xff]
    %v2307 = vld [vmem:[%s10 + $0x40] sm:$0xff]
    %v2308 = vld [vmem:[%s10 + $0x48] sm:$0xff]
    %v2309 = vld [vmem:[%s10 + $0x50] sm:$0xff]
    %v2310 = vld [vmem:[%s10 + $0x58] sm:$0xff]
    %v2311 = vld [vmem:[%s10 + $0x60] sm:$0xff]
    %v2312 = vld [vmem:[%s10 + $0x68] sm:$0xff]
    %v2313 = vld [vmem:[%s10 + $0x70] sm:$0xff]
    %v2314 = vld [vmem:[%s10 + $0x78] sm:$0xff]
    %v2315 = vld [vmem:[%s11] sm:$0x1]
    %v2317 = vlaneseq
    %v2318 = vshrl.u32 %v2317, 7
    %v2319 = vsub.s32 0, %v2318
    %v2320 = vrot.slane %v2315, %v2319
    %2322 = vmatprep.subr.mxu0 0.0
    %2323 = vmatpush1.msra.mxu0 %v2299
    %2324 = vmatprep.subr.mxu0 0.0
    %2325 = vmatpush1.msra.mxu0 %v2300
    %2326 = vmatprep.subr.mxu0 0.0
    %2327 = vmatpush1.msra.mxu0 %v2301
    %2328 = vmatprep.subr.mxu0 0.0
    %2329 = vmatpush1.msra.mxu0 %v2302
    %2330 = vmatprep.subr.mxu0 0.0
    %2331 = vmatpush1.msra.mxu0 %v2303
    %2332 = vmatprep.subr.mxu0 0.0
    %2333 = vmatpush1.msra.mxu0 %v2304
    %2334 = vmatprep.subr.mxu0 0.0
    %2335 = vmatpush1.msra.mxu0 %v2305
    %2336 = vmatprep.subr.mxu0 0.0
    %2337 = vmatpush1.msra.mxu0 %v2306
    %2338 = vmatprep.subr.mxu0 0.0
    %2339 = vmatpush1.msra.mxu0 %v2307
    %2340 = vmatprep.subr.mxu0 0.0
    %2341 = vmatpush1.msra.mxu0 %v2308
    %2342 = vmatprep.subr.mxu0 0.0
    %2343 = vmatpush1.msra.mxu0 %v2309
    %2344 = vmatprep.subr.mxu0 0.0
    %2345 = vmatpush1.msra.mxu0 %v2310
    %2346 = vmatprep.subr.mxu0 0.0
    %2347 = vmatpush1.msra.mxu0 %v2311
    %2348 = vmatprep.subr.mxu0 0.0
    %2349 = vmatpush1.msra.mxu0 %v2312
    %2350 = vmatprep.subr.mxu0 0.0
    %2351 = vmatpush1.msra.mxu0 %v2313
    %2352 = vmatprep.subr.mxu0 0.0
    %2353 = vmatpush1.msra.mxu0 %v2314
    %2354 = vmatprep.subr.mxu0 0.0
    %2355 = vmatpush1.msra.mxu0 0.0
    %2356 = vmatprep.subr.mxu0 0.0
    %2357 = vmatpush1.msra.mxu0 0.0
    %2358 = vmatprep.subr.mxu0 0.0
    %2359 = vmatpush1.msra.mxu0 0.0
    %2360 = vmatprep.subr.mxu0 0.0
    %2361 = vmatpush1.msra.mxu0 0.0
    %2362 = vmatprep.subr.mxu0 0.0
    %2363 = vmatpush1.msra.mxu0 0.0
    %2364 = vmatprep.subr.mxu0 0.0
    %2365 = vmatpush1.msra.mxu0 0.0
    %2366 = vmatprep.subr.mxu0 0.0
    %2367 = vmatpush1.msra.mxu0 0.0
    %2368 = vmatprep.subr.mxu0 0.0
    %2369 = vmatpush1.msra.mxu0 0.0
    %2370 = vmatprep.subr.mxu0 0.0
    %2371 = vmatpush1.msra.mxu0 0.0
    %2372 = vmatprep.subr.mxu0 0.0
    %2373 = vmatpush1.msra.mxu0 0.0
    %2374 = vmatprep.subr.mxu0 0.0
    %2375 = vmatpush1.msra.mxu0 0.0
    %2376 = vmatprep.subr.mxu0 0.0
    %2377 = vmatpush1.msra.mxu0 0.0
    %2378 = vmatprep.subr.mxu0 0.0
    %2379 = vmatpush1.msra.mxu0 0.0
    %2380 = vmatprep.subr.mxu0 0.0
    %2381 = vmatpush1.msra.mxu0 0.0
    %2382 = vmatprep.subr.mxu0 0.0
    %2383 = vmatpush1.msra.mxu0 0.0
    %2384 = vmatprep.subr.mxu0 0.0
    %2385 = vmatpush1.msra.mxu0 0.0
    %2386 = vmatprep.mubr.f32.mxu0 0.0
    %2387 = vmatmul.mubr.f32.gmra.mrb[0].mxu0 %v2297
    %v2388 = vpop.f32.mrb[0].mxu0
    %v2389 = vadd.f32 %v2320, %v2388
    %v2390 = vpop.f32.mrb[0].mxu0
    %2391 = vmatprep.mubr.f32.mxu0 0.0
    %2392 = vmatmul.mubr.f32.gmra.mrb[0].mxu0 %v2298
    %v2393 = vpop.f32.mrb[0].mxu0
    %v2394 = vadd.f32 %v2320, %v2393
    %v2395 = vpop.f32.mrb[0].mxu0
    %2396 = vdwg.mxu0
    %v2397 = vadd.f32 %v2143, %v2389
    %v2398 = vadd.f32 %v2144, %v2394
    %2399 = vst.msk [vmem:[#allocation4] sm:$0xff] %vm45, %v2397
    %s2400 = scalar_lea.vmem [#allocation4], 8
    %2401 = vst.msk [vmem:[%s2400] sm:$0xff] %vm45, %v2398
    // Predicated region
    $region50: #{tpu_custom_call.1} parent=1 // pred_check
      _
    $region51: #{tpu_custom_call.1} parent=1 // pred_check_branch
      %2403 = sbr.rel (0) target = $region53
    $region52: #{tpu_custom_call.1} parent=1 // pred_region
      %s2405 = ssub.s32 256, 256
      %2406 = vsyncadd [#allocation5], %s2405
      %s2407 = sshll.u32 [#allocation4], 4
      %s2408 = int_to_ptr.vmem [resolvable:$true] %s2407
      %2413 = dma.vmem_to_hbm [thread:$0]  %s2408, 256, %s12, [#allocation5], 128, 128, 8
    $region53: #{tpu_custom_call.1} parent=1 // pred_fallthru
      _
    // Predicated region
    $region54: #{tpu_custom_call.1} parent=1 // pred_check
      _
    $region55: #{tpu_custom_call.1} parent=1 // pred_check_branch
      %2415 = sbr.rel (0) target = $region57
    $region56: #{tpu_custom_call.1} parent=1 // pred_region
      %2416 = dma.done [#allocation5], 256
    $region57: #{tpu_custom_call.1} parent=1 // pred_fallthru
      _
    %2417 = vsyncpa [#allocation5], 1

</llo_original>
